<compile_context>
chip_gen: v7x
topology: tpu7x:2x2x1
jax: 0.10.0
libtpu: 0.0.40
codegen_flags: <defaults>
</compile_context>

<pallas_src>
import functools

import jax
import jax.numpy as jnp
from jax.experimental import pallas as pl
from jax.experimental.pallas import tpu as pltpu


# ----------------------------- Pallas kernels ------------------------------ #

def _conv_relu_pool_kernel(xe_ref, xo_ref, w_ref, b_ref, o_ref):
    """Fused conv3x3 (9 tap-dots) + bias + ReLU + 2x2 maxpool, one image.

    xe_ref / xo_ref: (H+2, W/2+1, Cin)  even / odd columns of the padded image
    w_ref: (9, Cin, Cout) tap weights (index kh*3+kw),  b_ref: (1, Cout) f32
    o_ref: (H/2, W/2, Cout) pooled output
    """
    hh, wh, _ = o_ref.shape

    def row(r, carry):
        best = None
        for gy in range(2):                    # pool-window row offset
            for gx in range(2):                # pool-window column offset
                acc = None
                for kh in range(3):
                    for kw in range(3):
                        s = gx + kw            # shift within the padded row
                        src = xe_ref if s % 2 == 0 else xo_ref
                        m = s // 2
                        x = src[2 * r + gy + kh, m:m + wh, :]      # (wh, Cin)
                        d = jnp.dot(x, w_ref[kh * 3 + kw],
                                    preferred_element_type=jnp.float32)
                        acc = d if acc is None else acc + d
                best = acc if best is None else jnp.maximum(best, acc)
        # bias + ReLU hoisted after the pool max (commutes with max).
        o_ref[r, :, :] = jnp.maximum(best + b_ref[...], 0.0).astype(o_ref.dtype)
        return carry

    jax.lax.fori_loop(0, hh, row, 0)


def _conv_relu_kernel(xp_ref, w_ref, b_ref, o_ref):
    """Fused conv3x3 (9 tap-dots) + bias + ReLU (no pooling), one image.

    xp_ref: (H+2, W+2, Cin) padded image, w_ref: (9, Cin, Cout),
    b_ref: (1, Cout) f32, o_ref: (H, W, Cout)
    """
    h_out, w_out, _ = o_ref.shape

    def row(h, carry):
        acc = None
        for kh in range(3):
            for kw in range(3):
                x = xp_ref[h + kh, kw:kw + w_out, :]               # (W, Cin)
                d = jnp.dot(x, w_ref[kh * 3 + kw],
                            preferred_element_type=jnp.float32)
                acc = d if acc is None else acc + d
        o_ref[h, :, :] = jnp.maximum(acc + b_ref[...], 0.0).astype(o_ref.dtype)
        return carry

    jax.lax.fori_loop(0, h_out, row, 0)


# ------------------------------ JAX glue ----------------------------------- #

def _round_up(x, m):
    return (x + m - 1) // m * m


def _block_bytes(shape, dtype):
    pad = list(shape)
    pad[-1] = max(_round_up(pad[-1], 128), 128)
    if len(pad) >= 2:
        pad[-2] = _round_up(pad[-2], 8)
    n = 1
    for d in pad:
        n *= d
    return n * jnp.dtype(dtype).itemsize


def _vmem_limit(blocks):
    need = 2 * sum(_block_bytes(s, d) for s, d in blocks) + (4 << 20)
    return int(min(max(need, 32 << 20), 64 << 20))


def _conv3x3_relu_pool(x_nhwc, w9, b2, compute_dtype, out_dtype):
    """maxpool2(relu(conv3x3(x) + b)); NHWC in / NHWC out, one pallas_call."""
    N, H, W, C = x_nhwc.shape
    assert H % 2 == 0 and W % 2 == 0
    Hh, Wh = H // 2, W // 2
    Cout = w9.shape[-1]

    xp = jnp.pad(x_nhwc.astype(compute_dtype), ((0, 0), (1, 1), (1, 1), (0, 0)))
    xe = xp[:, :, 0::2, :]            # (N, H+2, Wh+1, C): even padded columns
    xo = xp[:, :, 1::2, :]            # (N, H+2, Wh+1, C): odd padded columns

    vmem = _vmem_limit([((H + 2, Wh + 1, C), compute_dtype),
                        ((H + 2, Wh + 1, C), compute_dtype),
                        ((9, C, Cout), compute_dtype),
                        ((Hh, Wh, Cout), out_dtype)])

    return pl.pallas_call(
        _conv_relu_pool_kernel,
        out_shape=jax.ShapeDtypeStruct((N, Hh, Wh, Cout), out_dtype),
        grid=(N,),
        in_specs=[
            pl.BlockSpec((None, H + 2, Wh + 1, C), lambda n: (n, 0, 0, 0)),
            pl.BlockSpec((None, H + 2, Wh + 1, C), lambda n: (n, 0, 0, 0)),
            pl.BlockSpec((9, C, Cout), lambda n: (0, 0, 0)),
            pl.BlockSpec((1, Cout), lambda n: (0, 0)),
        ],
        out_specs=pl.BlockSpec((None, Hh, Wh, Cout), lambda n: (n, 0, 0, 0)),
        compiler_params=pltpu.CompilerParams(
            dimension_semantics=("parallel",),
            vmem_limit_bytes=vmem),
    )(xe, xo, w9, b2)


def _conv3x3_relu(x_nhwc, w9, b2, compute_dtype, out_dtype):
    """relu(conv3x3(x) + b) (no pooling); NHWC in / NHWC out."""
    N, H, W, C = x_nhwc.shape
    Cout = w9.shape[-1]

    xp = jnp.pad(x_nhwc.astype(compute_dtype), ((0, 0), (1, 1), (1, 1), (0, 0)))

    vmem = _vmem_limit([((H + 2, W + 2, C), compute_dtype),
                        ((9, C, Cout), compute_dtype),
                        ((H, W, Cout), out_dtype)])

    return pl.pallas_call(
        _conv_relu_kernel,
        out_shape=jax.ShapeDtypeStruct((N, H, W, Cout), out_dtype),
        grid=(N,),
        in_specs=[
            pl.BlockSpec((None, H + 2, W + 2, C), lambda n: (n, 0, 0, 0)),
            pl.BlockSpec((9, C, Cout), lambda n: (0, 0, 0)),
            pl.BlockSpec((1, Cout), lambda n: (0, 0)),
        ],
        out_specs=pl.BlockSpec((None, H, W, Cout), lambda n: (n, 0, 0, 0)),
        compiler_params=pltpu.CompilerParams(
            dimension_semantics=("parallel",),
            vmem_limit_bytes=vmem),
    )(xp, w9, b2)


def prepare_params(params, compute_dtype=jnp.float32):
    """PyTorch-layout (Cout, Cin, 3, 3) weights -> (9, Cin, Cout) tap weights
    plus (1, Cout) f32 bias, done ONCE outside the per-call jit."""
    prepped = []
    for w4d, b in params:
        cout, cin = w4d.shape[0], w4d.shape[1]
        w9 = jnp.transpose(w4d, (2, 3, 1, 0)).reshape(9, cin, cout)
        prepped.append((jnp.asarray(w9, compute_dtype),
                        jnp.asarray(b, jnp.float32).reshape(1, cout)))
    return tuple(prepped)


@functools.partial(jax.jit, static_argnames=("compute_dtype",))
def simple_cnn_encoder(x_nchw, prepped_params, compute_dtype=jnp.float32):
    """Forward pass matching the PyTorch module: NCHW in, NCHW out.

    compute_dtype=jnp.bfloat16 selects the v6e/v7x MXU fast path (bf16 dot
    inputs AND bf16 inter-layer activations, f32 accumulation); the default
    jnp.float32 matches the f32 reference to ~1e-3.
    """
    (w1, b1), (w2, b2), (w3, b3) = prepped_params
    act_dtype = compute_dtype                          # bf16 intermediates on bf16 path
    h = jnp.transpose(x_nchw, (0, 2, 3, 1))            # NCHW -> NHWC
    h = _conv3x3_relu_pool(h, w1, b1, compute_dtype, act_dtype)   # (N, H/2, W/2, 64)
    h = _conv3x3_relu_pool(h, w2, b2, compute_dtype, act_dtype)   # (N, H/4, W/4, 128)
    h = _conv3x3_relu(h, w3, b3, compute_dtype, jnp.float32)      # (N, H/4, W/4, 320)
    return jnp.transpose(h, (0, 3, 1, 2))              # NHWC -> NCHW


# ----------------------- pure-JAX reference (for check) -------------------- #

def _ref_layer(x_nhwc, w4d, b, pool):
    y = jax.lax.conv_general_dilated(
        x_nhwc, jnp.transpose(w4d, (2, 3, 1, 0)),
        window_strides=(1, 1), padding="SAME",
        dimension_numbers=("NHWC", "HWIO", "NHWC"),
        precision=jax.lax.Precision.HIGHEST)
    y = jnp.maximum(y + b, 0.0)
    if pool:
        N, H, W, C = y.shape
        y = y.reshape(N, H // 2, 2, W // 2, 2, C).max(axis=(2, 4))
    return y


def _reference(x_nchw, params):
    (w1, b1), (w2, b2), (w3, b3) = params
    h = jnp.transpose(x_nchw, (0, 2, 3, 1))
    h = _ref_layer(h, w1, b1, pool=True)
    h = _ref_layer(h, w2, b2, pool=True)
    h = _ref_layer(h, w3, b3, pool=False)
    return jnp.transpose(h, (0, 3, 1, 2))


# --------------------------------- main ------------------------------------ #

def _init_params(key, in_channels=3, out_channels=320):
    def conv_init(k, cout, cin):
        kw, kb = jax.random.split(k)
        scale = 1.0 / jnp.sqrt(cin * 9.0)
        w = jax.random.normal(kw, (cout, cin, 3, 3), jnp.float32) * scale
        b = jax.random.normal(kb, (cout,), jnp.float32) * 0.01
        return w, b

    k1, k2, k3 = jax.random.split(key, 3)
    return (conv_init(k1, 64, in_channels),
            conv_init(k2, 128, 64),
            conv_init(k3, out_channels, 128))


if __name__ == "__main__":
    key = jax.random.PRNGKey(0)
    kx, kp = jax.random.split(key)

    x = jax.random.normal(kx, (2, 3, 16, 16), jnp.float32)   # NCHW, like PyTorch
    params = _init_params(kp, in_channels=3, out_channels=320)

    ref = jax.block_until_ready(_reference(x, params))

    # f32 path: same semantics as the PyTorch module (f32 accumulate).
    out = jax.block_until_ready(
        simple_cnn_encoder(x, prepare_params(params, jnp.float32)))
    assert out.shape == (2, 320, 4, 4), out.shape
    assert jnp.allclose(out, ref, rtol=1e-3, atol=1e-3), \
        float(jnp.max(jnp.abs(out - ref)))

    # bf16-input / bf16-intermediate / f32-accumulate MXU fast path (v6e/v7x).
    out_bf16 = jax.block_until_ready(
        simple_cnn_encoder(x, prepare_params(params, jnp.bfloat16),
                           compute_dtype=jnp.bfloat16))
    assert out_bf16.shape == (2, 320, 4, 4), out_bf16.shape
    assert jnp.allclose(out_bf16, ref, rtol=1e-1, atol=1e-1), \
        float(jnp.max(jnp.abs(out_bf16 - ref)))

    print("KERNEL_OK")
</pallas_src>

<mosaic_0001>
module attributes {stable_mosaic.version = 11 : i64} {
  func.func @_conv_relu_pool_kernel(%arg0: i32, %arg1: memref<1x18x9x3xf32, #tpu.memory_space<vmem>>, %arg2: memref<1x18x9x3xf32, #tpu.memory_space<vmem>>, %arg3: memref<9x3x64xf32, #tpu.memory_space<vmem>>, %arg4: memref<1x64xf32, #tpu.memory_space<vmem>>, %arg5: memref<1x8x8x64xf32, #tpu.memory_space<vmem>>) attributes {dimension_semantics = [#tpu.dimension_semantics<parallel>], iteration_bounds = array<i64: 2>, scalar_prefetch = 0 : i64, scratch_operands = 0 : i64, tpu.core_type = #tpu.core_type<tc>, window_params = [{transform_indices = @transform_0, window_bounds = array<i64: 1, 18, 9, 3>}, {transform_indices = @transform_1, window_bounds = array<i64: 1, 18, 9, 3>}, {pipeline_mode = #tpu.pipeline_mode<synchronous>, transform_indices = @transform_2, window_bounds = array<i64: 9, 3, 64>}, {pipeline_mode = #tpu.pipeline_mode<synchronous>, transform_indices = @transform_3, window_bounds = array<i64: 1, 64>}, {transform_indices = @transform_4, window_bounds = array<i64: 1, 8, 8, 64>}]} {
    %c0_i32 = arith.constant 0 : i32
    %c8_i32 = arith.constant 8 : i32
    %0 = arith.addi %c0_i32, %c8_i32 : i32
    %c1_i32 = arith.constant 1 : i32
    scf.for %arg6 = %c0_i32 to %0 step %c1_i32  : i32 {
      %c2_i32 = arith.constant 2 : i32
      %1 = arith.muli %c2_i32, %arg6 : i32
      %c0_i32_1 = arith.constant 0 : i32
      %2 = arith.addi %1, %c0_i32_1 : i32
      %c0_i32_2 = arith.constant 0 : i32
      %3 = arith.addi %2, %c0_i32_2 : i32
      %c0 = arith.constant 0 : index
      %4 = arith.index_cast %3 : i32 to index
      %c0_3 = arith.constant 0 : index
      %c0_4 = arith.constant 0 : index
      %5 = vector.load %arg1[%c0, %4, %c0_3, %c0_4] : memref<1x18x9x3xf32, #tpu.memory_space<vmem>>, vector<1x1x8x3xf32>
      %6 = vector.shape_cast %5 : vector<1x1x8x3xf32> to vector<8x3xf32>
      %c0_5 = arith.constant 0 : index
      %c0_6 = arith.constant 0 : index
      %c0_7 = arith.constant 0 : index
      %7 = vector.load %arg3[%c0_5, %c0_6, %c0_7] : memref<9x3x64xf32, #tpu.memory_space<vmem>>, vector<1x3x64xf32>
      %8 = vector.shape_cast %7 : vector<1x3x64xf32> to vector<3x64xf32>
      %cst = arith.constant dense<0.000000e+00> : vector<8x64xf32>
      %9 = tpu.matmul %6, %8, %cst {dimension_numbers = #tpu.dot_dimension_numbers<[1], [0], [0], [1], [0, 0, 1, 1], [], []>} : vector<8x3xf32>, vector<3x64xf32>, vector<8x64xf32> -> vector<8x64xf32>
      %c2_i32_8 = arith.constant 2 : i32
      %10 = arith.muli %c2_i32_8, %arg6 : i32
      %c0_i32_9 = arith.constant 0 : i32
      %11 = arith.addi %10, %c0_i32_9 : i32
      %c0_i32_10 = arith.constant 0 : i32
      %12 = arith.addi %11, %c0_i32_10 : i32
      %c0_11 = arith.constant 0 : index
      %13 = arith.index_cast %12 : i32 to index
      %c0_12 = arith.constant 0 : index
      %c0_13 = arith.constant 0 : index
      %14 = vector.load %arg2[%c0_11, %13, %c0_12, %c0_13] : memref<1x18x9x3xf32, #tpu.memory_space<vmem>>, vector<1x1x8x3xf32>
      %15 = vector.shape_cast %14 : vector<1x1x8x3xf32> to vector<8x3xf32>
      %c1 = arith.constant 1 : index
      %c0_14 = arith.constant 0 : index
      %c0_15 = arith.constant 0 : index
      %16 = vector.load %arg3[%c1, %c0_14, %c0_15] : memref<9x3x64xf32, #tpu.memory_space<vmem>>, vector<1x3x64xf32>
      %17 = vector.shape_cast %16 : vector<1x3x64xf32> to vector<3x64xf32>
      %cst_16 = arith.constant dense<0.000000e+00> : vector<8x64xf32>
      %18 = tpu.matmul %15, %17, %cst_16 {dimension_numbers = #tpu.dot_dimension_numbers<[1], [0], [0], [1], [0, 0, 1, 1], [], []>} : vector<8x3xf32>, vector<3x64xf32>, vector<8x64xf32> -> vector<8x64xf32>
      %19 = arith.addf %9, %18 : vector<8x64xf32>
      %c2_i32_17 = arith.constant 2 : i32
      %20 = arith.muli %c2_i32_17, %arg6 : i32
      %c0_i32_18 = arith.constant 0 : i32
      %21 = arith.addi %20, %c0_i32_18 : i32
      %c0_i32_19 = arith.constant 0 : i32
      %22 = arith.addi %21, %c0_i32_19 : i32
      %c0_20 = arith.constant 0 : index
      %23 = arith.index_cast %22 : i32 to index
      %c1_21 = arith.constant 1 : index
      %c0_22 = arith.constant 0 : index
      %24 = vector.load %arg1[%c0_20, %23, %c1_21, %c0_22] : memref<1x18x9x3xf32, #tpu.memory_space<vmem>>, vector<1x1x8x3xf32>
      %25 = vector.shape_cast %24 : vector<1x1x8x3xf32> to vector<8x3xf32>
      %c2 = arith.constant 2 : index
      %c0_23 = arith.constant 0 : index
      %c0_24 = arith.constant 0 : index
      %26 = vector.load %arg3[%c2, %c0_23, %c0_24] : memref<9x3x64xf32, #tpu.memory_space<vmem>>, vector<1x3x64xf32>
      %27 = vector.shape_cast %26 : vector<1x3x64xf32> to vector<3x64xf32>
      %cst_25 = arith.constant dense<0.000000e+00> : vector<8x64xf32>
      %28 = tpu.matmul %25, %27, %cst_25 {dimension_numbers = #tpu.dot_dimension_numbers<[1], [0], [0], [1], [0, 0, 1, 1], [], []>} : vector<8x3xf32>, vector<3x64xf32>, vector<8x64xf32> -> vector<8x64xf32>
      %29 = arith.addf %19, %28 : vector<8x64xf32>
      %c2_i32_26 = arith.constant 2 : i32
      %30 = arith.muli %c2_i32_26, %arg6 : i32
      %c0_i32_27 = arith.constant 0 : i32
      %31 = arith.addi %30, %c0_i32_27 : i32
      %c1_i32_28 = arith.constant 1 : i32
      %32 = arith.addi %31, %c1_i32_28 : i32
      %c0_29 = arith.constant 0 : index
      %33 = arith.index_cast %32 : i32 to index
      %c0_30 = arith.constant 0 : index
      %c0_31 = arith.constant 0 : index
      %34 = vector.load %arg1[%c0_29, %33, %c0_30, %c0_31] : memref<1x18x9x3xf32, #tpu.memory_space<vmem>>, vector<1x1x8x3xf32>
      %35 = vector.shape_cast %34 : vector<1x1x8x3xf32> to vector<8x3xf32>
      %c3 = arith.constant 3 : index
      %c0_32 = arith.constant 0 : index
      %c0_33 = arith.constant 0 : index
      %36 = vector.load %arg3[%c3, %c0_32, %c0_33] : memref<9x3x64xf32, #tpu.memory_space<vmem>>, vector<1x3x64xf32>
      %37 = vector.shape_cast %36 : vector<1x3x64xf32> to vector<3x64xf32>
      %cst_34 = arith.constant dense<0.000000e+00> : vector<8x64xf32>
      %38 = tpu.matmul %35, %37, %cst_34 {dimension_numbers = #tpu.dot_dimension_numbers<[1], [0], [0], [1], [0, 0, 1, 1], [], []>} : vector<8x3xf32>, vector<3x64xf32>, vector<8x64xf32> -> vector<8x64xf32>
      %39 = arith.addf %29, %38 : vector<8x64xf32>
      %c2_i32_35 = arith.constant 2 : i32
      %40 = arith.muli %c2_i32_35, %arg6 : i32
      %c0_i32_36 = arith.constant 0 : i32
      %41 = arith.addi %40, %c0_i32_36 : i32
      %c1_i32_37 = arith.constant 1 : i32
      %42 = arith.addi %41, %c1_i32_37 : i32
      %c0_38 = arith.constant 0 : index
      %43 = arith.index_cast %42 : i32 to index
      %c0_39 = arith.constant 0 : index
      %c0_40 = arith.constant 0 : index
      %44 = vector.load %arg2[%c0_38, %43, %c0_39, %c0_40] : memref<1x18x9x3xf32, #tpu.memory_space<vmem>>, vector<1x1x8x3xf32>
      %45 = vector.shape_cast %44 : vector<1x1x8x3xf32> to vector<8x3xf32>
      %c4 = arith.constant 4 : index
      %c0_41 = arith.constant 0 : index
      %c0_42 = arith.constant 0 : index
      %46 = vector.load %arg3[%c4, %c0_41, %c0_42] : memref<9x3x64xf32, #tpu.memory_space<vmem>>, vector<1x3x64xf32>
      %47 = vector.shape_cast %46 : vector<1x3x64xf32> to vector<3x64xf32>
      %cst_43 = arith.constant dense<0.000000e+00> : vector<8x64xf32>
      %48 = tpu.matmul %45, %47, %cst_43 {dimension_numbers = #tpu.dot_dimension_numbers<[1], [0], [0], [1], [0, 0, 1, 1], [], []>} : vector<8x3xf32>, vector<3x64xf32>, vector<8x64xf32> -> vector<8x64xf32>
      %49 = arith.addf %39, %48 : vector<8x64xf32>
      %c2_i32_44 = arith.constant 2 : i32
      %50 = arith.muli %c2_i32_44, %arg6 : i32
      %c0_i32_45 = arith.constant 0 : i32
      %51 = arith.addi %50, %c0_i32_45 : i32
      %c1_i32_46 = arith.constant 1 : i32
      %52 = arith.addi %51, %c1_i32_46 : i32
      %c0_47 = arith.constant 0 : index
      %53 = arith.index_cast %52 : i32 to index
      %c1_48 = arith.constant 1 : index
      %c0_49 = arith.constant 0 : index
      %54 = vector.load %arg1[%c0_47, %53, %c1_48, %c0_49] : memref<1x18x9x3xf32, #tpu.memory_space<vmem>>, vector<1x1x8x3xf32>
      %55 = vector.shape_cast %54 : vector<1x1x8x3xf32> to vector<8x3xf32>
      %c5 = arith.constant 5 : index
      %c0_50 = arith.constant 0 : index
      %c0_51 = arith.constant 0 : index
      %56 = vector.load %arg3[%c5, %c0_50, %c0_51] : memref<9x3x64xf32, #tpu.memory_space<vmem>>, vector<1x3x64xf32>
      %57 = vector.shape_cast %56 : vector<1x3x64xf32> to vector<3x64xf32>
      %cst_52 = arith.constant dense<0.000000e+00> : vector<8x64xf32>
      %58 = tpu.matmul %55, %57, %cst_52 {dimension_numbers = #tpu.dot_dimension_numbers<[1], [0], [0], [1], [0, 0, 1, 1], [], []>} : vector<8x3xf32>, vector<3x64xf32>, vector<8x64xf32> -> vector<8x64xf32>
      %59 = arith.addf %49, %58 : vector<8x64xf32>
      %c2_i32_53 = arith.constant 2 : i32
      %60 = arith.muli %c2_i32_53, %arg6 : i32
      %c0_i32_54 = arith.constant 0 : i32
      %61 = arith.addi %60, %c0_i32_54 : i32
      %c2_i32_55 = arith.constant 2 : i32
      %62 = arith.addi %61, %c2_i32_55 : i32
      %c0_56 = arith.constant 0 : index
      %63 = arith.index_cast %62 : i32 to index
      %c0_57 = arith.constant 0 : index
      %c0_58 = arith.constant 0 : index
      %64 = vector.load %arg1[%c0_56, %63, %c0_57, %c0_58] : memref<1x18x9x3xf32, #tpu.memory_space<vmem>>, vector<1x1x8x3xf32>
      %65 = vector.shape_cast %64 : vector<1x1x8x3xf32> to vector<8x3xf32>
      %c6 = arith.constant 6 : index
      %c0_59 = arith.constant 0 : index
      %c0_60 = arith.constant 0 : index
      %66 = vector.load %arg3[%c6, %c0_59, %c0_60] : memref<9x3x64xf32, #tpu.memory_space<vmem>>, vector<1x3x64xf32>
      %67 = vector.shape_cast %66 : vector<1x3x64xf32> to vector<3x64xf32>
      %cst_61 = arith.constant dense<0.000000e+00> : vector<8x64xf32>
      %68 = tpu.matmul %65, %67, %cst_61 {dimension_numbers = #tpu.dot_dimension_numbers<[1], [0], [0], [1], [0, 0, 1, 1], [], []>} : vector<8x3xf32>, vector<3x64xf32>, vector<8x64xf32> -> vector<8x64xf32>
      %69 = arith.addf %59, %68 : vector<8x64xf32>
      %c2_i32_62 = arith.constant 2 : i32
      %70 = arith.muli %c2_i32_62, %arg6 : i32
      %c0_i32_63 = arith.constant 0 : i32
      %71 = arith.addi %70, %c0_i32_63 : i32
      %c2_i32_64 = arith.constant 2 : i32
      %72 = arith.addi %71, %c2_i32_64 : i32
      %c0_65 = arith.constant 0 : index
      %73 = arith.index_cast %72 : i32 to index
      %c0_66 = arith.constant 0 : index
      %c0_67 = arith.constant 0 : index
      %74 = vector.load %arg2[%c0_65, %73, %c0_66, %c0_67] : memref<1x18x9x3xf32, #tpu.memory_space<vmem>>, vector<1x1x8x3xf32>
      %75 = vector.shape_cast %74 : vector<1x1x8x3xf32> to vector<8x3xf32>
      %c7 = arith.constant 7 : index
      %c0_68 = arith.constant 0 : index
      %c0_69 = arith.constant 0 : index
      %76 = vector.load %arg3[%c7, %c0_68, %c0_69] : memref<9x3x64xf32, #tpu.memory_space<vmem>>, vector<1x3x64xf32>
      %77 = vector.shape_cast %76 : vector<1x3x64xf32> to vector<3x64xf32>
      %cst_70 = arith.constant dense<0.000000e+00> : vector<8x64xf32>
      %78 = tpu.matmul %75, %77, %cst_70 {dimension_numbers = #tpu.dot_dimension_numbers<[1], [0], [0], [1], [0, 0, 1, 1], [], []>} : vector<8x3xf32>, vector<3x64xf32>, vector<8x64xf32> -> vector<8x64xf32>
      %79 = arith.addf %69, %78 : vector<8x64xf32>
      %c2_i32_71 = arith.constant 2 : i32
      %80 = arith.muli %c2_i32_71, %arg6 : i32
      %c0_i32_72 = arith.constant 0 : i32
      %81 = arith.addi %80, %c0_i32_72 : i32
      %c2_i32_73 = arith.constant 2 : i32
      %82 = arith.addi %81, %c2_i32_73 : i32
      %c0_74 = arith.constant 0 : index
      %83 = arith.index_cast %82 : i32 to index
      %c1_75 = arith.constant 1 : index
      %c0_76 = arith.constant 0 : index
      %84 = vector.load %arg1[%c0_74, %83, %c1_75, %c0_76] : memref<1x18x9x3xf32, #tpu.memory_space<vmem>>, vector<1x1x8x3xf32>
      %85 = vector.shape_cast %84 : vector<1x1x8x3xf32> to vector<8x3xf32>
      %c8 = arith.constant 8 : index
      %c0_77 = arith.constant 0 : index
      %c0_78 = arith.constant 0 : index
      %86 = vector.load %arg3[%c8, %c0_77, %c0_78] : memref<9x3x64xf32, #tpu.memory_space<vmem>>, vector<1x3x64xf32>
      %87 = vector.shape_cast %86 : vector<1x3x64xf32> to vector<3x64xf32>
      %cst_79 = arith.constant dense<0.000000e+00> : vector<8x64xf32>
      %88 = tpu.matmul %85, %87, %cst_79 {dimension_numbers = #tpu.dot_dimension_numbers<[1], [0], [0], [1], [0, 0, 1, 1], [], []>} : vector<8x3xf32>, vector<3x64xf32>, vector<8x64xf32> -> vector<8x64xf32>
      %89 = arith.addf %79, %88 : vector<8x64xf32>
      %c2_i32_80 = arith.constant 2 : i32
      %90 = arith.muli %c2_i32_80, %arg6 : i32
      %c0_i32_81 = arith.constant 0 : i32
      %91 = arith.addi %90, %c0_i32_81 : i32
      %c0_i32_82 = arith.constant 0 : i32
      %92 = arith.addi %91, %c0_i32_82 : i32
      %c0_83 = arith.constant 0 : index
      %93 = arith.index_cast %92 : i32 to index
      %c0_84 = arith.constant 0 : index
      %c0_85 = arith.constant 0 : index
      %94 = vector.load %arg2[%c0_83, %93, %c0_84, %c0_85] : memref<1x18x9x3xf32, #tpu.memory_space<vmem>>, vector<1x1x8x3xf32>
      %95 = vector.shape_cast %94 : vector<1x1x8x3xf32> to vector<8x3xf32>
      %c0_86 = arith.constant 0 : index
      %c0_87 = arith.constant 0 : index
      %c0_88 = arith.constant 0 : index
      %96 = vector.load %arg3[%c0_86, %c0_87, %c0_88] : memref<9x3x64xf32, #tpu.memory_space<vmem>>, vector<1x3x64xf32>
      %97 = vector.shape_cast %96 : vector<1x3x64xf32> to vector<3x64xf32>
      %cst_89 = arith.constant dense<0.000000e+00> : vector<8x64xf32>
      %98 = tpu.matmul %95, %97, %cst_89 {dimension_numbers = #tpu.dot_dimension_numbers<[1], [0], [0], [1], [0, 0, 1, 1], [], []>} : vector<8x3xf32>, vector<3x64xf32>, vector<8x64xf32> -> vector<8x64xf32>
      %c2_i32_90 = arith.constant 2 : i32
      %99 = arith.muli %c2_i32_90, %arg6 : i32
      %c0_i32_91 = arith.constant 0 : i32
      %100 = arith.addi %99, %c0_i32_91 : i32
      %c0_i32_92 = arith.constant 0 : i32
      %101 = arith.addi %100, %c0_i32_92 : i32
      %c0_93 = arith.constant 0 : index
      %102 = arith.index_cast %101 : i32 to index
      %c1_94 = arith.constant 1 : index
      %c0_95 = arith.constant 0 : index
      %103 = vector.load %arg1[%c0_93, %102, %c1_94, %c0_95] : memref<1x18x9x3xf32, #tpu.memory_space<vmem>>, vector<1x1x8x3xf32>
      %104 = vector.shape_cast %103 : vector<1x1x8x3xf32> to vector<8x3xf32>
      %c1_96 = arith.constant 1 : index
      %c0_97 = arith.constant 0 : index
      %c0_98 = arith.constant 0 : index
      %105 = vector.load %arg3[%c1_96, %c0_97, %c0_98] : memref<9x3x64xf32, #tpu.memory_space<vmem>>, vector<1x3x64xf32>
      %106 = vector.shape_cast %105 : vector<1x3x64xf32> to vector<3x64xf32>
      %cst_99 = arith.constant dense<0.000000e+00> : vector<8x64xf32>
      %107 = tpu.matmul %104, %106, %cst_99 {dimension_numbers = #tpu.dot_dimension_numbers<[1], [0], [0], [1], [0, 0, 1, 1], [], []>} : vector<8x3xf32>, vector<3x64xf32>, vector<8x64xf32> -> vector<8x64xf32>
      %108 = arith.addf %98, %107 : vector<8x64xf32>
      %c2_i32_100 = arith.constant 2 : i32
      %109 = arith.muli %c2_i32_100, %arg6 : i32
      %c0_i32_101 = arith.constant 0 : i32
      %110 = arith.addi %109, %c0_i32_101 : i32
      %c0_i32_102 = arith.constant 0 : i32
      %111 = arith.addi %110, %c0_i32_102 : i32
      %c0_103 = arith.constant 0 : index
      %112 = arith.index_cast %111 : i32 to index
      %c1_104 = arith.constant 1 : index
      %c0_105 = arith.constant 0 : index
      %113 = vector.load %arg2[%c0_103, %112, %c1_104, %c0_105] : memref<1x18x9x3xf32, #tpu.memory_space<vmem>>, vector<1x1x8x3xf32>
      %114 = vector.shape_cast %113 : vector<1x1x8x3xf32> to vector<8x3xf32>
      %c2_106 = arith.constant 2 : index
      %c0_107 = arith.constant 0 : index
      %c0_108 = arith.constant 0 : index
      %115 = vector.load %arg3[%c2_106, %c0_107, %c0_108] : memref<9x3x64xf32, #tpu.memory_space<vmem>>, vector<1x3x64xf32>
      %116 = vector.shape_cast %115 : vector<1x3x64xf32> to vector<3x64xf32>
      %cst_109 = arith.constant dense<0.000000e+00> : vector<8x64xf32>
      %117 = tpu.matmul %114, %116, %cst_109 {dimension_numbers = #tpu.dot_dimension_numbers<[1], [0], [0], [1], [0, 0, 1, 1], [], []>} : vector<8x3xf32>, vector<3x64xf32>, vector<8x64xf32> -> vector<8x64xf32>
      %118 = arith.addf %108, %117 : vector<8x64xf32>
      %c2_i32_110 = arith.constant 2 : i32
      %119 = arith.muli %c2_i32_110, %arg6 : i32
      %c0_i32_111 = arith.constant 0 : i32
      %120 = arith.addi %119, %c0_i32_111 : i32
      %c1_i32_112 = arith.constant 1 : i32
      %121 = arith.addi %120, %c1_i32_112 : i32
      %c0_113 = arith.constant 0 : index
      %122 = arith.index_cast %121 : i32 to index
      %c0_114 = arith.constant 0 : index
      %c0_115 = arith.constant 0 : index
      %123 = vector.load %arg2[%c0_113, %122, %c0_114, %c0_115] : memref<1x18x9x3xf32, #tpu.memory_space<vmem>>, vector<1x1x8x3xf32>
      %124 = vector.shape_cast %123 : vector<1x1x8x3xf32> to vector<8x3xf32>
      %c3_116 = arith.constant 3 : index
      %c0_117 = arith.constant 0 : index
      %c0_118 = arith.constant 0 : index
      %125 = vector.load %arg3[%c3_116, %c0_117, %c0_118] : memref<9x3x64xf32, #tpu.memory_space<vmem>>, vector<1x3x64xf32>
      %126 = vector.shape_cast %125 : vector<1x3x64xf32> to vector<3x64xf32>
      %cst_119 = arith.constant dense<0.000000e+00> : vector<8x64xf32>
      %127 = tpu.matmul %124, %126, %cst_119 {dimension_numbers = #tpu.dot_dimension_numbers<[1], [0], [0], [1], [0, 0, 1, 1], [], []>} : vector<8x3xf32>, vector<3x64xf32>, vector<8x64xf32> -> vector<8x64xf32>
      %128 = arith.addf %118, %127 : vector<8x64xf32>
      %c2_i32_120 = arith.constant 2 : i32
      %129 = arith.muli %c2_i32_120, %arg6 : i32
      %c0_i32_121 = arith.constant 0 : i32
      %130 = arith.addi %129, %c0_i32_121 : i32
      %c1_i32_122 = arith.constant 1 : i32
      %131 = arith.addi %130, %c1_i32_122 : i32
      %c0_123 = arith.constant 0 : index
      %132 = arith.index_cast %131 : i32 to index
      %c1_124 = arith.constant 1 : index
      %c0_125 = arith.constant 0 : index
      %133 = vector.load %arg1[%c0_123, %132, %c1_124, %c0_125] : memref<1x18x9x3xf32, #tpu.memory_space<vmem>>, vector<1x1x8x3xf32>
      %134 = vector.shape_cast %133 : vector<1x1x8x3xf32> to vector<8x3xf32>
      %c4_126 = arith.constant 4 : index
      %c0_127 = arith.constant 0 : index
      %c0_128 = arith.constant 0 : index
      %135 = vector.load %arg3[%c4_126, %c0_127, %c0_128] : memref<9x3x64xf32, #tpu.memory_space<vmem>>, vector<1x3x64xf32>
      %136 = vector.shape_cast %135 : vector<1x3x64xf32> to vector<3x64xf32>
      %cst_129 = arith.constant dense<0.000000e+00> : vector<8x64xf32>
      %137 = tpu.matmul %134, %136, %cst_129 {dimension_numbers = #tpu.dot_dimension_numbers<[1], [0], [0], [1], [0, 0, 1, 1], [], []>} : vector<8x3xf32>, vector<3x64xf32>, vector<8x64xf32> -> vector<8x64xf32>
      %138 = arith.addf %128, %137 : vector<8x64xf32>
      %c2_i32_130 = arith.constant 2 : i32
      %139 = arith.muli %c2_i32_130, %arg6 : i32
      %c0_i32_131 = arith.constant 0 : i32
      %140 = arith.addi %139, %c0_i32_131 : i32
      %c1_i32_132 = arith.constant 1 : i32
      %141 = arith.addi %140, %c1_i32_132 : i32
      %c0_133 = arith.constant 0 : index
      %142 = arith.index_cast %141 : i32 to index
      %c1_134 = arith.constant 1 : index
      %c0_135 = arith.constant 0 : index
      %143 = vector.load %arg2[%c0_133, %142, %c1_134, %c0_135] : memref<1x18x9x3xf32, #tpu.memory_space<vmem>>, vector<1x1x8x3xf32>
      %144 = vector.shape_cast %143 : vector<1x1x8x3xf32> to vector<8x3xf32>
      %c5_136 = arith.constant 5 : index
      %c0_137 = arith.constant 0 : index
      %c0_138 = arith.constant 0 : index
      %145 = vector.load %arg3[%c5_136, %c0_137, %c0_138] : memref<9x3x64xf32, #tpu.memory_space<vmem>>, vector<1x3x64xf32>
      %146 = vector.shape_cast %145 : vector<1x3x64xf32> to vector<3x64xf32>
      %cst_139 = arith.constant dense<0.000000e+00> : vector<8x64xf32>
      %147 = tpu.matmul %144, %146, %cst_139 {dimension_numbers = #tpu.dot_dimension_numbers<[1], [0], [0], [1], [0, 0, 1, 1], [], []>} : vector<8x3xf32>, vector<3x64xf32>, vector<8x64xf32> -> vector<8x64xf32>
      %148 = arith.addf %138, %147 : vector<8x64xf32>
      %c2_i32_140 = arith.constant 2 : i32
      %149 = arith.muli %c2_i32_140, %arg6 : i32
      %c0_i32_141 = arith.constant 0 : i32
      %150 = arith.addi %149, %c0_i32_141 : i32
      %c2_i32_142 = arith.constant 2 : i32
      %151 = arith.addi %150, %c2_i32_142 : i32
      %c0_143 = arith.constant 0 : index
      %152 = arith.index_cast %151 : i32 to index
      %c0_144 = arith.constant 0 : index
      %c0_145 = arith.constant 0 : index
      %153 = vector.load %arg2[%c0_143, %152, %c0_144, %c0_145] : memref<1x18x9x3xf32, #tpu.memory_space<vmem>>, vector<1x1x8x3xf32>
      %154 = vector.shape_cast %153 : vector<1x1x8x3xf32> to vector<8x3xf32>
      %c6_146 = arith.constant 6 : index
      %c0_147 = arith.constant 0 : index
      %c0_148 = arith.constant 0 : index
      %155 = vector.load %arg3[%c6_146, %c0_147, %c0_148] : memref<9x3x64xf32, #tpu.memory_space<vmem>>, vector<1x3x64xf32>
      %156 = vector.shape_cast %155 : vector<1x3x64xf32> to vector<3x64xf32>
      %cst_149 = arith.constant dense<0.000000e+00> : vector<8x64xf32>
      %157 = tpu.matmul %154, %156, %cst_149 {dimension_numbers = #tpu.dot_dimension_numbers<[1], [0], [0], [1], [0, 0, 1, 1], [], []>} : vector<8x3xf32>, vector<3x64xf32>, vector<8x64xf32> -> vector<8x64xf32>
      %158 = arith.addf %148, %157 : vector<8x64xf32>
      %c2_i32_150 = arith.constant 2 : i32
      %159 = arith.muli %c2_i32_150, %arg6 : i32
      %c0_i32_151 = arith.constant 0 : i32
      %160 = arith.addi %159, %c0_i32_151 : i32
      %c2_i32_152 = arith.constant 2 : i32
      %161 = arith.addi %160, %c2_i32_152 : i32
      %c0_153 = arith.constant 0 : index
      %162 = arith.index_cast %161 : i32 to index
      %c1_154 = arith.constant 1 : index
      %c0_155 = arith.constant 0 : index
      %163 = vector.load %arg1[%c0_153, %162, %c1_154, %c0_155] : memref<1x18x9x3xf32, #tpu.memory_space<vmem>>, vector<1x1x8x3xf32>
      %164 = vector.shape_cast %163 : vector<1x1x8x3xf32> to vector<8x3xf32>
      %c7_156 = arith.constant 7 : index
      %c0_157 = arith.constant 0 : index
      %c0_158 = arith.constant 0 : index
      %165 = vector.load %arg3[%c7_156, %c0_157, %c0_158] : memref<9x3x64xf32, #tpu.memory_space<vmem>>, vector<1x3x64xf32>
      %166 = vector.shape_cast %165 : vector<1x3x64xf32> to vector<3x64xf32>
      %cst_159 = arith.constant dense<0.000000e+00> : vector<8x64xf32>
      %167 = tpu.matmul %164, %166, %cst_159 {dimension_numbers = #tpu.dot_dimension_numbers<[1], [0], [0], [1], [0, 0, 1, 1], [], []>} : vector<8x3xf32>, vector<3x64xf32>, vector<8x64xf32> -> vector<8x64xf32>
      %168 = arith.addf %158, %167 : vector<8x64xf32>
      %c2_i32_160 = arith.constant 2 : i32
      %169 = arith.muli %c2_i32_160, %arg6 : i32
      %c0_i32_161 = arith.constant 0 : i32
      %170 = arith.addi %169, %c0_i32_161 : i32
      %c2_i32_162 = arith.constant 2 : i32
      %171 = arith.addi %170, %c2_i32_162 : i32
      %c0_163 = arith.constant 0 : index
      %172 = arith.index_cast %171 : i32 to index
      %c1_164 = arith.constant 1 : index
      %c0_165 = arith.constant 0 : index
      %173 = vector.load %arg2[%c0_163, %172, %c1_164, %c0_165] : memref<1x18x9x3xf32, #tpu.memory_space<vmem>>, vector<1x1x8x3xf32>
      %174 = vector.shape_cast %173 : vector<1x1x8x3xf32> to vector<8x3xf32>
      %c8_166 = arith.constant 8 : index
      %c0_167 = arith.constant 0 : index
      %c0_168 = arith.constant 0 : index
      %175 = vector.load %arg3[%c8_166, %c0_167, %c0_168] : memref<9x3x64xf32, #tpu.memory_space<vmem>>, vector<1x3x64xf32>
      %176 = vector.shape_cast %175 : vector<1x3x64xf32> to vector<3x64xf32>
      %cst_169 = arith.constant dense<0.000000e+00> : vector<8x64xf32>
      %177 = tpu.matmul %174, %176, %cst_169 {dimension_numbers = #tpu.dot_dimension_numbers<[1], [0], [0], [1], [0, 0, 1, 1], [], []>} : vector<8x3xf32>, vector<3x64xf32>, vector<8x64xf32> -> vector<8x64xf32>
      %178 = arith.addf %168, %177 : vector<8x64xf32>
      %179 = arith.maximumf %89, %178 : vector<8x64xf32>
      %c2_i32_170 = arith.constant 2 : i32
      %180 = arith.muli %c2_i32_170, %arg6 : i32
      %c1_i32_171 = arith.constant 1 : i32
      %181 = arith.addi %180, %c1_i32_171 : i32
      %c0_i32_172 = arith.constant 0 : i32
      %182 = arith.addi %181, %c0_i32_172 : i32
      %c0_173 = arith.constant 0 : index
      %183 = arith.index_cast %182 : i32 to index
      %c0_174 = arith.constant 0 : index
      %c0_175 = arith.constant 0 : index
      %184 = vector.load %arg1[%c0_173, %183, %c0_174, %c0_175] : memref<1x18x9x3xf32, #tpu.memory_space<vmem>>, vector<1x1x8x3xf32>
      %185 = vector.shape_cast %184 : vector<1x1x8x3xf32> to vector<8x3xf32>
      %c0_176 = arith.constant 0 : index
      %c0_177 = arith.constant 0 : index
      %c0_178 = arith.constant 0 : index
      %186 = vector.load %arg3[%c0_176, %c0_177, %c0_178] : memref<9x3x64xf32, #tpu.memory_space<vmem>>, vector<1x3x64xf32>
      %187 = vector.shape_cast %186 : vector<1x3x64xf32> to vector<3x64xf32>
      %cst_179 = arith.constant dense<0.000000e+00> : vector<8x64xf32>
      %188 = tpu.matmul %185, %187, %cst_179 {dimension_numbers = #tpu.dot_dimension_numbers<[1], [0], [0], [1], [0, 0, 1, 1], [], []>} : vector<8x3xf32>, vector<3x64xf32>, vector<8x64xf32> -> vector<8x64xf32>
      %c2_i32_180 = arith.constant 2 : i32
      %189 = arith.muli %c2_i32_180, %arg6 : i32
      %c1_i32_181 = arith.constant 1 : i32
      %190 = arith.addi %189, %c1_i32_181 : i32
      %c0_i32_182 = arith.constant 0 : i32
      %191 = arith.addi %190, %c0_i32_182 : i32
      %c0_183 = arith.constant 0 : index
      %192 = arith.index_cast %191 : i32 to index
      %c0_184 = arith.constant 0 : index
      %c0_185 = arith.constant 0 : index
      %193 = vector.load %arg2[%c0_183, %192, %c0_184, %c0_185] : memref<1x18x9x3xf32, #tpu.memory_space<vmem>>, vector<1x1x8x3xf32>
      %194 = vector.shape_cast %193 : vector<1x1x8x3xf32> to vector<8x3xf32>
      %c1_186 = arith.constant 1 : index
      %c0_187 = arith.constant 0 : index
      %c0_188 = arith.constant 0 : index
      %195 = vector.load %arg3[%c1_186, %c0_187, %c0_188] : memref<9x3x64xf32, #tpu.memory_space<vmem>>, vector<1x3x64xf32>
      %196 = vector.shape_cast %195 : vector<1x3x64xf32> to vector<3x64xf32>
      %cst_189 = arith.constant dense<0.000000e+00> : vector<8x64xf32>
      %197 = tpu.matmul %194, %196, %cst_189 {dimension_numbers = #tpu.dot_dimension_numbers<[1], [0], [0], [1], [0, 0, 1, 1], [], []>} : vector<8x3xf32>, vector<3x64xf32>, vector<8x64xf32> -> vector<8x64xf32>
      %198 = arith.addf %188, %197 : vector<8x64xf32>
      %c2_i32_190 = arith.constant 2 : i32
      %199 = arith.muli %c2_i32_190, %arg6 : i32
      %c1_i32_191 = arith.constant 1 : i32
      %200 = arith.addi %199, %c1_i32_191 : i32
      %c0_i32_192 = arith.constant 0 : i32
      %201 = arith.addi %200, %c0_i32_192 : i32
      %c0_193 = arith.constant 0 : index
      %202 = arith.index_cast %201 : i32 to index
      %c1_194 = arith.constant 1 : index
      %c0_195 = arith.constant 0 : index
      %203 = vector.load %arg1[%c0_193, %202, %c1_194, %c0_195] : memref<1x18x9x3xf32, #tpu.memory_space<vmem>>, vector<1x1x8x3xf32>
      %204 = vector.shape_cast %203 : vector<1x1x8x3xf32> to vector<8x3xf32>
      %c2_196 = arith.constant 2 : index
      %c0_197 = arith.constant 0 : index
      %c0_198 = arith.constant 0 : index
      %205 = vector.load %arg3[%c2_196, %c0_197, %c0_198] : memref<9x3x64xf32, #tpu.memory_space<vmem>>, vector<1x3x64xf32>
      %206 = vector.shape_cast %205 : vector<1x3x64xf32> to vector<3x64xf32>
      %cst_199 = arith.constant dense<0.000000e+00> : vector<8x64xf32>
      %207 = tpu.matmul %204, %206, %cst_199 {dimension_numbers = #tpu.dot_dimension_numbers<[1], [0], [0], [1], [0, 0, 1, 1], [], []>} : vector<8x3xf32>, vector<3x64xf32>, vector<8x64xf32> -> vector<8x64xf32>
      %208 = arith.addf %198, %207 : vector<8x64xf32>
      %c2_i32_200 = arith.constant 2 : i32
      %209 = arith.muli %c2_i32_200, %arg6 : i32
      %c1_i32_201 = arith.constant 1 : i32
      %210 = arith.addi %209, %c1_i32_201 : i32
      %c1_i32_202 = arith.constant 1 : i32
      %211 = arith.addi %210, %c1_i32_202 : i32
      %c0_203 = arith.constant 0 : index
      %212 = arith.index_cast %211 : i32 to index
      %c0_204 = arith.constant 0 : index
      %c0_205 = arith.constant 0 : index
      %213 = vector.load %arg1[%c0_203, %212, %c0_204, %c0_205] : memref<1x18x9x3xf32, #tpu.memory_space<vmem>>, vector<1x1x8x3xf32>
      %214 = vector.shape_cast %213 : vector<1x1x8x3xf32> to vector<8x3xf32>
      %c3_206 = arith.constant 3 : index
      %c0_207 = arith.constant 0 : index
      %c0_208 = arith.constant 0 : index
      %215 = vector.load %arg3[%c3_206, %c0_207, %c0_208] : memref<9x3x64xf32, #tpu.memory_space<vmem>>, vector<1x3x64xf32>
      %216 = vector.shape_cast %215 : vector<1x3x64xf32> to vector<3x64xf32>
      %cst_209 = arith.constant dense<0.000000e+00> : vector<8x64xf32>
      %217 = tpu.matmul %214, %216, %cst_209 {dimension_numbers = #tpu.dot_dimension_numbers<[1], [0], [0], [1], [0, 0, 1, 1], [], []>} : vector<8x3xf32>, vector<3x64xf32>, vector<8x64xf32> -> vector<8x64xf32>
      %218 = arith.addf %208, %217 : vector<8x64xf32>
      %c2_i32_210 = arith.constant 2 : i32
      %219 = arith.muli %c2_i32_210, %arg6 : i32
      %c1_i32_211 = arith.constant 1 : i32
      %220 = arith.addi %219, %c1_i32_211 : i32
      %c1_i32_212 = arith.constant 1 : i32
      %221 = arith.addi %220, %c1_i32_212 : i32
      %c0_213 = arith.constant 0 : index
      %222 = arith.index_cast %221 : i32 to index
      %c0_214 = arith.constant 0 : index
      %c0_215 = arith.constant 0 : index
      %223 = vector.load %arg2[%c0_213, %222, %c0_214, %c0_215] : memref<1x18x9x3xf32, #tpu.memory_space<vmem>>, vector<1x1x8x3xf32>
      %224 = vector.shape_cast %223 : vector<1x1x8x3xf32> to vector<8x3xf32>
      %c4_216 = arith.constant 4 : index
      %c0_217 = arith.constant 0 : index
      %c0_218 = arith.constant 0 : index
      %225 = vector.load %arg3[%c4_216, %c0_217, %c0_218] : memref<9x3x64xf32, #tpu.memory_space<vmem>>, vector<1x3x64xf32>
      %226 = vector.shape_cast %225 : vector<1x3x64xf32> to vector<3x64xf32>
      %cst_219 = arith.constant dense<0.000000e+00> : vector<8x64xf32>
      %227 = tpu.matmul %224, %226, %cst_219 {dimension_numbers = #tpu.dot_dimension_numbers<[1], [0], [0], [1], [0, 0, 1, 1], [], []>} : vector<8x3xf32>, vector<3x64xf32>, vector<8x64xf32> -> vector<8x64xf32>
      %228 = arith.addf %218, %227 : vector<8x64xf32>
      %c2_i32_220 = arith.constant 2 : i32
      %229 = arith.muli %c2_i32_220, %arg6 : i32
      %c1_i32_221 = arith.constant 1 : i32
      %230 = arith.addi %229, %c1_i32_221 : i32
      %c1_i32_222 = arith.constant 1 : i32
      %231 = arith.addi %230, %c1_i32_222 : i32
      %c0_223 = arith.constant 0 : index
      %232 = arith.index_cast %231 : i32 to index
      %c1_224 = arith.constant 1 : index
      %c0_225 = arith.constant 0 : index
      %233 = vector.load %arg1[%c0_223, %232, %c1_224, %c0_225] : memref<1x18x9x3xf32, #tpu.memory_space<vmem>>, vector<1x1x8x3xf32>
      %234 = vector.shape_cast %233 : vector<1x1x8x3xf32> to vector<8x3xf32>
      %c5_226 = arith.constant 5 : index
      %c0_227 = arith.constant 0 : index
      %c0_228 = arith.constant 0 : index
      %235 = vector.load %arg3[%c5_226, %c0_227, %c0_228] : memref<9x3x64xf32, #tpu.memory_space<vmem>>, vector<1x3x64xf32>
      %236 = vector.shape_cast %235 : vector<1x3x64xf32> to vector<3x64xf32>
      %cst_229 = arith.constant dense<0.000000e+00> : vector<8x64xf32>
      %237 = tpu.matmul %234, %236, %cst_229 {dimension_numbers = #tpu.dot_dimension_numbers<[1], [0], [0], [1], [0, 0, 1, 1], [], []>} : vector<8x3xf32>, vector<3x64xf32>, vector<8x64xf32> -> vector<8x64xf32>
      %238 = arith.addf %228, %237 : vector<8x64xf32>
      %c2_i32_230 = arith.constant 2 : i32
      %239 = arith.muli %c2_i32_230, %arg6 : i32
      %c1_i32_231 = arith.constant 1 : i32
      %240 = arith.addi %239, %c1_i32_231 : i32
      %c2_i32_232 = arith.constant 2 : i32
      %241 = arith.addi %240, %c2_i32_232 : i32
      %c0_233 = arith.constant 0 : index
      %242 = arith.index_cast %241 : i32 to index
      %c0_234 = arith.constant 0 : index
      %c0_235 = arith.constant 0 : index
      %243 = vector.load %arg1[%c0_233, %242, %c0_234, %c0_235] : memref<1x18x9x3xf32, #tpu.memory_space<vmem>>, vector<1x1x8x3xf32>
      %244 = vector.shape_cast %243 : vector<1x1x8x3xf32> to vector<8x3xf32>
      %c6_236 = arith.constant 6 : index
      %c0_237 = arith.constant 0 : index
      %c0_238 = arith.constant 0 : index
      %245 = vector.load %arg3[%c6_236, %c0_237, %c0_238] : memref<9x3x64xf32, #tpu.memory_space<vmem>>, vector<1x3x64xf32>
      %246 = vector.shape_cast %245 : vector<1x3x64xf32> to vector<3x64xf32>
      %cst_239 = arith.constant dense<0.000000e+00> : vector<8x64xf32>
      %247 = tpu.matmul %244, %246, %cst_239 {dimension_numbers = #tpu.dot_dimension_numbers<[1], [0], [0], [1], [0, 0, 1, 1], [], []>} : vector<8x3xf32>, vector<3x64xf32>, vector<8x64xf32> -> vector<8x64xf32>
      %248 = arith.addf %238, %247 : vector<8x64xf32>
      %c2_i32_240 = arith.constant 2 : i32
      %249 = arith.muli %c2_i32_240, %arg6 : i32
      %c1_i32_241 = arith.constant 1 : i32
      %250 = arith.addi %249, %c1_i32_241 : i32
      %c2_i32_242 = arith.constant 2 : i32
      %251 = arith.addi %250, %c2_i32_242 : i32
      %c0_243 = arith.constant 0 : index
      %252 = arith.index_cast %251 : i32 to index
      %c0_244 = arith.constant 0 : index
      %c0_245 = arith.constant 0 : index
      %253 = vector.load %arg2[%c0_243, %252, %c0_244, %c0_245] : memref<1x18x9x3xf32, #tpu.memory_space<vmem>>, vector<1x1x8x3xf32>
      %254 = vector.shape_cast %253 : vector<1x1x8x3xf32> to vector<8x3xf32>
      %c7_246 = arith.constant 7 : index
      %c0_247 = arith.constant 0 : index
      %c0_248 = arith.constant 0 : index
      %255 = vector.load %arg3[%c7_246, %c0_247, %c0_248] : memref<9x3x64xf32, #tpu.memory_space<vmem>>, vector<1x3x64xf32>
      %256 = vector.shape_cast %255 : vector<1x3x64xf32> to vector<3x64xf32>
      %cst_249 = arith.constant dense<0.000000e+00> : vector<8x64xf32>
      %257 = tpu.matmul %254, %256, %cst_249 {dimension_numbers = #tpu.dot_dimension_numbers<[1], [0], [0], [1], [0, 0, 1, 1], [], []>} : vector<8x3xf32>, vector<3x64xf32>, vector<8x64xf32> -> vector<8x64xf32>
      %258 = arith.addf %248, %257 : vector<8x64xf32>
      %c2_i32_250 = arith.constant 2 : i32
      %259 = arith.muli %c2_i32_250, %arg6 : i32
      %c1_i32_251 = arith.constant 1 : i32
      %260 = arith.addi %259, %c1_i32_251 : i32
      %c2_i32_252 = arith.constant 2 : i32
      %261 = arith.addi %260, %c2_i32_252 : i32
      %c0_253 = arith.constant 0 : index
      %262 = arith.index_cast %261 : i32 to index
      %c1_254 = arith.constant 1 : index
      %c0_255 = arith.constant 0 : index
      %263 = vector.load %arg1[%c0_253, %262, %c1_254, %c0_255] : memref<1x18x9x3xf32, #tpu.memory_space<vmem>>, vector<1x1x8x3xf32>
      %264 = vector.shape_cast %263 : vector<1x1x8x3xf32> to vector<8x3xf32>
      %c8_256 = arith.constant 8 : index
      %c0_257 = arith.constant 0 : index
      %c0_258 = arith.constant 0 : index
      %265 = vector.load %arg3[%c8_256, %c0_257, %c0_258] : memref<9x3x64xf32, #tpu.memory_space<vmem>>, vector<1x3x64xf32>
      %266 = vector.shape_cast %265 : vector<1x3x64xf32> to vector<3x64xf32>
      %cst_259 = arith.constant dense<0.000000e+00> : vector<8x64xf32>
      %267 = tpu.matmul %264, %266, %cst_259 {dimension_numbers = #tpu.dot_dimension_numbers<[1], [0], [0], [1], [0, 0, 1, 1], [], []>} : vector<8x3xf32>, vector<3x64xf32>, vector<8x64xf32> -> vector<8x64xf32>
      %268 = arith.addf %258, %267 : vector<8x64xf32>
      %269 = arith.maximumf %179, %268 : vector<8x64xf32>
      %c2_i32_260 = arith.constant 2 : i32
      %270 = arith.muli %c2_i32_260, %arg6 : i32
      %c1_i32_261 = arith.constant 1 : i32
      %271 = arith.addi %270, %c1_i32_261 : i32
      %c0_i32_262 = arith.constant 0 : i32
      %272 = arith.addi %271, %c0_i32_262 : i32
      %c0_263 = arith.constant 0 : index
      %273 = arith.index_cast %272 : i32 to index
      %c0_264 = arith.constant 0 : index
      %c0_265 = arith.constant 0 : index
      %274 = vector.load %arg2[%c0_263, %273, %c0_264, %c0_265] : memref<1x18x9x3xf32, #tpu.memory_space<vmem>>, vector<1x1x8x3xf32>
      %275 = vector.shape_cast %274 : vector<1x1x8x3xf32> to vector<8x3xf32>
      %c0_266 = arith.constant 0 : index
      %c0_267 = arith.constant 0 : index
      %c0_268 = arith.constant 0 : index
      %276 = vector.load %arg3[%c0_266, %c0_267, %c0_268] : memref<9x3x64xf32, #tpu.memory_space<vmem>>, vector<1x3x64xf32>
      %277 = vector.shape_cast %276 : vector<1x3x64xf32> to vector<3x64xf32>
      %cst_269 = arith.constant dense<0.000000e+00> : vector<8x64xf32>
      %278 = tpu.matmul %275, %277, %cst_269 {dimension_numbers = #tpu.dot_dimension_numbers<[1], [0], [0], [1], [0, 0, 1, 1], [], []>} : vector<8x3xf32>, vector<3x64xf32>, vector<8x64xf32> -> vector<8x64xf32>
      %c2_i32_270 = arith.constant 2 : i32
      %279 = arith.muli %c2_i32_270, %arg6 : i32
      %c1_i32_271 = arith.constant 1 : i32
      %280 = arith.addi %279, %c1_i32_271 : i32
      %c0_i32_272 = arith.constant 0 : i32
      %281 = arith.addi %280, %c0_i32_272 : i32
      %c0_273 = arith.constant 0 : index
      %282 = arith.index_cast %281 : i32 to index
      %c1_274 = arith.constant 1 : index
      %c0_275 = arith.constant 0 : index
      %283 = vector.load %arg1[%c0_273, %282, %c1_274, %c0_275] : memref<1x18x9x3xf32, #tpu.memory_space<vmem>>, vector<1x1x8x3xf32>
      %284 = vector.shape_cast %283 : vector<1x1x8x3xf32> to vector<8x3xf32>
      %c1_276 = arith.constant 1 : index
      %c0_277 = arith.constant 0 : index
      %c0_278 = arith.constant 0 : index
      %285 = vector.load %arg3[%c1_276, %c0_277, %c0_278] : memref<9x3x64xf32, #tpu.memory_space<vmem>>, vector<1x3x64xf32>
      %286 = vector.shape_cast %285 : vector<1x3x64xf32> to vector<3x64xf32>
      %cst_279 = arith.constant dense<0.000000e+00> : vector<8x64xf32>
      %287 = tpu.matmul %284, %286, %cst_279 {dimension_numbers = #tpu.dot_dimension_numbers<[1], [0], [0], [1], [0, 0, 1, 1], [], []>} : vector<8x3xf32>, vector<3x64xf32>, vector<8x64xf32> -> vector<8x64xf32>
      %288 = arith.addf %278, %287 : vector<8x64xf32>
      %c2_i32_280 = arith.constant 2 : i32
      %289 = arith.muli %c2_i32_280, %arg6 : i32
      %c1_i32_281 = arith.constant 1 : i32
      %290 = arith.addi %289, %c1_i32_281 : i32
      %c0_i32_282 = arith.constant 0 : i32
      %291 = arith.addi %290, %c0_i32_282 : i32
      %c0_283 = arith.constant 0 : index
      %292 = arith.index_cast %291 : i32 to index
      %c1_284 = arith.constant 1 : index
      %c0_285 = arith.constant 0 : index
      %293 = vector.load %arg2[%c0_283, %292, %c1_284, %c0_285] : memref<1x18x9x3xf32, #tpu.memory_space<vmem>>, vector<1x1x8x3xf32>
      %294 = vector.shape_cast %293 : vector<1x1x8x3xf32> to vector<8x3xf32>
      %c2_286 = arith.constant 2 : index
      %c0_287 = arith.constant 0 : index
      %c0_288 = arith.constant 0 : index
      %295 = vector.load %arg3[%c2_286, %c0_287, %c0_288] : memref<9x3x64xf32, #tpu.memory_space<vmem>>, vector<1x3x64xf32>
      %296 = vector.shape_cast %295 : vector<1x3x64xf32> to vector<3x64xf32>
      %cst_289 = arith.constant dense<0.000000e+00> : vector<8x64xf32>
      %297 = tpu.matmul %294, %296, %cst_289 {dimension_numbers = #tpu.dot_dimension_numbers<[1], [0], [0], [1], [0, 0, 1, 1], [], []>} : vector<8x3xf32>, vector<3x64xf32>, vector<8x64xf32> -> vector<8x64xf32>
      %298 = arith.addf %288, %297 : vector<8x64xf32>
      %c2_i32_290 = arith.constant 2 : i32
      %299 = arith.muli %c2_i32_290, %arg6 : i32
      %c1_i32_291 = arith.constant 1 : i32
      %300 = arith.addi %299, %c1_i32_291 : i32
      %c1_i32_292 = arith.constant 1 : i32
      %301 = arith.addi %300, %c1_i32_292 : i32
      %c0_293 = arith.constant 0 : index
      %302 = arith.index_cast %301 : i32 to index
      %c0_294 = arith.constant 0 : index
      %c0_295 = arith.constant 0 : index
      %303 = vector.load %arg2[%c0_293, %302, %c0_294, %c0_295] : memref<1x18x9x3xf32, #tpu.memory_space<vmem>>, vector<1x1x8x3xf32>
      %304 = vector.shape_cast %303 : vector<1x1x8x3xf32> to vector<8x3xf32>
      %c3_296 = arith.constant 3 : index
      %c0_297 = arith.constant 0 : index
      %c0_298 = arith.constant 0 : index
      %305 = vector.load %arg3[%c3_296, %c0_297, %c0_298] : memref<9x3x64xf32, #tpu.memory_space<vmem>>, vector<1x3x64xf32>
      %306 = vector.shape_cast %305 : vector<1x3x64xf32> to vector<3x64xf32>
      %cst_299 = arith.constant dense<0.000000e+00> : vector<8x64xf32>
      %307 = tpu.matmul %304, %306, %cst_299 {dimension_numbers = #tpu.dot_dimension_numbers<[1], [0], [0], [1], [0, 0, 1, 1], [], []>} : vector<8x3xf32>, vector<3x64xf32>, vector<8x64xf32> -> vector<8x64xf32>
      %308 = arith.addf %298, %307 : vector<8x64xf32>
      %c2_i32_300 = arith.constant 2 : i32
      %309 = arith.muli %c2_i32_300, %arg6 : i32
      %c1_i32_301 = arith.constant 1 : i32
      %310 = arith.addi %309, %c1_i32_301 : i32
      %c1_i32_302 = arith.constant 1 : i32
      %311 = arith.addi %310, %c1_i32_302 : i32
      %c0_303 = arith.constant 0 : index
      %312 = arith.index_cast %311 : i32 to index
      %c1_304 = arith.constant 1 : index
      %c0_305 = arith.constant 0 : index
      %313 = vector.load %arg1[%c0_303, %312, %c1_304, %c0_305] : memref<1x18x9x3xf32, #tpu.memory_space<vmem>>, vector<1x1x8x3xf32>
      %314 = vector.shape_cast %313 : vector<1x1x8x3xf32> to vector<8x3xf32>
      %c4_306 = arith.constant 4 : index
      %c0_307 = arith.constant 0 : index
      %c0_308 = arith.constant 0 : index
      %315 = vector.load %arg3[%c4_306, %c0_307, %c0_308] : memref<9x3x64xf32, #tpu.memory_space<vmem>>, vector<1x3x64xf32>
      %316 = vector.shape_cast %315 : vector<1x3x64xf32> to vector<3x64xf32>
      %cst_309 = arith.constant dense<0.000000e+00> : vector<8x64xf32>
      %317 = tpu.matmul %314, %316, %cst_309 {dimension_numbers = #tpu.dot_dimension_numbers<[1], [0], [0], [1], [0, 0, 1, 1], [], []>} : vector<8x3xf32>, vector<3x64xf32>, vector<8x64xf32> -> vector<8x64xf32>
      %318 = arith.addf %308, %317 : vector<8x64xf32>
      %c2_i32_310 = arith.constant 2 : i32
      %319 = arith.muli %c2_i32_310, %arg6 : i32
      %c1_i32_311 = arith.constant 1 : i32
      %320 = arith.addi %319, %c1_i32_311 : i32
      %c1_i32_312 = arith.constant 1 : i32
      %321 = arith.addi %320, %c1_i32_312 : i32
      %c0_313 = arith.constant 0 : index
      %322 = arith.index_cast %321 : i32 to index
      %c1_314 = arith.constant 1 : index
      %c0_315 = arith.constant 0 : index
      %323 = vector.load %arg2[%c0_313, %322, %c1_314, %c0_315] : memref<1x18x9x3xf32, #tpu.memory_space<vmem>>, vector<1x1x8x3xf32>
      %324 = vector.shape_cast %323 : vector<1x1x8x3xf32> to vector<8x3xf32>
      %c5_316 = arith.constant 5 : index
      %c0_317 = arith.constant 0 : index
      %c0_318 = arith.constant 0 : index
      %325 = vector.load %arg3[%c5_316, %c0_317, %c0_318] : memref<9x3x64xf32, #tpu.memory_space<vmem>>, vector<1x3x64xf32>
      %326 = vector.shape_cast %325 : vector<1x3x64xf32> to vector<3x64xf32>
      %cst_319 = arith.constant dense<0.000000e+00> : vector<8x64xf32>
      %327 = tpu.matmul %324, %326, %cst_319 {dimension_numbers = #tpu.dot_dimension_numbers<[1], [0], [0], [1], [0, 0, 1, 1], [], []>} : vector<8x3xf32>, vector<3x64xf32>, vector<8x64xf32> -> vector<8x64xf32>
      %328 = arith.addf %318, %327 : vector<8x64xf32>
      %c2_i32_320 = arith.constant 2 : i32
      %329 = arith.muli %c2_i32_320, %arg6 : i32
      %c1_i32_321 = arith.constant 1 : i32
      %330 = arith.addi %329, %c1_i32_321 : i32
      %c2_i32_322 = arith.constant 2 : i32
      %331 = arith.addi %330, %c2_i32_322 : i32
      %c0_323 = arith.constant 0 : index
      %332 = arith.index_cast %331 : i32 to index
      %c0_324 = arith.constant 0 : index
      %c0_325 = arith.constant 0 : index
      %333 = vector.load %arg2[%c0_323, %332, %c0_324, %c0_325] : memref<1x18x9x3xf32, #tpu.memory_space<vmem>>, vector<1x1x8x3xf32>
      %334 = vector.shape_cast %333 : vector<1x1x8x3xf32> to vector<8x3xf32>
      %c6_326 = arith.constant 6 : index
      %c0_327 = arith.constant 0 : index
      %c0_328 = arith.constant 0 : index
      %335 = vector.load %arg3[%c6_326, %c0_327, %c0_328] : memref<9x3x64xf32, #tpu.memory_space<vmem>>, vector<1x3x64xf32>
      %336 = vector.shape_cast %335 : vector<1x3x64xf32> to vector<3x64xf32>
      %cst_329 = arith.constant dense<0.000000e+00> : vector<8x64xf32>
      %337 = tpu.matmul %334, %336, %cst_329 {dimension_numbers = #tpu.dot_dimension_numbers<[1], [0], [0], [1], [0, 0, 1, 1], [], []>} : vector<8x3xf32>, vector<3x64xf32>, vector<8x64xf32> -> vector<8x64xf32>
      %338 = arith.addf %328, %337 : vector<8x64xf32>
      %c2_i32_330 = arith.constant 2 : i32
      %339 = arith.muli %c2_i32_330, %arg6 : i32
      %c1_i32_331 = arith.constant 1 : i32
      %340 = arith.addi %339, %c1_i32_331 : i32
      %c2_i32_332 = arith.constant 2 : i32
      %341 = arith.addi %340, %c2_i32_332 : i32
      %c0_333 = arith.constant 0 : index
      %342 = arith.index_cast %341 : i32 to index
      %c1_334 = arith.constant 1 : index
      %c0_335 = arith.constant 0 : index
      %343 = vector.load %arg1[%c0_333, %342, %c1_334, %c0_335] : memref<1x18x9x3xf32, #tpu.memory_space<vmem>>, vector<1x1x8x3xf32>
      %344 = vector.shape_cast %343 : vector<1x1x8x3xf32> to vector<8x3xf32>
      %c7_336 = arith.constant 7 : index
      %c0_337 = arith.constant 0 : index
      %c0_338 = arith.constant 0 : index
      %345 = vector.load %arg3[%c7_336, %c0_337, %c0_338] : memref<9x3x64xf32, #tpu.memory_space<vmem>>, vector<1x3x64xf32>
      %346 = vector.shape_cast %345 : vector<1x3x64xf32> to vector<3x64xf32>
      %cst_339 = arith.constant dense<0.000000e+00> : vector<8x64xf32>
      %347 = tpu.matmul %344, %346, %cst_339 {dimension_numbers = #tpu.dot_dimension_numbers<[1], [0], [0], [1], [0, 0, 1, 1], [], []>} : vector<8x3xf32>, vector<3x64xf32>, vector<8x64xf32> -> vector<8x64xf32>
      %348 = arith.addf %338, %347 : vector<8x64xf32>
      %c2_i32_340 = arith.constant 2 : i32
      %349 = arith.muli %c2_i32_340, %arg6 : i32
      %c1_i32_341 = arith.constant 1 : i32
      %350 = arith.addi %349, %c1_i32_341 : i32
      %c2_i32_342 = arith.constant 2 : i32
      %351 = arith.addi %350, %c2_i32_342 : i32
      %c0_343 = arith.constant 0 : index
      %352 = arith.index_cast %351 : i32 to index
      %c1_344 = arith.constant 1 : index
      %c0_345 = arith.constant 0 : index
      %353 = vector.load %arg2[%c0_343, %352, %c1_344, %c0_345] : memref<1x18x9x3xf32, #tpu.memory_space<vmem>>, vector<1x1x8x3xf32>
      %354 = vector.shape_cast %353 : vector<1x1x8x3xf32> to vector<8x3xf32>
      %c8_346 = arith.constant 8 : index
      %c0_347 = arith.constant 0 : index
      %c0_348 = arith.constant 0 : index
      %355 = vector.load %arg3[%c8_346, %c0_347, %c0_348] : memref<9x3x64xf32, #tpu.memory_space<vmem>>, vector<1x3x64xf32>
      %356 = vector.shape_cast %355 : vector<1x3x64xf32> to vector<3x64xf32>
      %cst_349 = arith.constant dense<0.000000e+00> : vector<8x64xf32>
      %357 = tpu.matmul %354, %356, %cst_349 {dimension_numbers = #tpu.dot_dimension_numbers<[1], [0], [0], [1], [0, 0, 1, 1], [], []>} : vector<8x3xf32>, vector<3x64xf32>, vector<8x64xf32> -> vector<8x64xf32>
      %358 = arith.addf %348, %357 : vector<8x64xf32>
      %359 = arith.maximumf %269, %358 : vector<8x64xf32>
      %c0_350 = arith.constant 0 : index
      %c0_351 = arith.constant 0 : index
      %360 = vector.load %arg4[%c0_350, %c0_351] : memref<1x64xf32, #tpu.memory_space<vmem>>, vector<1x64xf32>
      %361 = vector.broadcast %360 : vector<1x64xf32> to vector<8x64xf32>
      %362 = arith.addf %359, %361 : vector<8x64xf32>
      %cst_352 = arith.constant 0.000000e+00 : f32
      %363 = vector.broadcast %cst_352 : f32 to vector<8x64xf32>
      %364 = arith.maximumf %362, %363 : vector<8x64xf32>
      %c0_353 = arith.constant 0 : index
      %365 = arith.index_cast %arg6 : i32 to index
      %c0_354 = arith.constant 0 : index
      %c0_355 = arith.constant 0 : index
      %366 = vector.load %arg5[%c0_353, %365, %c0_354, %c0_355] : memref<1x8x8x64xf32, #tpu.memory_space<vmem>>, vector<1x1x8x64xf32>
      %367 = vector.shape_cast %366 : vector<1x1x8x64xf32> to vector<8x64xf32>
      %368 = vector.shape_cast %364 : vector<8x64xf32> to vector<1x1x8x64xf32>
      tpu.vector_store %arg5[%c0_353, %365, %c0_354, %c0_355], %368 {strides = array<i32>} : memref<1x8x8x64xf32, #tpu.memory_space<vmem>>, vector<1x1x8x64xf32>,
    }
    %c8_i32_0 = arith.constant 8 : i32
    return
  }
  func.func @transform_0(%arg0: i32) -> (i32, i32, i32, i32) {
    %c0_i32 = arith.constant 0 : i32
    %c0_i32_0 = arith.constant 0 : i32
    %c0_i32_1 = arith.constant 0 : i32
    %c0_i32_2 = arith.constant 0 : i32
    return %arg0, %c0_i32, %c0_i32_0, %c0_i32_1 : i32, i32, i32, i32
  }
  func.func @transform_1(%arg0: i32) -> (i32, i32, i32, i32) {
    %c0_i32 = arith.constant 0 : i32
    %c0_i32_0 = arith.constant 0 : i32
    %c0_i32_1 = arith.constant 0 : i32
    %c0_i32_2 = arith.constant 0 : i32
    return %arg0, %c0_i32, %c0_i32_0, %c0_i32_1 : i32, i32, i32, i32
  }
  func.func @transform_2(%arg0: i32) -> (i32, i32, i32) {
    %c0_i32 = arith.constant 0 : i32
    %c0_i32_0 = arith.constant 0 : i32
    %c0_i32_1 = arith.constant 0 : i32
    %c0_i32_2 = arith.constant 0 : i32
    return %c0_i32, %c0_i32_0, %c0_i32_1 : i32, i32, i32
  }
  func.func @transform_3(%arg0: i32) -> (i32, i32) {
    %c0_i32 = arith.constant 0 : i32
    %c0_i32_0 = arith.constant 0 : i32
    %c0_i32_1 = arith.constant 0 : i32
    return %c0_i32, %c0_i32_0 : i32, i32
  }
  func.func @transform_4(%arg0: i32) -> (i32, i32, i32, i32) {
    %c0_i32 = arith.constant 0 : i32
    %c0_i32_0 = arith.constant 0 : i32
    %c0_i32_1 = arith.constant 0 : i32
    %c0_i32_2 = arith.constant 0 : i32
    return %arg0, %c0_i32, %c0_i32_0, %c0_i32_1 : i32, i32, i32, i32
  }
}

module attributes {stable_mosaic.version = 11 : i64} {
  func.func @_conv_relu_kernel(%arg0: i32, %arg1: memref<1x6x6x128xf32, #tpu.memory_space<vmem>>, %arg2: memref<9x128x320xf32, #tpu.memory_space<vmem>>, %arg3: memref<1x320xf32, #tpu.memory_space<vmem>>, %arg4: memref<1x4x4x320xf32, #tpu.memory_space<vmem>>) attributes {dimension_semantics = [#tpu.dimension_semantics<parallel>], iteration_bounds = array<i64: 2>, scalar_prefetch = 0 : i64, scratch_operands = 0 : i64, tpu.core_type = #tpu.core_type<tc>, window_params = [{transform_indices = @transform_0, window_bounds = array<i64: 1, 6, 6, 128>}, {pipeline_mode = #tpu.pipeline_mode<synchronous>, transform_indices = @transform_1, window_bounds = array<i64: 9, 128, 320>}, {pipeline_mode = #tpu.pipeline_mode<synchronous>, transform_indices = @transform_2, window_bounds = array<i64: 1, 320>}, {transform_indices = @transform_3, window_bounds = array<i64: 1, 4, 4, 320>}]} {
    %c0_i32 = arith.constant 0 : i32
    %c4_i32 = arith.constant 4 : i32
    %0 = arith.addi %c0_i32, %c4_i32 : i32
    %c1_i32 = arith.constant 1 : i32
    scf.for %arg5 = %c0_i32 to %0 step %c1_i32  : i32 {
      %c0_i32_1 = arith.constant 0 : i32
      %1 = arith.addi %arg5, %c0_i32_1 : i32
      %c0 = arith.constant 0 : index
      %2 = arith.index_cast %1 : i32 to index
      %c0_2 = arith.constant 0 : index
      %c0_3 = arith.constant 0 : index
      %3 = vector.load %arg1[%c0, %2, %c0_2, %c0_3] : memref<1x6x6x128xf32, #tpu.memory_space<vmem>>, vector<1x1x4x128xf32>
      %4 = vector.shape_cast %3 : vector<1x1x4x128xf32> to vector<4x128xf32>
      %c0_4 = arith.constant 0 : index
      %c0_5 = arith.constant 0 : index
      %c0_6 = arith.constant 0 : index
      %5 = vector.load %arg2[%c0_4, %c0_5, %c0_6] : memref<9x128x320xf32, #tpu.memory_space<vmem>>, vector<1x128x320xf32>
      %6 = vector.shape_cast %5 : vector<1x128x320xf32> to vector<128x320xf32>
      %cst = arith.constant dense<0.000000e+00> : vector<4x320xf32>
      %7 = tpu.matmul %4, %6, %cst {dimension_numbers = #tpu.dot_dimension_numbers<[1], [0], [0], [1], [0, 0, 1, 1], [], []>} : vector<4x128xf32>, vector<128x320xf32>, vector<4x320xf32> -> vector<4x320xf32>
      %c0_i32_7 = arith.constant 0 : i32
      %8 = arith.addi %arg5, %c0_i32_7 : i32
      %c0_8 = arith.constant 0 : index
      %9 = arith.index_cast %8 : i32 to index
      %c1 = arith.constant 1 : index
      %c0_9 = arith.constant 0 : index
      %10 = vector.load %arg1[%c0_8, %9, %c1, %c0_9] : memref<1x6x6x128xf32, #tpu.memory_space<vmem>>, vector<1x1x4x128xf32>
      %11 = vector.shape_cast %10 : vector<1x1x4x128xf32> to vector<4x128xf32>
      %c1_10 = arith.constant 1 : index
      %c0_11 = arith.constant 0 : index
      %c0_12 = arith.constant 0 : index
      %12 = vector.load %arg2[%c1_10, %c0_11, %c0_12] : memref<9x128x320xf32, #tpu.memory_space<vmem>>, vector<1x128x320xf32>
      %13 = vector.shape_cast %12 : vector<1x128x320xf32> to vector<128x320xf32>
      %cst_13 = arith.constant dense<0.000000e+00> : vector<4x320xf32>
      %14 = tpu.matmul %11, %13, %cst_13 {dimension_numbers = #tpu.dot_dimension_numbers<[1], [0], [0], [1], [0, 0, 1, 1], [], []>} : vector<4x128xf32>, vector<128x320xf32>, vector<4x320xf32> -> vector<4x320xf32>
      %15 = arith.addf %7, %14 : vector<4x320xf32>
      %c0_i32_14 = arith.constant 0 : i32
      %16 = arith.addi %arg5, %c0_i32_14 : i32
      %c0_15 = arith.constant 0 : index
      %17 = arith.index_cast %16 : i32 to index
      %c2 = arith.constant 2 : index
      %c0_16 = arith.constant 0 : index
      %18 = vector.load %arg1[%c0_15, %17, %c2, %c0_16] : memref<1x6x6x128xf32, #tpu.memory_space<vmem>>, vector<1x1x4x128xf32>
      %19 = vector.shape_cast %18 : vector<1x1x4x128xf32> to vector<4x128xf32>
      %c2_17 = arith.constant 2 : index
      %c0_18 = arith.constant 0 : index
      %c0_19 = arith.constant 0 : index
      %20 = vector.load %arg2[%c2_17, %c0_18, %c0_19] : memref<9x128x320xf32, #tpu.memory_space<vmem>>, vector<1x128x320xf32>
      %21 = vector.shape_cast %20 : vector<1x128x320xf32> to vector<128x320xf32>
      %cst_20 = arith.constant dense<0.000000e+00> : vector<4x320xf32>
      %22 = tpu.matmul %19, %21, %cst_20 {dimension_numbers = #tpu.dot_dimension_numbers<[1], [0], [0], [1], [0, 0, 1, 1], [], []>} : vector<4x128xf32>, vector<128x320xf32>, vector<4x320xf32> -> vector<4x320xf32>
      %23 = arith.addf %15, %22 : vector<4x320xf32>
      %c1_i32_21 = arith.constant 1 : i32
      %24 = arith.addi %arg5, %c1_i32_21 : i32
      %c0_22 = arith.constant 0 : index
      %25 = arith.index_cast %24 : i32 to index
      %c0_23 = arith.constant 0 : index
      %c0_24 = arith.constant 0 : index
      %26 = vector.load %arg1[%c0_22, %25, %c0_23, %c0_24] : memref<1x6x6x128xf32, #tpu.memory_space<vmem>>, vector<1x1x4x128xf32>
      %27 = vector.shape_cast %26 : vector<1x1x4x128xf32> to vector<4x128xf32>
      %c3 = arith.constant 3 : index
      %c0_25 = arith.constant 0 : index
      %c0_26 = arith.constant 0 : index
      %28 = vector.load %arg2[%c3, %c0_25, %c0_26] : memref<9x128x320xf32, #tpu.memory_space<vmem>>, vector<1x128x320xf32>
      %29 = vector.shape_cast %28 : vector<1x128x320xf32> to vector<128x320xf32>
      %cst_27 = arith.constant dense<0.000000e+00> : vector<4x320xf32>
      %30 = tpu.matmul %27, %29, %cst_27 {dimension_numbers = #tpu.dot_dimension_numbers<[1], [0], [0], [1], [0, 0, 1, 1], [], []>} : vector<4x128xf32>, vector<128x320xf32>, vector<4x320xf32> -> vector<4x320xf32>
      %31 = arith.addf %23, %30 : vector<4x320xf32>
      %c1_i32_28 = arith.constant 1 : i32
      %32 = arith.addi %arg5, %c1_i32_28 : i32
      %c0_29 = arith.constant 0 : index
      %33 = arith.index_cast %32 : i32 to index
      %c1_30 = arith.constant 1 : index
      %c0_31 = arith.constant 0 : index
      %34 = vector.load %arg1[%c0_29, %33, %c1_30, %c0_31] : memref<1x6x6x128xf32, #tpu.memory_space<vmem>>, vector<1x1x4x128xf32>
      %35 = vector.shape_cast %34 : vector<1x1x4x128xf32> to vector<4x128xf32>
      %c4 = arith.constant 4 : index
      %c0_32 = arith.constant 0 : index
      %c0_33 = arith.constant 0 : index
      %36 = vector.load %arg2[%c4, %c0_32, %c0_33] : memref<9x128x320xf32, #tpu.memory_space<vmem>>, vector<1x128x320xf32>
      %37 = vector.shape_cast %36 : vector<1x128x320xf32> to vector<128x320xf32>
      %cst_34 = arith.constant dense<0.000000e+00> : vector<4x320xf32>
      %38 = tpu.matmul %35, %37, %cst_34 {dimension_numbers = #tpu.dot_dimension_numbers<[1], [0], [0], [1], [0, 0, 1, 1], [], []>} : vector<4x128xf32>, vector<128x320xf32>, vector<4x320xf32> -> vector<4x320xf32>
      %39 = arith.addf %31, %38 : vector<4x320xf32>
      %c1_i32_35 = arith.constant 1 : i32
      %40 = arith.addi %arg5, %c1_i32_35 : i32
      %c0_36 = arith.constant 0 : index
      %41 = arith.index_cast %40 : i32 to index
      %c2_37 = arith.constant 2 : index
      %c0_38 = arith.constant 0 : index
      %42 = vector.load %arg1[%c0_36, %41, %c2_37, %c0_38] : memref<1x6x6x128xf32, #tpu.memory_space<vmem>>, vector<1x1x4x128xf32>
      %43 = vector.shape_cast %42 : vector<1x1x4x128xf32> to vector<4x128xf32>
      %c5 = arith.constant 5 : index
      %c0_39 = arith.constant 0 : index
      %c0_40 = arith.constant 0 : index
      %44 = vector.load %arg2[%c5, %c0_39, %c0_40] : memref<9x128x320xf32, #tpu.memory_space<vmem>>, vector<1x128x320xf32>
      %45 = vector.shape_cast %44 : vector<1x128x320xf32> to vector<128x320xf32>
      %cst_41 = arith.constant dense<0.000000e+00> : vector<4x320xf32>
      %46 = tpu.matmul %43, %45, %cst_41 {dimension_numbers = #tpu.dot_dimension_numbers<[1], [0], [0], [1], [0, 0, 1, 1], [], []>} : vector<4x128xf32>, vector<128x320xf32>, vector<4x320xf32> -> vector<4x320xf32>
      %47 = arith.addf %39, %46 : vector<4x320xf32>
      %c2_i32 = arith.constant 2 : i32
      %48 = arith.addi %arg5, %c2_i32 : i32
      %c0_42 = arith.constant 0 : index
      %49 = arith.index_cast %48 : i32 to index
      %c0_43 = arith.constant 0 : index
      %c0_44 = arith.constant 0 : index
      %50 = vector.load %arg1[%c0_42, %49, %c0_43, %c0_44] : memref<1x6x6x128xf32, #tpu.memory_space<vmem>>, vector<1x1x4x128xf32>
      %51 = vector.shape_cast %50 : vector<1x1x4x128xf32> to vector<4x128xf32>
      %c6 = arith.constant 6 : index
      %c0_45 = arith.constant 0 : index
      %c0_46 = arith.constant 0 : index
      %52 = vector.load %arg2[%c6, %c0_45, %c0_46] : memref<9x128x320xf32, #tpu.memory_space<vmem>>, vector<1x128x320xf32>
      %53 = vector.shape_cast %52 : vector<1x128x320xf32> to vector<128x320xf32>
      %cst_47 = arith.constant dense<0.000000e+00> : vector<4x320xf32>
      %54 = tpu.matmul %51, %53, %cst_47 {dimension_numbers = #tpu.dot_dimension_numbers<[1], [0], [0], [1], [0, 0, 1, 1], [], []>} : vector<4x128xf32>, vector<128x320xf32>, vector<4x320xf32> -> vector<4x320xf32>
      %55 = arith.addf %47, %54 : vector<4x320xf32>
      %c2_i32_48 = arith.constant 2 : i32
      %56 = arith.addi %arg5, %c2_i32_48 : i32
      %c0_49 = arith.constant 0 : index
      %57 = arith.index_cast %56 : i32 to index
      %c1_50 = arith.constant 1 : index
      %c0_51 = arith.constant 0 : index
      %58 = vector.load %arg1[%c0_49, %57, %c1_50, %c0_51] : memref<1x6x6x128xf32, #tpu.memory_space<vmem>>, vector<1x1x4x128xf32>
      %59 = vector.shape_cast %58 : vector<1x1x4x128xf32> to vector<4x128xf32>
      %c7 = arith.constant 7 : index
      %c0_52 = arith.constant 0 : index
      %c0_53 = arith.constant 0 : index
      %60 = vector.load %arg2[%c7, %c0_52, %c0_53] : memref<9x128x320xf32, #tpu.memory_space<vmem>>, vector<1x128x320xf32>
      %61 = vector.shape_cast %60 : vector<1x128x320xf32> to vector<128x320xf32>
      %cst_54 = arith.constant dense<0.000000e+00> : vector<4x320xf32>
      %62 = tpu.matmul %59, %61, %cst_54 {dimension_numbers = #tpu.dot_dimension_numbers<[1], [0], [0], [1], [0, 0, 1, 1], [], []>} : vector<4x128xf32>, vector<128x320xf32>, vector<4x320xf32> -> vector<4x320xf32>
      %63 = arith.addf %55, %62 : vector<4x320xf32>
      %c2_i32_55 = arith.constant 2 : i32
      %64 = arith.addi %arg5, %c2_i32_55 : i32
      %c0_56 = arith.constant 0 : index
      %65 = arith.index_cast %64 : i32 to index
      %c2_57 = arith.constant 2 : index
      %c0_58 = arith.constant 0 : index
      %66 = vector.load %arg1[%c0_56, %65, %c2_57, %c0_58] : memref<1x6x6x128xf32, #tpu.memory_space<vmem>>, vector<1x1x4x128xf32>
      %67 = vector.shape_cast %66 : vector<1x1x4x128xf32> to vector<4x128xf32>
      %c8 = arith.constant 8 : index
      %c0_59 = arith.constant 0 : index
      %c0_60 = arith.constant 0 : index
      %68 = vector.load %arg2[%c8, %c0_59, %c0_60] : memref<9x128x320xf32, #tpu.memory_space<vmem>>, vector<1x128x320xf32>
      %69 = vector.shape_cast %68 : vector<1x128x320xf32> to vector<128x320xf32>
      %cst_61 = arith.constant dense<0.000000e+00> : vector<4x320xf32>
      %70 = tpu.matmul %67, %69, %cst_61 {dimension_numbers = #tpu.dot_dimension_numbers<[1], [0], [0], [1], [0, 0, 1, 1], [], []>} : vector<4x128xf32>, vector<128x320xf32>, vector<4x320xf32> -> vector<4x320xf32>
      %71 = arith.addf %63, %70 : vector<4x320xf32>
      %c0_62 = arith.constant 0 : index
      %c0_63 = arith.constant 0 : index
      %72 = vector.load %arg3[%c0_62, %c0_63] : memref<1x320xf32, #tpu.memory_space<vmem>>, vector<1x320xf32>
      %73 = vector.broadcast %72 : vector<1x320xf32> to vector<4x320xf32>
      %74 = arith.addf %71, %73 : vector<4x320xf32>
      %cst_64 = arith.constant 0.000000e+00 : f32
      %75 = vector.broadcast %cst_64 : f32 to vector<4x320xf32>
      %76 = arith.maximumf %74, %75 : vector<4x320xf32>
      %c0_65 = arith.constant 0 : index
      %77 = arith.index_cast %arg5 : i32 to index
      %c0_66 = arith.constant 0 : index
      %c0_67 = arith.constant 0 : index
      %78 = vector.load %arg4[%c0_65, %77, %c0_66, %c0_67] : memref<1x4x4x320xf32, #tpu.memory_space<vmem>>, vector<1x1x4x320xf32>
      %79 = vector.shape_cast %78 : vector<1x1x4x320xf32> to vector<4x320xf32>
      %80 = vector.shape_cast %76 : vector<4x320xf32> to vector<1x1x4x320xf32>
      tpu.vector_store %arg4[%c0_65, %77, %c0_66, %c0_67], %80 {strides = array<i32>} : memref<1x4x4x320xf32, #tpu.memory_space<vmem>>, vector<1x1x4x320xf32>,
    }
    %c4_i32_0 = arith.constant 4 : i32
    return
  }
  func.func @transform_0(%arg0: i32) -> (i32, i32, i32, i32) {
    %c0_i32 = arith.constant 0 : i32
    %c0_i32_0 = arith.constant 0 : i32
    %c0_i32_1 = arith.constant 0 : i32
    %c0_i32_2 = arith.constant 0 : i32
    return %arg0, %c0_i32, %c0_i32_0, %c0_i32_1 : i32, i32, i32, i32
  }
  func.func @transform_1(%arg0: i32) -> (i32, i32, i32) {
    %c0_i32 = arith.constant 0 : i32
    %c0_i32_0 = arith.constant 0 : i32
    %c0_i32_1 = arith.constant 0 : i32
    %c0_i32_2 = arith.constant 0 : i32
    return %c0_i32, %c0_i32_0, %c0_i32_1 : i32, i32, i32
  }
  func.func @transform_2(%arg0: i32) -> (i32, i32) {
    %c0_i32 = arith.constant 0 : i32
    %c0_i32_0 = arith.constant 0 : i32
    %c0_i32_1 = arith.constant 0 : i32
    return %c0_i32, %c0_i32_0 : i32, i32
  }
  func.func @transform_3(%arg0: i32) -> (i32, i32, i32, i32) {
    %c0_i32 = arith.constant 0 : i32
    %c0_i32_0 = arith.constant 0 : i32
    %c0_i32_1 = arith.constant 0 : i32
    %c0_i32_2 = arith.constant 0 : i32
    return %arg0, %c0_i32, %c0_i32_0, %c0_i32_1 : i32, i32, i32, i32
  }
}

module attributes {stable_mosaic.version = 11 : i64} {
  func.func @_conv_relu_pool_kernel(%arg0: i32, %arg1: memref<1x10x5x64xf32, #tpu.memory_space<vmem>>, %arg2: memref<1x10x5x64xf32, #tpu.memory_space<vmem>>, %arg3: memref<9x64x128xf32, #tpu.memory_space<vmem>>, %arg4: memref<1x128xf32, #tpu.memory_space<vmem>>, %arg5: memref<1x4x4x128xf32, #tpu.memory_space<vmem>>) attributes {dimension_semantics = [#tpu.dimension_semantics<parallel>], iteration_bounds = array<i64: 2>, scalar_prefetch = 0 : i64, scratch_operands = 0 : i64, tpu.core_type = #tpu.core_type<tc>, window_params = [{transform_indices = @transform_0, window_bounds = array<i64: 1, 10, 5, 64>}, {transform_indices = @transform_1, window_bounds = array<i64: 1, 10, 5, 64>}, {pipeline_mode = #tpu.pipeline_mode<synchronous>, transform_indices = @transform_2, window_bounds = array<i64: 9, 64, 128>}, {pipeline_mode = #tpu.pipeline_mode<synchronous>, transform_indices = @transform_3, window_bounds = array<i64: 1, 128>}, {transform_indices = @transform_4, window_bounds = array<i64: 1, 4, 4, 128>}]} {
    %c0_i32 = arith.constant 0 : i32
    %c4_i32 = arith.constant 4 : i32
    %0 = arith.addi %c0_i32, %c4_i32 : i32
    %c1_i32 = arith.constant 1 : i32
    scf.for %arg6 = %c0_i32 to %0 step %c1_i32  : i32 {
      %c2_i32 = arith.constant 2 : i32
      %1 = arith.muli %c2_i32, %arg6 : i32
      %c0_i32_1 = arith.constant 0 : i32
      %2 = arith.addi %1, %c0_i32_1 : i32
      %c0_i32_2 = arith.constant 0 : i32
      %3 = arith.addi %2, %c0_i32_2 : i32
      %c0 = arith.constant 0 : index
      %4 = arith.index_cast %3 : i32 to index
      %c0_3 = arith.constant 0 : index
      %c0_4 = arith.constant 0 : index
      %5 = vector.load %arg1[%c0, %4, %c0_3, %c0_4] : memref<1x10x5x64xf32, #tpu.memory_space<vmem>>, vector<1x1x4x64xf32>
      %6 = vector.shape_cast %5 : vector<1x1x4x64xf32> to vector<4x64xf32>
      %c0_5 = arith.constant 0 : index
      %c0_6 = arith.constant 0 : index
      %c0_7 = arith.constant 0 : index
      %7 = vector.load %arg3[%c0_5, %c0_6, %c0_7] : memref<9x64x128xf32, #tpu.memory_space<vmem>>, vector<1x64x128xf32>
      %8 = vector.shape_cast %7 : vector<1x64x128xf32> to vector<64x128xf32>
      %cst = arith.constant dense<0.000000e+00> : vector<4x128xf32>
      %9 = tpu.matmul %6, %8, %cst {dimension_numbers = #tpu.dot_dimension_numbers<[1], [0], [0], [1], [0, 0, 1, 1], [], []>} : vector<4x64xf32>, vector<64x128xf32>, vector<4x128xf32> -> vector<4x128xf32>
      %c2_i32_8 = arith.constant 2 : i32
      %10 = arith.muli %c2_i32_8, %arg6 : i32
      %c0_i32_9 = arith.constant 0 : i32
      %11 = arith.addi %10, %c0_i32_9 : i32
      %c0_i32_10 = arith.constant 0 : i32
      %12 = arith.addi %11, %c0_i32_10 : i32
      %c0_11 = arith.constant 0 : index
      %13 = arith.index_cast %12 : i32 to index
      %c0_12 = arith.constant 0 : index
      %c0_13 = arith.constant 0 : index
      %14 = vector.load %arg2[%c0_11, %13, %c0_12, %c0_13] : memref<1x10x5x64xf32, #tpu.memory_space<vmem>>, vector<1x1x4x64xf32>
      %15 = vector.shape_cast %14 : vector<1x1x4x64xf32> to vector<4x64xf32>
      %c1 = arith.constant 1 : index
      %c0_14 = arith.constant 0 : index
      %c0_15 = arith.constant 0 : index
      %16 = vector.load %arg3[%c1, %c0_14, %c0_15] : memref<9x64x128xf32, #tpu.memory_space<vmem>>, vector<1x64x128xf32>
      %17 = vector.shape_cast %16 : vector<1x64x128xf32> to vector<64x128xf32>
      %cst_16 = arith.constant dense<0.000000e+00> : vector<4x128xf32>
      %18 = tpu.matmul %15, %17, %cst_16 {dimension_numbers = #tpu.dot_dimension_numbers<[1], [0], [0], [1], [0, 0, 1, 1], [], []>} : vector<4x64xf32>, vector<64x128xf32>, vector<4x128xf32> -> vector<4x128xf32>
      %19 = arith.addf %9, %18 : vector<4x128xf32>
      %c2_i32_17 = arith.constant 2 : i32
      %20 = arith.muli %c2_i32_17, %arg6 : i32
      %c0_i32_18 = arith.constant 0 : i32
      %21 = arith.addi %20, %c0_i32_18 : i32
      %c0_i32_19 = arith.constant 0 : i32
      %22 = arith.addi %21, %c0_i32_19 : i32
      %c0_20 = arith.constant 0 : index
      %23 = arith.index_cast %22 : i32 to index
      %c1_21 = arith.constant 1 : index
      %c0_22 = arith.constant 0 : index
      %24 = vector.load %arg1[%c0_20, %23, %c1_21, %c0_22] : memref<1x10x5x64xf32, #tpu.memory_space<vmem>>, vector<1x1x4x64xf32>
      %25 = vector.shape_cast %24 : vector<1x1x4x64xf32> to vector<4x64xf32>
      %c2 = arith.constant 2 : index
      %c0_23 = arith.constant 0 : index
      %c0_24 = arith.constant 0 : index
      %26 = vector.load %arg3[%c2, %c0_23, %c0_24] : memref<9x64x128xf32, #tpu.memory_space<vmem>>, vector<1x64x128xf32>
      %27 = vector.shape_cast %26 : vector<1x64x128xf32> to vector<64x128xf32>
      %cst_25 = arith.constant dense<0.000000e+00> : vector<4x128xf32>
      %28 = tpu.matmul %25, %27, %cst_25 {dimension_numbers = #tpu.dot_dimension_numbers<[1], [0], [0], [1], [0, 0, 1, 1], [], []>} : vector<4x64xf32>, vector<64x128xf32>, vector<4x128xf32> -> vector<4x128xf32>
      %29 = arith.addf %19, %28 : vector<4x128xf32>
      %c2_i32_26 = arith.constant 2 : i32
      %30 = arith.muli %c2_i32_26, %arg6 : i32
      %c0_i32_27 = arith.constant 0 : i32
      %31 = arith.addi %30, %c0_i32_27 : i32
      %c1_i32_28 = arith.constant 1 : i32
      %32 = arith.addi %31, %c1_i32_28 : i32
      %c0_29 = arith.constant 0 : index
      %33 = arith.index_cast %32 : i32 to index
      %c0_30 = arith.constant 0 : index
      %c0_31 = arith.constant 0 : index
      %34 = vector.load %arg1[%c0_29, %33, %c0_30, %c0_31] : memref<1x10x5x64xf32, #tpu.memory_space<vmem>>, vector<1x1x4x64xf32>
      %35 = vector.shape_cast %34 : vector<1x1x4x64xf32> to vector<4x64xf32>
      %c3 = arith.constant 3 : index
      %c0_32 = arith.constant 0 : index
      %c0_33 = arith.constant 0 : index
      %36 = vector.load %arg3[%c3, %c0_32, %c0_33] : memref<9x64x128xf32, #tpu.memory_space<vmem>>, vector<1x64x128xf32>
      %37 = vector.shape_cast %36 : vector<1x64x128xf32> to vector<64x128xf32>
      %cst_34 = arith.constant dense<0.000000e+00> : vector<4x128xf32>
      %38 = tpu.matmul %35, %37, %cst_34 {dimension_numbers = #tpu.dot_dimension_numbers<[1], [0], [0], [1], [0, 0, 1, 1], [], []>} : vector<4x64xf32>, vector<64x128xf32>, vector<4x128xf32> -> vector<4x128xf32>
      %39 = arith.addf %29, %38 : vector<4x128xf32>
      %c2_i32_35 = arith.constant 2 : i32
      %40 = arith.muli %c2_i32_35, %arg6 : i32
      %c0_i32_36 = arith.constant 0 : i32
      %41 = arith.addi %40, %c0_i32_36 : i32
      %c1_i32_37 = arith.constant 1 : i32
      %42 = arith.addi %41, %c1_i32_37 : i32
      %c0_38 = arith.constant 0 : index
      %43 = arith.index_cast %42 : i32 to index
      %c0_39 = arith.constant 0 : index
      %c0_40 = arith.constant 0 : index
      %44 = vector.load %arg2[%c0_38, %43, %c0_39, %c0_40] : memref<1x10x5x64xf32, #tpu.memory_space<vmem>>, vector<1x1x4x64xf32>
      %45 = vector.shape_cast %44 : vector<1x1x4x64xf32> to vector<4x64xf32>
      %c4 = arith.constant 4 : index
      %c0_41 = arith.constant 0 : index
      %c0_42 = arith.constant 0 : index
      %46 = vector.load %arg3[%c4, %c0_41, %c0_42] : memref<9x64x128xf32, #tpu.memory_space<vmem>>, vector<1x64x128xf32>
      %47 = vector.shape_cast %46 : vector<1x64x128xf32> to vector<64x128xf32>
      %cst_43 = arith.constant dense<0.000000e+00> : vector<4x128xf32>
      %48 = tpu.matmul %45, %47, %cst_43 {dimension_numbers = #tpu.dot_dimension_numbers<[1], [0], [0], [1], [0, 0, 1, 1], [], []>} : vector<4x64xf32>, vector<64x128xf32>, vector<4x128xf32> -> vector<4x128xf32>
      %49 = arith.addf %39, %48 : vector<4x128xf32>
      %c2_i32_44 = arith.constant 2 : i32
      %50 = arith.muli %c2_i32_44, %arg6 : i32
      %c0_i32_45 = arith.constant 0 : i32
      %51 = arith.addi %50, %c0_i32_45 : i32
      %c1_i32_46 = arith.constant 1 : i32
      %52 = arith.addi %51, %c1_i32_46 : i32
      %c0_47 = arith.constant 0 : index
      %53 = arith.index_cast %52 : i32 to index
      %c1_48 = arith.constant 1 : index
      %c0_49 = arith.constant 0 : index
      %54 = vector.load %arg1[%c0_47, %53, %c1_48, %c0_49] : memref<1x10x5x64xf32, #tpu.memory_space<vmem>>, vector<1x1x4x64xf32>
      %55 = vector.shape_cast %54 : vector<1x1x4x64xf32> to vector<4x64xf32>
      %c5 = arith.constant 5 : index
      %c0_50 = arith.constant 0 : index
      %c0_51 = arith.constant 0 : index
      %56 = vector.load %arg3[%c5, %c0_50, %c0_51] : memref<9x64x128xf32, #tpu.memory_space<vmem>>, vector<1x64x128xf32>
      %57 = vector.shape_cast %56 : vector<1x64x128xf32> to vector<64x128xf32>
      %cst_52 = arith.constant dense<0.000000e+00> : vector<4x128xf32>
      %58 = tpu.matmul %55, %57, %cst_52 {dimension_numbers = #tpu.dot_dimension_numbers<[1], [0], [0], [1], [0, 0, 1, 1], [], []>} : vector<4x64xf32>, vector<64x128xf32>, vector<4x128xf32> -> vector<4x128xf32>
      %59 = arith.addf %49, %58 : vector<4x128xf32>
      %c2_i32_53 = arith.constant 2 : i32
      %60 = arith.muli %c2_i32_53, %arg6 : i32
      %c0_i32_54 = arith.constant 0 : i32
      %61 = arith.addi %60, %c0_i32_54 : i32
      %c2_i32_55 = arith.constant 2 : i32
      %62 = arith.addi %61, %c2_i32_55 : i32
      %c0_56 = arith.constant 0 : index
      %63 = arith.index_cast %62 : i32 to index
      %c0_57 = arith.constant 0 : index
      %c0_58 = arith.constant 0 : index
      %64 = vector.load %arg1[%c0_56, %63, %c0_57, %c0_58] : memref<1x10x5x64xf32, #tpu.memory_space<vmem>>, vector<1x1x4x64xf32>
      %65 = vector.shape_cast %64 : vector<1x1x4x64xf32> to vector<4x64xf32>
      %c6 = arith.constant 6 : index
      %c0_59 = arith.constant 0 : index
      %c0_60 = arith.constant 0 : index
      %66 = vector.load %arg3[%c6, %c0_59, %c0_60] : memref<9x64x128xf32, #tpu.memory_space<vmem>>, vector<1x64x128xf32>
      %67 = vector.shape_cast %66 : vector<1x64x128xf32> to vector<64x128xf32>
      %cst_61 = arith.constant dense<0.000000e+00> : vector<4x128xf32>
      %68 = tpu.matmul %65, %67, %cst_61 {dimension_numbers = #tpu.dot_dimension_numbers<[1], [0], [0], [1], [0, 0, 1, 1], [], []>} : vector<4x64xf32>, vector<64x128xf32>, vector<4x128xf32> -> vector<4x128xf32>
      %69 = arith.addf %59, %68 : vector<4x128xf32>
      %c2_i32_62 = arith.constant 2 : i32
      %70 = arith.muli %c2_i32_62, %arg6 : i32
      %c0_i32_63 = arith.constant 0 : i32
      %71 = arith.addi %70, %c0_i32_63 : i32
      %c2_i32_64 = arith.constant 2 : i32
      %72 = arith.addi %71, %c2_i32_64 : i32
      %c0_65 = arith.constant 0 : index
      %73 = arith.index_cast %72 : i32 to index
      %c0_66 = arith.constant 0 : index
      %c0_67 = arith.constant 0 : index
      %74 = vector.load %arg2[%c0_65, %73, %c0_66, %c0_67] : memref<1x10x5x64xf32, #tpu.memory_space<vmem>>, vector<1x1x4x64xf32>
      %75 = vector.shape_cast %74 : vector<1x1x4x64xf32> to vector<4x64xf32>
      %c7 = arith.constant 7 : index
      %c0_68 = arith.constant 0 : index
      %c0_69 = arith.constant 0 : index
      %76 = vector.load %arg3[%c7, %c0_68, %c0_69] : memref<9x64x128xf32, #tpu.memory_space<vmem>>, vector<1x64x128xf32>
      %77 = vector.shape_cast %76 : vector<1x64x128xf32> to vector<64x128xf32>
      %cst_70 = arith.constant dense<0.000000e+00> : vector<4x128xf32>
      %78 = tpu.matmul %75, %77, %cst_70 {dimension_numbers = #tpu.dot_dimension_numbers<[1], [0], [0], [1], [0, 0, 1, 1], [], []>} : vector<4x64xf32>, vector<64x128xf32>, vector<4x128xf32> -> vector<4x128xf32>
      %79 = arith.addf %69, %78 : vector<4x128xf32>
      %c2_i32_71 = arith.constant 2 : i32
      %80 = arith.muli %c2_i32_71, %arg6 : i32
      %c0_i32_72 = arith.constant 0 : i32
      %81 = arith.addi %80, %c0_i32_72 : i32
      %c2_i32_73 = arith.constant 2 : i32
      %82 = arith.addi %81, %c2_i32_73 : i32
      %c0_74 = arith.constant 0 : index
      %83 = arith.index_cast %82 : i32 to index
      %c1_75 = arith.constant 1 : index
      %c0_76 = arith.constant 0 : index
      %84 = vector.load %arg1[%c0_74, %83, %c1_75, %c0_76] : memref<1x10x5x64xf32, #tpu.memory_space<vmem>>, vector<1x1x4x64xf32>
      %85 = vector.shape_cast %84 : vector<1x1x4x64xf32> to vector<4x64xf32>
      %c8 = arith.constant 8 : index
      %c0_77 = arith.constant 0 : index
      %c0_78 = arith.constant 0 : index
      %86 = vector.load %arg3[%c8, %c0_77, %c0_78] : memref<9x64x128xf32, #tpu.memory_space<vmem>>, vector<1x64x128xf32>
      %87 = vector.shape_cast %86 : vector<1x64x128xf32> to vector<64x128xf32>
      %cst_79 = arith.constant dense<0.000000e+00> : vector<4x128xf32>
      %88 = tpu.matmul %85, %87, %cst_79 {dimension_numbers = #tpu.dot_dimension_numbers<[1], [0], [0], [1], [0, 0, 1, 1], [], []>} : vector<4x64xf32>, vector<64x128xf32>, vector<4x128xf32> -> vector<4x128xf32>
      %89 = arith.addf %79, %88 : vector<4x128xf32>
      %c2_i32_80 = arith.constant 2 : i32
      %90 = arith.muli %c2_i32_80, %arg6 : i32
      %c0_i32_81 = arith.constant 0 : i32
      %91 = arith.addi %90, %c0_i32_81 : i32
      %c0_i32_82 = arith.constant 0 : i32
      %92 = arith.addi %91, %c0_i32_82 : i32
      %c0_83 = arith.constant 0 : index
      %93 = arith.index_cast %92 : i32 to index
      %c0_84 = arith.constant 0 : index
      %c0_85 = arith.constant 0 : index
      %94 = vector.load %arg2[%c0_83, %93, %c0_84, %c0_85] : memref<1x10x5x64xf32, #tpu.memory_space<vmem>>, vector<1x1x4x64xf32>
      %95 = vector.shape_cast %94 : vector<1x1x4x64xf32> to vector<4x64xf32>
      %c0_86 = arith.constant 0 : index
      %c0_87 = arith.constant 0 : index
      %c0_88 = arith.constant 0 : index
      %96 = vector.load %arg3[%c0_86, %c0_87, %c0_88] : memref<9x64x128xf32, #tpu.memory_space<vmem>>, vector<1x64x128xf32>
      %97 = vector.shape_cast %96 : vector<1x64x128xf32> to vector<64x128xf32>
      %cst_89 = arith.constant dense<0.000000e+00> : vector<4x128xf32>
      %98 = tpu.matmul %95, %97, %cst_89 {dimension_numbers = #tpu.dot_dimension_numbers<[1], [0], [0], [1], [0, 0, 1, 1], [], []>} : vector<4x64xf32>, vector<64x128xf32>, vector<4x128xf32> -> vector<4x128xf32>
      %c2_i32_90 = arith.constant 2 : i32
      %99 = arith.muli %c2_i32_90, %arg6 : i32
      %c0_i32_91 = arith.constant 0 : i32
      %100 = arith.addi %99, %c0_i32_91 : i32
      %c0_i32_92 = arith.constant 0 : i32
      %101 = arith.addi %100, %c0_i32_92 : i32
      %c0_93 = arith.constant 0 : index
      %102 = arith.index_cast %101 : i32 to index
      %c1_94 = arith.constant 1 : index
      %c0_95 = arith.constant 0 : index
      %103 = vector.load %arg1[%c0_93, %102, %c1_94, %c0_95] : memref<1x10x5x64xf32, #tpu.memory_space<vmem>>, vector<1x1x4x64xf32>
      %104 = vector.shape_cast %103 : vector<1x1x4x64xf32> to vector<4x64xf32>
      %c1_96 = arith.constant 1 : index
      %c0_97 = arith.constant 0 : index
      %c0_98 = arith.constant 0 : index
      %105 = vector.load %arg3[%c1_96, %c0_97, %c0_98] : memref<9x64x128xf32, #tpu.memory_space<vmem>>, vector<1x64x128xf32>
      %106 = vector.shape_cast %105 : vector<1x64x128xf32> to vector<64x128xf32>
      %cst_99 = arith.constant dense<0.000000e+00> : vector<4x128xf32>
      %107 = tpu.matmul %104, %106, %cst_99 {dimension_numbers = #tpu.dot_dimension_numbers<[1], [0], [0], [1], [0, 0, 1, 1], [], []>} : vector<4x64xf32>, vector<64x128xf32>, vector<4x128xf32> -> vector<4x128xf32>
      %108 = arith.addf %98, %107 : vector<4x128xf32>
      %c2_i32_100 = arith.constant 2 : i32
      %109 = arith.muli %c2_i32_100, %arg6 : i32
      %c0_i32_101 = arith.constant 0 : i32
      %110 = arith.addi %109, %c0_i32_101 : i32
      %c0_i32_102 = arith.constant 0 : i32
      %111 = arith.addi %110, %c0_i32_102 : i32
      %c0_103 = arith.constant 0 : index
      %112 = arith.index_cast %111 : i32 to index
      %c1_104 = arith.constant 1 : index
      %c0_105 = arith.constant 0 : index
      %113 = vector.load %arg2[%c0_103, %112, %c1_104, %c0_105] : memref<1x10x5x64xf32, #tpu.memory_space<vmem>>, vector<1x1x4x64xf32>
      %114 = vector.shape_cast %113 : vector<1x1x4x64xf32> to vector<4x64xf32>
      %c2_106 = arith.constant 2 : index
      %c0_107 = arith.constant 0 : index
      %c0_108 = arith.constant 0 : index
      %115 = vector.load %arg3[%c2_106, %c0_107, %c0_108] : memref<9x64x128xf32, #tpu.memory_space<vmem>>, vector<1x64x128xf32>
      %116 = vector.shape_cast %115 : vector<1x64x128xf32> to vector<64x128xf32>
      %cst_109 = arith.constant dense<0.000000e+00> : vector<4x128xf32>
      %117 = tpu.matmul %114, %116, %cst_109 {dimension_numbers = #tpu.dot_dimension_numbers<[1], [0], [0], [1], [0, 0, 1, 1], [], []>} : vector<4x64xf32>, vector<64x128xf32>, vector<4x128xf32> -> vector<4x128xf32>
      %118 = arith.addf %108, %117 : vector<4x128xf32>
      %c2_i32_110 = arith.constant 2 : i32
      %119 = arith.muli %c2_i32_110, %arg6 : i32
      %c0_i32_111 = arith.constant 0 : i32
      %120 = arith.addi %119, %c0_i32_111 : i32
      %c1_i32_112 = arith.constant 1 : i32
      %121 = arith.addi %120, %c1_i32_112 : i32
      %c0_113 = arith.constant 0 : index
      %122 = arith.index_cast %121 : i32 to index
      %c0_114 = arith.constant 0 : index
      %c0_115 = arith.constant 0 : index
      %123 = vector.load %arg2[%c0_113, %122, %c0_114, %c0_115] : memref<1x10x5x64xf32, #tpu.memory_space<vmem>>, vector<1x1x4x64xf32>
      %124 = vector.shape_cast %123 : vector<1x1x4x64xf32> to vector<4x64xf32>
      %c3_116 = arith.constant 3 : index
      %c0_117 = arith.constant 0 : index
      %c0_118 = arith.constant 0 : index
      %125 = vector.load %arg3[%c3_116, %c0_117, %c0_118] : memref<9x64x128xf32, #tpu.memory_space<vmem>>, vector<1x64x128xf32>
      %126 = vector.shape_cast %125 : vector<1x64x128xf32> to vector<64x128xf32>
      %cst_119 = arith.constant dense<0.000000e+00> : vector<4x128xf32>
      %127 = tpu.matmul %124, %126, %cst_119 {dimension_numbers = #tpu.dot_dimension_numbers<[1], [0], [0], [1], [0, 0, 1, 1], [], []>} : vector<4x64xf32>, vector<64x128xf32>, vector<4x128xf32> -> vector<4x128xf32>
      %128 = arith.addf %118, %127 : vector<4x128xf32>
      %c2_i32_120 = arith.constant 2 : i32
      %129 = arith.muli %c2_i32_120, %arg6 : i32
      %c0_i32_121 = arith.constant 0 : i32
      %130 = arith.addi %129, %c0_i32_121 : i32
      %c1_i32_122 = arith.constant 1 : i32
      %131 = arith.addi %130, %c1_i32_122 : i32
      %c0_123 = arith.constant 0 : index
      %132 = arith.index_cast %131 : i32 to index
      %c1_124 = arith.constant 1 : index
      %c0_125 = arith.constant 0 : index
      %133 = vector.load %arg1[%c0_123, %132, %c1_124, %c0_125] : memref<1x10x5x64xf32, #tpu.memory_space<vmem>>, vector<1x1x4x64xf32>
      %134 = vector.shape_cast %133 : vector<1x1x4x64xf32> to vector<4x64xf32>
      %c4_126 = arith.constant 4 : index
      %c0_127 = arith.constant 0 : index
      %c0_128 = arith.constant 0 : index
      %135 = vector.load %arg3[%c4_126, %c0_127, %c0_128] : memref<9x64x128xf32, #tpu.memory_space<vmem>>, vector<1x64x128xf32>
      %136 = vector.shape_cast %135 : vector<1x64x128xf32> to vector<64x128xf32>
      %cst_129 = arith.constant dense<0.000000e+00> : vector<4x128xf32>
      %137 = tpu.matmul %134, %136, %cst_129 {dimension_numbers = #tpu.dot_dimension_numbers<[1], [0], [0], [1], [0, 0, 1, 1], [], []>} : vector<4x64xf32>, vector<64x128xf32>, vector<4x128xf32> -> vector<4x128xf32>
      %138 = arith.addf %128, %137 : vector<4x128xf32>
      %c2_i32_130 = arith.constant 2 : i32
      %139 = arith.muli %c2_i32_130, %arg6 : i32
      %c0_i32_131 = arith.constant 0 : i32
      %140 = arith.addi %139, %c0_i32_131 : i32
      %c1_i32_132 = arith.constant 1 : i32
      %141 = arith.addi %140, %c1_i32_132 : i32
      %c0_133 = arith.constant 0 : index
      %142 = arith.index_cast %141 : i32 to index
      %c1_134 = arith.constant 1 : index
      %c0_135 = arith.constant 0 : index
      %143 = vector.load %arg2[%c0_133, %142, %c1_134, %c0_135] : memref<1x10x5x64xf32, #tpu.memory_space<vmem>>, vector<1x1x4x64xf32>
      %144 = vector.shape_cast %143 : vector<1x1x4x64xf32> to vector<4x64xf32>
      %c5_136 = arith.constant 5 : index
      %c0_137 = arith.constant 0 : index
      %c0_138 = arith.constant 0 : index
      %145 = vector.load %arg3[%c5_136, %c0_137, %c0_138] : memref<9x64x128xf32, #tpu.memory_space<vmem>>, vector<1x64x128xf32>
      %146 = vector.shape_cast %145 : vector<1x64x128xf32> to vector<64x128xf32>
      %cst_139 = arith.constant dense<0.000000e+00> : vector<4x128xf32>
      %147 = tpu.matmul %144, %146, %cst_139 {dimension_numbers = #tpu.dot_dimension_numbers<[1], [0], [0], [1], [0, 0, 1, 1], [], []>} : vector<4x64xf32>, vector<64x128xf32>, vector<4x128xf32> -> vector<4x128xf32>
      %148 = arith.addf %138, %147 : vector<4x128xf32>
      %c2_i32_140 = arith.constant 2 : i32
      %149 = arith.muli %c2_i32_140, %arg6 : i32
      %c0_i32_141 = arith.constant 0 : i32
      %150 = arith.addi %149, %c0_i32_141 : i32
      %c2_i32_142 = arith.constant 2 : i32
      %151 = arith.addi %150, %c2_i32_142 : i32
      %c0_143 = arith.constant 0 : index
      %152 = arith.index_cast %151 : i32 to index
      %c0_144 = arith.constant 0 : index
      %c0_145 = arith.constant 0 : index
      %153 = vector.load %arg2[%c0_143, %152, %c0_144, %c0_145] : memref<1x10x5x64xf32, #tpu.memory_space<vmem>>, vector<1x1x4x64xf32>
      %154 = vector.shape_cast %153 : vector<1x1x4x64xf32> to vector<4x64xf32>
      %c6_146 = arith.constant 6 : index
      %c0_147 = arith.constant 0 : index
      %c0_148 = arith.constant 0 : index
      %155 = vector.load %arg3[%c6_146, %c0_147, %c0_148] : memref<9x64x128xf32, #tpu.memory_space<vmem>>, vector<1x64x128xf32>
      %156 = vector.shape_cast %155 : vector<1x64x128xf32> to vector<64x128xf32>
      %cst_149 = arith.constant dense<0.000000e+00> : vector<4x128xf32>
      %157 = tpu.matmul %154, %156, %cst_149 {dimension_numbers = #tpu.dot_dimension_numbers<[1], [0], [0], [1], [0, 0, 1, 1], [], []>} : vector<4x64xf32>, vector<64x128xf32>, vector<4x128xf32> -> vector<4x128xf32>
      %158 = arith.addf %148, %157 : vector<4x128xf32>
      %c2_i32_150 = arith.constant 2 : i32
      %159 = arith.muli %c2_i32_150, %arg6 : i32
      %c0_i32_151 = arith.constant 0 : i32
      %160 = arith.addi %159, %c0_i32_151 : i32
      %c2_i32_152 = arith.constant 2 : i32
      %161 = arith.addi %160, %c2_i32_152 : i32
      %c0_153 = arith.constant 0 : index
      %162 = arith.index_cast %161 : i32 to index
      %c1_154 = arith.constant 1 : index
      %c0_155 = arith.constant 0 : index
      %163 = vector.load %arg1[%c0_153, %162, %c1_154, %c0_155] : memref<1x10x5x64xf32, #tpu.memory_space<vmem>>, vector<1x1x4x64xf32>
      %164 = vector.shape_cast %163 : vector<1x1x4x64xf32> to vector<4x64xf32>
      %c7_156 = arith.constant 7 : index
      %c0_157 = arith.constant 0 : index
      %c0_158 = arith.constant 0 : index
      %165 = vector.load %arg3[%c7_156, %c0_157, %c0_158] : memref<9x64x128xf32, #tpu.memory_space<vmem>>, vector<1x64x128xf32>
      %166 = vector.shape_cast %165 : vector<1x64x128xf32> to vector<64x128xf32>
      %cst_159 = arith.constant dense<0.000000e+00> : vector<4x128xf32>
      %167 = tpu.matmul %164, %166, %cst_159 {dimension_numbers = #tpu.dot_dimension_numbers<[1], [0], [0], [1], [0, 0, 1, 1], [], []>} : vector<4x64xf32>, vector<64x128xf32>, vector<4x128xf32> -> vector<4x128xf32>
      %168 = arith.addf %158, %167 : vector<4x128xf32>
      %c2_i32_160 = arith.constant 2 : i32
      %169 = arith.muli %c2_i32_160, %arg6 : i32
      %c0_i32_161 = arith.constant 0 : i32
      %170 = arith.addi %169, %c0_i32_161 : i32
      %c2_i32_162 = arith.constant 2 : i32
      %171 = arith.addi %170, %c2_i32_162 : i32
      %c0_163 = arith.constant 0 : index
      %172 = arith.index_cast %171 : i32 to index
      %c1_164 = arith.constant 1 : index
      %c0_165 = arith.constant 0 : index
      %173 = vector.load %arg2[%c0_163, %172, %c1_164, %c0_165] : memref<1x10x5x64xf32, #tpu.memory_space<vmem>>, vector<1x1x4x64xf32>
      %174 = vector.shape_cast %173 : vector<1x1x4x64xf32> to vector<4x64xf32>
      %c8_166 = arith.constant 8 : index
      %c0_167 = arith.constant 0 : index
      %c0_168 = arith.constant 0 : index
      %175 = vector.load %arg3[%c8_166, %c0_167, %c0_168] : memref<9x64x128xf32, #tpu.memory_space<vmem>>, vector<1x64x128xf32>
      %176 = vector.shape_cast %175 : vector<1x64x128xf32> to vector<64x128xf32>
      %cst_169 = arith.constant dense<0.000000e+00> : vector<4x128xf32>
      %177 = tpu.matmul %174, %176, %cst_169 {dimension_numbers = #tpu.dot_dimension_numbers<[1], [0], [0], [1], [0, 0, 1, 1], [], []>} : vector<4x64xf32>, vector<64x128xf32>, vector<4x128xf32> -> vector<4x128xf32>
      %178 = arith.addf %168, %177 : vector<4x128xf32>
      %179 = arith.maximumf %89, %178 : vector<4x128xf32>
      %c2_i32_170 = arith.constant 2 : i32
      %180 = arith.muli %c2_i32_170, %arg6 : i32
      %c1_i32_171 = arith.constant 1 : i32
      %181 = arith.addi %180, %c1_i32_171 : i32
      %c0_i32_172 = arith.constant 0 : i32
      %182 = arith.addi %181, %c0_i32_172 : i32
      %c0_173 = arith.constant 0 : index
      %183 = arith.index_cast %182 : i32 to index
      %c0_174 = arith.constant 0 : index
      %c0_175 = arith.constant 0 : index
      %184 = vector.load %arg1[%c0_173, %183, %c0_174, %c0_175] : memref<1x10x5x64xf32, #tpu.memory_space<vmem>>, vector<1x1x4x64xf32>
      %185 = vector.shape_cast %184 : vector<1x1x4x64xf32> to vector<4x64xf32>
      %c0_176 = arith.constant 0 : index
      %c0_177 = arith.constant 0 : index
      %c0_178 = arith.constant 0 : index
      %186 = vector.load %arg3[%c0_176, %c0_177, %c0_178] : memref<9x64x128xf32, #tpu.memory_space<vmem>>, vector<1x64x128xf32>
      %187 = vector.shape_cast %186 : vector<1x64x128xf32> to vector<64x128xf32>
      %cst_179 = arith.constant dense<0.000000e+00> : vector<4x128xf32>
      %188 = tpu.matmul %185, %187, %cst_179 {dimension_numbers = #tpu.dot_dimension_numbers<[1], [0], [0], [1], [0, 0, 1, 1], [], []>} : vector<4x64xf32>, vector<64x128xf32>, vector<4x128xf32> -> vector<4x128xf32>
      %c2_i32_180 = arith.constant 2 : i32
      %189 = arith.muli %c2_i32_180, %arg6 : i32
      %c1_i32_181 = arith.constant 1 : i32
      %190 = arith.addi %189, %c1_i32_181 : i32
      %c0_i32_182 = arith.constant 0 : i32
      %191 = arith.addi %190, %c0_i32_182 : i32
      %c0_183 = arith.constant 0 : index
      %192 = arith.index_cast %191 : i32 to index
      %c0_184 = arith.constant 0 : index
      %c0_185 = arith.constant 0 : index
      %193 = vector.load %arg2[%c0_183, %192, %c0_184, %c0_185] : memref<1x10x5x64xf32, #tpu.memory_space<vmem>>, vector<1x1x4x64xf32>
      %194 = vector.shape_cast %193 : vector<1x1x4x64xf32> to vector<4x64xf32>
      %c1_186 = arith.constant 1 : index
      %c0_187 = arith.constant 0 : index
      %c0_188 = arith.constant 0 : index
      %195 = vector.load %arg3[%c1_186, %c0_187, %c0_188] : memref<9x64x128xf32, #tpu.memory_space<vmem>>, vector<1x64x128xf32>
      %196 = vector.shape_cast %195 : vector<1x64x128xf32> to vector<64x128xf32>
      %cst_189 = arith.constant dense<0.000000e+00> : vector<4x128xf32>
      %197 = tpu.matmul %194, %196, %cst_189 {dimension_numbers = #tpu.dot_dimension_numbers<[1], [0], [0], [1], [0, 0, 1, 1], [], []>} : vector<4x64xf32>, vector<64x128xf32>, vector<4x128xf32> -> vector<4x128xf32>
      %198 = arith.addf %188, %197 : vector<4x128xf32>
      %c2_i32_190 = arith.constant 2 : i32
      %199 = arith.muli %c2_i32_190, %arg6 : i32
      %c1_i32_191 = arith.constant 1 : i32
      %200 = arith.addi %199, %c1_i32_191 : i32
      %c0_i32_192 = arith.constant 0 : i32
      %201 = arith.addi %200, %c0_i32_192 : i32
      %c0_193 = arith.constant 0 : index
      %202 = arith.index_cast %201 : i32 to index
      %c1_194 = arith.constant 1 : index
      %c0_195 = arith.constant 0 : index
      %203 = vector.load %arg1[%c0_193, %202, %c1_194, %c0_195] : memref<1x10x5x64xf32, #tpu.memory_space<vmem>>, vector<1x1x4x64xf32>
      %204 = vector.shape_cast %203 : vector<1x1x4x64xf32> to vector<4x64xf32>
      %c2_196 = arith.constant 2 : index
      %c0_197 = arith.constant 0 : index
      %c0_198 = arith.constant 0 : index
      %205 = vector.load %arg3[%c2_196, %c0_197, %c0_198] : memref<9x64x128xf32, #tpu.memory_space<vmem>>, vector<1x64x128xf32>
      %206 = vector.shape_cast %205 : vector<1x64x128xf32> to vector<64x128xf32>
      %cst_199 = arith.constant dense<0.000000e+00> : vector<4x128xf32>
      %207 = tpu.matmul %204, %206, %cst_199 {dimension_numbers = #tpu.dot_dimension_numbers<[1], [0], [0], [1], [0, 0, 1, 1], [], []>} : vector<4x64xf32>, vector<64x128xf32>, vector<4x128xf32> -> vector<4x128xf32>
      %208 = arith.addf %198, %207 : vector<4x128xf32>
      %c2_i32_200 = arith.constant 2 : i32
      %209 = arith.muli %c2_i32_200, %arg6 : i32
      %c1_i32_201 = arith.constant 1 : i32
      %210 = arith.addi %209, %c1_i32_201 : i32
      %c1_i32_202 = arith.constant 1 : i32
      %211 = arith.addi %210, %c1_i32_202 : i32
      %c0_203 = arith.constant 0 : index
      %212 = arith.index_cast %211 : i32 to index
      %c0_204 = arith.constant 0 : index
      %c0_205 = arith.constant 0 : index
      %213 = vector.load %arg1[%c0_203, %212, %c0_204, %c0_205] : memref<1x10x5x64xf32, #tpu.memory_space<vmem>>, vector<1x1x4x64xf32>
      %214 = vector.shape_cast %213 : vector<1x1x4x64xf32> to vector<4x64xf32>
      %c3_206 = arith.constant 3 : index
      %c0_207 = arith.constant 0 : index
      %c0_208 = arith.constant 0 : index
      %215 = vector.load %arg3[%c3_206, %c0_207, %c0_208] : memref<9x64x128xf32, #tpu.memory_space<vmem>>, vector<1x64x128xf32>
      %216 = vector.shape_cast %215 : vector<1x64x128xf32> to vector<64x128xf32>
      %cst_209 = arith.constant dense<0.000000e+00> : vector<4x128xf32>
      %217 = tpu.matmul %214, %216, %cst_209 {dimension_numbers = #tpu.dot_dimension_numbers<[1], [0], [0], [1], [0, 0, 1, 1], [], []>} : vector<4x64xf32>, vector<64x128xf32>, vector<4x128xf32> -> vector<4x128xf32>
      %218 = arith.addf %208, %217 : vector<4x128xf32>
      %c2_i32_210 = arith.constant 2 : i32
      %219 = arith.muli %c2_i32_210, %arg6 : i32
      %c1_i32_211 = arith.constant 1 : i32
      %220 = arith.addi %219, %c1_i32_211 : i32
      %c1_i32_212 = arith.constant 1 : i32
      %221 = arith.addi %220, %c1_i32_212 : i32
      %c0_213 = arith.constant 0 : index
      %222 = arith.index_cast %221 : i32 to index
      %c0_214 = arith.constant 0 : index
      %c0_215 = arith.constant 0 : index
      %223 = vector.load %arg2[%c0_213, %222, %c0_214, %c0_215] : memref<1x10x5x64xf32, #tpu.memory_space<vmem>>, vector<1x1x4x64xf32>
      %224 = vector.shape_cast %223 : vector<1x1x4x64xf32> to vector<4x64xf32>
      %c4_216 = arith.constant 4 : index
      %c0_217 = arith.constant 0 : index
      %c0_218 = arith.constant 0 : index
      %225 = vector.load %arg3[%c4_216, %c0_217, %c0_218] : memref<9x64x128xf32, #tpu.memory_space<vmem>>, vector<1x64x128xf32>
      %226 = vector.shape_cast %225 : vector<1x64x128xf32> to vector<64x128xf32>
      %cst_219 = arith.constant dense<0.000000e+00> : vector<4x128xf32>
      %227 = tpu.matmul %224, %226, %cst_219 {dimension_numbers = #tpu.dot_dimension_numbers<[1], [0], [0], [1], [0, 0, 1, 1], [], []>} : vector<4x64xf32>, vector<64x128xf32>, vector<4x128xf32> -> vector<4x128xf32>
      %228 = arith.addf %218, %227 : vector<4x128xf32>
      %c2_i32_220 = arith.constant 2 : i32
      %229 = arith.muli %c2_i32_220, %arg6 : i32
      %c1_i32_221 = arith.constant 1 : i32
      %230 = arith.addi %229, %c1_i32_221 : i32
      %c1_i32_222 = arith.constant 1 : i32
      %231 = arith.addi %230, %c1_i32_222 : i32
      %c0_223 = arith.constant 0 : index
      %232 = arith.index_cast %231 : i32 to index
      %c1_224 = arith.constant 1 : index
      %c0_225 = arith.constant 0 : index
      %233 = vector.load %arg1[%c0_223, %232, %c1_224, %c0_225] : memref<1x10x5x64xf32, #tpu.memory_space<vmem>>, vector<1x1x4x64xf32>
      %234 = vector.shape_cast %233 : vector<1x1x4x64xf32> to vector<4x64xf32>
      %c5_226 = arith.constant 5 : index
      %c0_227 = arith.constant 0 : index
      %c0_228 = arith.constant 0 : index
      %235 = vector.load %arg3[%c5_226, %c0_227, %c0_228] : memref<9x64x128xf32, #tpu.memory_space<vmem>>, vector<1x64x128xf32>
      %236 = vector.shape_cast %235 : vector<1x64x128xf32> to vector<64x128xf32>
      %cst_229 = arith.constant dense<0.000000e+00> : vector<4x128xf32>
      %237 = tpu.matmul %234, %236, %cst_229 {dimension_numbers = #tpu.dot_dimension_numbers<[1], [0], [0], [1], [0, 0, 1, 1], [], []>} : vector<4x64xf32>, vector<64x128xf32>, vector<4x128xf32> -> vector<4x128xf32>
      %238 = arith.addf %228, %237 : vector<4x128xf32>
      %c2_i32_230 = arith.constant 2 : i32
      %239 = arith.muli %c2_i32_230, %arg6 : i32
      %c1_i32_231 = arith.constant 1 : i32
      %240 = arith.addi %239, %c1_i32_231 : i32
      %c2_i32_232 = arith.constant 2 : i32
      %241 = arith.addi %240, %c2_i32_232 : i32
      %c0_233 = arith.constant 0 : index
      %242 = arith.index_cast %241 : i32 to index
      %c0_234 = arith.constant 0 : index
      %c0_235 = arith.constant 0 : index
      %243 = vector.load %arg1[%c0_233, %242, %c0_234, %c0_235] : memref<1x10x5x64xf32, #tpu.memory_space<vmem>>, vector<1x1x4x64xf32>
      %244 = vector.shape_cast %243 : vector<1x1x4x64xf32> to vector<4x64xf32>
      %c6_236 = arith.constant 6 : index
      %c0_237 = arith.constant 0 : index
      %c0_238 = arith.constant 0 : index
      %245 = vector.load %arg3[%c6_236, %c0_237, %c0_238] : memref<9x64x128xf32, #tpu.memory_space<vmem>>, vector<1x64x128xf32>
      %246 = vector.shape_cast %245 : vector<1x64x128xf32> to vector<64x128xf32>
      %cst_239 = arith.constant dense<0.000000e+00> : vector<4x128xf32>
      %247 = tpu.matmul %244, %246, %cst_239 {dimension_numbers = #tpu.dot_dimension_numbers<[1], [0], [0], [1], [0, 0, 1, 1], [], []>} : vector<4x64xf32>, vector<64x128xf32>, vector<4x128xf32> -> vector<4x128xf32>
      %248 = arith.addf %238, %247 : vector<4x128xf32>
      %c2_i32_240 = arith.constant 2 : i32
      %249 = arith.muli %c2_i32_240, %arg6 : i32
      %c1_i32_241 = arith.constant 1 : i32
      %250 = arith.addi %249, %c1_i32_241 : i32
      %c2_i32_242 = arith.constant 2 : i32
      %251 = arith.addi %250, %c2_i32_242 : i32
      %c0_243 = arith.constant 0 : index
      %252 = arith.index_cast %251 : i32 to index
      %c0_244 = arith.constant 0 : index
      %c0_245 = arith.constant 0 : index
      %253 = vector.load %arg2[%c0_243, %252, %c0_244, %c0_245] : memref<1x10x5x64xf32, #tpu.memory_space<vmem>>, vector<1x1x4x64xf32>
      %254 = vector.shape_cast %253 : vector<1x1x4x64xf32> to vector<4x64xf32>
      %c7_246 = arith.constant 7 : index
      %c0_247 = arith.constant 0 : index
      %c0_248 = arith.constant 0 : index
      %255 = vector.load %arg3[%c7_246, %c0_247, %c0_248] : memref<9x64x128xf32, #tpu.memory_space<vmem>>, vector<1x64x128xf32>
      %256 = vector.shape_cast %255 : vector<1x64x128xf32> to vector<64x128xf32>
      %cst_249 = arith.constant dense<0.000000e+00> : vector<4x128xf32>
      %257 = tpu.matmul %254, %256, %cst_249 {dimension_numbers = #tpu.dot_dimension_numbers<[1], [0], [0], [1], [0, 0, 1, 1], [], []>} : vector<4x64xf32>, vector<64x128xf32>, vector<4x128xf32> -> vector<4x128xf32>
      %258 = arith.addf %248, %257 : vector<4x128xf32>
      %c2_i32_250 = arith.constant 2 : i32
      %259 = arith.muli %c2_i32_250, %arg6 : i32
      %c1_i32_251 = arith.constant 1 : i32
      %260 = arith.addi %259, %c1_i32_251 : i32
      %c2_i32_252 = arith.constant 2 : i32
      %261 = arith.addi %260, %c2_i32_252 : i32
      %c0_253 = arith.constant 0 : index
      %262 = arith.index_cast %261 : i32 to index
      %c1_254 = arith.constant 1 : index
      %c0_255 = arith.constant 0 : index
      %263 = vector.load %arg1[%c0_253, %262, %c1_254, %c0_255] : memref<1x10x5x64xf32, #tpu.memory_space<vmem>>, vector<1x1x4x64xf32>
      %264 = vector.shape_cast %263 : vector<1x1x4x64xf32> to vector<4x64xf32>
      %c8_256 = arith.constant 8 : index
      %c0_257 = arith.constant 0 : index
      %c0_258 = arith.constant 0 : index
      %265 = vector.load %arg3[%c8_256, %c0_257, %c0_258] : memref<9x64x128xf32, #tpu.memory_space<vmem>>, vector<1x64x128xf32>
      %266 = vector.shape_cast %265 : vector<1x64x128xf32> to vector<64x128xf32>
      %cst_259 = arith.constant dense<0.000000e+00> : vector<4x128xf32>
      %267 = tpu.matmul %264, %266, %cst_259 {dimension_numbers = #tpu.dot_dimension_numbers<[1], [0], [0], [1], [0, 0, 1, 1], [], []>} : vector<4x64xf32>, vector<64x128xf32>, vector<4x128xf32> -> vector<4x128xf32>
      %268 = arith.addf %258, %267 : vector<4x128xf32>
      %269 = arith.maximumf %179, %268 : vector<4x128xf32>
      %c2_i32_260 = arith.constant 2 : i32
      %270 = arith.muli %c2_i32_260, %arg6 : i32
      %c1_i32_261 = arith.constant 1 : i32
      %271 = arith.addi %270, %c1_i32_261 : i32
      %c0_i32_262 = arith.constant 0 : i32
      %272 = arith.addi %271, %c0_i32_262 : i32
      %c0_263 = arith.constant 0 : index
      %273 = arith.index_cast %272 : i32 to index
      %c0_264 = arith.constant 0 : index
      %c0_265 = arith.constant 0 : index
      %274 = vector.load %arg2[%c0_263, %273, %c0_264, %c0_265] : memref<1x10x5x64xf32, #tpu.memory_space<vmem>>, vector<1x1x4x64xf32>
      %275 = vector.shape_cast %274 : vector<1x1x4x64xf32> to vector<4x64xf32>
      %c0_266 = arith.constant 0 : index
      %c0_267 = arith.constant 0 : index
      %c0_268 = arith.constant 0 : index
      %276 = vector.load %arg3[%c0_266, %c0_267, %c0_268] : memref<9x64x128xf32, #tpu.memory_space<vmem>>, vector<1x64x128xf32>
      %277 = vector.shape_cast %276 : vector<1x64x128xf32> to vector<64x128xf32>
      %cst_269 = arith.constant dense<0.000000e+00> : vector<4x128xf32>
      %278 = tpu.matmul %275, %277, %cst_269 {dimension_numbers = #tpu.dot_dimension_numbers<[1], [0], [0], [1], [0, 0, 1, 1], [], []>} : vector<4x64xf32>, vector<64x128xf32>, vector<4x128xf32> -> vector<4x128xf32>
      %c2_i32_270 = arith.constant 2 : i32
      %279 = arith.muli %c2_i32_270, %arg6 : i32
      %c1_i32_271 = arith.constant 1 : i32
      %280 = arith.addi %279, %c1_i32_271 : i32
      %c0_i32_272 = arith.constant 0 : i32
      %281 = arith.addi %280, %c0_i32_272 : i32
      %c0_273 = arith.constant 0 : index
      %282 = arith.index_cast %281 : i32 to index
      %c1_274 = arith.constant 1 : index
      %c0_275 = arith.constant 0 : index
      %283 = vector.load %arg1[%c0_273, %282, %c1_274, %c0_275] : memref<1x10x5x64xf32, #tpu.memory_space<vmem>>, vector<1x1x4x64xf32>
      %284 = vector.shape_cast %283 : vector<1x1x4x64xf32> to vector<4x64xf32>
      %c1_276 = arith.constant 1 : index
      %c0_277 = arith.constant 0 : index
      %c0_278 = arith.constant 0 : index
      %285 = vector.load %arg3[%c1_276, %c0_277, %c0_278] : memref<9x64x128xf32, #tpu.memory_space<vmem>>, vector<1x64x128xf32>
      %286 = vector.shape_cast %285 : vector<1x64x128xf32> to vector<64x128xf32>
      %cst_279 = arith.constant dense<0.000000e+00> : vector<4x128xf32>
      %287 = tpu.matmul %284, %286, %cst_279 {dimension_numbers = #tpu.dot_dimension_numbers<[1], [0], [0], [1], [0, 0, 1, 1], [], []>} : vector<4x64xf32>, vector<64x128xf32>, vector<4x128xf32> -> vector<4x128xf32>
      %288 = arith.addf %278, %287 : vector<4x128xf32>
      %c2_i32_280 = arith.constant 2 : i32
      %289 = arith.muli %c2_i32_280, %arg6 : i32
      %c1_i32_281 = arith.constant 1 : i32
      %290 = arith.addi %289, %c1_i32_281 : i32
      %c0_i32_282 = arith.constant 0 : i32
      %291 = arith.addi %290, %c0_i32_282 : i32
      %c0_283 = arith.constant 0 : index
      %292 = arith.index_cast %291 : i32 to index
      %c1_284 = arith.constant 1 : index
      %c0_285 = arith.constant 0 : index
      %293 = vector.load %arg2[%c0_283, %292, %c1_284, %c0_285] : memref<1x10x5x64xf32, #tpu.memory_space<vmem>>, vector<1x1x4x64xf32>
      %294 = vector.shape_cast %293 : vector<1x1x4x64xf32> to vector<4x64xf32>
      %c2_286 = arith.constant 2 : index
      %c0_287 = arith.constant 0 : index
      %c0_288 = arith.constant 0 : index
      %295 = vector.load %arg3[%c2_286, %c0_287, %c0_288] : memref<9x64x128xf32, #tpu.memory_space<vmem>>, vector<1x64x128xf32>
      %296 = vector.shape_cast %295 : vector<1x64x128xf32> to vector<64x128xf32>
      %cst_289 = arith.constant dense<0.000000e+00> : vector<4x128xf32>
      %297 = tpu.matmul %294, %296, %cst_289 {dimension_numbers = #tpu.dot_dimension_numbers<[1], [0], [0], [1], [0, 0, 1, 1], [], []>} : vector<4x64xf32>, vector<64x128xf32>, vector<4x128xf32> -> vector<4x128xf32>
      %298 = arith.addf %288, %297 : vector<4x128xf32>
      %c2_i32_290 = arith.constant 2 : i32
      %299 = arith.muli %c2_i32_290, %arg6 : i32
      %c1_i32_291 = arith.constant 1 : i32
      %300 = arith.addi %299, %c1_i32_291 : i32
      %c1_i32_292 = arith.constant 1 : i32
      %301 = arith.addi %300, %c1_i32_292 : i32
      %c0_293 = arith.constant 0 : index
      %302 = arith.index_cast %301 : i32 to index
      %c0_294 = arith.constant 0 : index
      %c0_295 = arith.constant 0 : index
      %303 = vector.load %arg2[%c0_293, %302, %c0_294, %c0_295] : memref<1x10x5x64xf32, #tpu.memory_space<vmem>>, vector<1x1x4x64xf32>
      %304 = vector.shape_cast %303 : vector<1x1x4x64xf32> to vector<4x64xf32>
      %c3_296 = arith.constant 3 : index
      %c0_297 = arith.constant 0 : index
      %c0_298 = arith.constant 0 : index
      %305 = vector.load %arg3[%c3_296, %c0_297, %c0_298] : memref<9x64x128xf32, #tpu.memory_space<vmem>>, vector<1x64x128xf32>
      %306 = vector.shape_cast %305 : vector<1x64x128xf32> to vector<64x128xf32>
      %cst_299 = arith.constant dense<0.000000e+00> : vector<4x128xf32>
      %307 = tpu.matmul %304, %306, %cst_299 {dimension_numbers = #tpu.dot_dimension_numbers<[1], [0], [0], [1], [0, 0, 1, 1], [], []>} : vector<4x64xf32>, vector<64x128xf32>, vector<4x128xf32> -> vector<4x128xf32>
      %308 = arith.addf %298, %307 : vector<4x128xf32>
      %c2_i32_300 = arith.constant 2 : i32
      %309 = arith.muli %c2_i32_300, %arg6 : i32
      %c1_i32_301 = arith.constant 1 : i32
      %310 = arith.addi %309, %c1_i32_301 : i32
      %c1_i32_302 = arith.constant 1 : i32
      %311 = arith.addi %310, %c1_i32_302 : i32
      %c0_303 = arith.constant 0 : index
      %312 = arith.index_cast %311 : i32 to index
      %c1_304 = arith.constant 1 : index
      %c0_305 = arith.constant 0 : index
      %313 = vector.load %arg1[%c0_303, %312, %c1_304, %c0_305] : memref<1x10x5x64xf32, #tpu.memory_space<vmem>>, vector<1x1x4x64xf32>
      %314 = vector.shape_cast %313 : vector<1x1x4x64xf32> to vector<4x64xf32>
      %c4_306 = arith.constant 4 : index
      %c0_307 = arith.constant 0 : index
      %c0_308 = arith.constant 0 : index
      %315 = vector.load %arg3[%c4_306, %c0_307, %c0_308] : memref<9x64x128xf32, #tpu.memory_space<vmem>>, vector<1x64x128xf32>
      %316 = vector.shape_cast %315 : vector<1x64x128xf32> to vector<64x128xf32>
      %cst_309 = arith.constant dense<0.000000e+00> : vector<4x128xf32>
      %317 = tpu.matmul %314, %316, %cst_309 {dimension_numbers = #tpu.dot_dimension_numbers<[1], [0], [0], [1], [0, 0, 1, 1], [], []>} : vector<4x64xf32>, vector<64x128xf32>, vector<4x128xf32> -> vector<4x128xf32>
      %318 = arith.addf %308, %317 : vector<4x128xf32>
      %c2_i32_310 = arith.constant 2 : i32
      %319 = arith.muli %c2_i32_310, %arg6 : i32
      %c1_i32_311 = arith.constant 1 : i32
      %320 = arith.addi %319, %c1_i32_311 : i32
      %c1_i32_312 = arith.constant 1 : i32
      %321 = arith.addi %320, %c1_i32_312 : i32
      %c0_313 = arith.constant 0 : index
      %322 = arith.index_cast %321 : i32 to index
      %c1_314 = arith.constant 1 : index
      %c0_315 = arith.constant 0 : index
      %323 = vector.load %arg2[%c0_313, %322, %c1_314, %c0_315] : memref<1x10x5x64xf32, #tpu.memory_space<vmem>>, vector<1x1x4x64xf32>
      %324 = vector.shape_cast %323 : vector<1x1x4x64xf32> to vector<4x64xf32>
      %c5_316 = arith.constant 5 : index
      %c0_317 = arith.constant 0 : index
      %c0_318 = arith.constant 0 : index
      %325 = vector.load %arg3[%c5_316, %c0_317, %c0_318] : memref<9x64x128xf32, #tpu.memory_space<vmem>>, vector<1x64x128xf32>
      %326 = vector.shape_cast %325 : vector<1x64x128xf32> to vector<64x128xf32>
      %cst_319 = arith.constant dense<0.000000e+00> : vector<4x128xf32>
      %327 = tpu.matmul %324, %326, %cst_319 {dimension_numbers = #tpu.dot_dimension_numbers<[1], [0], [0], [1], [0, 0, 1, 1], [], []>} : vector<4x64xf32>, vector<64x128xf32>, vector<4x128xf32> -> vector<4x128xf32>
      %328 = arith.addf %318, %327 : vector<4x128xf32>
      %c2_i32_320 = arith.constant 2 : i32
      %329 = arith.muli %c2_i32_320, %arg6 : i32
      %c1_i32_321 = arith.constant 1 : i32
      %330 = arith.addi %329, %c1_i32_321 : i32
      %c2_i32_322 = arith.constant 2 : i32
      %331 = arith.addi %330, %c2_i32_322 : i32
      %c0_323 = arith.constant 0 : index
      %332 = arith.index_cast %331 : i32 to index
      %c0_324 = arith.constant 0 : index
      %c0_325 = arith.constant 0 : index
      %333 = vector.load %arg2[%c0_323, %332, %c0_324, %c0_325] : memref<1x10x5x64xf32, #tpu.memory_space<vmem>>, vector<1x1x4x64xf32>
      %334 = vector.shape_cast %333 : vector<1x1x4x64xf32> to vector<4x64xf32>
      %c6_326 = arith.constant 6 : index
      %c0_327 = arith.constant 0 : index
      %c0_328 = arith.constant 0 : index
      %335 = vector.load %arg3[%c6_326, %c0_327, %c0_328] : memref<9x64x128xf32, #tpu.memory_space<vmem>>, vector<1x64x128xf32>
      %336 = vector.shape_cast %335 : vector<1x64x128xf32> to vector<64x128xf32>
      %cst_329 = arith.constant dense<0.000000e+00> : vector<4x128xf32>
      %337 = tpu.matmul %334, %336, %cst_329 {dimension_numbers = #tpu.dot_dimension_numbers<[1], [0], [0], [1], [0, 0, 1, 1], [], []>} : vector<4x64xf32>, vector<64x128xf32>, vector<4x128xf32> -> vector<4x128xf32>
      %338 = arith.addf %328, %337 : vector<4x128xf32>
      %c2_i32_330 = arith.constant 2 : i32
      %339 = arith.muli %c2_i32_330, %arg6 : i32
      %c1_i32_331 = arith.constant 1 : i32
      %340 = arith.addi %339, %c1_i32_331 : i32
      %c2_i32_332 = arith.constant 2 : i32
      %341 = arith.addi %340, %c2_i32_332 : i32
      %c0_333 = arith.constant 0 : index
      %342 = arith.index_cast %341 : i32 to index
      %c1_334 = arith.constant 1 : index
      %c0_335 = arith.constant 0 : index
      %343 = vector.load %arg1[%c0_333, %342, %c1_334, %c0_335] : memref<1x10x5x64xf32, #tpu.memory_space<vmem>>, vector<1x1x4x64xf32>
      %344 = vector.shape_cast %343 : vector<1x1x4x64xf32> to vector<4x64xf32>
      %c7_336 = arith.constant 7 : index
      %c0_337 = arith.constant 0 : index
      %c0_338 = arith.constant 0 : index
      %345 = vector.load %arg3[%c7_336, %c0_337, %c0_338] : memref<9x64x128xf32, #tpu.memory_space<vmem>>, vector<1x64x128xf32>
      %346 = vector.shape_cast %345 : vector<1x64x128xf32> to vector<64x128xf32>
      %cst_339 = arith.constant dense<0.000000e+00> : vector<4x128xf32>
      %347 = tpu.matmul %344, %346, %cst_339 {dimension_numbers = #tpu.dot_dimension_numbers<[1], [0], [0], [1], [0, 0, 1, 1], [], []>} : vector<4x64xf32>, vector<64x128xf32>, vector<4x128xf32> -> vector<4x128xf32>
      %348 = arith.addf %338, %347 : vector<4x128xf32>
      %c2_i32_340 = arith.constant 2 : i32
      %349 = arith.muli %c2_i32_340, %arg6 : i32
      %c1_i32_341 = arith.constant 1 : i32
      %350 = arith.addi %349, %c1_i32_341 : i32
      %c2_i32_342 = arith.constant 2 : i32
      %351 = arith.addi %350, %c2_i32_342 : i32
      %c0_343 = arith.constant 0 : index
      %352 = arith.index_cast %351 : i32 to index
      %c1_344 = arith.constant 1 : index
      %c0_345 = arith.constant 0 : index
      %353 = vector.load %arg2[%c0_343, %352, %c1_344, %c0_345] : memref<1x10x5x64xf32, #tpu.memory_space<vmem>>, vector<1x1x4x64xf32>
      %354 = vector.shape_cast %353 : vector<1x1x4x64xf32> to vector<4x64xf32>
      %c8_346 = arith.constant 8 : index
      %c0_347 = arith.constant 0 : index
      %c0_348 = arith.constant 0 : index
      %355 = vector.load %arg3[%c8_346, %c0_347, %c0_348] : memref<9x64x128xf32, #tpu.memory_space<vmem>>, vector<1x64x128xf32>
      %356 = vector.shape_cast %355 : vector<1x64x128xf32> to vector<64x128xf32>
      %cst_349 = arith.constant dense<0.000000e+00> : vector<4x128xf32>
      %357 = tpu.matmul %354, %356, %cst_349 {dimension_numbers = #tpu.dot_dimension_numbers<[1], [0], [0], [1], [0, 0, 1, 1], [], []>} : vector<4x64xf32>, vector<64x128xf32>, vector<4x128xf32> -> vector<4x128xf32>
      %358 = arith.addf %348, %357 : vector<4x128xf32>
      %359 = arith.maximumf %269, %358 : vector<4x128xf32>
      %c0_350 = arith.constant 0 : index
      %c0_351 = arith.constant 0 : index
      %360 = vector.load %arg4[%c0_350, %c0_351] : memref<1x128xf32, #tpu.memory_space<vmem>>, vector<1x128xf32>
      %361 = vector.broadcast %360 : vector<1x128xf32> to vector<4x128xf32>
      %362 = arith.addf %359, %361 : vector<4x128xf32>
      %cst_352 = arith.constant 0.000000e+00 : f32
      %363 = vector.broadcast %cst_352 : f32 to vector<4x128xf32>
      %364 = arith.maximumf %362, %363 : vector<4x128xf32>
      %c0_353 = arith.constant 0 : index
      %365 = arith.index_cast %arg6 : i32 to index
      %c0_354 = arith.constant 0 : index
      %c0_355 = arith.constant 0 : index
      %366 = vector.load %arg5[%c0_353, %365, %c0_354, %c0_355] : memref<1x4x4x128xf32, #tpu.memory_space<vmem>>, vector<1x1x4x128xf32>
      %367 = vector.shape_cast %366 : vector<1x1x4x128xf32> to vector<4x128xf32>
      %368 = vector.shape_cast %364 : vector<4x128xf32> to vector<1x1x4x128xf32>
      tpu.vector_store %arg5[%c0_353, %365, %c0_354, %c0_355], %368 {strides = array<i32>} : memref<1x4x4x128xf32, #tpu.memory_space<vmem>>, vector<1x1x4x128xf32>,
    }
    %c4_i32_0 = arith.constant 4 : i32
    return
  }
  func.func @transform_0(%arg0: i32) -> (i32, i32, i32, i32) {
    %c0_i32 = arith.constant 0 : i32
    %c0_i32_0 = arith.constant 0 : i32
    %c0_i32_1 = arith.constant 0 : i32
    %c0_i32_2 = arith.constant 0 : i32
    return %arg0, %c0_i32, %c0_i32_0, %c0_i32_1 : i32, i32, i32, i32
  }
  func.func @transform_1(%arg0: i32) -> (i32, i32, i32, i32) {
    %c0_i32 = arith.constant 0 : i32
    %c0_i32_0 = arith.constant 0 : i32
    %c0_i32_1 = arith.constant 0 : i32
    %c0_i32_2 = arith.constant 0 : i32
    return %arg0, %c0_i32, %c0_i32_0, %c0_i32_1 : i32, i32, i32, i32
  }
  func.func @transform_2(%arg0: i32) -> (i32, i32, i32) {
    %c0_i32 = arith.constant 0 : i32
    %c0_i32_0 = arith.constant 0 : i32
    %c0_i32_1 = arith.constant 0 : i32
    %c0_i32_2 = arith.constant 0 : i32
    return %c0_i32, %c0_i32_0, %c0_i32_1 : i32, i32, i32
  }
  func.func @transform_3(%arg0: i32) -> (i32, i32) {
    %c0_i32 = arith.constant 0 : i32
    %c0_i32_0 = arith.constant 0 : i32
    %c0_i32_1 = arith.constant 0 : i32
    return %c0_i32, %c0_i32_0 : i32, i32
  }
  func.func @transform_4(%arg0: i32) -> (i32, i32, i32, i32) {
    %c0_i32 = arith.constant 0 : i32
    %c0_i32_0 = arith.constant 0 : i32
    %c0_i32_1 = arith.constant 0 : i32
    %c0_i32_2 = arith.constant 0 : i32
    return %arg0, %c0_i32, %c0_i32_0, %c0_i32_1 : i32, i32, i32, i32
  }
}

</mosaic_0001>

<llo_original>
// kernel: simple_cnn_encoder.3
$region0: #{simple_cnn_encoder.3}
  #allocation0 [shape = 'u32[]', space=smem, size = 0x4, offset = 0x4, fixed_abs, tag = 'smem constant byte address 0x4 - core index']
  #allocation1 [shape = 'u32[144,128]{1,0:T(1,128)}', space=vmem, size = 0x12000, scoped, tag = 'internal scratch']
  %s0 = inlined_call_operand.vmem [shape: f32[2,18,9,3], index: 0, kind: input, shape index: {}]
  %s1 = inlined_call_operand.vmem [shape: f32[2,18,9,3], index: 1, kind: input, shape index: {}]
  %s2 = inlined_call_operand.vmem [shape: f32[9,3,64], index: 2, kind: input, shape index: {}]
  %s3 = inlined_call_operand.vmem [shape: f32[1,64], index: 3, kind: input, shape index: {}]
  %s4 = inlined_call_operand.vmem [shape: f32[2,8,8,64], index: 4, kind: output, shape index: {}]
  %s5 = sld [smem:[#allocation0]]
  $region56: #{simple_cnn_encoder.3} parent=0
    _
  %s7 = ssub.s32 1, %s5
  %s8 = scalar_select 0, %s7, %s5
  loop: start=0, step=1, limit=4
  $region2: #{simple_cnn_encoder.3} parent=0 // loop_pre_header
    _
  $region3: #{simple_cnn_encoder.3} parent=0 // loop_header
    %s10 = sphi 0, %s14
    %p11 = scmp.ge.s32.totalorder %s10, 4
    %s20 = sphi 0, %s22
    %s23 = sphi 0, %s20
    %s24 = sphi 0, %s23
    %s40 = sphi 0, %s24
    %s46 = sphi 0, %s48
    %s49 = sphi 0, %s46
    %s50 = sphi 0, %s49
    %s66 = sphi 0, %s50
    %s70 = sphi 0, %s70
    %s72 = sphi 0, %s70
    %s73 = sphi 0, %s72
    %s87 = sphi 0, %s73
    %s91 = sphi 0, %s91
    %s93 = sphi 0, %s91
    %s94 = sphi 0, %s93
    %s108 = sphi 0, %s94
    %s114 = sphi 0, %s116
    %s117 = sphi 0, %s114
    %s118 = sphi 0, %s117
    %s134 = sphi 0, %s118
  $region4: #{simple_cnn_encoder.3} parent=0 // loop_header_branch
    %13 = sbr.rel (%p11) target = $region8
  $region5: #{simple_cnn_encoder.3} parent=0 // loop_body
    %s15 = ssub.s32 %s10, 1
    %s16 = ssub.s32 %s10, 2
    %s17 = sadd.s32 %s10, 1
    %s18 = ssub.s32 %s10, %s17
    %p19 = scmp.eq.s32.totalorder %s18, 0
    %s21 = sadd.s32 %s20, 1
    %s22 = scalar_select %p19, %s20, %s21
    %p25 = pneg %p19
    %p26 = scmp.eq.s32.totalorder %s10, 1
    %p27 = por %p25, %p26
    %p28 = scmp.ne.s32.totalorder %s20, %s23
    %p29 = scmp.eq.s32.totalorder %s10, 0
    %p30 = por %p28, %p29
    %p31 = scmp.ne.s32.totalorder %s20, %s23
    %p32 = scmp.eq.s32.totalorder %s15, 1
    %p33 = por %p31, %p32
    %p34 = scmp.ne.s32.totalorder %s23, %s24
    %p35 = scmp.eq.s32.totalorder %s15, 0
    %p36 = por %p34, %p35
    %p37 = scmp.ne.s32.totalorder %s23, %s24
    %p38 = scmp.eq.s32.totalorder %s16, 1
    %p39 = por %p37, %p38
    %p41 = scmp.ne.s32.totalorder %s24, %s40
    %p42 = scmp.eq.s32.totalorder %s16, 0
    %p43 = por %p41, %p42
    %s44 = ssub.s32 %s10, %s17
    %p45 = scmp.eq.s32.totalorder %s44, 0
    %s47 = sadd.s32 %s46, 1
    %s48 = scalar_select %p45, %s46, %s47
    %p51 = pneg %p45
    %p52 = scmp.eq.s32.totalorder %s10, 1
    %p53 = por %p51, %p52
    %p54 = scmp.ne.s32.totalorder %s46, %s49
    %p55 = scmp.eq.s32.totalorder %s10, 0
    %p56 = por %p54, %p55
    %p57 = scmp.ne.s32.totalorder %s46, %s49
    %p58 = scmp.eq.s32.totalorder %s15, 1
    %p59 = por %p57, %p58
    %p60 = scmp.ne.s32.totalorder %s49, %s50
    %p61 = scmp.eq.s32.totalorder %s15, 0
    %p62 = por %p60, %p61
    %p63 = scmp.ne.s32.totalorder %s49, %s50
    %p64 = scmp.eq.s32.totalorder %s16, 1
    %p65 = por %p63, %p64
    %p67 = scmp.ne.s32.totalorder %s50, %s66
    %p68 = scmp.eq.s32.totalorder %s16, 0
    %p69 = por %p67, %p68
    %s71 = sadd.s32 %s70, 1
    %p74 = scmp.eq.s32.totalorder %s10, 1
    %p75 = scmp.ne.s32.totalorder %s70, %s72
    %p76 = scmp.eq.s32.totalorder %s10, 0
    %p77 = por %p75, %p76
    %p78 = scmp.ne.s32.totalorder %s70, %s72
    %p79 = scmp.eq.s32.totalorder %s15, 1
    %p80 = por %p78, %p79
    %p81 = scmp.ne.s32.totalorder %s72, %s73
    %p82 = scmp.eq.s32.totalorder %s15, 0
    %p83 = por %p81, %p82
    %p84 = scmp.ne.s32.totalorder %s72, %s73
    %p85 = scmp.eq.s32.totalorder %s16, 1
    %p86 = por %p84, %p85
    %p88 = scmp.ne.s32.totalorder %s73, %s87
    %p89 = scmp.eq.s32.totalorder %s16, 0
    %p90 = por %p88, %p89
    %s92 = sadd.s32 %s91, 1
    %p95 = scmp.eq.s32.totalorder %s10, 1
    %p96 = scmp.ne.s32.totalorder %s91, %s93
    %p97 = scmp.eq.s32.totalorder %s10, 0
    %p98 = por %p96, %p97
    %p99 = scmp.ne.s32.totalorder %s91, %s93
    %p100 = scmp.eq.s32.totalorder %s15, 1
    %p101 = por %p99, %p100
    %p102 = scmp.ne.s32.totalorder %s93, %s94
    %p103 = scmp.eq.s32.totalorder %s15, 0
    %p104 = por %p102, %p103
    %p105 = scmp.ne.s32.totalorder %s93, %s94
    %p106 = scmp.eq.s32.totalorder %s16, 1
    %p107 = por %p105, %p106
    %p109 = scmp.ne.s32.totalorder %s94, %s108
    %p110 = scmp.eq.s32.totalorder %s16, 0
    %p111 = por %p109, %p110
    %s112 = ssub.s32 %s10, %s17
    %p113 = scmp.eq.s32.totalorder %s112, 0
    %s115 = sadd.s32 %s114, 1
    %s116 = scalar_select %p113, %s114, %s115
    %p119 = pneg %p113
    %p120 = scmp.eq.s32.totalorder %s10, 1
    %p121 = por %p119, %p120
    %p122 = scmp.ne.s32.totalorder %s114, %s117
    %p123 = scmp.eq.s32.totalorder %s10, 0
    %p124 = por %p122, %p123
    %p125 = scmp.ne.s32.totalorder %s114, %s117
    %p126 = scmp.eq.s32.totalorder %s15, 1
    %p127 = por %p125, %p126
    %p128 = scmp.ne.s32.totalorder %s117, %s118
    %p129 = scmp.eq.s32.totalorder %s15, 0
    %p130 = por %p128, %p129
    %p131 = scmp.ne.s32.totalorder %s117, %s118
    %p132 = scmp.eq.s32.totalorder %s16, 1
    %p133 = por %p131, %p132
    %p135 = scmp.ne.s32.totalorder %s118, %s134
    %p136 = scmp.eq.s32.totalorder %s16, 0
    %p137 = por %p135, %p136
    %p138 = scmp.le.s32.totalorder 1, %s10
    %p139 = scmp.lt.s32.totalorder %s10, 3
    %p140 = pnand %p138, %p139
    %p141 = pneg %p140
    // Predicated region
    $region9: #{simple_cnn_encoder.3} parent=5 // pred_check
      _
    $region10: #{simple_cnn_encoder.3} parent=5 // pred_check_branch
      %143 = sbr.rel (%p140) target = $region12
    $region11: #{simple_cnn_encoder.3} parent=5 // pred_region
      %s144 = ssub.s32 %s10, 1
      // Predicated region
      $region13: #{simple_cnn_encoder.3} parent=11 // pred_check
        %p145 = pneg %p83
      $region14: #{simple_cnn_encoder.3} parent=11 // pred_check_branch
        %147 = sbr.rel (%p145) target = $region16
      $region15: #{simple_cnn_encoder.3} parent=11 // pred_region
        _
      $region16: #{simple_cnn_encoder.3} parent=11 // pred_fallthru
        _
      // Predicated region
      $region17: #{simple_cnn_encoder.3} parent=11 // pred_check
        %p148 = pneg %p104
      $region18: #{simple_cnn_encoder.3} parent=11 // pred_check_branch
        %150 = sbr.rel (%p148) target = $region20
      $region19: #{simple_cnn_encoder.3} parent=11 // pred_region
        _
      $region20: #{simple_cnn_encoder.3} parent=11 // pred_fallthru
        _
    $region12: #{simple_cnn_encoder.3} parent=5 // pred_fallthru
      _
    %p151 = scmp.lt.s32.totalorder %s10, 2
    // Predicated region
    $region21: #{simple_cnn_encoder.3} parent=5 // pred_check
      %p152 = pneg %p151
    $region22: #{simple_cnn_encoder.3} parent=5 // pred_check_branch
      %154 = sbr.rel (%p152) target = $region24
    $region23: #{simple_cnn_encoder.3} parent=5 // pred_region
      // Predicated region
      $region25: #{simple_cnn_encoder.3} parent=23 // pred_check
        %p155 = pneg %p30
      $region26: #{simple_cnn_encoder.3} parent=23 // pred_check_branch
        %157 = sbr.rel (%p155) target = $region28
      $region27: #{simple_cnn_encoder.3} parent=23 // pred_region
        %p158 = scmp.lt.s32.totalorder %s10, 1
        %s159 = scalar_select %p158, %s10, 1
        %s160 = smul.addr %s159, 36
        %s161 = smul.addr %s160, 8
        %s162 = scalar_lea.vmem %s0, %s161
      $region28: #{simple_cnn_encoder.3} parent=23 // pred_fallthru
        _
      // Predicated region
      $region29: #{simple_cnn_encoder.3} parent=23 // pred_check
        %p163 = pneg %p56
      $region30: #{simple_cnn_encoder.3} parent=23 // pred_check_branch
        %165 = sbr.rel (%p163) target = $region32
      $region31: #{simple_cnn_encoder.3} parent=23 // pred_region
        %p166 = scmp.lt.s32.totalorder %s10, 1
        %s167 = scalar_select %p166, %s10, 1
        %s168 = smul.addr %s167, 36
        %s169 = smul.addr %s168, 8
        %s170 = scalar_lea.vmem %s1, %s169
      $region32: #{simple_cnn_encoder.3} parent=23 // pred_fallthru
        _
    $region24: #{simple_cnn_encoder.3} parent=5 // pred_fallthru
      _
    %p171 = scmp.le.s32.totalorder 1, %s10
    %p172 = scmp.lt.s32.totalorder %s10, 3
    %p173 = pnand %p171, %p172
    %p174 = pneg %p173
    // Predicated region
    $region33: #{simple_cnn_encoder.3} parent=5 // pred_check
      _
    $region34: #{simple_cnn_encoder.3} parent=5 // pred_check_branch
      %176 = sbr.rel (%p173) target = $region36
    $region35: #{simple_cnn_encoder.3} parent=5 // pred_region
      %s177 = ssub.s32 %s10, 1
      %p178 = scmp.lt.s32.totalorder %s15, 1
      %s179 = scalar_select %p178, %s15, 1
      %s180 = smul.addr %s179, 36
      %s181 = smul.addr %s180, 8
      %s182 = scalar_lea.vmem %s0, %s181
      %p183 = pneg %p36
      %p184 = pneg %p33
      %p185 = scmp.lt.s32.totalorder %s15, 1
      %s186 = scalar_select %p185, %s15, 1
      %s187 = smul.addr %s186, 36
      %s188 = smul.addr %s187, 8
      %s189 = scalar_lea.vmem %s1, %s188
      %p190 = pneg %p62
      %p191 = pneg %p59
      %p192 = pneg %p83
      %p193 = pneg %p80
      %p194 = pneg %p104
      %p195 = pneg %p101
      %p196 = pneg %p130
      %p197 = pneg %p127
      %p198 = scmp.lt.s32.totalorder %s15, 1
      %s199 = scalar_select %p198, %s15, 1
      %s200 = smul.addr %s199, 8
      %s201 = smul.addr %s200, 8
      %s202 = scalar_lea.vmem %s4, %s201
      %p203 = scmp.lt.s32.totalorder %s15, 1
      %s204 = scalar_select %p203, %s15, 1
      %s205 = smul.addr %s204, 36
      %s206 = smul.addr %s205, 8
      %s207 = scalar_lea.vmem %s0, %s206
      %p208 = scmp.lt.s32.totalorder %s15, 1
      %s209 = scalar_select %p208, %s15, 1
      %s210 = smul.addr %s209, 36
      %s211 = smul.addr %s210, 8
      %s212 = scalar_lea.vmem %s1, %s211
      %p213 = scmp.lt.s32.totalorder %s15, 1
      %s214 = scalar_select %p213, %s15, 1
      %s215 = smul.addr %s214, 8
      %s216 = smul.addr %s215, 8
      %s217 = scalar_lea.vmem %s4, %s216
      loop: start=0, step=1, limit=8
      $region37: #{simple_cnn_encoder.3} parent=35 // loop_pre_header
        _
      $region38: #{simple_cnn_encoder.3} parent=35 // loop_header
        %s219 = sphi 0, %s223
        %p220 = scmp.ge.s32.totalorder %s219, 8
      $region39: #{simple_cnn_encoder.3} parent=35 // loop_header_branch
        %222 = sbr.rel (%p220) target = $region43
      $region40: #{simple_cnn_encoder.3} parent=35 // loop_body
        %s224 = smul.u32 %s219, 2
        %s225 = smul.u32 %s224, 16
        %s226 = scalar_lea.vmem %s207, %s225
        %v227 = vld [vmem:[%s226] sm:$0xff]
        %v228 = vld [vmem:[%s2] sm:$0x7]
        %s229 = scalar_lea.vmem %s212, %s225
        %v230 = vld [vmem:[%s229] sm:$0xff]
        %s231 = scalar_lea.vmem %s2, 4
        %v232 = vld [vmem:[%s231] sm:$0x7]
        %vm233 = vcmask 23552
        %v235 = vsel %vm233, %v230, 0
        %vm237 = vcmask 1042432
        %v239 = vsel %vm237, %v232, 0
        %241 = vmatprep.subr.mxu0 0.0
        %242 = vmatpush1.msra.mxu0 %v239
        %243 = vmatprep.subr.mxu0 0.0
        %244 = vmatpush1.msra.mxu0 0.0
        %245 = vmatprep.subr.mxu0 0.0
        %246 = vmatpush1.msra.mxu0 0.0
        %247 = vmatprep.subr.mxu0 0.0
        %248 = vmatpush1.msra.mxu0 0.0
        %249 = vmatprep.subr.mxu0 0.0
        %250 = vmatpush1.msra.mxu0 0.0
        %251 = vmatprep.subr.mxu0 0.0
        %252 = vmatpush1.msra.mxu0 0.0
        %253 = vmatprep.subr.mxu0 0.0
        %254 = vmatpush1.msra.mxu0 0.0
        %255 = vmatprep.subr.mxu0 0.0
        %256 = vmatpush1.msra.mxu0 0.0
        %257 = vmatprep.subr.mxu0 0.0
        %258 = vmatpush1.msra.mxu0 0.0
        %259 = vmatprep.subr.mxu0 0.0
        %260 = vmatpush1.msra.mxu0 0.0
        %261 = vmatprep.subr.mxu0 0.0
        %262 = vmatpush1.msra.mxu0 0.0
        %263 = vmatprep.subr.mxu0 0.0
        %264 = vmatpush1.msra.mxu0 0.0
        %265 = vmatprep.subr.mxu0 0.0
        %266 = vmatpush1.msra.mxu0 0.0
        %267 = vmatprep.subr.mxu0 0.0
        %268 = vmatpush1.msra.mxu0 0.0
        %269 = vmatprep.subr.mxu0 0.0
        %270 = vmatpush1.msra.mxu0 0.0
        %271 = vmatprep.subr.mxu0 0.0
        %272 = vmatpush1.msra.mxu0 0.0
        %273 = vmatprep.subr.mxu0 0.0
        %274 = vmatpush1.msra.mxu0 0.0
        %275 = vmatprep.subr.mxu0 0.0
        %276 = vmatpush1.msra.mxu0 0.0
        %277 = vmatprep.subr.mxu0 0.0
        %278 = vmatpush1.msra.mxu0 0.0
        %279 = vmatprep.subr.mxu0 0.0
        %280 = vmatpush1.msra.mxu0 0.0
        %281 = vmatprep.subr.mxu0 0.0
        %282 = vmatpush1.msra.mxu0 0.0
        %283 = vmatprep.subr.mxu0 0.0
        %284 = vmatpush1.msra.mxu0 0.0
        %285 = vmatprep.subr.mxu0 0.0
        %286 = vmatpush1.msra.mxu0 0.0
        %287 = vmatprep.subr.mxu0 0.0
        %288 = vmatpush1.msra.mxu0 0.0
        %289 = vmatprep.subr.mxu0 0.0
        %290 = vmatpush1.msra.mxu0 0.0
        %291 = vmatprep.subr.mxu0 0.0
        %292 = vmatpush1.msra.mxu0 0.0
        %293 = vmatprep.subr.mxu0 0.0
        %294 = vmatpush1.msra.mxu0 0.0
        %295 = vmatprep.subr.mxu0 0.0
        %296 = vmatpush1.msra.mxu0 0.0
        %297 = vmatprep.subr.mxu0 0.0
        %298 = vmatpush1.msra.mxu0 0.0
        %299 = vmatprep.subr.mxu0 0.0
        %300 = vmatpush1.msra.mxu0 0.0
        %301 = vmatprep.subr.mxu0 0.0
        %302 = vmatpush1.msra.mxu0 0.0
        %303 = vmatprep.subr.mxu0 0.0
        %304 = vmatpush1.msra.mxu0 0.0
        %305 = vmatprep.mubr.f32.mxu0 0.0
        %306 = vmatmul.mubr.f32.gmra.mrb[0].mxu0 %v235
        %v307 = vpop.f32.mrb[0].mxu0
        %v308 = vadd.f32 0.0, %v307
        %v309 = vpop.f32.mrb[0].mxu0
        %310 = vdwg.mxu0
        %v312 = vsel %vm233, %v227, 0
        %v315 = vsel %vm237, %v228, 0
        %317 = vmatprep.subr.mxu0 0.0
        %318 = vmatpush1.msra.mxu0 %v315
        %319 = vmatprep.subr.mxu0 0.0
        %320 = vmatpush1.msra.mxu0 0.0
        %321 = vmatprep.subr.mxu0 0.0
        %322 = vmatpush1.msra.mxu0 0.0
        %323 = vmatprep.subr.mxu0 0.0
        %324 = vmatpush1.msra.mxu0 0.0
        %325 = vmatprep.subr.mxu0 0.0
        %326 = vmatpush1.msra.mxu0 0.0
        %327 = vmatprep.subr.mxu0 0.0
        %328 = vmatpush1.msra.mxu0 0.0
        %329 = vmatprep.subr.mxu0 0.0
        %330 = vmatpush1.msra.mxu0 0.0
        %331 = vmatprep.subr.mxu0 0.0
        %332 = vmatpush1.msra.mxu0 0.0
        %333 = vmatprep.subr.mxu0 0.0
        %334 = vmatpush1.msra.mxu0 0.0
        %335 = vmatprep.subr.mxu0 0.0
        %336 = vmatpush1.msra.mxu0 0.0
        %337 = vmatprep.subr.mxu0 0.0
        %338 = vmatpush1.msra.mxu0 0.0
        %339 = vmatprep.subr.mxu0 0.0
        %340 = vmatpush1.msra.mxu0 0.0
        %341 = vmatprep.subr.mxu0 0.0
        %342 = vmatpush1.msra.mxu0 0.0
        %343 = vmatprep.subr.mxu0 0.0
        %344 = vmatpush1.msra.mxu0 0.0
        %345 = vmatprep.subr.mxu0 0.0
        %346 = vmatpush1.msra.mxu0 0.0
        %347 = vmatprep.subr.mxu0 0.0
        %348 = vmatpush1.msra.mxu0 0.0
        %349 = vmatprep.subr.mxu0 0.0
        %350 = vmatpush1.msra.mxu0 0.0
        %351 = vmatprep.subr.mxu0 0.0
        %352 = vmatpush1.msra.mxu0 0.0
        %353 = vmatprep.subr.mxu0 0.0
        %354 = vmatpush1.msra.mxu0 0.0
        %355 = vmatprep.subr.mxu0 0.0
        %356 = vmatpush1.msra.mxu0 0.0
        %357 = vmatprep.subr.mxu0 0.0
        %358 = vmatpush1.msra.mxu0 0.0
        %359 = vmatprep.subr.mxu0 0.0
        %360 = vmatpush1.msra.mxu0 0.0
        %361 = vmatprep.subr.mxu0 0.0
        %362 = vmatpush1.msra.mxu0 0.0
        %363 = vmatprep.subr.mxu0 0.0
        %364 = vmatpush1.msra.mxu0 0.0
        %365 = vmatprep.subr.mxu0 0.0
        %366 = vmatpush1.msra.mxu0 0.0
        %367 = vmatprep.subr.mxu0 0.0
        %368 = vmatpush1.msra.mxu0 0.0
        %369 = vmatprep.subr.mxu0 0.0
        %370 = vmatpush1.msra.mxu0 0.0
        %371 = vmatprep.subr.mxu0 0.0
        %372 = vmatpush1.msra.mxu0 0.0
        %373 = vmatprep.subr.mxu0 0.0
        %374 = vmatpush1.msra.mxu0 0.0
        %375 = vmatprep.subr.mxu0 0.0
        %376 = vmatpush1.msra.mxu0 0.0
        %377 = vmatprep.subr.mxu0 0.0
        %378 = vmatpush1.msra.mxu0 0.0
        %379 = vmatprep.subr.mxu0 0.0
        %380 = vmatpush1.msra.mxu0 0.0
        %381 = vmatprep.mubr.f32.mxu0 0.0
        %382 = vmatmul.mubr.f32.gmra.mrb[0].mxu0 %v312
        %v383 = vpop.f32.mrb[0].mxu0
        %v384 = vadd.f32 %v308, %v383
        %v385 = vpop.f32.mrb[0].mxu0
        %386 = vdwg.mxu0
        %v387 = vld [vmem:[%s226 + $0x1] sm:$0xff]
        %s388 = scalar_lea.vmem %s2, 8
        %v389 = vld [vmem:[%s388] sm:$0x7]
        %v391 = vsel %vm233, %v387, 0
        %v394 = vsel %vm237, %v389, 0
        %396 = vmatprep.subr.mxu0 0.0
        %397 = vmatpush1.msra.mxu0 %v394
        %398 = vmatprep.subr.mxu0 0.0
        %399 = vmatpush1.msra.mxu0 0.0
        %400 = vmatprep.subr.mxu0 0.0
        %401 = vmatpush1.msra.mxu0 0.0
        %402 = vmatprep.subr.mxu0 0.0
        %403 = vmatpush1.msra.mxu0 0.0
        %404 = vmatprep.subr.mxu0 0.0
        %405 = vmatpush1.msra.mxu0 0.0
        %406 = vmatprep.subr.mxu0 0.0
        %407 = vmatpush1.msra.mxu0 0.0
        %408 = vmatprep.subr.mxu0 0.0
        %409 = vmatpush1.msra.mxu0 0.0
        %410 = vmatprep.subr.mxu0 0.0
        %411 = vmatpush1.msra.mxu0 0.0
        %412 = vmatprep.subr.mxu0 0.0
        %413 = vmatpush1.msra.mxu0 0.0
        %414 = vmatprep.subr.mxu0 0.0
        %415 = vmatpush1.msra.mxu0 0.0
        %416 = vmatprep.subr.mxu0 0.0
        %417 = vmatpush1.msra.mxu0 0.0
        %418 = vmatprep.subr.mxu0 0.0
        %419 = vmatpush1.msra.mxu0 0.0
        %420 = vmatprep.subr.mxu0 0.0
        %421 = vmatpush1.msra.mxu0 0.0
        %422 = vmatprep.subr.mxu0 0.0
        %423 = vmatpush1.msra.mxu0 0.0
        %424 = vmatprep.subr.mxu0 0.0
        %425 = vmatpush1.msra.mxu0 0.0
        %426 = vmatprep.subr.mxu0 0.0
        %427 = vmatpush1.msra.mxu0 0.0
        %428 = vmatprep.subr.mxu0 0.0
        %429 = vmatpush1.msra.mxu0 0.0
        %430 = vmatprep.subr.mxu0 0.0
        %431 = vmatpush1.msra.mxu0 0.0
        %432 = vmatprep.subr.mxu0 0.0
        %433 = vmatpush1.msra.mxu0 0.0
        %434 = vmatprep.subr.mxu0 0.0
        %435 = vmatpush1.msra.mxu0 0.0
        %436 = vmatprep.subr.mxu0 0.0
        %437 = vmatpush1.msra.mxu0 0.0
        %438 = vmatprep.subr.mxu0 0.0
        %439 = vmatpush1.msra.mxu0 0.0
        %440 = vmatprep.subr.mxu0 0.0
        %441 = vmatpush1.msra.mxu0 0.0
        %442 = vmatprep.subr.mxu0 0.0
        %443 = vmatpush1.msra.mxu0 0.0
        %444 = vmatprep.subr.mxu0 0.0
        %445 = vmatpush1.msra.mxu0 0.0
        %446 = vmatprep.subr.mxu0 0.0
        %447 = vmatpush1.msra.mxu0 0.0
        %448 = vmatprep.subr.mxu0 0.0
        %449 = vmatpush1.msra.mxu0 0.0
        %450 = vmatprep.subr.mxu0 0.0
        %451 = vmatpush1.msra.mxu0 0.0
        %452 = vmatprep.subr.mxu0 0.0
        %453 = vmatpush1.msra.mxu0 0.0
        %454 = vmatprep.subr.mxu0 0.0
        %455 = vmatpush1.msra.mxu0 0.0
        %456 = vmatprep.subr.mxu0 0.0
        %457 = vmatpush1.msra.mxu0 0.0
        %458 = vmatprep.subr.mxu0 0.0
        %459 = vmatpush1.msra.mxu0 0.0
        %460 = vmatprep.mubr.f32.mxu0 0.0
        %461 = vmatmul.mubr.f32.gmra.mrb[0].mxu0 %v391
        %v462 = vpop.f32.mrb[0].mxu0
        %v463 = vadd.f32 0.0, %v462
        %v464 = vpop.f32.mrb[0].mxu0
        %465 = vdwg.mxu0
        %v466 = vadd.f32 %v384, %v463
        %s467 = sadd.s32 %s224, 1
        %s468 = smul.u32 %s467, 16
        %s469 = scalar_lea.vmem %s207, %s468
        %v470 = vld [vmem:[%s469] sm:$0xff]
        %s471 = scalar_lea.vmem %s2, 12
        %v472 = vld [vmem:[%s471] sm:$0x7]
        %v474 = vsel %vm233, %v470, 0
        %v477 = vsel %vm237, %v472, 0
        %479 = vmatprep.subr.mxu0 0.0
        %480 = vmatpush1.msra.mxu0 %v477
        %481 = vmatprep.subr.mxu0 0.0
        %482 = vmatpush1.msra.mxu0 0.0
        %483 = vmatprep.subr.mxu0 0.0
        %484 = vmatpush1.msra.mxu0 0.0
        %485 = vmatprep.subr.mxu0 0.0
        %486 = vmatpush1.msra.mxu0 0.0
        %487 = vmatprep.subr.mxu0 0.0
        %488 = vmatpush1.msra.mxu0 0.0
        %489 = vmatprep.subr.mxu0 0.0
        %490 = vmatpush1.msra.mxu0 0.0
        %491 = vmatprep.subr.mxu0 0.0
        %492 = vmatpush1.msra.mxu0 0.0
        %493 = vmatprep.subr.mxu0 0.0
        %494 = vmatpush1.msra.mxu0 0.0
        %495 = vmatprep.subr.mxu0 0.0
        %496 = vmatpush1.msra.mxu0 0.0
        %497 = vmatprep.subr.mxu0 0.0
        %498 = vmatpush1.msra.mxu0 0.0
        %499 = vmatprep.subr.mxu0 0.0
        %500 = vmatpush1.msra.mxu0 0.0
        %501 = vmatprep.subr.mxu0 0.0
        %502 = vmatpush1.msra.mxu0 0.0
        %503 = vmatprep.subr.mxu0 0.0
        %504 = vmatpush1.msra.mxu0 0.0
        %505 = vmatprep.subr.mxu0 0.0
        %506 = vmatpush1.msra.mxu0 0.0
        %507 = vmatprep.subr.mxu0 0.0
        %508 = vmatpush1.msra.mxu0 0.0
        %509 = vmatprep.subr.mxu0 0.0
        %510 = vmatpush1.msra.mxu0 0.0
        %511 = vmatprep.subr.mxu0 0.0
        %512 = vmatpush1.msra.mxu0 0.0
        %513 = vmatprep.subr.mxu0 0.0
        %514 = vmatpush1.msra.mxu0 0.0
        %515 = vmatprep.subr.mxu0 0.0
        %516 = vmatpush1.msra.mxu0 0.0
        %517 = vmatprep.subr.mxu0 0.0
        %518 = vmatpush1.msra.mxu0 0.0
        %519 = vmatprep.subr.mxu0 0.0
        %520 = vmatpush1.msra.mxu0 0.0
        %521 = vmatprep.subr.mxu0 0.0
        %522 = vmatpush1.msra.mxu0 0.0
        %523 = vmatprep.subr.mxu0 0.0
        %524 = vmatpush1.msra.mxu0 0.0
        %525 = vmatprep.subr.mxu0 0.0
        %526 = vmatpush1.msra.mxu0 0.0
        %527 = vmatprep.subr.mxu0 0.0
        %528 = vmatpush1.msra.mxu0 0.0
        %529 = vmatprep.subr.mxu0 0.0
        %530 = vmatpush1.msra.mxu0 0.0
        %531 = vmatprep.subr.mxu0 0.0
        %532 = vmatpush1.msra.mxu0 0.0
        %533 = vmatprep.subr.mxu0 0.0
        %534 = vmatpush1.msra.mxu0 0.0
        %535 = vmatprep.subr.mxu0 0.0
        %536 = vmatpush1.msra.mxu0 0.0
        %537 = vmatprep.subr.mxu0 0.0
        %538 = vmatpush1.msra.mxu0 0.0
        %539 = vmatprep.subr.mxu0 0.0
        %540 = vmatpush1.msra.mxu0 0.0
        %541 = vmatprep.subr.mxu0 0.0
        %542 = vmatpush1.msra.mxu0 0.0
        %543 = vmatprep.mubr.f32.mxu0 0.0
        %544 = vmatmul.mubr.f32.gmra.mrb[0].mxu0 %v474
        %v545 = vpop.f32.mrb[0].mxu0
        %v546 = vadd.f32 0.0, %v545
        %v547 = vpop.f32.mrb[0].mxu0
        %548 = vdwg.mxu0
        %v549 = vadd.f32 %v466, %v546
        %s550 = scalar_lea.vmem %s212, %s468
        %v551 = vld [vmem:[%s550] sm:$0xff]
        %s552 = scalar_lea.vmem %s2, 16
        %v553 = vld [vmem:[%s552] sm:$0x7]
        %v555 = vsel %vm233, %v551, 0
        %v558 = vsel %vm237, %v553, 0
        %560 = vmatprep.subr.mxu0 0.0
        %561 = vmatpush1.msra.mxu0 %v558
        %562 = vmatprep.subr.mxu0 0.0
        %563 = vmatpush1.msra.mxu0 0.0
        %564 = vmatprep.subr.mxu0 0.0
        %565 = vmatpush1.msra.mxu0 0.0
        %566 = vmatprep.subr.mxu0 0.0
        %567 = vmatpush1.msra.mxu0 0.0
        %568 = vmatprep.subr.mxu0 0.0
        %569 = vmatpush1.msra.mxu0 0.0
        %570 = vmatprep.subr.mxu0 0.0
        %571 = vmatpush1.msra.mxu0 0.0
        %572 = vmatprep.subr.mxu0 0.0
        %573 = vmatpush1.msra.mxu0 0.0
        %574 = vmatprep.subr.mxu0 0.0
        %575 = vmatpush1.msra.mxu0 0.0
        %576 = vmatprep.subr.mxu0 0.0
        %577 = vmatpush1.msra.mxu0 0.0
        %578 = vmatprep.subr.mxu0 0.0
        %579 = vmatpush1.msra.mxu0 0.0
        %580 = vmatprep.subr.mxu0 0.0
        %581 = vmatpush1.msra.mxu0 0.0
        %582 = vmatprep.subr.mxu0 0.0
        %583 = vmatpush1.msra.mxu0 0.0
        %584 = vmatprep.subr.mxu0 0.0
        %585 = vmatpush1.msra.mxu0 0.0
        %586 = vmatprep.subr.mxu0 0.0
        %587 = vmatpush1.msra.mxu0 0.0
        %588 = vmatprep.subr.mxu0 0.0
        %589 = vmatpush1.msra.mxu0 0.0
        %590 = vmatprep.subr.mxu0 0.0
        %591 = vmatpush1.msra.mxu0 0.0
        %592 = vmatprep.subr.mxu0 0.0
        %593 = vmatpush1.msra.mxu0 0.0
        %594 = vmatprep.subr.mxu0 0.0
        %595 = vmatpush1.msra.mxu0 0.0
        %596 = vmatprep.subr.mxu0 0.0
        %597 = vmatpush1.msra.mxu0 0.0
        %598 = vmatprep.subr.mxu0 0.0
        %599 = vmatpush1.msra.mxu0 0.0
        %600 = vmatprep.subr.mxu0 0.0
        %601 = vmatpush1.msra.mxu0 0.0
        %602 = vmatprep.subr.mxu0 0.0
        %603 = vmatpush1.msra.mxu0 0.0
        %604 = vmatprep.subr.mxu0 0.0
        %605 = vmatpush1.msra.mxu0 0.0
        %606 = vmatprep.subr.mxu0 0.0
        %607 = vmatpush1.msra.mxu0 0.0
        %608 = vmatprep.subr.mxu0 0.0
        %609 = vmatpush1.msra.mxu0 0.0
        %610 = vmatprep.subr.mxu0 0.0
        %611 = vmatpush1.msra.mxu0 0.0
        %612 = vmatprep.subr.mxu0 0.0
        %613 = vmatpush1.msra.mxu0 0.0
        %614 = vmatprep.subr.mxu0 0.0
        %615 = vmatpush1.msra.mxu0 0.0
        %616 = vmatprep.subr.mxu0 0.0
        %617 = vmatpush1.msra.mxu0 0.0
        %618 = vmatprep.subr.mxu0 0.0
        %619 = vmatpush1.msra.mxu0 0.0
        %620 = vmatprep.subr.mxu0 0.0
        %621 = vmatpush1.msra.mxu0 0.0
        %622 = vmatprep.subr.mxu0 0.0
        %623 = vmatpush1.msra.mxu0 0.0
        %624 = vmatprep.mubr.f32.mxu0 0.0
        %625 = vmatmul.mubr.f32.gmra.mrb[0].mxu0 %v555
        %v626 = vpop.f32.mrb[0].mxu0
        %v627 = vadd.f32 0.0, %v626
        %v628 = vpop.f32.mrb[0].mxu0
        %629 = vdwg.mxu0
        %v630 = vadd.f32 %v549, %v627
        %v631 = vld [vmem:[%s469 + $0x1] sm:$0xff]
        %s632 = scalar_lea.vmem %s2, 20
        %v633 = vld [vmem:[%s632] sm:$0x7]
        %v635 = vsel %vm233, %v631, 0
        %v638 = vsel %vm237, %v633, 0
        %640 = vmatprep.subr.mxu0 0.0
        %641 = vmatpush1.msra.mxu0 %v638
        %642 = vmatprep.subr.mxu0 0.0
        %643 = vmatpush1.msra.mxu0 0.0
        %644 = vmatprep.subr.mxu0 0.0
        %645 = vmatpush1.msra.mxu0 0.0
        %646 = vmatprep.subr.mxu0 0.0
        %647 = vmatpush1.msra.mxu0 0.0
        %648 = vmatprep.subr.mxu0 0.0
        %649 = vmatpush1.msra.mxu0 0.0
        %650 = vmatprep.subr.mxu0 0.0
        %651 = vmatpush1.msra.mxu0 0.0
        %652 = vmatprep.subr.mxu0 0.0
        %653 = vmatpush1.msra.mxu0 0.0
        %654 = vmatprep.subr.mxu0 0.0
        %655 = vmatpush1.msra.mxu0 0.0
        %656 = vmatprep.subr.mxu0 0.0
        %657 = vmatpush1.msra.mxu0 0.0
        %658 = vmatprep.subr.mxu0 0.0
        %659 = vmatpush1.msra.mxu0 0.0
        %660 = vmatprep.subr.mxu0 0.0
        %661 = vmatpush1.msra.mxu0 0.0
        %662 = vmatprep.subr.mxu0 0.0
        %663 = vmatpush1.msra.mxu0 0.0
        %664 = vmatprep.subr.mxu0 0.0
        %665 = vmatpush1.msra.mxu0 0.0
        %666 = vmatprep.subr.mxu0 0.0
        %667 = vmatpush1.msra.mxu0 0.0
        %668 = vmatprep.subr.mxu0 0.0
        %669 = vmatpush1.msra.mxu0 0.0
        %670 = vmatprep.subr.mxu0 0.0
        %671 = vmatpush1.msra.mxu0 0.0
        %672 = vmatprep.subr.mxu0 0.0
        %673 = vmatpush1.msra.mxu0 0.0
        %674 = vmatprep.subr.mxu0 0.0
        %675 = vmatpush1.msra.mxu0 0.0
        %676 = vmatprep.subr.mxu0 0.0
        %677 = vmatpush1.msra.mxu0 0.0
        %678 = vmatprep.subr.mxu0 0.0
        %679 = vmatpush1.msra.mxu0 0.0
        %680 = vmatprep.subr.mxu0 0.0
        %681 = vmatpush1.msra.mxu0 0.0
        %682 = vmatprep.subr.mxu0 0.0
        %683 = vmatpush1.msra.mxu0 0.0
        %684 = vmatprep.subr.mxu0 0.0
        %685 = vmatpush1.msra.mxu0 0.0
        %686 = vmatprep.subr.mxu0 0.0
        %687 = vmatpush1.msra.mxu0 0.0
        %688 = vmatprep.subr.mxu0 0.0
        %689 = vmatpush1.msra.mxu0 0.0
        %690 = vmatprep.subr.mxu0 0.0
        %691 = vmatpush1.msra.mxu0 0.0
        %692 = vmatprep.subr.mxu0 0.0
        %693 = vmatpush1.msra.mxu0 0.0
        %694 = vmatprep.subr.mxu0 0.0
        %695 = vmatpush1.msra.mxu0 0.0
        %696 = vmatprep.subr.mxu0 0.0
        %697 = vmatpush1.msra.mxu0 0.0
        %698 = vmatprep.subr.mxu0 0.0
        %699 = vmatpush1.msra.mxu0 0.0
        %700 = vmatprep.subr.mxu0 0.0
        %701 = vmatpush1.msra.mxu0 0.0
        %702 = vmatprep.subr.mxu0 0.0
        %703 = vmatpush1.msra.mxu0 0.0
        %704 = vmatprep.mubr.f32.mxu0 0.0
        %705 = vmatmul.mubr.f32.gmra.mrb[0].mxu0 %v635
        %v706 = vpop.f32.mrb[0].mxu0
        %v707 = vadd.f32 0.0, %v706
        %v708 = vpop.f32.mrb[0].mxu0
        %709 = vdwg.mxu0
        %v710 = vadd.f32 %v630, %v707
        %s711 = sadd.s32 %s224, 2
        %s712 = smul.u32 %s711, 16
        %s713 = scalar_lea.vmem %s207, %s712
        %v714 = vld [vmem:[%s713] sm:$0xff]
        %s715 = scalar_lea.vmem %s2, 24
        %v716 = vld [vmem:[%s715] sm:$0x7]
        %v718 = vsel %vm233, %v714, 0
        %v721 = vsel %vm237, %v716, 0
        %723 = vmatprep.subr.mxu0 0.0
        %724 = vmatpush1.msra.mxu0 %v721
        %725 = vmatprep.subr.mxu0 0.0
        %726 = vmatpush1.msra.mxu0 0.0
        %727 = vmatprep.subr.mxu0 0.0
        %728 = vmatpush1.msra.mxu0 0.0
        %729 = vmatprep.subr.mxu0 0.0
        %730 = vmatpush1.msra.mxu0 0.0
        %731 = vmatprep.subr.mxu0 0.0
        %732 = vmatpush1.msra.mxu0 0.0
        %733 = vmatprep.subr.mxu0 0.0
        %734 = vmatpush1.msra.mxu0 0.0
        %735 = vmatprep.subr.mxu0 0.0
        %736 = vmatpush1.msra.mxu0 0.0
        %737 = vmatprep.subr.mxu0 0.0
        %738 = vmatpush1.msra.mxu0 0.0
        %739 = vmatprep.subr.mxu0 0.0
        %740 = vmatpush1.msra.mxu0 0.0
        %741 = vmatprep.subr.mxu0 0.0
        %742 = vmatpush1.msra.mxu0 0.0
        %743 = vmatprep.subr.mxu0 0.0
        %744 = vmatpush1.msra.mxu0 0.0
        %745 = vmatprep.subr.mxu0 0.0
        %746 = vmatpush1.msra.mxu0 0.0
        %747 = vmatprep.subr.mxu0 0.0
        %748 = vmatpush1.msra.mxu0 0.0
        %749 = vmatprep.subr.mxu0 0.0
        %750 = vmatpush1.msra.mxu0 0.0
        %751 = vmatprep.subr.mxu0 0.0
        %752 = vmatpush1.msra.mxu0 0.0
        %753 = vmatprep.subr.mxu0 0.0
        %754 = vmatpush1.msra.mxu0 0.0
        %755 = vmatprep.subr.mxu0 0.0
        %756 = vmatpush1.msra.mxu0 0.0
        %757 = vmatprep.subr.mxu0 0.0
        %758 = vmatpush1.msra.mxu0 0.0
        %759 = vmatprep.subr.mxu0 0.0
        %760 = vmatpush1.msra.mxu0 0.0
        %761 = vmatprep.subr.mxu0 0.0
        %762 = vmatpush1.msra.mxu0 0.0
        %763 = vmatprep.subr.mxu0 0.0
        %764 = vmatpush1.msra.mxu0 0.0
        %765 = vmatprep.subr.mxu0 0.0
        %766 = vmatpush1.msra.mxu0 0.0
        %767 = vmatprep.subr.mxu0 0.0
        %768 = vmatpush1.msra.mxu0 0.0
        %769 = vmatprep.subr.mxu0 0.0
        %770 = vmatpush1.msra.mxu0 0.0
        %771 = vmatprep.subr.mxu0 0.0
        %772 = vmatpush1.msra.mxu0 0.0
        %773 = vmatprep.subr.mxu0 0.0
        %774 = vmatpush1.msra.mxu0 0.0
        %775 = vmatprep.subr.mxu0 0.0
        %776 = vmatpush1.msra.mxu0 0.0
        %777 = vmatprep.subr.mxu0 0.0
        %778 = vmatpush1.msra.mxu0 0.0
        %779 = vmatprep.subr.mxu0 0.0
        %780 = vmatpush1.msra.mxu0 0.0
        %781 = vmatprep.subr.mxu0 0.0
        %782 = vmatpush1.msra.mxu0 0.0
        %783 = vmatprep.subr.mxu0 0.0
        %784 = vmatpush1.msra.mxu0 0.0
        %785 = vmatprep.subr.mxu0 0.0
        %786 = vmatpush1.msra.mxu0 0.0
        %787 = vmatprep.mubr.f32.mxu0 0.0
        %788 = vmatmul.mubr.f32.gmra.mrb[0].mxu0 %v718
        %v789 = vpop.f32.mrb[0].mxu0
        %v790 = vadd.f32 0.0, %v789
        %v791 = vpop.f32.mrb[0].mxu0
        %792 = vdwg.mxu0
        %v793 = vadd.f32 %v710, %v790
        %s794 = scalar_lea.vmem %s212, %s712
        %v795 = vld [vmem:[%s794] sm:$0xff]
        %s796 = scalar_lea.vmem %s2, 28
        %v797 = vld [vmem:[%s796] sm:$0x7]
        %v799 = vsel %vm233, %v795, 0
        %v802 = vsel %vm237, %v797, 0
        %804 = vmatprep.subr.mxu0 0.0
        %805 = vmatpush1.msra.mxu0 %v802
        %806 = vmatprep.subr.mxu0 0.0
        %807 = vmatpush1.msra.mxu0 0.0
        %808 = vmatprep.subr.mxu0 0.0
        %809 = vmatpush1.msra.mxu0 0.0
        %810 = vmatprep.subr.mxu0 0.0
        %811 = vmatpush1.msra.mxu0 0.0
        %812 = vmatprep.subr.mxu0 0.0
        %813 = vmatpush1.msra.mxu0 0.0
        %814 = vmatprep.subr.mxu0 0.0
        %815 = vmatpush1.msra.mxu0 0.0
        %816 = vmatprep.subr.mxu0 0.0
        %817 = vmatpush1.msra.mxu0 0.0
        %818 = vmatprep.subr.mxu0 0.0
        %819 = vmatpush1.msra.mxu0 0.0
        %820 = vmatprep.subr.mxu0 0.0
        %821 = vmatpush1.msra.mxu0 0.0
        %822 = vmatprep.subr.mxu0 0.0
        %823 = vmatpush1.msra.mxu0 0.0
        %824 = vmatprep.subr.mxu0 0.0
        %825 = vmatpush1.msra.mxu0 0.0
        %826 = vmatprep.subr.mxu0 0.0
        %827 = vmatpush1.msra.mxu0 0.0
        %828 = vmatprep.subr.mxu0 0.0
        %829 = vmatpush1.msra.mxu0 0.0
        %830 = vmatprep.subr.mxu0 0.0
        %831 = vmatpush1.msra.mxu0 0.0
        %832 = vmatprep.subr.mxu0 0.0
        %833 = vmatpush1.msra.mxu0 0.0
        %834 = vmatprep.subr.mxu0 0.0
        %835 = vmatpush1.msra.mxu0 0.0
        %836 = vmatprep.subr.mxu0 0.0
        %837 = vmatpush1.msra.mxu0 0.0
        %838 = vmatprep.subr.mxu0 0.0
        %839 = vmatpush1.msra.mxu0 0.0
        %840 = vmatprep.subr.mxu0 0.0
        %841 = vmatpush1.msra.mxu0 0.0
        %842 = vmatprep.subr.mxu0 0.0
        %843 = vmatpush1.msra.mxu0 0.0
        %844 = vmatprep.subr.mxu0 0.0
        %845 = vmatpush1.msra.mxu0 0.0
        %846 = vmatprep.subr.mxu0 0.0
        %847 = vmatpush1.msra.mxu0 0.0
        %848 = vmatprep.subr.mxu0 0.0
        %849 = vmatpush1.msra.mxu0 0.0
        %850 = vmatprep.subr.mxu0 0.0
        %851 = vmatpush1.msra.mxu0 0.0
        %852 = vmatprep.subr.mxu0 0.0
        %853 = vmatpush1.msra.mxu0 0.0
        %854 = vmatprep.subr.mxu0 0.0
        %855 = vmatpush1.msra.mxu0 0.0
        %856 = vmatprep.subr.mxu0 0.0
        %857 = vmatpush1.msra.mxu0 0.0
        %858 = vmatprep.subr.mxu0 0.0
        %859 = vmatpush1.msra.mxu0 0.0
        %860 = vmatprep.subr.mxu0 0.0
        %861 = vmatpush1.msra.mxu0 0.0
        %862 = vmatprep.subr.mxu0 0.0
        %863 = vmatpush1.msra.mxu0 0.0
        %864 = vmatprep.subr.mxu0 0.0
        %865 = vmatpush1.msra.mxu0 0.0
        %866 = vmatprep.subr.mxu0 0.0
        %867 = vmatpush1.msra.mxu0 0.0
        %868 = vmatprep.mubr.f32.mxu0 0.0
        %869 = vmatmul.mubr.f32.gmra.mrb[0].mxu0 %v799
        %v870 = vpop.f32.mrb[0].mxu0
        %v871 = vadd.f32 0.0, %v870
        %v872 = vpop.f32.mrb[0].mxu0
        %873 = vdwg.mxu0
        %v874 = vadd.f32 %v793, %v871
        %v875 = vld [vmem:[%s713 + $0x1] sm:$0xff]
        %s876 = scalar_lea.vmem %s2, 32
        %v877 = vld [vmem:[%s876] sm:$0x7]
        %v879 = vsel %vm233, %v875, 0
        %v882 = vsel %vm237, %v877, 0
        %884 = vmatprep.subr.mxu0 0.0
        %885 = vmatpush1.msra.mxu0 %v882
        %886 = vmatprep.subr.mxu0 0.0
        %887 = vmatpush1.msra.mxu0 0.0
        %888 = vmatprep.subr.mxu0 0.0
        %889 = vmatpush1.msra.mxu0 0.0
        %890 = vmatprep.subr.mxu0 0.0
        %891 = vmatpush1.msra.mxu0 0.0
        %892 = vmatprep.subr.mxu0 0.0
        %893 = vmatpush1.msra.mxu0 0.0
        %894 = vmatprep.subr.mxu0 0.0
        %895 = vmatpush1.msra.mxu0 0.0
        %896 = vmatprep.subr.mxu0 0.0
        %897 = vmatpush1.msra.mxu0 0.0
        %898 = vmatprep.subr.mxu0 0.0
        %899 = vmatpush1.msra.mxu0 0.0
        %900 = vmatprep.subr.mxu0 0.0
        %901 = vmatpush1.msra.mxu0 0.0
        %902 = vmatprep.subr.mxu0 0.0
        %903 = vmatpush1.msra.mxu0 0.0
        %904 = vmatprep.subr.mxu0 0.0
        %905 = vmatpush1.msra.mxu0 0.0
        %906 = vmatprep.subr.mxu0 0.0
        %907 = vmatpush1.msra.mxu0 0.0
        %908 = vmatprep.subr.mxu0 0.0
        %909 = vmatpush1.msra.mxu0 0.0
        %910 = vmatprep.subr.mxu0 0.0
        %911 = vmatpush1.msra.mxu0 0.0
        %912 = vmatprep.subr.mxu0 0.0
        %913 = vmatpush1.msra.mxu0 0.0
        %914 = vmatprep.subr.mxu0 0.0
        %915 = vmatpush1.msra.mxu0 0.0
        %916 = vmatprep.subr.mxu0 0.0
        %917 = vmatpush1.msra.mxu0 0.0
        %918 = vmatprep.subr.mxu0 0.0
        %919 = vmatpush1.msra.mxu0 0.0
        %920 = vmatprep.subr.mxu0 0.0
        %921 = vmatpush1.msra.mxu0 0.0
        %922 = vmatprep.subr.mxu0 0.0
        %923 = vmatpush1.msra.mxu0 0.0
        %924 = vmatprep.subr.mxu0 0.0
        %925 = vmatpush1.msra.mxu0 0.0
        %926 = vmatprep.subr.mxu0 0.0
        %927 = vmatpush1.msra.mxu0 0.0
        %928 = vmatprep.subr.mxu0 0.0
        %929 = vmatpush1.msra.mxu0 0.0
        %930 = vmatprep.subr.mxu0 0.0
        %931 = vmatpush1.msra.mxu0 0.0
        %932 = vmatprep.subr.mxu0 0.0
        %933 = vmatpush1.msra.mxu0 0.0
        %934 = vmatprep.subr.mxu0 0.0
        %935 = vmatpush1.msra.mxu0 0.0
        %936 = vmatprep.subr.mxu0 0.0
        %937 = vmatpush1.msra.mxu0 0.0
        %938 = vmatprep.subr.mxu0 0.0
        %939 = vmatpush1.msra.mxu0 0.0
        %940 = vmatprep.subr.mxu0 0.0
        %941 = vmatpush1.msra.mxu0 0.0
        %942 = vmatprep.subr.mxu0 0.0
        %943 = vmatpush1.msra.mxu0 0.0
        %944 = vmatprep.subr.mxu0 0.0
        %945 = vmatpush1.msra.mxu0 0.0
        %946 = vmatprep.subr.mxu0 0.0
        %947 = vmatpush1.msra.mxu0 0.0
        %948 = vmatprep.mubr.f32.mxu0 0.0
        %949 = vmatmul.mubr.f32.gmra.mrb[0].mxu0 %v879
        %v950 = vpop.f32.mrb[0].mxu0
        %v951 = vadd.f32 0.0, %v950
        %v952 = vpop.f32.mrb[0].mxu0
        %953 = vdwg.mxu0
        %v954 = vadd.f32 %v874, %v951
        %955 = vmatprep.subr.mxu0 0.0
        %956 = vmatpush1.msra.mxu0 %v239
        %957 = vmatprep.subr.mxu0 0.0
        %958 = vmatpush1.msra.mxu0 0.0
        %959 = vmatprep.subr.mxu0 0.0
        %960 = vmatpush1.msra.mxu0 0.0
        %961 = vmatprep.subr.mxu0 0.0
        %962 = vmatpush1.msra.mxu0 0.0
        %963 = vmatprep.subr.mxu0 0.0
        %964 = vmatpush1.msra.mxu0 0.0
        %965 = vmatprep.subr.mxu0 0.0
        %966 = vmatpush1.msra.mxu0 0.0
        %967 = vmatprep.subr.mxu0 0.0
        %968 = vmatpush1.msra.mxu0 0.0
        %969 = vmatprep.subr.mxu0 0.0
        %970 = vmatpush1.msra.mxu0 0.0
        %971 = vmatprep.subr.mxu0 0.0
        %972 = vmatpush1.msra.mxu0 0.0
        %973 = vmatprep.subr.mxu0 0.0
        %974 = vmatpush1.msra.mxu0 0.0
        %975 = vmatprep.subr.mxu0 0.0
        %976 = vmatpush1.msra.mxu0 0.0
        %977 = vmatprep.subr.mxu0 0.0
        %978 = vmatpush1.msra.mxu0 0.0
        %979 = vmatprep.subr.mxu0 0.0
        %980 = vmatpush1.msra.mxu0 0.0
        %981 = vmatprep.subr.mxu0 0.0
        %982 = vmatpush1.msra.mxu0 0.0
        %983 = vmatprep.subr.mxu0 0.0
        %984 = vmatpush1.msra.mxu0 0.0
        %985 = vmatprep.subr.mxu0 0.0
        %986 = vmatpush1.msra.mxu0 0.0
        %987 = vmatprep.subr.mxu0 0.0
        %988 = vmatpush1.msra.mxu0 0.0
        %989 = vmatprep.subr.mxu0 0.0
        %990 = vmatpush1.msra.mxu0 0.0
        %991 = vmatprep.subr.mxu0 0.0
        %992 = vmatpush1.msra.mxu0 0.0
        %993 = vmatprep.subr.mxu0 0.0
        %994 = vmatpush1.msra.mxu0 0.0
        %995 = vmatprep.subr.mxu0 0.0
        %996 = vmatpush1.msra.mxu0 0.0
        %997 = vmatprep.subr.mxu0 0.0
        %998 = vmatpush1.msra.mxu0 0.0
        %999 = vmatprep.subr.mxu0 0.0
        %1000 = vmatpush1.msra.mxu0 0.0
        %1001 = vmatprep.subr.mxu0 0.0
        %1002 = vmatpush1.msra.mxu0 0.0
        %1003 = vmatprep.subr.mxu0 0.0
        %1004 = vmatpush1.msra.mxu0 0.0
        %1005 = vmatprep.subr.mxu0 0.0
        %1006 = vmatpush1.msra.mxu0 0.0
        %1007 = vmatprep.subr.mxu0 0.0
        %1008 = vmatpush1.msra.mxu0 0.0
        %1009 = vmatprep.subr.mxu0 0.0
        %1010 = vmatpush1.msra.mxu0 0.0
        %1011 = vmatprep.subr.mxu0 0.0
        %1012 = vmatpush1.msra.mxu0 0.0
        %1013 = vmatprep.subr.mxu0 0.0
        %1014 = vmatpush1.msra.mxu0 0.0
        %1015 = vmatprep.subr.mxu0 0.0
        %1016 = vmatpush1.msra.mxu0 0.0
        %1017 = vmatprep.subr.mxu0 0.0
        %1018 = vmatpush1.msra.mxu0 0.0
        %1019 = vmatprep.mubr.f32.mxu0 0.0
        %1020 = vmatmul.mubr.f32.gmra.mrb[0].mxu0 %v391
        %v1021 = vpop.f32.mrb[0].mxu0
        %v1022 = vadd.f32 0.0, %v1021
        %v1023 = vpop.f32.mrb[0].mxu0
        %1024 = vdwg.mxu0
        %1025 = vmatprep.subr.mxu0 0.0
        %1026 = vmatpush1.msra.mxu0 %v315
        %1027 = vmatprep.subr.mxu0 0.0
        %1028 = vmatpush1.msra.mxu0 0.0
        %1029 = vmatprep.subr.mxu0 0.0
        %1030 = vmatpush1.msra.mxu0 0.0
        %1031 = vmatprep.subr.mxu0 0.0
        %1032 = vmatpush1.msra.mxu0 0.0
        %1033 = vmatprep.subr.mxu0 0.0
        %1034 = vmatpush1.msra.mxu0 0.0
        %1035 = vmatprep.subr.mxu0 0.0
        %1036 = vmatpush1.msra.mxu0 0.0
        %1037 = vmatprep.subr.mxu0 0.0
        %1038 = vmatpush1.msra.mxu0 0.0
        %1039 = vmatprep.subr.mxu0 0.0
        %1040 = vmatpush1.msra.mxu0 0.0
        %1041 = vmatprep.subr.mxu0 0.0
        %1042 = vmatpush1.msra.mxu0 0.0
        %1043 = vmatprep.subr.mxu0 0.0
        %1044 = vmatpush1.msra.mxu0 0.0
        %1045 = vmatprep.subr.mxu0 0.0
        %1046 = vmatpush1.msra.mxu0 0.0
        %1047 = vmatprep.subr.mxu0 0.0
        %1048 = vmatpush1.msra.mxu0 0.0
        %1049 = vmatprep.subr.mxu0 0.0
        %1050 = vmatpush1.msra.mxu0 0.0
        %1051 = vmatprep.subr.mxu0 0.0
        %1052 = vmatpush1.msra.mxu0 0.0
        %1053 = vmatprep.subr.mxu0 0.0
        %1054 = vmatpush1.msra.mxu0 0.0
        %1055 = vmatprep.subr.mxu0 0.0
        %1056 = vmatpush1.msra.mxu0 0.0
        %1057 = vmatprep.subr.mxu0 0.0
        %1058 = vmatpush1.msra.mxu0 0.0
        %1059 = vmatprep.subr.mxu0 0.0
        %1060 = vmatpush1.msra.mxu0 0.0
        %1061 = vmatprep.subr.mxu0 0.0
        %1062 = vmatpush1.msra.mxu0 0.0
        %1063 = vmatprep.subr.mxu0 0.0
        %1064 = vmatpush1.msra.mxu0 0.0
        %1065 = vmatprep.subr.mxu0 0.0
        %1066 = vmatpush1.msra.mxu0 0.0
        %1067 = vmatprep.subr.mxu0 0.0
        %1068 = vmatpush1.msra.mxu0 0.0
        %1069 = vmatprep.subr.mxu0 0.0
        %1070 = vmatpush1.msra.mxu0 0.0
        %1071 = vmatprep.subr.mxu0 0.0
        %1072 = vmatpush1.msra.mxu0 0.0
        %1073 = vmatprep.subr.mxu0 0.0
        %1074 = vmatpush1.msra.mxu0 0.0
        %1075 = vmatprep.subr.mxu0 0.0
        %1076 = vmatpush1.msra.mxu0 0.0
        %1077 = vmatprep.subr.mxu0 0.0
        %1078 = vmatpush1.msra.mxu0 0.0
        %1079 = vmatprep.subr.mxu0 0.0
        %1080 = vmatpush1.msra.mxu0 0.0
        %1081 = vmatprep.subr.mxu0 0.0
        %1082 = vmatpush1.msra.mxu0 0.0
        %1083 = vmatprep.subr.mxu0 0.0
        %1084 = vmatpush1.msra.mxu0 0.0
        %1085 = vmatprep.subr.mxu0 0.0
        %1086 = vmatpush1.msra.mxu0 0.0
        %1087 = vmatprep.subr.mxu0 0.0
        %1088 = vmatpush1.msra.mxu0 0.0
        %1089 = vmatprep.mubr.f32.mxu0 0.0
        %1090 = vmatmul.mubr.f32.gmra.mrb[0].mxu0 %v235
        %v1091 = vpop.f32.mrb[0].mxu0
        %v1092 = vadd.f32 %v1022, %v1091
        %v1093 = vpop.f32.mrb[0].mxu0
        %1094 = vdwg.mxu0
        %v1095 = vld [vmem:[%s229 + $0x1] sm:$0xff]
        %v1097 = vsel %vm233, %v1095, 0
        %1099 = vmatprep.subr.mxu0 0.0
        %1100 = vmatpush1.msra.mxu0 %v394
        %1101 = vmatprep.subr.mxu0 0.0
        %1102 = vmatpush1.msra.mxu0 0.0
        %1103 = vmatprep.subr.mxu0 0.0
        %1104 = vmatpush1.msra.mxu0 0.0
        %1105 = vmatprep.subr.mxu0 0.0
        %1106 = vmatpush1.msra.mxu0 0.0
        %1107 = vmatprep.subr.mxu0 0.0
        %1108 = vmatpush1.msra.mxu0 0.0
        %1109 = vmatprep.subr.mxu0 0.0
        %1110 = vmatpush1.msra.mxu0 0.0
        %1111 = vmatprep.subr.mxu0 0.0
        %1112 = vmatpush1.msra.mxu0 0.0
        %1113 = vmatprep.subr.mxu0 0.0
        %1114 = vmatpush1.msra.mxu0 0.0
        %1115 = vmatprep.subr.mxu0 0.0
        %1116 = vmatpush1.msra.mxu0 0.0
        %1117 = vmatprep.subr.mxu0 0.0
        %1118 = vmatpush1.msra.mxu0 0.0
        %1119 = vmatprep.subr.mxu0 0.0
        %1120 = vmatpush1.msra.mxu0 0.0
        %1121 = vmatprep.subr.mxu0 0.0
        %1122 = vmatpush1.msra.mxu0 0.0
        %1123 = vmatprep.subr.mxu0 0.0
        %1124 = vmatpush1.msra.mxu0 0.0
        %1125 = vmatprep.subr.mxu0 0.0
        %1126 = vmatpush1.msra.mxu0 0.0
        %1127 = vmatprep.subr.mxu0 0.0
        %1128 = vmatpush1.msra.mxu0 0.0
        %1129 = vmatprep.subr.mxu0 0.0
        %1130 = vmatpush1.msra.mxu0 0.0
        %1131 = vmatprep.subr.mxu0 0.0
        %1132 = vmatpush1.msra.mxu0 0.0
        %1133 = vmatprep.subr.mxu0 0.0
        %1134 = vmatpush1.msra.mxu0 0.0
        %1135 = vmatprep.subr.mxu0 0.0
        %1136 = vmatpush1.msra.mxu0 0.0
        %1137 = vmatprep.subr.mxu0 0.0
        %1138 = vmatpush1.msra.mxu0 0.0
        %1139 = vmatprep.subr.mxu0 0.0
        %1140 = vmatpush1.msra.mxu0 0.0
        %1141 = vmatprep.subr.mxu0 0.0
        %1142 = vmatpush1.msra.mxu0 0.0
        %1143 = vmatprep.subr.mxu0 0.0
        %1144 = vmatpush1.msra.mxu0 0.0
        %1145 = vmatprep.subr.mxu0 0.0
        %1146 = vmatpush1.msra.mxu0 0.0
        %1147 = vmatprep.subr.mxu0 0.0
        %1148 = vmatpush1.msra.mxu0 0.0
        %1149 = vmatprep.subr.mxu0 0.0
        %1150 = vmatpush1.msra.mxu0 0.0
        %1151 = vmatprep.subr.mxu0 0.0
        %1152 = vmatpush1.msra.mxu0 0.0
        %1153 = vmatprep.subr.mxu0 0.0
        %1154 = vmatpush1.msra.mxu0 0.0
        %1155 = vmatprep.subr.mxu0 0.0
        %1156 = vmatpush1.msra.mxu0 0.0
        %1157 = vmatprep.subr.mxu0 0.0
        %1158 = vmatpush1.msra.mxu0 0.0
        %1159 = vmatprep.subr.mxu0 0.0
        %1160 = vmatpush1.msra.mxu0 0.0
        %1161 = vmatprep.subr.mxu0 0.0
        %1162 = vmatpush1.msra.mxu0 0.0
        %1163 = vmatprep.mubr.f32.mxu0 0.0
        %1164 = vmatmul.mubr.f32.gmra.mrb[0].mxu0 %v1097
        %v1165 = vpop.f32.mrb[0].mxu0
        %v1166 = vadd.f32 0.0, %v1165
        %v1167 = vpop.f32.mrb[0].mxu0
        %1168 = vdwg.mxu0
        %v1169 = vadd.f32 %v1092, %v1166
        %1170 = vmatprep.subr.mxu0 0.0
        %1171 = vmatpush1.msra.mxu0 %v477
        %1172 = vmatprep.subr.mxu0 0.0
        %1173 = vmatpush1.msra.mxu0 0.0
        %1174 = vmatprep.subr.mxu0 0.0
        %1175 = vmatpush1.msra.mxu0 0.0
        %1176 = vmatprep.subr.mxu0 0.0
        %1177 = vmatpush1.msra.mxu0 0.0
        %1178 = vmatprep.subr.mxu0 0.0
        %1179 = vmatpush1.msra.mxu0 0.0
        %1180 = vmatprep.subr.mxu0 0.0
        %1181 = vmatpush1.msra.mxu0 0.0
        %1182 = vmatprep.subr.mxu0 0.0
        %1183 = vmatpush1.msra.mxu0 0.0
        %1184 = vmatprep.subr.mxu0 0.0
        %1185 = vmatpush1.msra.mxu0 0.0
        %1186 = vmatprep.subr.mxu0 0.0
        %1187 = vmatpush1.msra.mxu0 0.0
        %1188 = vmatprep.subr.mxu0 0.0
        %1189 = vmatpush1.msra.mxu0 0.0
        %1190 = vmatprep.subr.mxu0 0.0
        %1191 = vmatpush1.msra.mxu0 0.0
        %1192 = vmatprep.subr.mxu0 0.0
        %1193 = vmatpush1.msra.mxu0 0.0
        %1194 = vmatprep.subr.mxu0 0.0
        %1195 = vmatpush1.msra.mxu0 0.0
        %1196 = vmatprep.subr.mxu0 0.0
        %1197 = vmatpush1.msra.mxu0 0.0
        %1198 = vmatprep.subr.mxu0 0.0
        %1199 = vmatpush1.msra.mxu0 0.0
        %1200 = vmatprep.subr.mxu0 0.0
        %1201 = vmatpush1.msra.mxu0 0.0
        %1202 = vmatprep.subr.mxu0 0.0
        %1203 = vmatpush1.msra.mxu0 0.0
        %1204 = vmatprep.subr.mxu0 0.0
        %1205 = vmatpush1.msra.mxu0 0.0
        %1206 = vmatprep.subr.mxu0 0.0
        %1207 = vmatpush1.msra.mxu0 0.0
        %1208 = vmatprep.subr.mxu0 0.0
        %1209 = vmatpush1.msra.mxu0 0.0
        %1210 = vmatprep.subr.mxu0 0.0
        %1211 = vmatpush1.msra.mxu0 0.0
        %1212 = vmatprep.subr.mxu0 0.0
        %1213 = vmatpush1.msra.mxu0 0.0
        %1214 = vmatprep.subr.mxu0 0.0
        %1215 = vmatpush1.msra.mxu0 0.0
        %1216 = vmatprep.subr.mxu0 0.0
        %1217 = vmatpush1.msra.mxu0 0.0
        %1218 = vmatprep.subr.mxu0 0.0
        %1219 = vmatpush1.msra.mxu0 0.0
        %1220 = vmatprep.subr.mxu0 0.0
        %1221 = vmatpush1.msra.mxu0 0.0
        %1222 = vmatprep.subr.mxu0 0.0
        %1223 = vmatpush1.msra.mxu0 0.0
        %1224 = vmatprep.subr.mxu0 0.0
        %1225 = vmatpush1.msra.mxu0 0.0
        %1226 = vmatprep.subr.mxu0 0.0
        %1227 = vmatpush1.msra.mxu0 0.0
        %1228 = vmatprep.subr.mxu0 0.0
        %1229 = vmatpush1.msra.mxu0 0.0
        %1230 = vmatprep.subr.mxu0 0.0
        %1231 = vmatpush1.msra.mxu0 0.0
        %1232 = vmatprep.subr.mxu0 0.0
        %1233 = vmatpush1.msra.mxu0 0.0
        %1234 = vmatprep.mubr.f32.mxu0 0.0
        %1235 = vmatmul.mubr.f32.gmra.mrb[0].mxu0 %v555
        %v1236 = vpop.f32.mrb[0].mxu0
        %v1237 = vadd.f32 0.0, %v1236
        %v1238 = vpop.f32.mrb[0].mxu0
        %1239 = vdwg.mxu0
        %v1240 = vadd.f32 %v1169, %v1237
        %1241 = vmatprep.subr.mxu0 0.0
        %1242 = vmatpush1.msra.mxu0 %v558
        %1243 = vmatprep.subr.mxu0 0.0
        %1244 = vmatpush1.msra.mxu0 0.0
        %1245 = vmatprep.subr.mxu0 0.0
        %1246 = vmatpush1.msra.mxu0 0.0
        %1247 = vmatprep.subr.mxu0 0.0
        %1248 = vmatpush1.msra.mxu0 0.0
        %1249 = vmatprep.subr.mxu0 0.0
        %1250 = vmatpush1.msra.mxu0 0.0
        %1251 = vmatprep.subr.mxu0 0.0
        %1252 = vmatpush1.msra.mxu0 0.0
        %1253 = vmatprep.subr.mxu0 0.0
        %1254 = vmatpush1.msra.mxu0 0.0
        %1255 = vmatprep.subr.mxu0 0.0
        %1256 = vmatpush1.msra.mxu0 0.0
        %1257 = vmatprep.subr.mxu0 0.0
        %1258 = vmatpush1.msra.mxu0 0.0
        %1259 = vmatprep.subr.mxu0 0.0
        %1260 = vmatpush1.msra.mxu0 0.0
        %1261 = vmatprep.subr.mxu0 0.0
        %1262 = vmatpush1.msra.mxu0 0.0
        %1263 = vmatprep.subr.mxu0 0.0
        %1264 = vmatpush1.msra.mxu0 0.0
        %1265 = vmatprep.subr.mxu0 0.0
        %1266 = vmatpush1.msra.mxu0 0.0
        %1267 = vmatprep.subr.mxu0 0.0
        %1268 = vmatpush1.msra.mxu0 0.0
        %1269 = vmatprep.subr.mxu0 0.0
        %1270 = vmatpush1.msra.mxu0 0.0
        %1271 = vmatprep.subr.mxu0 0.0
        %1272 = vmatpush1.msra.mxu0 0.0
        %1273 = vmatprep.subr.mxu0 0.0
        %1274 = vmatpush1.msra.mxu0 0.0
        %1275 = vmatprep.subr.mxu0 0.0
        %1276 = vmatpush1.msra.mxu0 0.0
        %1277 = vmatprep.subr.mxu0 0.0
        %1278 = vmatpush1.msra.mxu0 0.0
        %1279 = vmatprep.subr.mxu0 0.0
        %1280 = vmatpush1.msra.mxu0 0.0
        %1281 = vmatprep.subr.mxu0 0.0
        %1282 = vmatpush1.msra.mxu0 0.0
        %1283 = vmatprep.subr.mxu0 0.0
        %1284 = vmatpush1.msra.mxu0 0.0
        %1285 = vmatprep.subr.mxu0 0.0
        %1286 = vmatpush1.msra.mxu0 0.0
        %1287 = vmatprep.subr.mxu0 0.0
        %1288 = vmatpush1.msra.mxu0 0.0
        %1289 = vmatprep.subr.mxu0 0.0
        %1290 = vmatpush1.msra.mxu0 0.0
        %1291 = vmatprep.subr.mxu0 0.0
        %1292 = vmatpush1.msra.mxu0 0.0
        %1293 = vmatprep.subr.mxu0 0.0
        %1294 = vmatpush1.msra.mxu0 0.0
        %1295 = vmatprep.subr.mxu0 0.0
        %1296 = vmatpush1.msra.mxu0 0.0
        %1297 = vmatprep.subr.mxu0 0.0
        %1298 = vmatpush1.msra.mxu0 0.0
        %1299 = vmatprep.subr.mxu0 0.0
        %1300 = vmatpush1.msra.mxu0 0.0
        %1301 = vmatprep.subr.mxu0 0.0
        %1302 = vmatpush1.msra.mxu0 0.0
        %1303 = vmatprep.subr.mxu0 0.0
        %1304 = vmatpush1.msra.mxu0 0.0
        %1305 = vmatprep.mubr.f32.mxu0 0.0
        %1306 = vmatmul.mubr.f32.gmra.mrb[0].mxu0 %v635
        %v1307 = vpop.f32.mrb[0].mxu0
        %v1308 = vadd.f32 0.0, %v1307
        %v1309 = vpop.f32.mrb[0].mxu0
        %1310 = vdwg.mxu0
        %v1311 = vadd.f32 %v1240, %v1308
        %v1312 = vld [vmem:[%s550 + $0x1] sm:$0xff]
        %v1314 = vsel %vm233, %v1312, 0
        %1316 = vmatprep.subr.mxu0 0.0
        %1317 = vmatpush1.msra.mxu0 %v638
        %1318 = vmatprep.subr.mxu0 0.0
        %1319 = vmatpush1.msra.mxu0 0.0
        %1320 = vmatprep.subr.mxu0 0.0
        %1321 = vmatpush1.msra.mxu0 0.0
        %1322 = vmatprep.subr.mxu0 0.0
        %1323 = vmatpush1.msra.mxu0 0.0
        %1324 = vmatprep.subr.mxu0 0.0
        %1325 = vmatpush1.msra.mxu0 0.0
        %1326 = vmatprep.subr.mxu0 0.0
        %1327 = vmatpush1.msra.mxu0 0.0
        %1328 = vmatprep.subr.mxu0 0.0
        %1329 = vmatpush1.msra.mxu0 0.0
        %1330 = vmatprep.subr.mxu0 0.0
        %1331 = vmatpush1.msra.mxu0 0.0
        %1332 = vmatprep.subr.mxu0 0.0
        %1333 = vmatpush1.msra.mxu0 0.0
        %1334 = vmatprep.subr.mxu0 0.0
        %1335 = vmatpush1.msra.mxu0 0.0
        %1336 = vmatprep.subr.mxu0 0.0
        %1337 = vmatpush1.msra.mxu0 0.0
        %1338 = vmatprep.subr.mxu0 0.0
        %1339 = vmatpush1.msra.mxu0 0.0
        %1340 = vmatprep.subr.mxu0 0.0
        %1341 = vmatpush1.msra.mxu0 0.0
        %1342 = vmatprep.subr.mxu0 0.0
        %1343 = vmatpush1.msra.mxu0 0.0
        %1344 = vmatprep.subr.mxu0 0.0
        %1345 = vmatpush1.msra.mxu0 0.0
        %1346 = vmatprep.subr.mxu0 0.0
        %1347 = vmatpush1.msra.mxu0 0.0
        %1348 = vmatprep.subr.mxu0 0.0
        %1349 = vmatpush1.msra.mxu0 0.0
        %1350 = vmatprep.subr.mxu0 0.0
        %1351 = vmatpush1.msra.mxu0 0.0
        %1352 = vmatprep.subr.mxu0 0.0
        %1353 = vmatpush1.msra.mxu0 0.0
        %1354 = vmatprep.subr.mxu0 0.0
        %1355 = vmatpush1.msra.mxu0 0.0
        %1356 = vmatprep.subr.mxu0 0.0
        %1357 = vmatpush1.msra.mxu0 0.0
        %1358 = vmatprep.subr.mxu0 0.0
        %1359 = vmatpush1.msra.mxu0 0.0
        %1360 = vmatprep.subr.mxu0 0.0
        %1361 = vmatpush1.msra.mxu0 0.0
        %1362 = vmatprep.subr.mxu0 0.0
        %1363 = vmatpush1.msra.mxu0 0.0
        %1364 = vmatprep.subr.mxu0 0.0
        %1365 = vmatpush1.msra.mxu0 0.0
        %1366 = vmatprep.subr.mxu0 0.0
        %1367 = vmatpush1.msra.mxu0 0.0
        %1368 = vmatprep.subr.mxu0 0.0
        %1369 = vmatpush1.msra.mxu0 0.0
        %1370 = vmatprep.subr.mxu0 0.0
        %1371 = vmatpush1.msra.mxu0 0.0
        %1372 = vmatprep.subr.mxu0 0.0
        %1373 = vmatpush1.msra.mxu0 0.0
        %1374 = vmatprep.subr.mxu0 0.0
        %1375 = vmatpush1.msra.mxu0 0.0
        %1376 = vmatprep.subr.mxu0 0.0
        %1377 = vmatpush1.msra.mxu0 0.0
        %1378 = vmatprep.subr.mxu0 0.0
        %1379 = vmatpush1.msra.mxu0 0.0
        %1380 = vmatprep.mubr.f32.mxu0 0.0
        %1381 = vmatmul.mubr.f32.gmra.mrb[0].mxu0 %v1314
        %v1382 = vpop.f32.mrb[0].mxu0
        %v1383 = vadd.f32 0.0, %v1382
        %v1384 = vpop.f32.mrb[0].mxu0
        %1385 = vdwg.mxu0
        %v1386 = vadd.f32 %v1311, %v1383
        %1387 = vmatprep.subr.mxu0 0.0
        %1388 = vmatpush1.msra.mxu0 %v721
        %1389 = vmatprep.subr.mxu0 0.0
        %1390 = vmatpush1.msra.mxu0 0.0
        %1391 = vmatprep.subr.mxu0 0.0
        %1392 = vmatpush1.msra.mxu0 0.0
        %1393 = vmatprep.subr.mxu0 0.0
        %1394 = vmatpush1.msra.mxu0 0.0
        %1395 = vmatprep.subr.mxu0 0.0
        %1396 = vmatpush1.msra.mxu0 0.0
        %1397 = vmatprep.subr.mxu0 0.0
        %1398 = vmatpush1.msra.mxu0 0.0
        %1399 = vmatprep.subr.mxu0 0.0
        %1400 = vmatpush1.msra.mxu0 0.0
        %1401 = vmatprep.subr.mxu0 0.0
        %1402 = vmatpush1.msra.mxu0 0.0
        %1403 = vmatprep.subr.mxu0 0.0
        %1404 = vmatpush1.msra.mxu0 0.0
        %1405 = vmatprep.subr.mxu0 0.0
        %1406 = vmatpush1.msra.mxu0 0.0
        %1407 = vmatprep.subr.mxu0 0.0
        %1408 = vmatpush1.msra.mxu0 0.0
        %1409 = vmatprep.subr.mxu0 0.0
        %1410 = vmatpush1.msra.mxu0 0.0
        %1411 = vmatprep.subr.mxu0 0.0
        %1412 = vmatpush1.msra.mxu0 0.0
        %1413 = vmatprep.subr.mxu0 0.0
        %1414 = vmatpush1.msra.mxu0 0.0
        %1415 = vmatprep.subr.mxu0 0.0
        %1416 = vmatpush1.msra.mxu0 0.0
        %1417 = vmatprep.subr.mxu0 0.0
        %1418 = vmatpush1.msra.mxu0 0.0
        %1419 = vmatprep.subr.mxu0 0.0
        %1420 = vmatpush1.msra.mxu0 0.0
        %1421 = vmatprep.subr.mxu0 0.0
        %1422 = vmatpush1.msra.mxu0 0.0
        %1423 = vmatprep.subr.mxu0 0.0
        %1424 = vmatpush1.msra.mxu0 0.0
        %1425 = vmatprep.subr.mxu0 0.0
        %1426 = vmatpush1.msra.mxu0 0.0
        %1427 = vmatprep.subr.mxu0 0.0
        %1428 = vmatpush1.msra.mxu0 0.0
        %1429 = vmatprep.subr.mxu0 0.0
        %1430 = vmatpush1.msra.mxu0 0.0
        %1431 = vmatprep.subr.mxu0 0.0
        %1432 = vmatpush1.msra.mxu0 0.0
        %1433 = vmatprep.subr.mxu0 0.0
        %1434 = vmatpush1.msra.mxu0 0.0
        %1435 = vmatprep.subr.mxu0 0.0
        %1436 = vmatpush1.msra.mxu0 0.0
        %1437 = vmatprep.subr.mxu0 0.0
        %1438 = vmatpush1.msra.mxu0 0.0
        %1439 = vmatprep.subr.mxu0 0.0
        %1440 = vmatpush1.msra.mxu0 0.0
        %1441 = vmatprep.subr.mxu0 0.0
        %1442 = vmatpush1.msra.mxu0 0.0
        %1443 = vmatprep.subr.mxu0 0.0
        %1444 = vmatpush1.msra.mxu0 0.0
        %1445 = vmatprep.subr.mxu0 0.0
        %1446 = vmatpush1.msra.mxu0 0.0
        %1447 = vmatprep.subr.mxu0 0.0
        %1448 = vmatpush1.msra.mxu0 0.0
        %1449 = vmatprep.subr.mxu0 0.0
        %1450 = vmatpush1.msra.mxu0 0.0
        %1451 = vmatprep.mubr.f32.mxu0 0.0
        %1452 = vmatmul.mubr.f32.gmra.mrb[0].mxu0 %v799
        %v1453 = vpop.f32.mrb[0].mxu0
        %v1454 = vadd.f32 0.0, %v1453
        %v1455 = vpop.f32.mrb[0].mxu0
        %1456 = vdwg.mxu0
        %v1457 = vadd.f32 %v1386, %v1454
        %1458 = vmatprep.subr.mxu0 0.0
        %1459 = vmatpush1.msra.mxu0 %v802
        %1460 = vmatprep.subr.mxu0 0.0
        %1461 = vmatpush1.msra.mxu0 0.0
        %1462 = vmatprep.subr.mxu0 0.0
        %1463 = vmatpush1.msra.mxu0 0.0
        %1464 = vmatprep.subr.mxu0 0.0
        %1465 = vmatpush1.msra.mxu0 0.0
        %1466 = vmatprep.subr.mxu0 0.0
        %1467 = vmatpush1.msra.mxu0 0.0
        %1468 = vmatprep.subr.mxu0 0.0
        %1469 = vmatpush1.msra.mxu0 0.0
        %1470 = vmatprep.subr.mxu0 0.0
        %1471 = vmatpush1.msra.mxu0 0.0
        %1472 = vmatprep.subr.mxu0 0.0
        %1473 = vmatpush1.msra.mxu0 0.0
        %1474 = vmatprep.subr.mxu0 0.0
        %1475 = vmatpush1.msra.mxu0 0.0
        %1476 = vmatprep.subr.mxu0 0.0
        %1477 = vmatpush1.msra.mxu0 0.0
        %1478 = vmatprep.subr.mxu0 0.0
        %1479 = vmatpush1.msra.mxu0 0.0
        %1480 = vmatprep.subr.mxu0 0.0
        %1481 = vmatpush1.msra.mxu0 0.0
        %1482 = vmatprep.subr.mxu0 0.0
        %1483 = vmatpush1.msra.mxu0 0.0
        %1484 = vmatprep.subr.mxu0 0.0
        %1485 = vmatpush1.msra.mxu0 0.0
        %1486 = vmatprep.subr.mxu0 0.0
        %1487 = vmatpush1.msra.mxu0 0.0
        %1488 = vmatprep.subr.mxu0 0.0
        %1489 = vmatpush1.msra.mxu0 0.0
        %1490 = vmatprep.subr.mxu0 0.0
        %1491 = vmatpush1.msra.mxu0 0.0
        %1492 = vmatprep.subr.mxu0 0.0
        %1493 = vmatpush1.msra.mxu0 0.0
        %1494 = vmatprep.subr.mxu0 0.0
        %1495 = vmatpush1.msra.mxu0 0.0
        %1496 = vmatprep.subr.mxu0 0.0
        %1497 = vmatpush1.msra.mxu0 0.0
        %1498 = vmatprep.subr.mxu0 0.0
        %1499 = vmatpush1.msra.mxu0 0.0
        %1500 = vmatprep.subr.mxu0 0.0
        %1501 = vmatpush1.msra.mxu0 0.0
        %1502 = vmatprep.subr.mxu0 0.0
        %1503 = vmatpush1.msra.mxu0 0.0
        %1504 = vmatprep.subr.mxu0 0.0
        %1505 = vmatpush1.msra.mxu0 0.0
        %1506 = vmatprep.subr.mxu0 0.0
        %1507 = vmatpush1.msra.mxu0 0.0
        %1508 = vmatprep.subr.mxu0 0.0
        %1509 = vmatpush1.msra.mxu0 0.0
        %1510 = vmatprep.subr.mxu0 0.0
        %1511 = vmatpush1.msra.mxu0 0.0
        %1512 = vmatprep.subr.mxu0 0.0
        %1513 = vmatpush1.msra.mxu0 0.0
        %1514 = vmatprep.subr.mxu0 0.0
        %1515 = vmatpush1.msra.mxu0 0.0
        %1516 = vmatprep.subr.mxu0 0.0
        %1517 = vmatpush1.msra.mxu0 0.0
        %1518 = vmatprep.subr.mxu0 0.0
        %1519 = vmatpush1.msra.mxu0 0.0
        %1520 = vmatprep.subr.mxu0 0.0
        %1521 = vmatpush1.msra.mxu0 0.0
        %1522 = vmatprep.mubr.f32.mxu0 0.0
        %1523 = vmatmul.mubr.f32.gmra.mrb[0].mxu0 %v879
        %v1524 = vpop.f32.mrb[0].mxu0
        %v1525 = vadd.f32 0.0, %v1524
        %v1526 = vpop.f32.mrb[0].mxu0
        %1527 = vdwg.mxu0
        %v1528 = vadd.f32 %v1457, %v1525
        %v1529 = vld [vmem:[%s794 + $0x1] sm:$0xff]
        %v1531 = vsel %vm233, %v1529, 0
        %1533 = vmatprep.subr.mxu0 0.0
        %1534 = vmatpush1.msra.mxu0 %v882
        %1535 = vmatprep.subr.mxu0 0.0
        %1536 = vmatpush1.msra.mxu0 0.0
        %1537 = vmatprep.subr.mxu0 0.0
        %1538 = vmatpush1.msra.mxu0 0.0
        %1539 = vmatprep.subr.mxu0 0.0
        %1540 = vmatpush1.msra.mxu0 0.0
        %1541 = vmatprep.subr.mxu0 0.0
        %1542 = vmatpush1.msra.mxu0 0.0
        %1543 = vmatprep.subr.mxu0 0.0
        %1544 = vmatpush1.msra.mxu0 0.0
        %1545 = vmatprep.subr.mxu0 0.0
        %1546 = vmatpush1.msra.mxu0 0.0
        %1547 = vmatprep.subr.mxu0 0.0
        %1548 = vmatpush1.msra.mxu0 0.0
        %1549 = vmatprep.subr.mxu0 0.0
        %1550 = vmatpush1.msra.mxu0 0.0
        %1551 = vmatprep.subr.mxu0 0.0
        %1552 = vmatpush1.msra.mxu0 0.0
        %1553 = vmatprep.subr.mxu0 0.0
        %1554 = vmatpush1.msra.mxu0 0.0
        %1555 = vmatprep.subr.mxu0 0.0
        %1556 = vmatpush1.msra.mxu0 0.0
        %1557 = vmatprep.subr.mxu0 0.0
        %1558 = vmatpush1.msra.mxu0 0.0
        %1559 = vmatprep.subr.mxu0 0.0
        %1560 = vmatpush1.msra.mxu0 0.0
        %1561 = vmatprep.subr.mxu0 0.0
        %1562 = vmatpush1.msra.mxu0 0.0
        %1563 = vmatprep.subr.mxu0 0.0
        %1564 = vmatpush1.msra.mxu0 0.0
        %1565 = vmatprep.subr.mxu0 0.0
        %1566 = vmatpush1.msra.mxu0 0.0
        %1567 = vmatprep.subr.mxu0 0.0
        %1568 = vmatpush1.msra.mxu0 0.0
        %1569 = vmatprep.subr.mxu0 0.0
        %1570 = vmatpush1.msra.mxu0 0.0
        %1571 = vmatprep.subr.mxu0 0.0
        %1572 = vmatpush1.msra.mxu0 0.0
        %1573 = vmatprep.subr.mxu0 0.0
        %1574 = vmatpush1.msra.mxu0 0.0
        %1575 = vmatprep.subr.mxu0 0.0
        %1576 = vmatpush1.msra.mxu0 0.0
        %1577 = vmatprep.subr.mxu0 0.0
        %1578 = vmatpush1.msra.mxu0 0.0
        %1579 = vmatprep.subr.mxu0 0.0
        %1580 = vmatpush1.msra.mxu0 0.0
        %1581 = vmatprep.subr.mxu0 0.0
        %1582 = vmatpush1.msra.mxu0 0.0
        %1583 = vmatprep.subr.mxu0 0.0
        %1584 = vmatpush1.msra.mxu0 0.0
        %1585 = vmatprep.subr.mxu0 0.0
        %1586 = vmatpush1.msra.mxu0 0.0
        %1587 = vmatprep.subr.mxu0 0.0
        %1588 = vmatpush1.msra.mxu0 0.0
        %1589 = vmatprep.subr.mxu0 0.0
        %1590 = vmatpush1.msra.mxu0 0.0
        %1591 = vmatprep.subr.mxu0 0.0
        %1592 = vmatpush1.msra.mxu0 0.0
        %1593 = vmatprep.subr.mxu0 0.0
        %1594 = vmatpush1.msra.mxu0 0.0
        %1595 = vmatprep.subr.mxu0 0.0
        %1596 = vmatpush1.msra.mxu0 0.0
        %1597 = vmatprep.mubr.f32.mxu0 0.0
        %1598 = vmatmul.mubr.f32.gmra.mrb[0].mxu0 %v1531
        %v1599 = vpop.f32.mrb[0].mxu0
        %v1600 = vadd.f32 0.0, %v1599
        %v1601 = vpop.f32.mrb[0].mxu0
        %1602 = vdwg.mxu0
        %v1603 = vadd.f32 %v1528, %v1600
        %v1604 = vmax.f32 %v954, %v1603
        %1605 = vmatprep.subr.mxu0 0.0
        %1606 = vmatpush1.msra.mxu0 %v239
        %1607 = vmatprep.subr.mxu0 0.0
        %1608 = vmatpush1.msra.mxu0 0.0
        %1609 = vmatprep.subr.mxu0 0.0
        %1610 = vmatpush1.msra.mxu0 0.0
        %1611 = vmatprep.subr.mxu0 0.0
        %1612 = vmatpush1.msra.mxu0 0.0
        %1613 = vmatprep.subr.mxu0 0.0
        %1614 = vmatpush1.msra.mxu0 0.0
        %1615 = vmatprep.subr.mxu0 0.0
        %1616 = vmatpush1.msra.mxu0 0.0
        %1617 = vmatprep.subr.mxu0 0.0
        %1618 = vmatpush1.msra.mxu0 0.0
        %1619 = vmatprep.subr.mxu0 0.0
        %1620 = vmatpush1.msra.mxu0 0.0
        %1621 = vmatprep.subr.mxu0 0.0
        %1622 = vmatpush1.msra.mxu0 0.0
        %1623 = vmatprep.subr.mxu0 0.0
        %1624 = vmatpush1.msra.mxu0 0.0
        %1625 = vmatprep.subr.mxu0 0.0
        %1626 = vmatpush1.msra.mxu0 0.0
        %1627 = vmatprep.subr.mxu0 0.0
        %1628 = vmatpush1.msra.mxu0 0.0
        %1629 = vmatprep.subr.mxu0 0.0
        %1630 = vmatpush1.msra.mxu0 0.0
        %1631 = vmatprep.subr.mxu0 0.0
        %1632 = vmatpush1.msra.mxu0 0.0
        %1633 = vmatprep.subr.mxu0 0.0
        %1634 = vmatpush1.msra.mxu0 0.0
        %1635 = vmatprep.subr.mxu0 0.0
        %1636 = vmatpush1.msra.mxu0 0.0
        %1637 = vmatprep.subr.mxu0 0.0
        %1638 = vmatpush1.msra.mxu0 0.0
        %1639 = vmatprep.subr.mxu0 0.0
        %1640 = vmatpush1.msra.mxu0 0.0
        %1641 = vmatprep.subr.mxu0 0.0
        %1642 = vmatpush1.msra.mxu0 0.0
        %1643 = vmatprep.subr.mxu0 0.0
        %1644 = vmatpush1.msra.mxu0 0.0
        %1645 = vmatprep.subr.mxu0 0.0
        %1646 = vmatpush1.msra.mxu0 0.0
        %1647 = vmatprep.subr.mxu0 0.0
        %1648 = vmatpush1.msra.mxu0 0.0
        %1649 = vmatprep.subr.mxu0 0.0
        %1650 = vmatpush1.msra.mxu0 0.0
        %1651 = vmatprep.subr.mxu0 0.0
        %1652 = vmatpush1.msra.mxu0 0.0
        %1653 = vmatprep.subr.mxu0 0.0
        %1654 = vmatpush1.msra.mxu0 0.0
        %1655 = vmatprep.subr.mxu0 0.0
        %1656 = vmatpush1.msra.mxu0 0.0
        %1657 = vmatprep.subr.mxu0 0.0
        %1658 = vmatpush1.msra.mxu0 0.0
        %1659 = vmatprep.subr.mxu0 0.0
        %1660 = vmatpush1.msra.mxu0 0.0
        %1661 = vmatprep.subr.mxu0 0.0
        %1662 = vmatpush1.msra.mxu0 0.0
        %1663 = vmatprep.subr.mxu0 0.0
        %1664 = vmatpush1.msra.mxu0 0.0
        %1665 = vmatprep.subr.mxu0 0.0
        %1666 = vmatpush1.msra.mxu0 0.0
        %1667 = vmatprep.subr.mxu0 0.0
        %1668 = vmatpush1.msra.mxu0 0.0
        %1669 = vmatprep.mubr.f32.mxu0 0.0
        %1670 = vmatmul.mubr.f32.gmra.mrb[0].mxu0 %v555
        %v1671 = vpop.f32.mrb[0].mxu0
        %v1672 = vadd.f32 0.0, %v1671
        %v1673 = vpop.f32.mrb[0].mxu0
        %1674 = vdwg.mxu0
        %1675 = vmatprep.subr.mxu0 0.0
        %1676 = vmatpush1.msra.mxu0 %v315
        %1677 = vmatprep.subr.mxu0 0.0
        %1678 = vmatpush1.msra.mxu0 0.0
        %1679 = vmatprep.subr.mxu0 0.0
        %1680 = vmatpush1.msra.mxu0 0.0
        %1681 = vmatprep.subr.mxu0 0.0
        %1682 = vmatpush1.msra.mxu0 0.0
        %1683 = vmatprep.subr.mxu0 0.0
        %1684 = vmatpush1.msra.mxu0 0.0
        %1685 = vmatprep.subr.mxu0 0.0
        %1686 = vmatpush1.msra.mxu0 0.0
        %1687 = vmatprep.subr.mxu0 0.0
        %1688 = vmatpush1.msra.mxu0 0.0
        %1689 = vmatprep.subr.mxu0 0.0
        %1690 = vmatpush1.msra.mxu0 0.0
        %1691 = vmatprep.subr.mxu0 0.0
        %1692 = vmatpush1.msra.mxu0 0.0
        %1693 = vmatprep.subr.mxu0 0.0
        %1694 = vmatpush1.msra.mxu0 0.0
        %1695 = vmatprep.subr.mxu0 0.0
        %1696 = vmatpush1.msra.mxu0 0.0
        %1697 = vmatprep.subr.mxu0 0.0
        %1698 = vmatpush1.msra.mxu0 0.0
        %1699 = vmatprep.subr.mxu0 0.0
        %1700 = vmatpush1.msra.mxu0 0.0
        %1701 = vmatprep.subr.mxu0 0.0
        %1702 = vmatpush1.msra.mxu0 0.0
        %1703 = vmatprep.subr.mxu0 0.0
        %1704 = vmatpush1.msra.mxu0 0.0
        %1705 = vmatprep.subr.mxu0 0.0
        %1706 = vmatpush1.msra.mxu0 0.0
        %1707 = vmatprep.subr.mxu0 0.0
        %1708 = vmatpush1.msra.mxu0 0.0
        %1709 = vmatprep.subr.mxu0 0.0
        %1710 = vmatpush1.msra.mxu0 0.0
        %1711 = vmatprep.subr.mxu0 0.0
        %1712 = vmatpush1.msra.mxu0 0.0
        %1713 = vmatprep.subr.mxu0 0.0
        %1714 = vmatpush1.msra.mxu0 0.0
        %1715 = vmatprep.subr.mxu0 0.0
        %1716 = vmatpush1.msra.mxu0 0.0
        %1717 = vmatprep.subr.mxu0 0.0
        %1718 = vmatpush1.msra.mxu0 0.0
        %1719 = vmatprep.subr.mxu0 0.0
        %1720 = vmatpush1.msra.mxu0 0.0
        %1721 = vmatprep.subr.mxu0 0.0
        %1722 = vmatpush1.msra.mxu0 0.0
        %1723 = vmatprep.subr.mxu0 0.0
        %1724 = vmatpush1.msra.mxu0 0.0
        %1725 = vmatprep.subr.mxu0 0.0
        %1726 = vmatpush1.msra.mxu0 0.0
        %1727 = vmatprep.subr.mxu0 0.0
        %1728 = vmatpush1.msra.mxu0 0.0
        %1729 = vmatprep.subr.mxu0 0.0
        %1730 = vmatpush1.msra.mxu0 0.0
        %1731 = vmatprep.subr.mxu0 0.0
        %1732 = vmatpush1.msra.mxu0 0.0
        %1733 = vmatprep.subr.mxu0 0.0
        %1734 = vmatpush1.msra.mxu0 0.0
        %1735 = vmatprep.subr.mxu0 0.0
        %1736 = vmatpush1.msra.mxu0 0.0
        %1737 = vmatprep.subr.mxu0 0.0
        %1738 = vmatpush1.msra.mxu0 0.0
        %1739 = vmatprep.mubr.f32.mxu0 0.0
        %1740 = vmatmul.mubr.f32.gmra.mrb[0].mxu0 %v474
        %v1741 = vpop.f32.mrb[0].mxu0
        %v1742 = vadd.f32 %v1672, %v1741
        %v1743 = vpop.f32.mrb[0].mxu0
        %1744 = vdwg.mxu0
        %1745 = vmatprep.subr.mxu0 0.0
        %1746 = vmatpush1.msra.mxu0 %v394
        %1747 = vmatprep.subr.mxu0 0.0
        %1748 = vmatpush1.msra.mxu0 0.0
        %1749 = vmatprep.subr.mxu0 0.0
        %1750 = vmatpush1.msra.mxu0 0.0
        %1751 = vmatprep.subr.mxu0 0.0
        %1752 = vmatpush1.msra.mxu0 0.0
        %1753 = vmatprep.subr.mxu0 0.0
        %1754 = vmatpush1.msra.mxu0 0.0
        %1755 = vmatprep.subr.mxu0 0.0
        %1756 = vmatpush1.msra.mxu0 0.0
        %1757 = vmatprep.subr.mxu0 0.0
        %1758 = vmatpush1.msra.mxu0 0.0
        %1759 = vmatprep.subr.mxu0 0.0
        %1760 = vmatpush1.msra.mxu0 0.0
        %1761 = vmatprep.subr.mxu0 0.0
        %1762 = vmatpush1.msra.mxu0 0.0
        %1763 = vmatprep.subr.mxu0 0.0
        %1764 = vmatpush1.msra.mxu0 0.0
        %1765 = vmatprep.subr.mxu0 0.0
        %1766 = vmatpush1.msra.mxu0 0.0
        %1767 = vmatprep.subr.mxu0 0.0
        %1768 = vmatpush1.msra.mxu0 0.0
        %1769 = vmatprep.subr.mxu0 0.0
        %1770 = vmatpush1.msra.mxu0 0.0
        %1771 = vmatprep.subr.mxu0 0.0
        %1772 = vmatpush1.msra.mxu0 0.0
        %1773 = vmatprep.subr.mxu0 0.0
        %1774 = vmatpush1.msra.mxu0 0.0
        %1775 = vmatprep.subr.mxu0 0.0
        %1776 = vmatpush1.msra.mxu0 0.0
        %1777 = vmatprep.subr.mxu0 0.0
        %1778 = vmatpush1.msra.mxu0 0.0
        %1779 = vmatprep.subr.mxu0 0.0
        %1780 = vmatpush1.msra.mxu0 0.0
        %1781 = vmatprep.subr.mxu0 0.0
        %1782 = vmatpush1.msra.mxu0 0.0
        %1783 = vmatprep.subr.mxu0 0.0
        %1784 = vmatpush1.msra.mxu0 0.0
        %1785 = vmatprep.subr.mxu0 0.0
        %1786 = vmatpush1.msra.mxu0 0.0
        %1787 = vmatprep.subr.mxu0 0.0
        %1788 = vmatpush1.msra.mxu0 0.0
        %1789 = vmatprep.subr.mxu0 0.0
        %1790 = vmatpush1.msra.mxu0 0.0
        %1791 = vmatprep.subr.mxu0 0.0
        %1792 = vmatpush1.msra.mxu0 0.0
        %1793 = vmatprep.subr.mxu0 0.0
        %1794 = vmatpush1.msra.mxu0 0.0
        %1795 = vmatprep.subr.mxu0 0.0
        %1796 = vmatpush1.msra.mxu0 0.0
        %1797 = vmatprep.subr.mxu0 0.0
        %1798 = vmatpush1.msra.mxu0 0.0
        %1799 = vmatprep.subr.mxu0 0.0
        %1800 = vmatpush1.msra.mxu0 0.0
        %1801 = vmatprep.subr.mxu0 0.0
        %1802 = vmatpush1.msra.mxu0 0.0
        %1803 = vmatprep.subr.mxu0 0.0
        %1804 = vmatpush1.msra.mxu0 0.0
        %1805 = vmatprep.subr.mxu0 0.0
        %1806 = vmatpush1.msra.mxu0 0.0
        %1807 = vmatprep.subr.mxu0 0.0
        %1808 = vmatpush1.msra.mxu0 0.0
        %1809 = vmatprep.mubr.f32.mxu0 0.0
        %1810 = vmatmul.mubr.f32.gmra.mrb[0].mxu0 %v635
        %v1811 = vpop.f32.mrb[0].mxu0
        %v1812 = vadd.f32 0.0, %v1811
        %v1813 = vpop.f32.mrb[0].mxu0
        %1814 = vdwg.mxu0
        %v1815 = vadd.f32 %v1742, %v1812
        %1816 = vmatprep.subr.mxu0 0.0
        %1817 = vmatpush1.msra.mxu0 %v477
        %1818 = vmatprep.subr.mxu0 0.0
        %1819 = vmatpush1.msra.mxu0 0.0
        %1820 = vmatprep.subr.mxu0 0.0
        %1821 = vmatpush1.msra.mxu0 0.0
        %1822 = vmatprep.subr.mxu0 0.0
        %1823 = vmatpush1.msra.mxu0 0.0
        %1824 = vmatprep.subr.mxu0 0.0
        %1825 = vmatpush1.msra.mxu0 0.0
        %1826 = vmatprep.subr.mxu0 0.0
        %1827 = vmatpush1.msra.mxu0 0.0
        %1828 = vmatprep.subr.mxu0 0.0
        %1829 = vmatpush1.msra.mxu0 0.0
        %1830 = vmatprep.subr.mxu0 0.0
        %1831 = vmatpush1.msra.mxu0 0.0
        %1832 = vmatprep.subr.mxu0 0.0
        %1833 = vmatpush1.msra.mxu0 0.0
        %1834 = vmatprep.subr.mxu0 0.0
        %1835 = vmatpush1.msra.mxu0 0.0
        %1836 = vmatprep.subr.mxu0 0.0
        %1837 = vmatpush1.msra.mxu0 0.0
        %1838 = vmatprep.subr.mxu0 0.0
        %1839 = vmatpush1.msra.mxu0 0.0
        %1840 = vmatprep.subr.mxu0 0.0
        %1841 = vmatpush1.msra.mxu0 0.0
        %1842 = vmatprep.subr.mxu0 0.0
        %1843 = vmatpush1.msra.mxu0 0.0
        %1844 = vmatprep.subr.mxu0 0.0
        %1845 = vmatpush1.msra.mxu0 0.0
        %1846 = vmatprep.subr.mxu0 0.0
        %1847 = vmatpush1.msra.mxu0 0.0
        %1848 = vmatprep.subr.mxu0 0.0
        %1849 = vmatpush1.msra.mxu0 0.0
        %1850 = vmatprep.subr.mxu0 0.0
        %1851 = vmatpush1.msra.mxu0 0.0
        %1852 = vmatprep.subr.mxu0 0.0
        %1853 = vmatpush1.msra.mxu0 0.0
        %1854 = vmatprep.subr.mxu0 0.0
        %1855 = vmatpush1.msra.mxu0 0.0
        %1856 = vmatprep.subr.mxu0 0.0
        %1857 = vmatpush1.msra.mxu0 0.0
        %1858 = vmatprep.subr.mxu0 0.0
        %1859 = vmatpush1.msra.mxu0 0.0
        %1860 = vmatprep.subr.mxu0 0.0
        %1861 = vmatpush1.msra.mxu0 0.0
        %1862 = vmatprep.subr.mxu0 0.0
        %1863 = vmatpush1.msra.mxu0 0.0
        %1864 = vmatprep.subr.mxu0 0.0
        %1865 = vmatpush1.msra.mxu0 0.0
        %1866 = vmatprep.subr.mxu0 0.0
        %1867 = vmatpush1.msra.mxu0 0.0
        %1868 = vmatprep.subr.mxu0 0.0
        %1869 = vmatpush1.msra.mxu0 0.0
        %1870 = vmatprep.subr.mxu0 0.0
        %1871 = vmatpush1.msra.mxu0 0.0
        %1872 = vmatprep.subr.mxu0 0.0
        %1873 = vmatpush1.msra.mxu0 0.0
        %1874 = vmatprep.subr.mxu0 0.0
        %1875 = vmatpush1.msra.mxu0 0.0
        %1876 = vmatprep.subr.mxu0 0.0
        %1877 = vmatpush1.msra.mxu0 0.0
        %1878 = vmatprep.subr.mxu0 0.0
        %1879 = vmatpush1.msra.mxu0 0.0
        %1880 = vmatprep.mubr.f32.mxu0 0.0
        %1881 = vmatmul.mubr.f32.gmra.mrb[0].mxu0 %v718
        %v1882 = vpop.f32.mrb[0].mxu0
        %v1883 = vadd.f32 0.0, %v1882
        %v1884 = vpop.f32.mrb[0].mxu0
        %1885 = vdwg.mxu0
        %v1886 = vadd.f32 %v1815, %v1883
        %1887 = vmatprep.subr.mxu0 0.0
        %1888 = vmatpush1.msra.mxu0 %v558
        %1889 = vmatprep.subr.mxu0 0.0
        %1890 = vmatpush1.msra.mxu0 0.0
        %1891 = vmatprep.subr.mxu0 0.0
        %1892 = vmatpush1.msra.mxu0 0.0
        %1893 = vmatprep.subr.mxu0 0.0
        %1894 = vmatpush1.msra.mxu0 0.0
        %1895 = vmatprep.subr.mxu0 0.0
        %1896 = vmatpush1.msra.mxu0 0.0
        %1897 = vmatprep.subr.mxu0 0.0
        %1898 = vmatpush1.msra.mxu0 0.0
        %1899 = vmatprep.subr.mxu0 0.0
        %1900 = vmatpush1.msra.mxu0 0.0
        %1901 = vmatprep.subr.mxu0 0.0
        %1902 = vmatpush1.msra.mxu0 0.0
        %1903 = vmatprep.subr.mxu0 0.0
        %1904 = vmatpush1.msra.mxu0 0.0
        %1905 = vmatprep.subr.mxu0 0.0
        %1906 = vmatpush1.msra.mxu0 0.0
        %1907 = vmatprep.subr.mxu0 0.0
        %1908 = vmatpush1.msra.mxu0 0.0
        %1909 = vmatprep.subr.mxu0 0.0
        %1910 = vmatpush1.msra.mxu0 0.0
        %1911 = vmatprep.subr.mxu0 0.0
        %1912 = vmatpush1.msra.mxu0 0.0
        %1913 = vmatprep.subr.mxu0 0.0
        %1914 = vmatpush1.msra.mxu0 0.0
        %1915 = vmatprep.subr.mxu0 0.0
        %1916 = vmatpush1.msra.mxu0 0.0
        %1917 = vmatprep.subr.mxu0 0.0
        %1918 = vmatpush1.msra.mxu0 0.0
        %1919 = vmatprep.subr.mxu0 0.0
        %1920 = vmatpush1.msra.mxu0 0.0
        %1921 = vmatprep.subr.mxu0 0.0
        %1922 = vmatpush1.msra.mxu0 0.0
        %1923 = vmatprep.subr.mxu0 0.0
        %1924 = vmatpush1.msra.mxu0 0.0
        %1925 = vmatprep.subr.mxu0 0.0
        %1926 = vmatpush1.msra.mxu0 0.0
        %1927 = vmatprep.subr.mxu0 0.0
        %1928 = vmatpush1.msra.mxu0 0.0
        %1929 = vmatprep.subr.mxu0 0.0
        %1930 = vmatpush1.msra.mxu0 0.0
        %1931 = vmatprep.subr.mxu0 0.0
        %1932 = vmatpush1.msra.mxu0 0.0
        %1933 = vmatprep.subr.mxu0 0.0
        %1934 = vmatpush1.msra.mxu0 0.0
        %1935 = vmatprep.subr.mxu0 0.0
        %1936 = vmatpush1.msra.mxu0 0.0
        %1937 = vmatprep.subr.mxu0 0.0
        %1938 = vmatpush1.msra.mxu0 0.0
        %1939 = vmatprep.subr.mxu0 0.0
        %1940 = vmatpush1.msra.mxu0 0.0
        %1941 = vmatprep.subr.mxu0 0.0
        %1942 = vmatpush1.msra.mxu0 0.0
        %1943 = vmatprep.subr.mxu0 0.0
        %1944 = vmatpush1.msra.mxu0 0.0
        %1945 = vmatprep.subr.mxu0 0.0
        %1946 = vmatpush1.msra.mxu0 0.0
        %1947 = vmatprep.subr.mxu0 0.0
        %1948 = vmatpush1.msra.mxu0 0.0
        %1949 = vmatprep.subr.mxu0 0.0
        %1950 = vmatpush1.msra.mxu0 0.0
        %1951 = vmatprep.mubr.f32.mxu0 0.0
        %1952 = vmatmul.mubr.f32.gmra.mrb[0].mxu0 %v799
        %v1953 = vpop.f32.mrb[0].mxu0
        %v1954 = vadd.f32 0.0, %v1953
        %v1955 = vpop.f32.mrb[0].mxu0
        %1956 = vdwg.mxu0
        %v1957 = vadd.f32 %v1886, %v1954
        %1958 = vmatprep.subr.mxu0 0.0
        %1959 = vmatpush1.msra.mxu0 %v638
        %1960 = vmatprep.subr.mxu0 0.0
        %1961 = vmatpush1.msra.mxu0 0.0
        %1962 = vmatprep.subr.mxu0 0.0
        %1963 = vmatpush1.msra.mxu0 0.0
        %1964 = vmatprep.subr.mxu0 0.0
        %1965 = vmatpush1.msra.mxu0 0.0
        %1966 = vmatprep.subr.mxu0 0.0
        %1967 = vmatpush1.msra.mxu0 0.0
        %1968 = vmatprep.subr.mxu0 0.0
        %1969 = vmatpush1.msra.mxu0 0.0
        %1970 = vmatprep.subr.mxu0 0.0
        %1971 = vmatpush1.msra.mxu0 0.0
        %1972 = vmatprep.subr.mxu0 0.0
        %1973 = vmatpush1.msra.mxu0 0.0
        %1974 = vmatprep.subr.mxu0 0.0
        %1975 = vmatpush1.msra.mxu0 0.0
        %1976 = vmatprep.subr.mxu0 0.0
        %1977 = vmatpush1.msra.mxu0 0.0
        %1978 = vmatprep.subr.mxu0 0.0
        %1979 = vmatpush1.msra.mxu0 0.0
        %1980 = vmatprep.subr.mxu0 0.0
        %1981 = vmatpush1.msra.mxu0 0.0
        %1982 = vmatprep.subr.mxu0 0.0
        %1983 = vmatpush1.msra.mxu0 0.0
        %1984 = vmatprep.subr.mxu0 0.0
        %1985 = vmatpush1.msra.mxu0 0.0
        %1986 = vmatprep.subr.mxu0 0.0
        %1987 = vmatpush1.msra.mxu0 0.0
        %1988 = vmatprep.subr.mxu0 0.0
        %1989 = vmatpush1.msra.mxu0 0.0
        %1990 = vmatprep.subr.mxu0 0.0
        %1991 = vmatpush1.msra.mxu0 0.0
        %1992 = vmatprep.subr.mxu0 0.0
        %1993 = vmatpush1.msra.mxu0 0.0
        %1994 = vmatprep.subr.mxu0 0.0
        %1995 = vmatpush1.msra.mxu0 0.0
        %1996 = vmatprep.subr.mxu0 0.0
        %1997 = vmatpush1.msra.mxu0 0.0
        %1998 = vmatprep.subr.mxu0 0.0
        %1999 = vmatpush1.msra.mxu0 0.0
        %2000 = vmatprep.subr.mxu0 0.0
        %2001 = vmatpush1.msra.mxu0 0.0
        %2002 = vmatprep.subr.mxu0 0.0
        %2003 = vmatpush1.msra.mxu0 0.0
        %2004 = vmatprep.subr.mxu0 0.0
        %2005 = vmatpush1.msra.mxu0 0.0
        %2006 = vmatprep.subr.mxu0 0.0
        %2007 = vmatpush1.msra.mxu0 0.0
        %2008 = vmatprep.subr.mxu0 0.0
        %2009 = vmatpush1.msra.mxu0 0.0
        %2010 = vmatprep.subr.mxu0 0.0
        %2011 = vmatpush1.msra.mxu0 0.0
        %2012 = vmatprep.subr.mxu0 0.0
        %2013 = vmatpush1.msra.mxu0 0.0
        %2014 = vmatprep.subr.mxu0 0.0
        %2015 = vmatpush1.msra.mxu0 0.0
        %2016 = vmatprep.subr.mxu0 0.0
        %2017 = vmatpush1.msra.mxu0 0.0
        %2018 = vmatprep.subr.mxu0 0.0
        %2019 = vmatpush1.msra.mxu0 0.0
        %2020 = vmatprep.subr.mxu0 0.0
        %2021 = vmatpush1.msra.mxu0 0.0
        %2022 = vmatprep.mubr.f32.mxu0 0.0
        %2023 = vmatmul.mubr.f32.gmra.mrb[0].mxu0 %v879
        %v2024 = vpop.f32.mrb[0].mxu0
        %v2025 = vadd.f32 0.0, %v2024
        %v2026 = vpop.f32.mrb[0].mxu0
        %2027 = vdwg.mxu0
        %v2028 = vadd.f32 %v1957, %v2025
        %s2029 = sadd.s32 %s224, 3
        %s2030 = smul.u32 %s2029, 16
        %s2031 = scalar_lea.vmem %s207, %s2030
        %v2032 = vld [vmem:[%s2031] sm:$0xff]
        %v2034 = vsel %vm233, %v2032, 0
        %2036 = vmatprep.subr.mxu0 0.0
        %2037 = vmatpush1.msra.mxu0 %v721
        %2038 = vmatprep.subr.mxu0 0.0
        %2039 = vmatpush1.msra.mxu0 0.0
        %2040 = vmatprep.subr.mxu0 0.0
        %2041 = vmatpush1.msra.mxu0 0.0
        %2042 = vmatprep.subr.mxu0 0.0
        %2043 = vmatpush1.msra.mxu0 0.0
        %2044 = vmatprep.subr.mxu0 0.0
        %2045 = vmatpush1.msra.mxu0 0.0
        %2046 = vmatprep.subr.mxu0 0.0
        %2047 = vmatpush1.msra.mxu0 0.0
        %2048 = vmatprep.subr.mxu0 0.0
        %2049 = vmatpush1.msra.mxu0 0.0
        %2050 = vmatprep.subr.mxu0 0.0
        %2051 = vmatpush1.msra.mxu0 0.0
        %2052 = vmatprep.subr.mxu0 0.0
        %2053 = vmatpush1.msra.mxu0 0.0
        %2054 = vmatprep.subr.mxu0 0.0
        %2055 = vmatpush1.msra.mxu0 0.0
        %2056 = vmatprep.subr.mxu0 0.0
        %2057 = vmatpush1.msra.mxu0 0.0
        %2058 = vmatprep.subr.mxu0 0.0
        %2059 = vmatpush1.msra.mxu0 0.0
        %2060 = vmatprep.subr.mxu0 0.0
        %2061 = vmatpush1.msra.mxu0 0.0
        %2062 = vmatprep.subr.mxu0 0.0
        %2063 = vmatpush1.msra.mxu0 0.0
        %2064 = vmatprep.subr.mxu0 0.0
        %2065 = vmatpush1.msra.mxu0 0.0
        %2066 = vmatprep.subr.mxu0 0.0
        %2067 = vmatpush1.msra.mxu0 0.0
        %2068 = vmatprep.subr.mxu0 0.0
        %2069 = vmatpush1.msra.mxu0 0.0
        %2070 = vmatprep.subr.mxu0 0.0
        %2071 = vmatpush1.msra.mxu0 0.0
        %2072 = vmatprep.subr.mxu0 0.0
        %2073 = vmatpush1.msra.mxu0 0.0
        %2074 = vmatprep.subr.mxu0 0.0
        %2075 = vmatpush1.msra.mxu0 0.0
        %2076 = vmatprep.subr.mxu0 0.0
        %2077 = vmatpush1.msra.mxu0 0.0
        %2078 = vmatprep.subr.mxu0 0.0
        %2079 = vmatpush1.msra.mxu0 0.0
        %2080 = vmatprep.subr.mxu0 0.0
        %2081 = vmatpush1.msra.mxu0 0.0
        %2082 = vmatprep.subr.mxu0 0.0
        %2083 = vmatpush1.msra.mxu0 0.0
        %2084 = vmatprep.subr.mxu0 0.0
        %2085 = vmatpush1.msra.mxu0 0.0
        %2086 = vmatprep.subr.mxu0 0.0
        %2087 = vmatpush1.msra.mxu0 0.0
        %2088 = vmatprep.subr.mxu0 0.0
        %2089 = vmatpush1.msra.mxu0 0.0
        %2090 = vmatprep.subr.mxu0 0.0
        %2091 = vmatpush1.msra.mxu0 0.0
        %2092 = vmatprep.subr.mxu0 0.0
        %2093 = vmatpush1.msra.mxu0 0.0
        %2094 = vmatprep.subr.mxu0 0.0
        %2095 = vmatpush1.msra.mxu0 0.0
        %2096 = vmatprep.subr.mxu0 0.0
        %2097 = vmatpush1.msra.mxu0 0.0
        %2098 = vmatprep.subr.mxu0 0.0
        %2099 = vmatpush1.msra.mxu0 0.0
        %2100 = vmatprep.mubr.f32.mxu0 0.0
        %2101 = vmatmul.mubr.f32.gmra.mrb[0].mxu0 %v2034
        %v2102 = vpop.f32.mrb[0].mxu0
        %v2103 = vadd.f32 0.0, %v2102
        %v2104 = vpop.f32.mrb[0].mxu0
        %2105 = vdwg.mxu0
        %v2106 = vadd.f32 %v2028, %v2103
        %s2107 = scalar_lea.vmem %s212, %s2030
        %v2108 = vld [vmem:[%s2107] sm:$0xff]
        %v2110 = vsel %vm233, %v2108, 0
        %2112 = vmatprep.subr.mxu0 0.0
        %2113 = vmatpush1.msra.mxu0 %v802
        %2114 = vmatprep.subr.mxu0 0.0
        %2115 = vmatpush1.msra.mxu0 0.0
        %2116 = vmatprep.subr.mxu0 0.0
        %2117 = vmatpush1.msra.mxu0 0.0
        %2118 = vmatprep.subr.mxu0 0.0
        %2119 = vmatpush1.msra.mxu0 0.0
        %2120 = vmatprep.subr.mxu0 0.0
        %2121 = vmatpush1.msra.mxu0 0.0
        %2122 = vmatprep.subr.mxu0 0.0
        %2123 = vmatpush1.msra.mxu0 0.0
        %2124 = vmatprep.subr.mxu0 0.0
        %2125 = vmatpush1.msra.mxu0 0.0
        %2126 = vmatprep.subr.mxu0 0.0
        %2127 = vmatpush1.msra.mxu0 0.0
        %2128 = vmatprep.subr.mxu0 0.0
        %2129 = vmatpush1.msra.mxu0 0.0
        %2130 = vmatprep.subr.mxu0 0.0
        %2131 = vmatpush1.msra.mxu0 0.0
        %2132 = vmatprep.subr.mxu0 0.0
        %2133 = vmatpush1.msra.mxu0 0.0
        %2134 = vmatprep.subr.mxu0 0.0
        %2135 = vmatpush1.msra.mxu0 0.0
        %2136 = vmatprep.subr.mxu0 0.0
        %2137 = vmatpush1.msra.mxu0 0.0
        %2138 = vmatprep.subr.mxu0 0.0
        %2139 = vmatpush1.msra.mxu0 0.0
        %2140 = vmatprep.subr.mxu0 0.0
        %2141 = vmatpush1.msra.mxu0 0.0
        %2142 = vmatprep.subr.mxu0 0.0
        %2143 = vmatpush1.msra.mxu0 0.0
        %2144 = vmatprep.subr.mxu0 0.0
        %2145 = vmatpush1.msra.mxu0 0.0
        %2146 = vmatprep.subr.mxu0 0.0
        %2147 = vmatpush1.msra.mxu0 0.0
        %2148 = vmatprep.subr.mxu0 0.0
        %2149 = vmatpush1.msra.mxu0 0.0
        %2150 = vmatprep.subr.mxu0 0.0
        %2151 = vmatpush1.msra.mxu0 0.0
        %2152 = vmatprep.subr.mxu0 0.0
        %2153 = vmatpush1.msra.mxu0 0.0
        %2154 = vmatprep.subr.mxu0 0.0
        %2155 = vmatpush1.msra.mxu0 0.0
        %2156 = vmatprep.subr.mxu0 0.0
        %2157 = vmatpush1.msra.mxu0 0.0
        %2158 = vmatprep.subr.mxu0 0.0
        %2159 = vmatpush1.msra.mxu0 0.0
        %2160 = vmatprep.subr.mxu0 0.0
        %2161 = vmatpush1.msra.mxu0 0.0
        %2162 = vmatprep.subr.mxu0 0.0
        %2163 = vmatpush1.msra.mxu0 0.0
        %2164 = vmatprep.subr.mxu0 0.0
        %2165 = vmatpush1.msra.mxu0 0.0
        %2166 = vmatprep.subr.mxu0 0.0
        %2167 = vmatpush1.msra.mxu0 0.0
        %2168 = vmatprep.subr.mxu0 0.0
        %2169 = vmatpush1.msra.mxu0 0.0
        %2170 = vmatprep.subr.mxu0 0.0
        %2171 = vmatpush1.msra.mxu0 0.0
        %2172 = vmatprep.subr.mxu0 0.0
        %2173 = vmatpush1.msra.mxu0 0.0
        %2174 = vmatprep.subr.mxu0 0.0
        %2175 = vmatpush1.msra.mxu0 0.0
        %2176 = vmatprep.mubr.f32.mxu0 0.0
        %2177 = vmatmul.mubr.f32.gmra.mrb[0].mxu0 %v2110
        %v2178 = vpop.f32.mrb[0].mxu0
        %v2179 = vadd.f32 0.0, %v2178
        %v2180 = vpop.f32.mrb[0].mxu0
        %2181 = vdwg.mxu0
        %v2182 = vadd.f32 %v2106, %v2179
        %v2183 = vld [vmem:[%s2031 + $0x1] sm:$0xff]
        %v2185 = vsel %vm233, %v2183, 0
        %2187 = vmatprep.subr.mxu0 0.0
        %2188 = vmatpush1.msra.mxu0 %v882
        %2189 = vmatprep.subr.mxu0 0.0
        %2190 = vmatpush1.msra.mxu0 0.0
        %2191 = vmatprep.subr.mxu0 0.0
        %2192 = vmatpush1.msra.mxu0 0.0
        %2193 = vmatprep.subr.mxu0 0.0
        %2194 = vmatpush1.msra.mxu0 0.0
        %2195 = vmatprep.subr.mxu0 0.0
        %2196 = vmatpush1.msra.mxu0 0.0
        %2197 = vmatprep.subr.mxu0 0.0
        %2198 = vmatpush1.msra.mxu0 0.0
        %2199 = vmatprep.subr.mxu0 0.0
        %2200 = vmatpush1.msra.mxu0 0.0
        %2201 = vmatprep.subr.mxu0 0.0
        %2202 = vmatpush1.msra.mxu0 0.0
        %2203 = vmatprep.subr.mxu0 0.0
        %2204 = vmatpush1.msra.mxu0 0.0
        %2205 = vmatprep.subr.mxu0 0.0
        %2206 = vmatpush1.msra.mxu0 0.0
        %2207 = vmatprep.subr.mxu0 0.0
        %2208 = vmatpush1.msra.mxu0 0.0
        %2209 = vmatprep.subr.mxu0 0.0
        %2210 = vmatpush1.msra.mxu0 0.0
        %2211 = vmatprep.subr.mxu0 0.0
        %2212 = vmatpush1.msra.mxu0 0.0
        %2213 = vmatprep.subr.mxu0 0.0
        %2214 = vmatpush1.msra.mxu0 0.0
        %2215 = vmatprep.subr.mxu0 0.0
        %2216 = vmatpush1.msra.mxu0 0.0
        %2217 = vmatprep.subr.mxu0 0.0
        %2218 = vmatpush1.msra.mxu0 0.0
        %2219 = vmatprep.subr.mxu0 0.0
        %2220 = vmatpush1.msra.mxu0 0.0
        %2221 = vmatprep.subr.mxu0 0.0
        %2222 = vmatpush1.msra.mxu0 0.0
        %2223 = vmatprep.subr.mxu0 0.0
        %2224 = vmatpush1.msra.mxu0 0.0
        %2225 = vmatprep.subr.mxu0 0.0
        %2226 = vmatpush1.msra.mxu0 0.0
        %2227 = vmatprep.subr.mxu0 0.0
        %2228 = vmatpush1.msra.mxu0 0.0
        %2229 = vmatprep.subr.mxu0 0.0
        %2230 = vmatpush1.msra.mxu0 0.0
        %2231 = vmatprep.subr.mxu0 0.0
        %2232 = vmatpush1.msra.mxu0 0.0
        %2233 = vmatprep.subr.mxu0 0.0
        %2234 = vmatpush1.msra.mxu0 0.0
        %2235 = vmatprep.subr.mxu0 0.0
        %2236 = vmatpush1.msra.mxu0 0.0
        %2237 = vmatprep.subr.mxu0 0.0
        %2238 = vmatpush1.msra.mxu0 0.0
        %2239 = vmatprep.subr.mxu0 0.0
        %2240 = vmatpush1.msra.mxu0 0.0
        %2241 = vmatprep.subr.mxu0 0.0
        %2242 = vmatpush1.msra.mxu0 0.0
        %2243 = vmatprep.subr.mxu0 0.0
        %2244 = vmatpush1.msra.mxu0 0.0
        %2245 = vmatprep.subr.mxu0 0.0
        %2246 = vmatpush1.msra.mxu0 0.0
        %2247 = vmatprep.subr.mxu0 0.0
        %2248 = vmatpush1.msra.mxu0 0.0
        %2249 = vmatprep.subr.mxu0 0.0
        %2250 = vmatpush1.msra.mxu0 0.0
        %2251 = vmatprep.mubr.f32.mxu0 0.0
        %2252 = vmatmul.mubr.f32.gmra.mrb[0].mxu0 %v2185
        %v2253 = vpop.f32.mrb[0].mxu0
        %v2254 = vadd.f32 0.0, %v2253
        %v2255 = vpop.f32.mrb[0].mxu0
        %2256 = vdwg.mxu0
        %v2257 = vadd.f32 %v2182, %v2254
        %v2258 = vmax.f32 %v1604, %v2257
        %2259 = vmatprep.subr.mxu0 0.0
        %2260 = vmatpush1.msra.mxu0 %v239
        %2261 = vmatprep.subr.mxu0 0.0
        %2262 = vmatpush1.msra.mxu0 0.0
        %2263 = vmatprep.subr.mxu0 0.0
        %2264 = vmatpush1.msra.mxu0 0.0
        %2265 = vmatprep.subr.mxu0 0.0
        %2266 = vmatpush1.msra.mxu0 0.0
        %2267 = vmatprep.subr.mxu0 0.0
        %2268 = vmatpush1.msra.mxu0 0.0
        %2269 = vmatprep.subr.mxu0 0.0
        %2270 = vmatpush1.msra.mxu0 0.0
        %2271 = vmatprep.subr.mxu0 0.0
        %2272 = vmatpush1.msra.mxu0 0.0
        %2273 = vmatprep.subr.mxu0 0.0
        %2274 = vmatpush1.msra.mxu0 0.0
        %2275 = vmatprep.subr.mxu0 0.0
        %2276 = vmatpush1.msra.mxu0 0.0
        %2277 = vmatprep.subr.mxu0 0.0
        %2278 = vmatpush1.msra.mxu0 0.0
        %2279 = vmatprep.subr.mxu0 0.0
        %2280 = vmatpush1.msra.mxu0 0.0
        %2281 = vmatprep.subr.mxu0 0.0
        %2282 = vmatpush1.msra.mxu0 0.0
        %2283 = vmatprep.subr.mxu0 0.0
        %2284 = vmatpush1.msra.mxu0 0.0
        %2285 = vmatprep.subr.mxu0 0.0
        %2286 = vmatpush1.msra.mxu0 0.0
        %2287 = vmatprep.subr.mxu0 0.0
        %2288 = vmatpush1.msra.mxu0 0.0
        %2289 = vmatprep.subr.mxu0 0.0
        %2290 = vmatpush1.msra.mxu0 0.0
        %2291 = vmatprep.subr.mxu0 0.0
        %2292 = vmatpush1.msra.mxu0 0.0
        %2293 = vmatprep.subr.mxu0 0.0
        %2294 = vmatpush1.msra.mxu0 0.0
        %2295 = vmatprep.subr.mxu0 0.0
        %2296 = vmatpush1.msra.mxu0 0.0
        %2297 = vmatprep.subr.mxu0 0.0
        %2298 = vmatpush1.msra.mxu0 0.0
        %2299 = vmatprep.subr.mxu0 0.0
        %2300 = vmatpush1.msra.mxu0 0.0
        %2301 = vmatprep.subr.mxu0 0.0
        %2302 = vmatpush1.msra.mxu0 0.0
        %2303 = vmatprep.subr.mxu0 0.0
        %2304 = vmatpush1.msra.mxu0 0.0
        %2305 = vmatprep.subr.mxu0 0.0
        %2306 = vmatpush1.msra.mxu0 0.0
        %2307 = vmatprep.subr.mxu0 0.0
        %2308 = vmatpush1.msra.mxu0 0.0
        %2309 = vmatprep.subr.mxu0 0.0
        %2310 = vmatpush1.msra.mxu0 0.0
        %2311 = vmatprep.subr.mxu0 0.0
        %2312 = vmatpush1.msra.mxu0 0.0
        %2313 = vmatprep.subr.mxu0 0.0
        %2314 = vmatpush1.msra.mxu0 0.0
        %2315 = vmatprep.subr.mxu0 0.0
        %2316 = vmatpush1.msra.mxu0 0.0
        %2317 = vmatprep.subr.mxu0 0.0
        %2318 = vmatpush1.msra.mxu0 0.0
        %2319 = vmatprep.subr.mxu0 0.0
        %2320 = vmatpush1.msra.mxu0 0.0
        %2321 = vmatprep.subr.mxu0 0.0
        %2322 = vmatpush1.msra.mxu0 0.0
        %2323 = vmatprep.mubr.f32.mxu0 0.0
        %2324 = vmatmul.mubr.f32.gmra.mrb[0].mxu0 %v635
        %v2325 = vpop.f32.mrb[0].mxu0
        %v2326 = vadd.f32 0.0, %v2325
        %v2327 = vpop.f32.mrb[0].mxu0
        %2328 = vdwg.mxu0
        %2329 = vmatprep.subr.mxu0 0.0
        %2330 = vmatpush1.msra.mxu0 %v315
        %2331 = vmatprep.subr.mxu0 0.0
        %2332 = vmatpush1.msra.mxu0 0.0
        %2333 = vmatprep.subr.mxu0 0.0
        %2334 = vmatpush1.msra.mxu0 0.0
        %2335 = vmatprep.subr.mxu0 0.0
        %2336 = vmatpush1.msra.mxu0 0.0
        %2337 = vmatprep.subr.mxu0 0.0
        %2338 = vmatpush1.msra.mxu0 0.0
        %2339 = vmatprep.subr.mxu0 0.0
        %2340 = vmatpush1.msra.mxu0 0.0
        %2341 = vmatprep.subr.mxu0 0.0
        %2342 = vmatpush1.msra.mxu0 0.0
        %2343 = vmatprep.subr.mxu0 0.0
        %2344 = vmatpush1.msra.mxu0 0.0
        %2345 = vmatprep.subr.mxu0 0.0
        %2346 = vmatpush1.msra.mxu0 0.0
        %2347 = vmatprep.subr.mxu0 0.0
        %2348 = vmatpush1.msra.mxu0 0.0
        %2349 = vmatprep.subr.mxu0 0.0
        %2350 = vmatpush1.msra.mxu0 0.0
        %2351 = vmatprep.subr.mxu0 0.0
        %2352 = vmatpush1.msra.mxu0 0.0
        %2353 = vmatprep.subr.mxu0 0.0
        %2354 = vmatpush1.msra.mxu0 0.0
        %2355 = vmatprep.subr.mxu0 0.0
        %2356 = vmatpush1.msra.mxu0 0.0
        %2357 = vmatprep.subr.mxu0 0.0
        %2358 = vmatpush1.msra.mxu0 0.0
        %2359 = vmatprep.subr.mxu0 0.0
        %2360 = vmatpush1.msra.mxu0 0.0
        %2361 = vmatprep.subr.mxu0 0.0
        %2362 = vmatpush1.msra.mxu0 0.0
        %2363 = vmatprep.subr.mxu0 0.0
        %2364 = vmatpush1.msra.mxu0 0.0
        %2365 = vmatprep.subr.mxu0 0.0
        %2366 = vmatpush1.msra.mxu0 0.0
        %2367 = vmatprep.subr.mxu0 0.0
        %2368 = vmatpush1.msra.mxu0 0.0
        %2369 = vmatprep.subr.mxu0 0.0
        %2370 = vmatpush1.msra.mxu0 0.0
        %2371 = vmatprep.subr.mxu0 0.0
        %2372 = vmatpush1.msra.mxu0 0.0
        %2373 = vmatprep.subr.mxu0 0.0
        %2374 = vmatpush1.msra.mxu0 0.0
        %2375 = vmatprep.subr.mxu0 0.0
        %2376 = vmatpush1.msra.mxu0 0.0
        %2377 = vmatprep.subr.mxu0 0.0
        %2378 = vmatpush1.msra.mxu0 0.0
        %2379 = vmatprep.subr.mxu0 0.0
        %2380 = vmatpush1.msra.mxu0 0.0
        %2381 = vmatprep.subr.mxu0 0.0
        %2382 = vmatpush1.msra.mxu0 0.0
        %2383 = vmatprep.subr.mxu0 0.0
        %2384 = vmatpush1.msra.mxu0 0.0
        %2385 = vmatprep.subr.mxu0 0.0
        %2386 = vmatpush1.msra.mxu0 0.0
        %2387 = vmatprep.subr.mxu0 0.0
        %2388 = vmatpush1.msra.mxu0 0.0
        %2389 = vmatprep.subr.mxu0 0.0
        %2390 = vmatpush1.msra.mxu0 0.0
        %2391 = vmatprep.subr.mxu0 0.0
        %2392 = vmatpush1.msra.mxu0 0.0
        %2393 = vmatprep.mubr.f32.mxu0 0.0
        %2394 = vmatmul.mubr.f32.gmra.mrb[0].mxu0 %v555
        %v2395 = vpop.f32.mrb[0].mxu0
        %v2396 = vadd.f32 %v2326, %v2395
        %v2397 = vpop.f32.mrb[0].mxu0
        %2398 = vdwg.mxu0
        %2399 = vmatprep.subr.mxu0 0.0
        %2400 = vmatpush1.msra.mxu0 %v394
        %2401 = vmatprep.subr.mxu0 0.0
        %2402 = vmatpush1.msra.mxu0 0.0
        %2403 = vmatprep.subr.mxu0 0.0
        %2404 = vmatpush1.msra.mxu0 0.0
        %2405 = vmatprep.subr.mxu0 0.0
        %2406 = vmatpush1.msra.mxu0 0.0
        %2407 = vmatprep.subr.mxu0 0.0
        %2408 = vmatpush1.msra.mxu0 0.0
        %2409 = vmatprep.subr.mxu0 0.0
        %2410 = vmatpush1.msra.mxu0 0.0
        %2411 = vmatprep.subr.mxu0 0.0
        %2412 = vmatpush1.msra.mxu0 0.0
        %2413 = vmatprep.subr.mxu0 0.0
        %2414 = vmatpush1.msra.mxu0 0.0
        %2415 = vmatprep.subr.mxu0 0.0
        %2416 = vmatpush1.msra.mxu0 0.0
        %2417 = vmatprep.subr.mxu0 0.0
        %2418 = vmatpush1.msra.mxu0 0.0
        %2419 = vmatprep.subr.mxu0 0.0
        %2420 = vmatpush1.msra.mxu0 0.0
        %2421 = vmatprep.subr.mxu0 0.0
        %2422 = vmatpush1.msra.mxu0 0.0
        %2423 = vmatprep.subr.mxu0 0.0
        %2424 = vmatpush1.msra.mxu0 0.0
        %2425 = vmatprep.subr.mxu0 0.0
        %2426 = vmatpush1.msra.mxu0 0.0
        %2427 = vmatprep.subr.mxu0 0.0
        %2428 = vmatpush1.msra.mxu0 0.0
        %2429 = vmatprep.subr.mxu0 0.0
        %2430 = vmatpush1.msra.mxu0 0.0
        %2431 = vmatprep.subr.mxu0 0.0
        %2432 = vmatpush1.msra.mxu0 0.0
        %2433 = vmatprep.subr.mxu0 0.0
        %2434 = vmatpush1.msra.mxu0 0.0
        %2435 = vmatprep.subr.mxu0 0.0
        %2436 = vmatpush1.msra.mxu0 0.0
        %2437 = vmatprep.subr.mxu0 0.0
        %2438 = vmatpush1.msra.mxu0 0.0
        %2439 = vmatprep.subr.mxu0 0.0
        %2440 = vmatpush1.msra.mxu0 0.0
        %2441 = vmatprep.subr.mxu0 0.0
        %2442 = vmatpush1.msra.mxu0 0.0
        %2443 = vmatprep.subr.mxu0 0.0
        %2444 = vmatpush1.msra.mxu0 0.0
        %2445 = vmatprep.subr.mxu0 0.0
        %2446 = vmatpush1.msra.mxu0 0.0
        %2447 = vmatprep.subr.mxu0 0.0
        %2448 = vmatpush1.msra.mxu0 0.0
        %2449 = vmatprep.subr.mxu0 0.0
        %2450 = vmatpush1.msra.mxu0 0.0
        %2451 = vmatprep.subr.mxu0 0.0
        %2452 = vmatpush1.msra.mxu0 0.0
        %2453 = vmatprep.subr.mxu0 0.0
        %2454 = vmatpush1.msra.mxu0 0.0
        %2455 = vmatprep.subr.mxu0 0.0
        %2456 = vmatpush1.msra.mxu0 0.0
        %2457 = vmatprep.subr.mxu0 0.0
        %2458 = vmatpush1.msra.mxu0 0.0
        %2459 = vmatprep.subr.mxu0 0.0
        %2460 = vmatpush1.msra.mxu0 0.0
        %2461 = vmatprep.subr.mxu0 0.0
        %2462 = vmatpush1.msra.mxu0 0.0
        %2463 = vmatprep.mubr.f32.mxu0 0.0
        %2464 = vmatmul.mubr.f32.gmra.mrb[0].mxu0 %v1314
        %v2465 = vpop.f32.mrb[0].mxu0
        %v2466 = vadd.f32 0.0, %v2465
        %v2467 = vpop.f32.mrb[0].mxu0
        %2468 = vdwg.mxu0
        %v2469 = vadd.f32 %v2396, %v2466
        %2470 = vmatprep.subr.mxu0 0.0
        %2471 = vmatpush1.msra.mxu0 %v477
        %2472 = vmatprep.subr.mxu0 0.0
        %2473 = vmatpush1.msra.mxu0 0.0
        %2474 = vmatprep.subr.mxu0 0.0
        %2475 = vmatpush1.msra.mxu0 0.0
        %2476 = vmatprep.subr.mxu0 0.0
        %2477 = vmatpush1.msra.mxu0 0.0
        %2478 = vmatprep.subr.mxu0 0.0
        %2479 = vmatpush1.msra.mxu0 0.0
        %2480 = vmatprep.subr.mxu0 0.0
        %2481 = vmatpush1.msra.mxu0 0.0
        %2482 = vmatprep.subr.mxu0 0.0
        %2483 = vmatpush1.msra.mxu0 0.0
        %2484 = vmatprep.subr.mxu0 0.0
        %2485 = vmatpush1.msra.mxu0 0.0
        %2486 = vmatprep.subr.mxu0 0.0
        %2487 = vmatpush1.msra.mxu0 0.0
        %2488 = vmatprep.subr.mxu0 0.0
        %2489 = vmatpush1.msra.mxu0 0.0
        %2490 = vmatprep.subr.mxu0 0.0
        %2491 = vmatpush1.msra.mxu0 0.0
        %2492 = vmatprep.subr.mxu0 0.0
        %2493 = vmatpush1.msra.mxu0 0.0
        %2494 = vmatprep.subr.mxu0 0.0
        %2495 = vmatpush1.msra.mxu0 0.0
        %2496 = vmatprep.subr.mxu0 0.0
        %2497 = vmatpush1.msra.mxu0 0.0
        %2498 = vmatprep.subr.mxu0 0.0
        %2499 = vmatpush1.msra.mxu0 0.0
        %2500 = vmatprep.subr.mxu0 0.0
        %2501 = vmatpush1.msra.mxu0 0.0
        %2502 = vmatprep.subr.mxu0 0.0
        %2503 = vmatpush1.msra.mxu0 0.0
        %2504 = vmatprep.subr.mxu0 0.0
        %2505 = vmatpush1.msra.mxu0 0.0
        %2506 = vmatprep.subr.mxu0 0.0
        %2507 = vmatpush1.msra.mxu0 0.0
        %2508 = vmatprep.subr.mxu0 0.0
        %2509 = vmatpush1.msra.mxu0 0.0
        %2510 = vmatprep.subr.mxu0 0.0
        %2511 = vmatpush1.msra.mxu0 0.0
        %2512 = vmatprep.subr.mxu0 0.0
        %2513 = vmatpush1.msra.mxu0 0.0
        %2514 = vmatprep.subr.mxu0 0.0
        %2515 = vmatpush1.msra.mxu0 0.0
        %2516 = vmatprep.subr.mxu0 0.0
        %2517 = vmatpush1.msra.mxu0 0.0
        %2518 = vmatprep.subr.mxu0 0.0
        %2519 = vmatpush1.msra.mxu0 0.0
        %2520 = vmatprep.subr.mxu0 0.0
        %2521 = vmatpush1.msra.mxu0 0.0
        %2522 = vmatprep.subr.mxu0 0.0
        %2523 = vmatpush1.msra.mxu0 0.0
        %2524 = vmatprep.subr.mxu0 0.0
        %2525 = vmatpush1.msra.mxu0 0.0
        %2526 = vmatprep.subr.mxu0 0.0
        %2527 = vmatpush1.msra.mxu0 0.0
        %2528 = vmatprep.subr.mxu0 0.0
        %2529 = vmatpush1.msra.mxu0 0.0
        %2530 = vmatprep.subr.mxu0 0.0
        %2531 = vmatpush1.msra.mxu0 0.0
        %2532 = vmatprep.subr.mxu0 0.0
        %2533 = vmatpush1.msra.mxu0 0.0
        %2534 = vmatprep.mubr.f32.mxu0 0.0
        %2535 = vmatmul.mubr.f32.gmra.mrb[0].mxu0 %v799
        %v2536 = vpop.f32.mrb[0].mxu0
        %v2537 = vadd.f32 0.0, %v2536
        %v2538 = vpop.f32.mrb[0].mxu0
        %2539 = vdwg.mxu0
        %v2540 = vadd.f32 %v2469, %v2537
        %2541 = vmatprep.subr.mxu0 0.0
        %2542 = vmatpush1.msra.mxu0 %v558
        %2543 = vmatprep.subr.mxu0 0.0
        %2544 = vmatpush1.msra.mxu0 0.0
        %2545 = vmatprep.subr.mxu0 0.0
        %2546 = vmatpush1.msra.mxu0 0.0
        %2547 = vmatprep.subr.mxu0 0.0
        %2548 = vmatpush1.msra.mxu0 0.0
        %2549 = vmatprep.subr.mxu0 0.0
        %2550 = vmatpush1.msra.mxu0 0.0
        %2551 = vmatprep.subr.mxu0 0.0
        %2552 = vmatpush1.msra.mxu0 0.0
        %2553 = vmatprep.subr.mxu0 0.0
        %2554 = vmatpush1.msra.mxu0 0.0
        %2555 = vmatprep.subr.mxu0 0.0
        %2556 = vmatpush1.msra.mxu0 0.0
        %2557 = vmatprep.subr.mxu0 0.0
        %2558 = vmatpush1.msra.mxu0 0.0
        %2559 = vmatprep.subr.mxu0 0.0
        %2560 = vmatpush1.msra.mxu0 0.0
        %2561 = vmatprep.subr.mxu0 0.0
        %2562 = vmatpush1.msra.mxu0 0.0
        %2563 = vmatprep.subr.mxu0 0.0
        %2564 = vmatpush1.msra.mxu0 0.0
        %2565 = vmatprep.subr.mxu0 0.0
        %2566 = vmatpush1.msra.mxu0 0.0
        %2567 = vmatprep.subr.mxu0 0.0
        %2568 = vmatpush1.msra.mxu0 0.0
        %2569 = vmatprep.subr.mxu0 0.0
        %2570 = vmatpush1.msra.mxu0 0.0
        %2571 = vmatprep.subr.mxu0 0.0
        %2572 = vmatpush1.msra.mxu0 0.0
        %2573 = vmatprep.subr.mxu0 0.0
        %2574 = vmatpush1.msra.mxu0 0.0
        %2575 = vmatprep.subr.mxu0 0.0
        %2576 = vmatpush1.msra.mxu0 0.0
        %2577 = vmatprep.subr.mxu0 0.0
        %2578 = vmatpush1.msra.mxu0 0.0
        %2579 = vmatprep.subr.mxu0 0.0
        %2580 = vmatpush1.msra.mxu0 0.0
        %2581 = vmatprep.subr.mxu0 0.0
        %2582 = vmatpush1.msra.mxu0 0.0
        %2583 = vmatprep.subr.mxu0 0.0
        %2584 = vmatpush1.msra.mxu0 0.0
        %2585 = vmatprep.subr.mxu0 0.0
        %2586 = vmatpush1.msra.mxu0 0.0
        %2587 = vmatprep.subr.mxu0 0.0
        %2588 = vmatpush1.msra.mxu0 0.0
        %2589 = vmatprep.subr.mxu0 0.0
        %2590 = vmatpush1.msra.mxu0 0.0
        %2591 = vmatprep.subr.mxu0 0.0
        %2592 = vmatpush1.msra.mxu0 0.0
        %2593 = vmatprep.subr.mxu0 0.0
        %2594 = vmatpush1.msra.mxu0 0.0
        %2595 = vmatprep.subr.mxu0 0.0
        %2596 = vmatpush1.msra.mxu0 0.0
        %2597 = vmatprep.subr.mxu0 0.0
        %2598 = vmatpush1.msra.mxu0 0.0
        %2599 = vmatprep.subr.mxu0 0.0
        %2600 = vmatpush1.msra.mxu0 0.0
        %2601 = vmatprep.subr.mxu0 0.0
        %2602 = vmatpush1.msra.mxu0 0.0
        %2603 = vmatprep.subr.mxu0 0.0
        %2604 = vmatpush1.msra.mxu0 0.0
        %2605 = vmatprep.mubr.f32.mxu0 0.0
        %2606 = vmatmul.mubr.f32.gmra.mrb[0].mxu0 %v879
        %v2607 = vpop.f32.mrb[0].mxu0
        %v2608 = vadd.f32 0.0, %v2607
        %v2609 = vpop.f32.mrb[0].mxu0
        %2610 = vdwg.mxu0
        %v2611 = vadd.f32 %v2540, %v2608
        %2612 = vmatprep.subr.mxu0 0.0
        %2613 = vmatpush1.msra.mxu0 %v638
        %2614 = vmatprep.subr.mxu0 0.0
        %2615 = vmatpush1.msra.mxu0 0.0
        %2616 = vmatprep.subr.mxu0 0.0
        %2617 = vmatpush1.msra.mxu0 0.0
        %2618 = vmatprep.subr.mxu0 0.0
        %2619 = vmatpush1.msra.mxu0 0.0
        %2620 = vmatprep.subr.mxu0 0.0
        %2621 = vmatpush1.msra.mxu0 0.0
        %2622 = vmatprep.subr.mxu0 0.0
        %2623 = vmatpush1.msra.mxu0 0.0
        %2624 = vmatprep.subr.mxu0 0.0
        %2625 = vmatpush1.msra.mxu0 0.0
        %2626 = vmatprep.subr.mxu0 0.0
        %2627 = vmatpush1.msra.mxu0 0.0
        %2628 = vmatprep.subr.mxu0 0.0
        %2629 = vmatpush1.msra.mxu0 0.0
        %2630 = vmatprep.subr.mxu0 0.0
        %2631 = vmatpush1.msra.mxu0 0.0
        %2632 = vmatprep.subr.mxu0 0.0
        %2633 = vmatpush1.msra.mxu0 0.0
        %2634 = vmatprep.subr.mxu0 0.0
        %2635 = vmatpush1.msra.mxu0 0.0
        %2636 = vmatprep.subr.mxu0 0.0
        %2637 = vmatpush1.msra.mxu0 0.0
        %2638 = vmatprep.subr.mxu0 0.0
        %2639 = vmatpush1.msra.mxu0 0.0
        %2640 = vmatprep.subr.mxu0 0.0
        %2641 = vmatpush1.msra.mxu0 0.0
        %2642 = vmatprep.subr.mxu0 0.0
        %2643 = vmatpush1.msra.mxu0 0.0
        %2644 = vmatprep.subr.mxu0 0.0
        %2645 = vmatpush1.msra.mxu0 0.0
        %2646 = vmatprep.subr.mxu0 0.0
        %2647 = vmatpush1.msra.mxu0 0.0
        %2648 = vmatprep.subr.mxu0 0.0
        %2649 = vmatpush1.msra.mxu0 0.0
        %2650 = vmatprep.subr.mxu0 0.0
        %2651 = vmatpush1.msra.mxu0 0.0
        %2652 = vmatprep.subr.mxu0 0.0
        %2653 = vmatpush1.msra.mxu0 0.0
        %2654 = vmatprep.subr.mxu0 0.0
        %2655 = vmatpush1.msra.mxu0 0.0
        %2656 = vmatprep.subr.mxu0 0.0
        %2657 = vmatpush1.msra.mxu0 0.0
        %2658 = vmatprep.subr.mxu0 0.0
        %2659 = vmatpush1.msra.mxu0 0.0
        %2660 = vmatprep.subr.mxu0 0.0
        %2661 = vmatpush1.msra.mxu0 0.0
        %2662 = vmatprep.subr.mxu0 0.0
        %2663 = vmatpush1.msra.mxu0 0.0
        %2664 = vmatprep.subr.mxu0 0.0
        %2665 = vmatpush1.msra.mxu0 0.0
        %2666 = vmatprep.subr.mxu0 0.0
        %2667 = vmatpush1.msra.mxu0 0.0
        %2668 = vmatprep.subr.mxu0 0.0
        %2669 = vmatpush1.msra.mxu0 0.0
        %2670 = vmatprep.subr.mxu0 0.0
        %2671 = vmatpush1.msra.mxu0 0.0
        %2672 = vmatprep.subr.mxu0 0.0
        %2673 = vmatpush1.msra.mxu0 0.0
        %2674 = vmatprep.subr.mxu0 0.0
        %2675 = vmatpush1.msra.mxu0 0.0
        %2676 = vmatprep.mubr.f32.mxu0 0.0
        %2677 = vmatmul.mubr.f32.gmra.mrb[0].mxu0 %v1531
        %v2678 = vpop.f32.mrb[0].mxu0
        %v2679 = vadd.f32 0.0, %v2678
        %v2680 = vpop.f32.mrb[0].mxu0
        %2681 = vdwg.mxu0
        %v2682 = vadd.f32 %v2611, %v2679
        %2683 = vmatprep.subr.mxu0 0.0
        %2684 = vmatpush1.msra.mxu0 %v721
        %2685 = vmatprep.subr.mxu0 0.0
        %2686 = vmatpush1.msra.mxu0 0.0
        %2687 = vmatprep.subr.mxu0 0.0
        %2688 = vmatpush1.msra.mxu0 0.0
        %2689 = vmatprep.subr.mxu0 0.0
        %2690 = vmatpush1.msra.mxu0 0.0
        %2691 = vmatprep.subr.mxu0 0.0
        %2692 = vmatpush1.msra.mxu0 0.0
        %2693 = vmatprep.subr.mxu0 0.0
        %2694 = vmatpush1.msra.mxu0 0.0
        %2695 = vmatprep.subr.mxu0 0.0
        %2696 = vmatpush1.msra.mxu0 0.0
        %2697 = vmatprep.subr.mxu0 0.0
        %2698 = vmatpush1.msra.mxu0 0.0
        %2699 = vmatprep.subr.mxu0 0.0
        %2700 = vmatpush1.msra.mxu0 0.0
        %2701 = vmatprep.subr.mxu0 0.0
        %2702 = vmatpush1.msra.mxu0 0.0
        %2703 = vmatprep.subr.mxu0 0.0
        %2704 = vmatpush1.msra.mxu0 0.0
        %2705 = vmatprep.subr.mxu0 0.0
        %2706 = vmatpush1.msra.mxu0 0.0
        %2707 = vmatprep.subr.mxu0 0.0
        %2708 = vmatpush1.msra.mxu0 0.0
        %2709 = vmatprep.subr.mxu0 0.0
        %2710 = vmatpush1.msra.mxu0 0.0
        %2711 = vmatprep.subr.mxu0 0.0
        %2712 = vmatpush1.msra.mxu0 0.0
        %2713 = vmatprep.subr.mxu0 0.0
        %2714 = vmatpush1.msra.mxu0 0.0
        %2715 = vmatprep.subr.mxu0 0.0
        %2716 = vmatpush1.msra.mxu0 0.0
        %2717 = vmatprep.subr.mxu0 0.0
        %2718 = vmatpush1.msra.mxu0 0.0
        %2719 = vmatprep.subr.mxu0 0.0
        %2720 = vmatpush1.msra.mxu0 0.0
        %2721 = vmatprep.subr.mxu0 0.0
        %2722 = vmatpush1.msra.mxu0 0.0
        %2723 = vmatprep.subr.mxu0 0.0
        %2724 = vmatpush1.msra.mxu0 0.0
        %2725 = vmatprep.subr.mxu0 0.0
        %2726 = vmatpush1.msra.mxu0 0.0
        %2727 = vmatprep.subr.mxu0 0.0
        %2728 = vmatpush1.msra.mxu0 0.0
        %2729 = vmatprep.subr.mxu0 0.0
        %2730 = vmatpush1.msra.mxu0 0.0
        %2731 = vmatprep.subr.mxu0 0.0
        %2732 = vmatpush1.msra.mxu0 0.0
        %2733 = vmatprep.subr.mxu0 0.0
        %2734 = vmatpush1.msra.mxu0 0.0
        %2735 = vmatprep.subr.mxu0 0.0
        %2736 = vmatpush1.msra.mxu0 0.0
        %2737 = vmatprep.subr.mxu0 0.0
        %2738 = vmatpush1.msra.mxu0 0.0
        %2739 = vmatprep.subr.mxu0 0.0
        %2740 = vmatpush1.msra.mxu0 0.0
        %2741 = vmatprep.subr.mxu0 0.0
        %2742 = vmatpush1.msra.mxu0 0.0
        %2743 = vmatprep.subr.mxu0 0.0
        %2744 = vmatpush1.msra.mxu0 0.0
        %2745 = vmatprep.subr.mxu0 0.0
        %2746 = vmatpush1.msra.mxu0 0.0
        %2747 = vmatprep.mubr.f32.mxu0 0.0
        %2748 = vmatmul.mubr.f32.gmra.mrb[0].mxu0 %v2110
        %v2749 = vpop.f32.mrb[0].mxu0
        %v2750 = vadd.f32 0.0, %v2749
        %v2751 = vpop.f32.mrb[0].mxu0
        %2752 = vdwg.mxu0
        %v2753 = vadd.f32 %v2682, %v2750
        %2754 = vmatprep.subr.mxu0 0.0
        %2755 = vmatpush1.msra.mxu0 %v802
        %2756 = vmatprep.subr.mxu0 0.0
        %2757 = vmatpush1.msra.mxu0 0.0
        %2758 = vmatprep.subr.mxu0 0.0
        %2759 = vmatpush1.msra.mxu0 0.0
        %2760 = vmatprep.subr.mxu0 0.0
        %2761 = vmatpush1.msra.mxu0 0.0
        %2762 = vmatprep.subr.mxu0 0.0
        %2763 = vmatpush1.msra.mxu0 0.0
        %2764 = vmatprep.subr.mxu0 0.0
        %2765 = vmatpush1.msra.mxu0 0.0
        %2766 = vmatprep.subr.mxu0 0.0
        %2767 = vmatpush1.msra.mxu0 0.0
        %2768 = vmatprep.subr.mxu0 0.0
        %2769 = vmatpush1.msra.mxu0 0.0
        %2770 = vmatprep.subr.mxu0 0.0
        %2771 = vmatpush1.msra.mxu0 0.0
        %2772 = vmatprep.subr.mxu0 0.0
        %2773 = vmatpush1.msra.mxu0 0.0
        %2774 = vmatprep.subr.mxu0 0.0
        %2775 = vmatpush1.msra.mxu0 0.0
        %2776 = vmatprep.subr.mxu0 0.0
        %2777 = vmatpush1.msra.mxu0 0.0
        %2778 = vmatprep.subr.mxu0 0.0
        %2779 = vmatpush1.msra.mxu0 0.0
        %2780 = vmatprep.subr.mxu0 0.0
        %2781 = vmatpush1.msra.mxu0 0.0
        %2782 = vmatprep.subr.mxu0 0.0
        %2783 = vmatpush1.msra.mxu0 0.0
        %2784 = vmatprep.subr.mxu0 0.0
        %2785 = vmatpush1.msra.mxu0 0.0
        %2786 = vmatprep.subr.mxu0 0.0
        %2787 = vmatpush1.msra.mxu0 0.0
        %2788 = vmatprep.subr.mxu0 0.0
        %2789 = vmatpush1.msra.mxu0 0.0
        %2790 = vmatprep.subr.mxu0 0.0
        %2791 = vmatpush1.msra.mxu0 0.0
        %2792 = vmatprep.subr.mxu0 0.0
        %2793 = vmatpush1.msra.mxu0 0.0
        %2794 = vmatprep.subr.mxu0 0.0
        %2795 = vmatpush1.msra.mxu0 0.0
        %2796 = vmatprep.subr.mxu0 0.0
        %2797 = vmatpush1.msra.mxu0 0.0
        %2798 = vmatprep.subr.mxu0 0.0
        %2799 = vmatpush1.msra.mxu0 0.0
        %2800 = vmatprep.subr.mxu0 0.0
        %2801 = vmatpush1.msra.mxu0 0.0
        %2802 = vmatprep.subr.mxu0 0.0
        %2803 = vmatpush1.msra.mxu0 0.0
        %2804 = vmatprep.subr.mxu0 0.0
        %2805 = vmatpush1.msra.mxu0 0.0
        %2806 = vmatprep.subr.mxu0 0.0
        %2807 = vmatpush1.msra.mxu0 0.0
        %2808 = vmatprep.subr.mxu0 0.0
        %2809 = vmatpush1.msra.mxu0 0.0
        %2810 = vmatprep.subr.mxu0 0.0
        %2811 = vmatpush1.msra.mxu0 0.0
        %2812 = vmatprep.subr.mxu0 0.0
        %2813 = vmatpush1.msra.mxu0 0.0
        %2814 = vmatprep.subr.mxu0 0.0
        %2815 = vmatpush1.msra.mxu0 0.0
        %2816 = vmatprep.subr.mxu0 0.0
        %2817 = vmatpush1.msra.mxu0 0.0
        %2818 = vmatprep.mubr.f32.mxu0 0.0
        %2819 = vmatmul.mubr.f32.gmra.mrb[0].mxu0 %v2185
        %v2820 = vpop.f32.mrb[0].mxu0
        %v2821 = vadd.f32 0.0, %v2820
        %v2822 = vpop.f32.mrb[0].mxu0
        %2823 = vdwg.mxu0
        %v2824 = vadd.f32 %v2753, %v2821
        %v2825 = vld [vmem:[%s2107 + $0x1] sm:$0xff]
        %v2827 = vsel %vm233, %v2825, 0
        %2829 = vmatprep.subr.mxu0 0.0
        %2830 = vmatpush1.msra.mxu0 %v882
        %2831 = vmatprep.subr.mxu0 0.0
        %2832 = vmatpush1.msra.mxu0 0.0
        %2833 = vmatprep.subr.mxu0 0.0
        %2834 = vmatpush1.msra.mxu0 0.0
        %2835 = vmatprep.subr.mxu0 0.0
        %2836 = vmatpush1.msra.mxu0 0.0
        %2837 = vmatprep.subr.mxu0 0.0
        %2838 = vmatpush1.msra.mxu0 0.0
        %2839 = vmatprep.subr.mxu0 0.0
        %2840 = vmatpush1.msra.mxu0 0.0
        %2841 = vmatprep.subr.mxu0 0.0
        %2842 = vmatpush1.msra.mxu0 0.0
        %2843 = vmatprep.subr.mxu0 0.0
        %2844 = vmatpush1.msra.mxu0 0.0
        %2845 = vmatprep.subr.mxu0 0.0
        %2846 = vmatpush1.msra.mxu0 0.0
        %2847 = vmatprep.subr.mxu0 0.0
        %2848 = vmatpush1.msra.mxu0 0.0
        %2849 = vmatprep.subr.mxu0 0.0
        %2850 = vmatpush1.msra.mxu0 0.0
        %2851 = vmatprep.subr.mxu0 0.0
        %2852 = vmatpush1.msra.mxu0 0.0
        %2853 = vmatprep.subr.mxu0 0.0
        %2854 = vmatpush1.msra.mxu0 0.0
        %2855 = vmatprep.subr.mxu0 0.0
        %2856 = vmatpush1.msra.mxu0 0.0
        %2857 = vmatprep.subr.mxu0 0.0
        %2858 = vmatpush1.msra.mxu0 0.0
        %2859 = vmatprep.subr.mxu0 0.0
        %2860 = vmatpush1.msra.mxu0 0.0
        %2861 = vmatprep.subr.mxu0 0.0
        %2862 = vmatpush1.msra.mxu0 0.0
        %2863 = vmatprep.subr.mxu0 0.0
        %2864 = vmatpush1.msra.mxu0 0.0
        %2865 = vmatprep.subr.mxu0 0.0
        %2866 = vmatpush1.msra.mxu0 0.0
        %2867 = vmatprep.subr.mxu0 0.0
        %2868 = vmatpush1.msra.mxu0 0.0
        %2869 = vmatprep.subr.mxu0 0.0
        %2870 = vmatpush1.msra.mxu0 0.0
        %2871 = vmatprep.subr.mxu0 0.0
        %2872 = vmatpush1.msra.mxu0 0.0
        %2873 = vmatprep.subr.mxu0 0.0
        %2874 = vmatpush1.msra.mxu0 0.0
        %2875 = vmatprep.subr.mxu0 0.0
        %2876 = vmatpush1.msra.mxu0 0.0
        %2877 = vmatprep.subr.mxu0 0.0
        %2878 = vmatpush1.msra.mxu0 0.0
        %2879 = vmatprep.subr.mxu0 0.0
        %2880 = vmatpush1.msra.mxu0 0.0
        %2881 = vmatprep.subr.mxu0 0.0
        %2882 = vmatpush1.msra.mxu0 0.0
        %2883 = vmatprep.subr.mxu0 0.0
        %2884 = vmatpush1.msra.mxu0 0.0
        %2885 = vmatprep.subr.mxu0 0.0
        %2886 = vmatpush1.msra.mxu0 0.0
        %2887 = vmatprep.subr.mxu0 0.0
        %2888 = vmatpush1.msra.mxu0 0.0
        %2889 = vmatprep.subr.mxu0 0.0
        %2890 = vmatpush1.msra.mxu0 0.0
        %2891 = vmatprep.subr.mxu0 0.0
        %2892 = vmatpush1.msra.mxu0 0.0
        %2893 = vmatprep.mubr.f32.mxu0 0.0
        %2894 = vmatmul.mubr.f32.gmra.mrb[0].mxu0 %v2827
        %v2895 = vpop.f32.mrb[0].mxu0
        %v2896 = vadd.f32 0.0, %v2895
        %v2897 = vpop.f32.mrb[0].mxu0
        %2898 = vdwg.mxu0
        %v2899 = vadd.f32 %v2824, %v2896
        %v2900 = vmax.f32 %v2258, %v2899
        %v2901 = vld [vmem:[%s3] sm:$0x1]
        %v2903 = vlaneseq
        %v2904 = vshrl.u32 %v2903, 7
        %v2905 = vsub.s32 0, %v2904
        %v2906 = vrot.slane %v2901, %v2905
        %v2908 = vadd.f32 %v2900, %v2906
        %v2909 = vmax.f32 %v2908, 0.0
        %s2910 = smul.u32 %s219, 8
        %s2911 = scalar_lea.vmem %s217, %s2910
        %vm2912 = vcmask 523264
        %2913 = vst.msk [vmem:[%s2911] sm:$0xff] %vm2912, %v2909
      $region41: #{simple_cnn_encoder.3} parent=35 // loop_footer
        %s223 = sadd.s32 1, %s219
      $region42: #{simple_cnn_encoder.3} parent=35 // loop_footer_branch
        %218 = sbr.rel target = $region38
      $region43: #{simple_cnn_encoder.3} parent=35 // loop_exit
        _
      %p2914 = scmp.lt.s32.totalorder %s15, 1
      %s2915 = scalar_select %p2914, %s15, 1
      %s2916 = smul.addr %s2915, 8
      %s2917 = smul.addr %s2916, 8
      %s2918 = scalar_lea.vmem %s4, %s2917
      // Predicated region
      $region44: #{simple_cnn_encoder.3} parent=35 // pred_check
        %p2919 = pneg %p127
      $region45: #{simple_cnn_encoder.3} parent=35 // pred_check_branch
        %2921 = sbr.rel (%p2919) target = $region47
      $region46: #{simple_cnn_encoder.3} parent=35 // pred_region
        _
      $region47: #{simple_cnn_encoder.3} parent=35 // pred_fallthru
        _
    $region36: #{simple_cnn_encoder.3} parent=5 // pred_fallthru
      _
    %p2922 = scmp.le.s32.totalorder 2, %s10
    // Predicated region
    $region48: #{simple_cnn_encoder.3} parent=5 // pred_check
      %p2923 = pneg %p2922
    $region49: #{simple_cnn_encoder.3} parent=5 // pred_check_branch
      %2925 = sbr.rel (%p2923) target = $region51
    $region50: #{simple_cnn_encoder.3} parent=5 // pred_region
      %s2926 = ssub.s32 %s10, 2
      // Predicated region
      $region52: #{simple_cnn_encoder.3} parent=50 // pred_check
        %p2927 = pneg %p133
      $region53: #{simple_cnn_encoder.3} parent=50 // pred_check_branch
        %2929 = sbr.rel (%p2927) target = $region55
      $region54: #{simple_cnn_encoder.3} parent=50 // pred_region
        %p2930 = scmp.lt.s32.totalorder %s16, 1
        %s2931 = scalar_select %p2930, %s16, 1
        %s2932 = smul.addr %s2931, 8
        %s2933 = smul.addr %s2932, 8
        %s2934 = scalar_lea.vmem %s4, %s2933
      $region55: #{simple_cnn_encoder.3} parent=50 // pred_fallthru
        _
    $region51: #{simple_cnn_encoder.3} parent=5 // pred_fallthru
      _
  $region6: #{simple_cnn_encoder.3} parent=0 // loop_footer
    %s14 = sadd.s32 1, %s10
  $region7: #{simple_cnn_encoder.3} parent=0 // loop_footer_branch
    %9 = sbr.rel target = $region3
  $region8: #{simple_cnn_encoder.3} parent=0 // loop_exit
    _

// kernel: simple_cnn_encoder.4
$region0: #{simple_cnn_encoder.4}
  #allocation0 [shape = 'u32[]', space=smem, size = 0x4, offset = 0x4, fixed_abs, tag = 'smem constant byte address 0x4 - core index']
  #allocation1 [shape = 'u32[144,128]{1,0:T(1,128)}', space=vmem, size = 0x12000, scoped, tag = 'internal scratch']
  %s0 = inlined_call_operand.vmem [shape: f32[2,10,5,64], index: 0, kind: input, shape index: {}]
  %s1 = inlined_call_operand.vmem [shape: f32[2,10,5,64], index: 1, kind: input, shape index: {}]
  %s2 = inlined_call_operand.vmem [shape: f32[9,64,128], index: 2, kind: input, shape index: {}]
  %s3 = inlined_call_operand.vmem [shape: f32[1,128], index: 3, kind: input, shape index: {}]
  %s4 = inlined_call_operand.vmem [shape: f32[2,4,4,128], index: 4, kind: output, shape index: {}]
  %s5 = sld [smem:[#allocation0]]
  $region56: #{simple_cnn_encoder.4} parent=0
    _
  %s7 = ssub.s32 1, %s5
  %s8 = scalar_select 0, %s7, %s5
  loop: start=0, step=1, limit=4
  $region2: #{simple_cnn_encoder.4} parent=0 // loop_pre_header
    _
  $region3: #{simple_cnn_encoder.4} parent=0 // loop_header
    %s10 = sphi 0, %s14
    %p11 = scmp.ge.s32.totalorder %s10, 4
    %s20 = sphi 0, %s22
    %s23 = sphi 0, %s20
    %s24 = sphi 0, %s23
    %s40 = sphi 0, %s24
    %s46 = sphi 0, %s48
    %s49 = sphi 0, %s46
    %s50 = sphi 0, %s49
    %s66 = sphi 0, %s50
    %s70 = sphi 0, %s70
    %s72 = sphi 0, %s70
    %s73 = sphi 0, %s72
    %s87 = sphi 0, %s73
    %s91 = sphi 0, %s91
    %s93 = sphi 0, %s91
    %s94 = sphi 0, %s93
    %s108 = sphi 0, %s94
    %s114 = sphi 0, %s116
    %s117 = sphi 0, %s114
    %s118 = sphi 0, %s117
    %s134 = sphi 0, %s118
  $region4: #{simple_cnn_encoder.4} parent=0 // loop_header_branch
    %13 = sbr.rel (%p11) target = $region8
  $region5: #{simple_cnn_encoder.4} parent=0 // loop_body
    %s15 = ssub.s32 %s10, 1
    %s16 = ssub.s32 %s10, 2
    %s17 = sadd.s32 %s10, 1
    %s18 = ssub.s32 %s10, %s17
    %p19 = scmp.eq.s32.totalorder %s18, 0
    %s21 = sadd.s32 %s20, 1
    %s22 = scalar_select %p19, %s20, %s21
    %p25 = pneg %p19
    %p26 = scmp.eq.s32.totalorder %s10, 1
    %p27 = por %p25, %p26
    %p28 = scmp.ne.s32.totalorder %s20, %s23
    %p29 = scmp.eq.s32.totalorder %s10, 0
    %p30 = por %p28, %p29
    %p31 = scmp.ne.s32.totalorder %s20, %s23
    %p32 = scmp.eq.s32.totalorder %s15, 1
    %p33 = por %p31, %p32
    %p34 = scmp.ne.s32.totalorder %s23, %s24
    %p35 = scmp.eq.s32.totalorder %s15, 0
    %p36 = por %p34, %p35
    %p37 = scmp.ne.s32.totalorder %s23, %s24
    %p38 = scmp.eq.s32.totalorder %s16, 1
    %p39 = por %p37, %p38
    %p41 = scmp.ne.s32.totalorder %s24, %s40
    %p42 = scmp.eq.s32.totalorder %s16, 0
    %p43 = por %p41, %p42
    %s44 = ssub.s32 %s10, %s17
    %p45 = scmp.eq.s32.totalorder %s44, 0
    %s47 = sadd.s32 %s46, 1
    %s48 = scalar_select %p45, %s46, %s47
    %p51 = pneg %p45
    %p52 = scmp.eq.s32.totalorder %s10, 1
    %p53 = por %p51, %p52
    %p54 = scmp.ne.s32.totalorder %s46, %s49
    %p55 = scmp.eq.s32.totalorder %s10, 0
    %p56 = por %p54, %p55
    %p57 = scmp.ne.s32.totalorder %s46, %s49
    %p58 = scmp.eq.s32.totalorder %s15, 1
    %p59 = por %p57, %p58
    %p60 = scmp.ne.s32.totalorder %s49, %s50
    %p61 = scmp.eq.s32.totalorder %s15, 0
    %p62 = por %p60, %p61
    %p63 = scmp.ne.s32.totalorder %s49, %s50
    %p64 = scmp.eq.s32.totalorder %s16, 1
    %p65 = por %p63, %p64
    %p67 = scmp.ne.s32.totalorder %s50, %s66
    %p68 = scmp.eq.s32.totalorder %s16, 0
    %p69 = por %p67, %p68
    %s71 = sadd.s32 %s70, 1
    %p74 = scmp.eq.s32.totalorder %s10, 1
    %p75 = scmp.ne.s32.totalorder %s70, %s72
    %p76 = scmp.eq.s32.totalorder %s10, 0
    %p77 = por %p75, %p76
    %p78 = scmp.ne.s32.totalorder %s70, %s72
    %p79 = scmp.eq.s32.totalorder %s15, 1
    %p80 = por %p78, %p79
    %p81 = scmp.ne.s32.totalorder %s72, %s73
    %p82 = scmp.eq.s32.totalorder %s15, 0
    %p83 = por %p81, %p82
    %p84 = scmp.ne.s32.totalorder %s72, %s73
    %p85 = scmp.eq.s32.totalorder %s16, 1
    %p86 = por %p84, %p85
    %p88 = scmp.ne.s32.totalorder %s73, %s87
    %p89 = scmp.eq.s32.totalorder %s16, 0
    %p90 = por %p88, %p89
    %s92 = sadd.s32 %s91, 1
    %p95 = scmp.eq.s32.totalorder %s10, 1
    %p96 = scmp.ne.s32.totalorder %s91, %s93
    %p97 = scmp.eq.s32.totalorder %s10, 0
    %p98 = por %p96, %p97
    %p99 = scmp.ne.s32.totalorder %s91, %s93
    %p100 = scmp.eq.s32.totalorder %s15, 1
    %p101 = por %p99, %p100
    %p102 = scmp.ne.s32.totalorder %s93, %s94
    %p103 = scmp.eq.s32.totalorder %s15, 0
    %p104 = por %p102, %p103
    %p105 = scmp.ne.s32.totalorder %s93, %s94
    %p106 = scmp.eq.s32.totalorder %s16, 1
    %p107 = por %p105, %p106
    %p109 = scmp.ne.s32.totalorder %s94, %s108
    %p110 = scmp.eq.s32.totalorder %s16, 0
    %p111 = por %p109, %p110
    %s112 = ssub.s32 %s10, %s17
    %p113 = scmp.eq.s32.totalorder %s112, 0
    %s115 = sadd.s32 %s114, 1
    %s116 = scalar_select %p113, %s114, %s115
    %p119 = pneg %p113
    %p120 = scmp.eq.s32.totalorder %s10, 1
    %p121 = por %p119, %p120
    %p122 = scmp.ne.s32.totalorder %s114, %s117
    %p123 = scmp.eq.s32.totalorder %s10, 0
    %p124 = por %p122, %p123
    %p125 = scmp.ne.s32.totalorder %s114, %s117
    %p126 = scmp.eq.s32.totalorder %s15, 1
    %p127 = por %p125, %p126
    %p128 = scmp.ne.s32.totalorder %s117, %s118
    %p129 = scmp.eq.s32.totalorder %s15, 0
    %p130 = por %p128, %p129
    %p131 = scmp.ne.s32.totalorder %s117, %s118
    %p132 = scmp.eq.s32.totalorder %s16, 1
    %p133 = por %p131, %p132
    %p135 = scmp.ne.s32.totalorder %s118, %s134
    %p136 = scmp.eq.s32.totalorder %s16, 0
    %p137 = por %p135, %p136
    %p138 = scmp.le.s32.totalorder 1, %s10
    %p139 = scmp.lt.s32.totalorder %s10, 3
    %p140 = pnand %p138, %p139
    %p141 = pneg %p140
    // Predicated region
    $region9: #{simple_cnn_encoder.4} parent=5 // pred_check
      _
    $region10: #{simple_cnn_encoder.4} parent=5 // pred_check_branch
      %143 = sbr.rel (%p140) target = $region12
    $region11: #{simple_cnn_encoder.4} parent=5 // pred_region
      %s144 = ssub.s32 %s10, 1
      // Predicated region
      $region13: #{simple_cnn_encoder.4} parent=11 // pred_check
        %p145 = pneg %p83
      $region14: #{simple_cnn_encoder.4} parent=11 // pred_check_branch
        %147 = sbr.rel (%p145) target = $region16
      $region15: #{simple_cnn_encoder.4} parent=11 // pred_region
        _
      $region16: #{simple_cnn_encoder.4} parent=11 // pred_fallthru
        _
      // Predicated region
      $region17: #{simple_cnn_encoder.4} parent=11 // pred_check
        %p148 = pneg %p104
      $region18: #{simple_cnn_encoder.4} parent=11 // pred_check_branch
        %150 = sbr.rel (%p148) target = $region20
      $region19: #{simple_cnn_encoder.4} parent=11 // pred_region
        _
      $region20: #{simple_cnn_encoder.4} parent=11 // pred_fallthru
        _
    $region12: #{simple_cnn_encoder.4} parent=5 // pred_fallthru
      _
    %p151 = scmp.lt.s32.totalorder %s10, 2
    // Predicated region
    $region21: #{simple_cnn_encoder.4} parent=5 // pred_check
      %p152 = pneg %p151
    $region22: #{simple_cnn_encoder.4} parent=5 // pred_check_branch
      %154 = sbr.rel (%p152) target = $region24
    $region23: #{simple_cnn_encoder.4} parent=5 // pred_region
      // Predicated region
      $region25: #{simple_cnn_encoder.4} parent=23 // pred_check
        %p155 = pneg %p30
      $region26: #{simple_cnn_encoder.4} parent=23 // pred_check_branch
        %157 = sbr.rel (%p155) target = $region28
      $region27: #{simple_cnn_encoder.4} parent=23 // pred_region
        %p158 = scmp.lt.s32.totalorder %s10, 1
        %s159 = scalar_select %p158, %s10, 1
        %s160 = smul.addr %s159, 10
        %s161 = smul.addr %s160, 8
        %s162 = scalar_lea.vmem %s0, %s161
      $region28: #{simple_cnn_encoder.4} parent=23 // pred_fallthru
        _
      // Predicated region
      $region29: #{simple_cnn_encoder.4} parent=23 // pred_check
        %p163 = pneg %p56
      $region30: #{simple_cnn_encoder.4} parent=23 // pred_check_branch
        %165 = sbr.rel (%p163) target = $region32
      $region31: #{simple_cnn_encoder.4} parent=23 // pred_region
        %p166 = scmp.lt.s32.totalorder %s10, 1
        %s167 = scalar_select %p166, %s10, 1
        %s168 = smul.addr %s167, 10
        %s169 = smul.addr %s168, 8
        %s170 = scalar_lea.vmem %s1, %s169
      $region32: #{simple_cnn_encoder.4} parent=23 // pred_fallthru
        _
    $region24: #{simple_cnn_encoder.4} parent=5 // pred_fallthru
      _
    %p171 = scmp.le.s32.totalorder 1, %s10
    %p172 = scmp.lt.s32.totalorder %s10, 3
    %p173 = pnand %p171, %p172
    %p174 = pneg %p173
    // Predicated region
    $region33: #{simple_cnn_encoder.4} parent=5 // pred_check
      _
    $region34: #{simple_cnn_encoder.4} parent=5 // pred_check_branch
      %176 = sbr.rel (%p173) target = $region36
    $region35: #{simple_cnn_encoder.4} parent=5 // pred_region
      %s177 = ssub.s32 %s10, 1
      %p178 = scmp.lt.s32.totalorder %s15, 1
      %s179 = scalar_select %p178, %s15, 1
      %s180 = smul.addr %s179, 10
      %s181 = smul.addr %s180, 8
      %s182 = scalar_lea.vmem %s0, %s181
      %p183 = pneg %p36
      %p184 = pneg %p33
      %p185 = scmp.lt.s32.totalorder %s15, 1
      %s186 = scalar_select %p185, %s15, 1
      %s187 = smul.addr %s186, 10
      %s188 = smul.addr %s187, 8
      %s189 = scalar_lea.vmem %s1, %s188
      %p190 = pneg %p62
      %p191 = pneg %p59
      %p192 = pneg %p83
      %p193 = pneg %p80
      %p194 = pneg %p104
      %p195 = pneg %p101
      %p196 = pneg %p130
      %p197 = pneg %p127
      %p198 = scmp.lt.s32.totalorder %s15, 1
      %s199 = scalar_select %p198, %s15, 1
      %s200 = smul.addr %s199, 4
      %s201 = smul.addr %s200, 4
      %s202 = scalar_lea.vmem %s4, %s201
      %p203 = scmp.lt.s32.totalorder %s15, 1
      %s204 = scalar_select %p203, %s15, 1
      %s205 = smul.addr %s204, 10
      %s206 = smul.addr %s205, 8
      %s207 = scalar_lea.vmem %s0, %s206
      %p208 = scmp.lt.s32.totalorder %s15, 1
      %s209 = scalar_select %p208, %s15, 1
      %s210 = smul.addr %s209, 10
      %s211 = smul.addr %s210, 8
      %s212 = scalar_lea.vmem %s1, %s211
      %p213 = scmp.lt.s32.totalorder %s15, 1
      %s214 = scalar_select %p213, %s15, 1
      %s215 = smul.addr %s214, 4
      %s216 = smul.addr %s215, 4
      %s217 = scalar_lea.vmem %s4, %s216
      loop: start=0, step=1, limit=4
      $region37: #{simple_cnn_encoder.4} parent=35 // loop_pre_header
        _
      $region38: #{simple_cnn_encoder.4} parent=35 // loop_header
        %s219 = sphi 0, %s223
        %p220 = scmp.ge.s32.totalorder %s219, 4
      $region39: #{simple_cnn_encoder.4} parent=35 // loop_header_branch
        %222 = sbr.rel (%p220) target = $region43
      $region40: #{simple_cnn_encoder.4} parent=35 // loop_body
        %s224 = smul.u32 %s219, 2
        %s225 = smul.u32 %s224, 8
        %s226 = scalar_lea.vmem %s207, %s225
        %v227 = vld [vmem:[%s226] sm:$0xf]
        %v228 = vld [vmem:[%s2] sm:$0xff]
        %v229 = vld [vmem:[%s2 + $0x8] sm:$0xff]
        %v230 = vld [vmem:[%s2 + $0x10] sm:$0xff]
        %v231 = vld [vmem:[%s2 + $0x18] sm:$0xff]
        %v232 = vld [vmem:[%s2 + $0x20] sm:$0xff]
        %v233 = vld [vmem:[%s2 + $0x28] sm:$0xff]
        %v234 = vld [vmem:[%s2 + $0x30] sm:$0xff]
        %v235 = vld [vmem:[%s2 + $0x38] sm:$0xff]
        %s236 = scalar_lea.vmem %s212, %s225
        %v237 = vld [vmem:[%s236] sm:$0xf]
        %s238 = scalar_lea.vmem %s2, 64
        %v239 = vld [vmem:[%s238] sm:$0xff]
        %v240 = vld [vmem:[%s238 + $0x8] sm:$0xff]
        %v241 = vld [vmem:[%s238 + $0x10] sm:$0xff]
        %v242 = vld [vmem:[%s238 + $0x18] sm:$0xff]
        %v243 = vld [vmem:[%s238 + $0x20] sm:$0xff]
        %v244 = vld [vmem:[%s238 + $0x28] sm:$0xff]
        %v245 = vld [vmem:[%s238 + $0x30] sm:$0xff]
        %v246 = vld [vmem:[%s238 + $0x38] sm:$0xff]
        %vm247 = vcmask 523264
        %v249 = vsel %vm247, %v237, 0
        %251 = vmatprep.subr.mxu0 0.0
        %252 = vmatpush1.msra.mxu0 %v239
        %253 = vmatprep.subr.mxu0 0.0
        %254 = vmatpush1.msra.mxu0 %v240
        %255 = vmatprep.subr.mxu0 0.0
        %256 = vmatpush1.msra.mxu0 %v241
        %257 = vmatprep.subr.mxu0 0.0
        %258 = vmatpush1.msra.mxu0 %v242
        %259 = vmatprep.subr.mxu0 0.0
        %260 = vmatpush1.msra.mxu0 %v243
        %261 = vmatprep.subr.mxu0 0.0
        %262 = vmatpush1.msra.mxu0 %v244
        %263 = vmatprep.subr.mxu0 0.0
        %264 = vmatpush1.msra.mxu0 %v245
        %265 = vmatprep.subr.mxu0 0.0
        %266 = vmatpush1.msra.mxu0 %v246
        %267 = vmatprep.subr.mxu0 0.0
        %268 = vmatpush1.msra.mxu0 0.0
        %269 = vmatprep.subr.mxu0 0.0
        %270 = vmatpush1.msra.mxu0 0.0
        %271 = vmatprep.subr.mxu0 0.0
        %272 = vmatpush1.msra.mxu0 0.0
        %273 = vmatprep.subr.mxu0 0.0
        %274 = vmatpush1.msra.mxu0 0.0
        %275 = vmatprep.subr.mxu0 0.0
        %276 = vmatpush1.msra.mxu0 0.0
        %277 = vmatprep.subr.mxu0 0.0
        %278 = vmatpush1.msra.mxu0 0.0
        %279 = vmatprep.subr.mxu0 0.0
        %280 = vmatpush1.msra.mxu0 0.0
        %281 = vmatprep.subr.mxu0 0.0
        %282 = vmatpush1.msra.mxu0 0.0
        %283 = vmatprep.subr.mxu0 0.0
        %284 = vmatpush1.msra.mxu0 0.0
        %285 = vmatprep.subr.mxu0 0.0
        %286 = vmatpush1.msra.mxu0 0.0
        %287 = vmatprep.subr.mxu0 0.0
        %288 = vmatpush1.msra.mxu0 0.0
        %289 = vmatprep.subr.mxu0 0.0
        %290 = vmatpush1.msra.mxu0 0.0
        %291 = vmatprep.subr.mxu0 0.0
        %292 = vmatpush1.msra.mxu0 0.0
        %293 = vmatprep.subr.mxu0 0.0
        %294 = vmatpush1.msra.mxu0 0.0
        %295 = vmatprep.subr.mxu0 0.0
        %296 = vmatpush1.msra.mxu0 0.0
        %297 = vmatprep.subr.mxu0 0.0
        %298 = vmatpush1.msra.mxu0 0.0
        %299 = vmatprep.subr.mxu0 0.0
        %300 = vmatpush1.msra.mxu0 0.0
        %301 = vmatprep.subr.mxu0 0.0
        %302 = vmatpush1.msra.mxu0 0.0
        %303 = vmatprep.subr.mxu0 0.0
        %304 = vmatpush1.msra.mxu0 0.0
        %305 = vmatprep.subr.mxu0 0.0
        %306 = vmatpush1.msra.mxu0 0.0
        %307 = vmatprep.subr.mxu0 0.0
        %308 = vmatpush1.msra.mxu0 0.0
        %309 = vmatprep.subr.mxu0 0.0
        %310 = vmatpush1.msra.mxu0 0.0
        %311 = vmatprep.subr.mxu0 0.0
        %312 = vmatpush1.msra.mxu0 0.0
        %313 = vmatprep.subr.mxu0 0.0
        %314 = vmatpush1.msra.mxu0 0.0
        %315 = vmatprep.mubr.f32.mxu0 0.0
        %316 = vmatmul.mubr.f32.gmra.mrb[0].mxu0 %v249
        %v317 = vpop.f32.mrb[0].mxu0
        %v318 = vadd.f32 0.0, %v317
        %v319 = vpop.f32.mrb[0].mxu0
        %320 = vdwg.mxu0
        %v322 = vsel %vm247, %v227, 0
        %324 = vmatprep.subr.mxu0 0.0
        %325 = vmatpush1.msra.mxu0 %v228
        %326 = vmatprep.subr.mxu0 0.0
        %327 = vmatpush1.msra.mxu0 %v229
        %328 = vmatprep.subr.mxu0 0.0
        %329 = vmatpush1.msra.mxu0 %v230
        %330 = vmatprep.subr.mxu0 0.0
        %331 = vmatpush1.msra.mxu0 %v231
        %332 = vmatprep.subr.mxu0 0.0
        %333 = vmatpush1.msra.mxu0 %v232
        %334 = vmatprep.subr.mxu0 0.0
        %335 = vmatpush1.msra.mxu0 %v233
        %336 = vmatprep.subr.mxu0 0.0
        %337 = vmatpush1.msra.mxu0 %v234
        %338 = vmatprep.subr.mxu0 0.0
        %339 = vmatpush1.msra.mxu0 %v235
        %340 = vmatprep.subr.mxu0 0.0
        %341 = vmatpush1.msra.mxu0 0.0
        %342 = vmatprep.subr.mxu0 0.0
        %343 = vmatpush1.msra.mxu0 0.0
        %344 = vmatprep.subr.mxu0 0.0
        %345 = vmatpush1.msra.mxu0 0.0
        %346 = vmatprep.subr.mxu0 0.0
        %347 = vmatpush1.msra.mxu0 0.0
        %348 = vmatprep.subr.mxu0 0.0
        %349 = vmatpush1.msra.mxu0 0.0
        %350 = vmatprep.subr.mxu0 0.0
        %351 = vmatpush1.msra.mxu0 0.0
        %352 = vmatprep.subr.mxu0 0.0
        %353 = vmatpush1.msra.mxu0 0.0
        %354 = vmatprep.subr.mxu0 0.0
        %355 = vmatpush1.msra.mxu0 0.0
        %356 = vmatprep.subr.mxu0 0.0
        %357 = vmatpush1.msra.mxu0 0.0
        %358 = vmatprep.subr.mxu0 0.0
        %359 = vmatpush1.msra.mxu0 0.0
        %360 = vmatprep.subr.mxu0 0.0
        %361 = vmatpush1.msra.mxu0 0.0
        %362 = vmatprep.subr.mxu0 0.0
        %363 = vmatpush1.msra.mxu0 0.0
        %364 = vmatprep.subr.mxu0 0.0
        %365 = vmatpush1.msra.mxu0 0.0
        %366 = vmatprep.subr.mxu0 0.0
        %367 = vmatpush1.msra.mxu0 0.0
        %368 = vmatprep.subr.mxu0 0.0
        %369 = vmatpush1.msra.mxu0 0.0
        %370 = vmatprep.subr.mxu0 0.0
        %371 = vmatpush1.msra.mxu0 0.0
        %372 = vmatprep.subr.mxu0 0.0
        %373 = vmatpush1.msra.mxu0 0.0
        %374 = vmatprep.subr.mxu0 0.0
        %375 = vmatpush1.msra.mxu0 0.0
        %376 = vmatprep.subr.mxu0 0.0
        %377 = vmatpush1.msra.mxu0 0.0
        %378 = vmatprep.subr.mxu0 0.0
        %379 = vmatpush1.msra.mxu0 0.0
        %380 = vmatprep.subr.mxu0 0.0
        %381 = vmatpush1.msra.mxu0 0.0
        %382 = vmatprep.subr.mxu0 0.0
        %383 = vmatpush1.msra.mxu0 0.0
        %384 = vmatprep.subr.mxu0 0.0
        %385 = vmatpush1.msra.mxu0 0.0
        %386 = vmatprep.subr.mxu0 0.0
        %387 = vmatpush1.msra.mxu0 0.0
        %388 = vmatprep.mubr.f32.mxu0 0.0
        %389 = vmatmul.mubr.f32.gmra.mrb[0].mxu0 %v322
        %v390 = vpop.f32.mrb[0].mxu0
        %v391 = vadd.f32 %v318, %v390
        %v392 = vpop.f32.mrb[0].mxu0
        %393 = vdwg.mxu0
        %v394 = vld [vmem:[%s226 + $0x1] sm:$0xf]
        %s395 = scalar_lea.vmem %s2, 128
        %v396 = vld [vmem:[%s395] sm:$0xff]
        %v397 = vld [vmem:[%s395 + $0x8] sm:$0xff]
        %v398 = vld [vmem:[%s395 + $0x10] sm:$0xff]
        %v399 = vld [vmem:[%s395 + $0x18] sm:$0xff]
        %v400 = vld [vmem:[%s395 + $0x20] sm:$0xff]
        %v401 = vld [vmem:[%s395 + $0x28] sm:$0xff]
        %v402 = vld [vmem:[%s395 + $0x30] sm:$0xff]
        %v403 = vld [vmem:[%s395 + $0x38] sm:$0xff]
        %v405 = vsel %vm247, %v394, 0
        %407 = vmatprep.subr.mxu0 0.0
        %408 = vmatpush1.msra.mxu0 %v396
        %409 = vmatprep.subr.mxu0 0.0
        %410 = vmatpush1.msra.mxu0 %v397
        %411 = vmatprep.subr.mxu0 0.0
        %412 = vmatpush1.msra.mxu0 %v398
        %413 = vmatprep.subr.mxu0 0.0
        %414 = vmatpush1.msra.mxu0 %v399
        %415 = vmatprep.subr.mxu0 0.0
        %416 = vmatpush1.msra.mxu0 %v400
        %417 = vmatprep.subr.mxu0 0.0
        %418 = vmatpush1.msra.mxu0 %v401
        %419 = vmatprep.subr.mxu0 0.0
        %420 = vmatpush1.msra.mxu0 %v402
        %421 = vmatprep.subr.mxu0 0.0
        %422 = vmatpush1.msra.mxu0 %v403
        %423 = vmatprep.subr.mxu0 0.0
        %424 = vmatpush1.msra.mxu0 0.0
        %425 = vmatprep.subr.mxu0 0.0
        %426 = vmatpush1.msra.mxu0 0.0
        %427 = vmatprep.subr.mxu0 0.0
        %428 = vmatpush1.msra.mxu0 0.0
        %429 = vmatprep.subr.mxu0 0.0
        %430 = vmatpush1.msra.mxu0 0.0
        %431 = vmatprep.subr.mxu0 0.0
        %432 = vmatpush1.msra.mxu0 0.0
        %433 = vmatprep.subr.mxu0 0.0
        %434 = vmatpush1.msra.mxu0 0.0
        %435 = vmatprep.subr.mxu0 0.0
        %436 = vmatpush1.msra.mxu0 0.0
        %437 = vmatprep.subr.mxu0 0.0
        %438 = vmatpush1.msra.mxu0 0.0
        %439 = vmatprep.subr.mxu0 0.0
        %440 = vmatpush1.msra.mxu0 0.0
        %441 = vmatprep.subr.mxu0 0.0
        %442 = vmatpush1.msra.mxu0 0.0
        %443 = vmatprep.subr.mxu0 0.0
        %444 = vmatpush1.msra.mxu0 0.0
        %445 = vmatprep.subr.mxu0 0.0
        %446 = vmatpush1.msra.mxu0 0.0
        %447 = vmatprep.subr.mxu0 0.0
        %448 = vmatpush1.msra.mxu0 0.0
        %449 = vmatprep.subr.mxu0 0.0
        %450 = vmatpush1.msra.mxu0 0.0
        %451 = vmatprep.subr.mxu0 0.0
        %452 = vmatpush1.msra.mxu0 0.0
        %453 = vmatprep.subr.mxu0 0.0
        %454 = vmatpush1.msra.mxu0 0.0
        %455 = vmatprep.subr.mxu0 0.0
        %456 = vmatpush1.msra.mxu0 0.0
        %457 = vmatprep.subr.mxu0 0.0
        %458 = vmatpush1.msra.mxu0 0.0
        %459 = vmatprep.subr.mxu0 0.0
        %460 = vmatpush1.msra.mxu0 0.0
        %461 = vmatprep.subr.mxu0 0.0
        %462 = vmatpush1.msra.mxu0 0.0
        %463 = vmatprep.subr.mxu0 0.0
        %464 = vmatpush1.msra.mxu0 0.0
        %465 = vmatprep.subr.mxu0 0.0
        %466 = vmatpush1.msra.mxu0 0.0
        %467 = vmatprep.subr.mxu0 0.0
        %468 = vmatpush1.msra.mxu0 0.0
        %469 = vmatprep.subr.mxu0 0.0
        %470 = vmatpush1.msra.mxu0 0.0
        %471 = vmatprep.mubr.f32.mxu0 0.0
        %472 = vmatmul.mubr.f32.gmra.mrb[0].mxu0 %v405
        %v473 = vpop.f32.mrb[0].mxu0
        %v474 = vadd.f32 0.0, %v473
        %v475 = vpop.f32.mrb[0].mxu0
        %476 = vdwg.mxu0
        %v477 = vadd.f32 %v391, %v474
        %s478 = sadd.s32 %s224, 1
        %s479 = smul.u32 %s478, 8
        %s480 = scalar_lea.vmem %s207, %s479
        %v481 = vld [vmem:[%s480] sm:$0xf]
        %s482 = scalar_lea.vmem %s2, 192
        %v483 = vld [vmem:[%s482] sm:$0xff]
        %v484 = vld [vmem:[%s482 + $0x8] sm:$0xff]
        %v485 = vld [vmem:[%s482 + $0x10] sm:$0xff]
        %v486 = vld [vmem:[%s482 + $0x18] sm:$0xff]
        %v487 = vld [vmem:[%s482 + $0x20] sm:$0xff]
        %v488 = vld [vmem:[%s482 + $0x28] sm:$0xff]
        %v489 = vld [vmem:[%s482 + $0x30] sm:$0xff]
        %v490 = vld [vmem:[%s482 + $0x38] sm:$0xff]
        %v492 = vsel %vm247, %v481, 0
        %494 = vmatprep.subr.mxu0 0.0
        %495 = vmatpush1.msra.mxu0 %v483
        %496 = vmatprep.subr.mxu0 0.0
        %497 = vmatpush1.msra.mxu0 %v484
        %498 = vmatprep.subr.mxu0 0.0
        %499 = vmatpush1.msra.mxu0 %v485
        %500 = vmatprep.subr.mxu0 0.0
        %501 = vmatpush1.msra.mxu0 %v486
        %502 = vmatprep.subr.mxu0 0.0
        %503 = vmatpush1.msra.mxu0 %v487
        %504 = vmatprep.subr.mxu0 0.0
        %505 = vmatpush1.msra.mxu0 %v488
        %506 = vmatprep.subr.mxu0 0.0
        %507 = vmatpush1.msra.mxu0 %v489
        %508 = vmatprep.subr.mxu0 0.0
        %509 = vmatpush1.msra.mxu0 %v490
        %510 = vmatprep.subr.mxu0 0.0
        %511 = vmatpush1.msra.mxu0 0.0
        %512 = vmatprep.subr.mxu0 0.0
        %513 = vmatpush1.msra.mxu0 0.0
        %514 = vmatprep.subr.mxu0 0.0
        %515 = vmatpush1.msra.mxu0 0.0
        %516 = vmatprep.subr.mxu0 0.0
        %517 = vmatpush1.msra.mxu0 0.0
        %518 = vmatprep.subr.mxu0 0.0
        %519 = vmatpush1.msra.mxu0 0.0
        %520 = vmatprep.subr.mxu0 0.0
        %521 = vmatpush1.msra.mxu0 0.0
        %522 = vmatprep.subr.mxu0 0.0
        %523 = vmatpush1.msra.mxu0 0.0
        %524 = vmatprep.subr.mxu0 0.0
        %525 = vmatpush1.msra.mxu0 0.0
        %526 = vmatprep.subr.mxu0 0.0
        %527 = vmatpush1.msra.mxu0 0.0
        %528 = vmatprep.subr.mxu0 0.0
        %529 = vmatpush1.msra.mxu0 0.0
        %530 = vmatprep.subr.mxu0 0.0
        %531 = vmatpush1.msra.mxu0 0.0
        %532 = vmatprep.subr.mxu0 0.0
        %533 = vmatpush1.msra.mxu0 0.0
        %534 = vmatprep.subr.mxu0 0.0
        %535 = vmatpush1.msra.mxu0 0.0
        %536 = vmatprep.subr.mxu0 0.0
        %537 = vmatpush1.msra.mxu0 0.0
        %538 = vmatprep.subr.mxu0 0.0
        %539 = vmatpush1.msra.mxu0 0.0
        %540 = vmatprep.subr.mxu0 0.0
        %541 = vmatpush1.msra.mxu0 0.0
        %542 = vmatprep.subr.mxu0 0.0
        %543 = vmatpush1.msra.mxu0 0.0
        %544 = vmatprep.subr.mxu0 0.0
        %545 = vmatpush1.msra.mxu0 0.0
        %546 = vmatprep.subr.mxu0 0.0
        %547 = vmatpush1.msra.mxu0 0.0
        %548 = vmatprep.subr.mxu0 0.0
        %549 = vmatpush1.msra.mxu0 0.0
        %550 = vmatprep.subr.mxu0 0.0
        %551 = vmatpush1.msra.mxu0 0.0
        %552 = vmatprep.subr.mxu0 0.0
        %553 = vmatpush1.msra.mxu0 0.0
        %554 = vmatprep.subr.mxu0 0.0
        %555 = vmatpush1.msra.mxu0 0.0
        %556 = vmatprep.subr.mxu0 0.0
        %557 = vmatpush1.msra.mxu0 0.0
        %558 = vmatprep.mubr.f32.mxu0 0.0
        %559 = vmatmul.mubr.f32.gmra.mrb[0].mxu0 %v492
        %v560 = vpop.f32.mrb[0].mxu0
        %v561 = vadd.f32 0.0, %v560
        %v562 = vpop.f32.mrb[0].mxu0
        %563 = vdwg.mxu0
        %v564 = vadd.f32 %v477, %v561
        %s565 = scalar_lea.vmem %s212, %s479
        %v566 = vld [vmem:[%s565] sm:$0xf]
        %s567 = scalar_lea.vmem %s2, 256
        %v568 = vld [vmem:[%s567] sm:$0xff]
        %v569 = vld [vmem:[%s567 + $0x8] sm:$0xff]
        %v570 = vld [vmem:[%s567 + $0x10] sm:$0xff]
        %v571 = vld [vmem:[%s567 + $0x18] sm:$0xff]
        %v572 = vld [vmem:[%s567 + $0x20] sm:$0xff]
        %v573 = vld [vmem:[%s567 + $0x28] sm:$0xff]
        %v574 = vld [vmem:[%s567 + $0x30] sm:$0xff]
        %v575 = vld [vmem:[%s567 + $0x38] sm:$0xff]
        %v577 = vsel %vm247, %v566, 0
        %579 = vmatprep.subr.mxu0 0.0
        %580 = vmatpush1.msra.mxu0 %v568
        %581 = vmatprep.subr.mxu0 0.0
        %582 = vmatpush1.msra.mxu0 %v569
        %583 = vmatprep.subr.mxu0 0.0
        %584 = vmatpush1.msra.mxu0 %v570
        %585 = vmatprep.subr.mxu0 0.0
        %586 = vmatpush1.msra.mxu0 %v571
        %587 = vmatprep.subr.mxu0 0.0
        %588 = vmatpush1.msra.mxu0 %v572
        %589 = vmatprep.subr.mxu0 0.0
        %590 = vmatpush1.msra.mxu0 %v573
        %591 = vmatprep.subr.mxu0 0.0
        %592 = vmatpush1.msra.mxu0 %v574
        %593 = vmatprep.subr.mxu0 0.0
        %594 = vmatpush1.msra.mxu0 %v575
        %595 = vmatprep.subr.mxu0 0.0
        %596 = vmatpush1.msra.mxu0 0.0
        %597 = vmatprep.subr.mxu0 0.0
        %598 = vmatpush1.msra.mxu0 0.0
        %599 = vmatprep.subr.mxu0 0.0
        %600 = vmatpush1.msra.mxu0 0.0
        %601 = vmatprep.subr.mxu0 0.0
        %602 = vmatpush1.msra.mxu0 0.0
        %603 = vmatprep.subr.mxu0 0.0
        %604 = vmatpush1.msra.mxu0 0.0
        %605 = vmatprep.subr.mxu0 0.0
        %606 = vmatpush1.msra.mxu0 0.0
        %607 = vmatprep.subr.mxu0 0.0
        %608 = vmatpush1.msra.mxu0 0.0
        %609 = vmatprep.subr.mxu0 0.0
        %610 = vmatpush1.msra.mxu0 0.0
        %611 = vmatprep.subr.mxu0 0.0
        %612 = vmatpush1.msra.mxu0 0.0
        %613 = vmatprep.subr.mxu0 0.0
        %614 = vmatpush1.msra.mxu0 0.0
        %615 = vmatprep.subr.mxu0 0.0
        %616 = vmatpush1.msra.mxu0 0.0
        %617 = vmatprep.subr.mxu0 0.0
        %618 = vmatpush1.msra.mxu0 0.0
        %619 = vmatprep.subr.mxu0 0.0
        %620 = vmatpush1.msra.mxu0 0.0
        %621 = vmatprep.subr.mxu0 0.0
        %622 = vmatpush1.msra.mxu0 0.0
        %623 = vmatprep.subr.mxu0 0.0
        %624 = vmatpush1.msra.mxu0 0.0
        %625 = vmatprep.subr.mxu0 0.0
        %626 = vmatpush1.msra.mxu0 0.0
        %627 = vmatprep.subr.mxu0 0.0
        %628 = vmatpush1.msra.mxu0 0.0
        %629 = vmatprep.subr.mxu0 0.0
        %630 = vmatpush1.msra.mxu0 0.0
        %631 = vmatprep.subr.mxu0 0.0
        %632 = vmatpush1.msra.mxu0 0.0
        %633 = vmatprep.subr.mxu0 0.0
        %634 = vmatpush1.msra.mxu0 0.0
        %635 = vmatprep.subr.mxu0 0.0
        %636 = vmatpush1.msra.mxu0 0.0
        %637 = vmatprep.subr.mxu0 0.0
        %638 = vmatpush1.msra.mxu0 0.0
        %639 = vmatprep.subr.mxu0 0.0
        %640 = vmatpush1.msra.mxu0 0.0
        %641 = vmatprep.subr.mxu0 0.0
        %642 = vmatpush1.msra.mxu0 0.0
        %643 = vmatprep.mubr.f32.mxu0 0.0
        %644 = vmatmul.mubr.f32.gmra.mrb[0].mxu0 %v577
        %v645 = vpop.f32.mrb[0].mxu0
        %v646 = vadd.f32 0.0, %v645
        %v647 = vpop.f32.mrb[0].mxu0
        %648 = vdwg.mxu0
        %v649 = vadd.f32 %v564, %v646
        %v650 = vld [vmem:[%s480 + $0x1] sm:$0xf]
        %s651 = scalar_lea.vmem %s2, 320
        %v652 = vld [vmem:[%s651] sm:$0xff]
        %v653 = vld [vmem:[%s651 + $0x8] sm:$0xff]
        %v654 = vld [vmem:[%s651 + $0x10] sm:$0xff]
        %v655 = vld [vmem:[%s651 + $0x18] sm:$0xff]
        %v656 = vld [vmem:[%s651 + $0x20] sm:$0xff]
        %v657 = vld [vmem:[%s651 + $0x28] sm:$0xff]
        %v658 = vld [vmem:[%s651 + $0x30] sm:$0xff]
        %v659 = vld [vmem:[%s651 + $0x38] sm:$0xff]
        %v661 = vsel %vm247, %v650, 0
        %663 = vmatprep.subr.mxu0 0.0
        %664 = vmatpush1.msra.mxu0 %v652
        %665 = vmatprep.subr.mxu0 0.0
        %666 = vmatpush1.msra.mxu0 %v653
        %667 = vmatprep.subr.mxu0 0.0
        %668 = vmatpush1.msra.mxu0 %v654
        %669 = vmatprep.subr.mxu0 0.0
        %670 = vmatpush1.msra.mxu0 %v655
        %671 = vmatprep.subr.mxu0 0.0
        %672 = vmatpush1.msra.mxu0 %v656
        %673 = vmatprep.subr.mxu0 0.0
        %674 = vmatpush1.msra.mxu0 %v657
        %675 = vmatprep.subr.mxu0 0.0
        %676 = vmatpush1.msra.mxu0 %v658
        %677 = vmatprep.subr.mxu0 0.0
        %678 = vmatpush1.msra.mxu0 %v659
        %679 = vmatprep.subr.mxu0 0.0
        %680 = vmatpush1.msra.mxu0 0.0
        %681 = vmatprep.subr.mxu0 0.0
        %682 = vmatpush1.msra.mxu0 0.0
        %683 = vmatprep.subr.mxu0 0.0
        %684 = vmatpush1.msra.mxu0 0.0
        %685 = vmatprep.subr.mxu0 0.0
        %686 = vmatpush1.msra.mxu0 0.0
        %687 = vmatprep.subr.mxu0 0.0
        %688 = vmatpush1.msra.mxu0 0.0
        %689 = vmatprep.subr.mxu0 0.0
        %690 = vmatpush1.msra.mxu0 0.0
        %691 = vmatprep.subr.mxu0 0.0
        %692 = vmatpush1.msra.mxu0 0.0
        %693 = vmatprep.subr.mxu0 0.0
        %694 = vmatpush1.msra.mxu0 0.0
        %695 = vmatprep.subr.mxu0 0.0
        %696 = vmatpush1.msra.mxu0 0.0
        %697 = vmatprep.subr.mxu0 0.0
        %698 = vmatpush1.msra.mxu0 0.0
        %699 = vmatprep.subr.mxu0 0.0
        %700 = vmatpush1.msra.mxu0 0.0
        %701 = vmatprep.subr.mxu0 0.0
        %702 = vmatpush1.msra.mxu0 0.0
        %703 = vmatprep.subr.mxu0 0.0
        %704 = vmatpush1.msra.mxu0 0.0
        %705 = vmatprep.subr.mxu0 0.0
        %706 = vmatpush1.msra.mxu0 0.0
        %707 = vmatprep.subr.mxu0 0.0
        %708 = vmatpush1.msra.mxu0 0.0
        %709 = vmatprep.subr.mxu0 0.0
        %710 = vmatpush1.msra.mxu0 0.0
        %711 = vmatprep.subr.mxu0 0.0
        %712 = vmatpush1.msra.mxu0 0.0
        %713 = vmatprep.subr.mxu0 0.0
        %714 = vmatpush1.msra.mxu0 0.0
        %715 = vmatprep.subr.mxu0 0.0
        %716 = vmatpush1.msra.mxu0 0.0
        %717 = vmatprep.subr.mxu0 0.0
        %718 = vmatpush1.msra.mxu0 0.0
        %719 = vmatprep.subr.mxu0 0.0
        %720 = vmatpush1.msra.mxu0 0.0
        %721 = vmatprep.subr.mxu0 0.0
        %722 = vmatpush1.msra.mxu0 0.0
        %723 = vmatprep.subr.mxu0 0.0
        %724 = vmatpush1.msra.mxu0 0.0
        %725 = vmatprep.subr.mxu0 0.0
        %726 = vmatpush1.msra.mxu0 0.0
        %727 = vmatprep.mubr.f32.mxu0 0.0
        %728 = vmatmul.mubr.f32.gmra.mrb[0].mxu0 %v661
        %v729 = vpop.f32.mrb[0].mxu0
        %v730 = vadd.f32 0.0, %v729
        %v731 = vpop.f32.mrb[0].mxu0
        %732 = vdwg.mxu0
        %v733 = vadd.f32 %v649, %v730
        %s734 = sadd.s32 %s224, 2
        %s735 = smul.u32 %s734, 8
        %s736 = scalar_lea.vmem %s207, %s735
        %v737 = vld [vmem:[%s736] sm:$0xf]
        %s738 = scalar_lea.vmem %s2, 384
        %v739 = vld [vmem:[%s738] sm:$0xff]
        %v740 = vld [vmem:[%s738 + $0x8] sm:$0xff]
        %v741 = vld [vmem:[%s738 + $0x10] sm:$0xff]
        %v742 = vld [vmem:[%s738 + $0x18] sm:$0xff]
        %v743 = vld [vmem:[%s738 + $0x20] sm:$0xff]
        %v744 = vld [vmem:[%s738 + $0x28] sm:$0xff]
        %v745 = vld [vmem:[%s738 + $0x30] sm:$0xff]
        %v746 = vld [vmem:[%s738 + $0x38] sm:$0xff]
        %v748 = vsel %vm247, %v737, 0
        %750 = vmatprep.subr.mxu0 0.0
        %751 = vmatpush1.msra.mxu0 %v739
        %752 = vmatprep.subr.mxu0 0.0
        %753 = vmatpush1.msra.mxu0 %v740
        %754 = vmatprep.subr.mxu0 0.0
        %755 = vmatpush1.msra.mxu0 %v741
        %756 = vmatprep.subr.mxu0 0.0
        %757 = vmatpush1.msra.mxu0 %v742
        %758 = vmatprep.subr.mxu0 0.0
        %759 = vmatpush1.msra.mxu0 %v743
        %760 = vmatprep.subr.mxu0 0.0
        %761 = vmatpush1.msra.mxu0 %v744
        %762 = vmatprep.subr.mxu0 0.0
        %763 = vmatpush1.msra.mxu0 %v745
        %764 = vmatprep.subr.mxu0 0.0
        %765 = vmatpush1.msra.mxu0 %v746
        %766 = vmatprep.subr.mxu0 0.0
        %767 = vmatpush1.msra.mxu0 0.0
        %768 = vmatprep.subr.mxu0 0.0
        %769 = vmatpush1.msra.mxu0 0.0
        %770 = vmatprep.subr.mxu0 0.0
        %771 = vmatpush1.msra.mxu0 0.0
        %772 = vmatprep.subr.mxu0 0.0
        %773 = vmatpush1.msra.mxu0 0.0
        %774 = vmatprep.subr.mxu0 0.0
        %775 = vmatpush1.msra.mxu0 0.0
        %776 = vmatprep.subr.mxu0 0.0
        %777 = vmatpush1.msra.mxu0 0.0
        %778 = vmatprep.subr.mxu0 0.0
        %779 = vmatpush1.msra.mxu0 0.0
        %780 = vmatprep.subr.mxu0 0.0
        %781 = vmatpush1.msra.mxu0 0.0
        %782 = vmatprep.subr.mxu0 0.0
        %783 = vmatpush1.msra.mxu0 0.0
        %784 = vmatprep.subr.mxu0 0.0
        %785 = vmatpush1.msra.mxu0 0.0
        %786 = vmatprep.subr.mxu0 0.0
        %787 = vmatpush1.msra.mxu0 0.0
        %788 = vmatprep.subr.mxu0 0.0
        %789 = vmatpush1.msra.mxu0 0.0
        %790 = vmatprep.subr.mxu0 0.0
        %791 = vmatpush1.msra.mxu0 0.0
        %792 = vmatprep.subr.mxu0 0.0
        %793 = vmatpush1.msra.mxu0 0.0
        %794 = vmatprep.subr.mxu0 0.0
        %795 = vmatpush1.msra.mxu0 0.0
        %796 = vmatprep.subr.mxu0 0.0
        %797 = vmatpush1.msra.mxu0 0.0
        %798 = vmatprep.subr.mxu0 0.0
        %799 = vmatpush1.msra.mxu0 0.0
        %800 = vmatprep.subr.mxu0 0.0
        %801 = vmatpush1.msra.mxu0 0.0
        %802 = vmatprep.subr.mxu0 0.0
        %803 = vmatpush1.msra.mxu0 0.0
        %804 = vmatprep.subr.mxu0 0.0
        %805 = vmatpush1.msra.mxu0 0.0
        %806 = vmatprep.subr.mxu0 0.0
        %807 = vmatpush1.msra.mxu0 0.0
        %808 = vmatprep.subr.mxu0 0.0
        %809 = vmatpush1.msra.mxu0 0.0
        %810 = vmatprep.subr.mxu0 0.0
        %811 = vmatpush1.msra.mxu0 0.0
        %812 = vmatprep.subr.mxu0 0.0
        %813 = vmatpush1.msra.mxu0 0.0
        %814 = vmatprep.mubr.f32.mxu0 0.0
        %815 = vmatmul.mubr.f32.gmra.mrb[0].mxu0 %v748
        %v816 = vpop.f32.mrb[0].mxu0
        %v817 = vadd.f32 0.0, %v816
        %v818 = vpop.f32.mrb[0].mxu0
        %819 = vdwg.mxu0
        %v820 = vadd.f32 %v733, %v817
        %s821 = scalar_lea.vmem %s212, %s735
        %v822 = vld [vmem:[%s821] sm:$0xf]
        %s823 = scalar_lea.vmem %s2, 448
        %v824 = vld [vmem:[%s823] sm:$0xff]
        %v825 = vld [vmem:[%s823 + $0x8] sm:$0xff]
        %v826 = vld [vmem:[%s823 + $0x10] sm:$0xff]
        %v827 = vld [vmem:[%s823 + $0x18] sm:$0xff]
        %v828 = vld [vmem:[%s823 + $0x20] sm:$0xff]
        %v829 = vld [vmem:[%s823 + $0x28] sm:$0xff]
        %v830 = vld [vmem:[%s823 + $0x30] sm:$0xff]
        %v831 = vld [vmem:[%s823 + $0x38] sm:$0xff]
        %v833 = vsel %vm247, %v822, 0
        %835 = vmatprep.subr.mxu0 0.0
        %836 = vmatpush1.msra.mxu0 %v824
        %837 = vmatprep.subr.mxu0 0.0
        %838 = vmatpush1.msra.mxu0 %v825
        %839 = vmatprep.subr.mxu0 0.0
        %840 = vmatpush1.msra.mxu0 %v826
        %841 = vmatprep.subr.mxu0 0.0
        %842 = vmatpush1.msra.mxu0 %v827
        %843 = vmatprep.subr.mxu0 0.0
        %844 = vmatpush1.msra.mxu0 %v828
        %845 = vmatprep.subr.mxu0 0.0
        %846 = vmatpush1.msra.mxu0 %v829
        %847 = vmatprep.subr.mxu0 0.0
        %848 = vmatpush1.msra.mxu0 %v830
        %849 = vmatprep.subr.mxu0 0.0
        %850 = vmatpush1.msra.mxu0 %v831
        %851 = vmatprep.subr.mxu0 0.0
        %852 = vmatpush1.msra.mxu0 0.0
        %853 = vmatprep.subr.mxu0 0.0
        %854 = vmatpush1.msra.mxu0 0.0
        %855 = vmatprep.subr.mxu0 0.0
        %856 = vmatpush1.msra.mxu0 0.0
        %857 = vmatprep.subr.mxu0 0.0
        %858 = vmatpush1.msra.mxu0 0.0
        %859 = vmatprep.subr.mxu0 0.0
        %860 = vmatpush1.msra.mxu0 0.0
        %861 = vmatprep.subr.mxu0 0.0
        %862 = vmatpush1.msra.mxu0 0.0
        %863 = vmatprep.subr.mxu0 0.0
        %864 = vmatpush1.msra.mxu0 0.0
        %865 = vmatprep.subr.mxu0 0.0
        %866 = vmatpush1.msra.mxu0 0.0
        %867 = vmatprep.subr.mxu0 0.0
        %868 = vmatpush1.msra.mxu0 0.0
        %869 = vmatprep.subr.mxu0 0.0
        %870 = vmatpush1.msra.mxu0 0.0
        %871 = vmatprep.subr.mxu0 0.0
        %872 = vmatpush1.msra.mxu0 0.0
        %873 = vmatprep.subr.mxu0 0.0
        %874 = vmatpush1.msra.mxu0 0.0
        %875 = vmatprep.subr.mxu0 0.0
        %876 = vmatpush1.msra.mxu0 0.0
        %877 = vmatprep.subr.mxu0 0.0
        %878 = vmatpush1.msra.mxu0 0.0
        %879 = vmatprep.subr.mxu0 0.0
        %880 = vmatpush1.msra.mxu0 0.0
        %881 = vmatprep.subr.mxu0 0.0
        %882 = vmatpush1.msra.mxu0 0.0
        %883 = vmatprep.subr.mxu0 0.0
        %884 = vmatpush1.msra.mxu0 0.0
        %885 = vmatprep.subr.mxu0 0.0
        %886 = vmatpush1.msra.mxu0 0.0
        %887 = vmatprep.subr.mxu0 0.0
        %888 = vmatpush1.msra.mxu0 0.0
        %889 = vmatprep.subr.mxu0 0.0
        %890 = vmatpush1.msra.mxu0 0.0
        %891 = vmatprep.subr.mxu0 0.0
        %892 = vmatpush1.msra.mxu0 0.0
        %893 = vmatprep.subr.mxu0 0.0
        %894 = vmatpush1.msra.mxu0 0.0
        %895 = vmatprep.subr.mxu0 0.0
        %896 = vmatpush1.msra.mxu0 0.0
        %897 = vmatprep.subr.mxu0 0.0
        %898 = vmatpush1.msra.mxu0 0.0
        %899 = vmatprep.mubr.f32.mxu0 0.0
        %900 = vmatmul.mubr.f32.gmra.mrb[0].mxu0 %v833
        %v901 = vpop.f32.mrb[0].mxu0
        %v902 = vadd.f32 0.0, %v901
        %v903 = vpop.f32.mrb[0].mxu0
        %904 = vdwg.mxu0
        %v905 = vadd.f32 %v820, %v902
        %v906 = vld [vmem:[%s736 + $0x1] sm:$0xf]
        %s907 = scalar_lea.vmem %s2, 512
        %v908 = vld [vmem:[%s907] sm:$0xff]
        %v909 = vld [vmem:[%s907 + $0x8] sm:$0xff]
        %v910 = vld [vmem:[%s907 + $0x10] sm:$0xff]
        %v911 = vld [vmem:[%s907 + $0x18] sm:$0xff]
        %v912 = vld [vmem:[%s907 + $0x20] sm:$0xff]
        %v913 = vld [vmem:[%s907 + $0x28] sm:$0xff]
        %v914 = vld [vmem:[%s907 + $0x30] sm:$0xff]
        %v915 = vld [vmem:[%s907 + $0x38] sm:$0xff]
        %v917 = vsel %vm247, %v906, 0
        %919 = vmatprep.subr.mxu0 0.0
        %920 = vmatpush1.msra.mxu0 %v908
        %921 = vmatprep.subr.mxu0 0.0
        %922 = vmatpush1.msra.mxu0 %v909
        %923 = vmatprep.subr.mxu0 0.0
        %924 = vmatpush1.msra.mxu0 %v910
        %925 = vmatprep.subr.mxu0 0.0
        %926 = vmatpush1.msra.mxu0 %v911
        %927 = vmatprep.subr.mxu0 0.0
        %928 = vmatpush1.msra.mxu0 %v912
        %929 = vmatprep.subr.mxu0 0.0
        %930 = vmatpush1.msra.mxu0 %v913
        %931 = vmatprep.subr.mxu0 0.0
        %932 = vmatpush1.msra.mxu0 %v914
        %933 = vmatprep.subr.mxu0 0.0
        %934 = vmatpush1.msra.mxu0 %v915
        %935 = vmatprep.subr.mxu0 0.0
        %936 = vmatpush1.msra.mxu0 0.0
        %937 = vmatprep.subr.mxu0 0.0
        %938 = vmatpush1.msra.mxu0 0.0
        %939 = vmatprep.subr.mxu0 0.0
        %940 = vmatpush1.msra.mxu0 0.0
        %941 = vmatprep.subr.mxu0 0.0
        %942 = vmatpush1.msra.mxu0 0.0
        %943 = vmatprep.subr.mxu0 0.0
        %944 = vmatpush1.msra.mxu0 0.0
        %945 = vmatprep.subr.mxu0 0.0
        %946 = vmatpush1.msra.mxu0 0.0
        %947 = vmatprep.subr.mxu0 0.0
        %948 = vmatpush1.msra.mxu0 0.0
        %949 = vmatprep.subr.mxu0 0.0
        %950 = vmatpush1.msra.mxu0 0.0
        %951 = vmatprep.subr.mxu0 0.0
        %952 = vmatpush1.msra.mxu0 0.0
        %953 = vmatprep.subr.mxu0 0.0
        %954 = vmatpush1.msra.mxu0 0.0
        %955 = vmatprep.subr.mxu0 0.0
        %956 = vmatpush1.msra.mxu0 0.0
        %957 = vmatprep.subr.mxu0 0.0
        %958 = vmatpush1.msra.mxu0 0.0
        %959 = vmatprep.subr.mxu0 0.0
        %960 = vmatpush1.msra.mxu0 0.0
        %961 = vmatprep.subr.mxu0 0.0
        %962 = vmatpush1.msra.mxu0 0.0
        %963 = vmatprep.subr.mxu0 0.0
        %964 = vmatpush1.msra.mxu0 0.0
        %965 = vmatprep.subr.mxu0 0.0
        %966 = vmatpush1.msra.mxu0 0.0
        %967 = vmatprep.subr.mxu0 0.0
        %968 = vmatpush1.msra.mxu0 0.0
        %969 = vmatprep.subr.mxu0 0.0
        %970 = vmatpush1.msra.mxu0 0.0
        %971 = vmatprep.subr.mxu0 0.0
        %972 = vmatpush1.msra.mxu0 0.0
        %973 = vmatprep.subr.mxu0 0.0
        %974 = vmatpush1.msra.mxu0 0.0
        %975 = vmatprep.subr.mxu0 0.0
        %976 = vmatpush1.msra.mxu0 0.0
        %977 = vmatprep.subr.mxu0 0.0
        %978 = vmatpush1.msra.mxu0 0.0
        %979 = vmatprep.subr.mxu0 0.0
        %980 = vmatpush1.msra.mxu0 0.0
        %981 = vmatprep.subr.mxu0 0.0
        %982 = vmatpush1.msra.mxu0 0.0
        %983 = vmatprep.mubr.f32.mxu0 0.0
        %984 = vmatmul.mubr.f32.gmra.mrb[0].mxu0 %v917
        %v985 = vpop.f32.mrb[0].mxu0
        %v986 = vadd.f32 0.0, %v985
        %v987 = vpop.f32.mrb[0].mxu0
        %988 = vdwg.mxu0
        %v989 = vadd.f32 %v905, %v986
        %990 = vmatprep.subr.mxu0 0.0
        %991 = vmatpush1.msra.mxu0 %v239
        %992 = vmatprep.subr.mxu0 0.0
        %993 = vmatpush1.msra.mxu0 %v240
        %994 = vmatprep.subr.mxu0 0.0
        %995 = vmatpush1.msra.mxu0 %v241
        %996 = vmatprep.subr.mxu0 0.0
        %997 = vmatpush1.msra.mxu0 %v242
        %998 = vmatprep.subr.mxu0 0.0
        %999 = vmatpush1.msra.mxu0 %v243
        %1000 = vmatprep.subr.mxu0 0.0
        %1001 = vmatpush1.msra.mxu0 %v244
        %1002 = vmatprep.subr.mxu0 0.0
        %1003 = vmatpush1.msra.mxu0 %v245
        %1004 = vmatprep.subr.mxu0 0.0
        %1005 = vmatpush1.msra.mxu0 %v246
        %1006 = vmatprep.subr.mxu0 0.0
        %1007 = vmatpush1.msra.mxu0 0.0
        %1008 = vmatprep.subr.mxu0 0.0
        %1009 = vmatpush1.msra.mxu0 0.0
        %1010 = vmatprep.subr.mxu0 0.0
        %1011 = vmatpush1.msra.mxu0 0.0
        %1012 = vmatprep.subr.mxu0 0.0
        %1013 = vmatpush1.msra.mxu0 0.0
        %1014 = vmatprep.subr.mxu0 0.0
        %1015 = vmatpush1.msra.mxu0 0.0
        %1016 = vmatprep.subr.mxu0 0.0
        %1017 = vmatpush1.msra.mxu0 0.0
        %1018 = vmatprep.subr.mxu0 0.0
        %1019 = vmatpush1.msra.mxu0 0.0
        %1020 = vmatprep.subr.mxu0 0.0
        %1021 = vmatpush1.msra.mxu0 0.0
        %1022 = vmatprep.subr.mxu0 0.0
        %1023 = vmatpush1.msra.mxu0 0.0
        %1024 = vmatprep.subr.mxu0 0.0
        %1025 = vmatpush1.msra.mxu0 0.0
        %1026 = vmatprep.subr.mxu0 0.0
        %1027 = vmatpush1.msra.mxu0 0.0
        %1028 = vmatprep.subr.mxu0 0.0
        %1029 = vmatpush1.msra.mxu0 0.0
        %1030 = vmatprep.subr.mxu0 0.0
        %1031 = vmatpush1.msra.mxu0 0.0
        %1032 = vmatprep.subr.mxu0 0.0
        %1033 = vmatpush1.msra.mxu0 0.0
        %1034 = vmatprep.subr.mxu0 0.0
        %1035 = vmatpush1.msra.mxu0 0.0
        %1036 = vmatprep.subr.mxu0 0.0
        %1037 = vmatpush1.msra.mxu0 0.0
        %1038 = vmatprep.subr.mxu0 0.0
        %1039 = vmatpush1.msra.mxu0 0.0
        %1040 = vmatprep.subr.mxu0 0.0
        %1041 = vmatpush1.msra.mxu0 0.0
        %1042 = vmatprep.subr.mxu0 0.0
        %1043 = vmatpush1.msra.mxu0 0.0
        %1044 = vmatprep.subr.mxu0 0.0
        %1045 = vmatpush1.msra.mxu0 0.0
        %1046 = vmatprep.subr.mxu0 0.0
        %1047 = vmatpush1.msra.mxu0 0.0
        %1048 = vmatprep.subr.mxu0 0.0
        %1049 = vmatpush1.msra.mxu0 0.0
        %1050 = vmatprep.subr.mxu0 0.0
        %1051 = vmatpush1.msra.mxu0 0.0
        %1052 = vmatprep.subr.mxu0 0.0
        %1053 = vmatpush1.msra.mxu0 0.0
        %1054 = vmatprep.mubr.f32.mxu0 0.0
        %1055 = vmatmul.mubr.f32.gmra.mrb[0].mxu0 %v405
        %v1056 = vpop.f32.mrb[0].mxu0
        %v1057 = vadd.f32 0.0, %v1056
        %v1058 = vpop.f32.mrb[0].mxu0
        %1059 = vdwg.mxu0
        %1060 = vmatprep.subr.mxu0 0.0
        %1061 = vmatpush1.msra.mxu0 %v228
        %1062 = vmatprep.subr.mxu0 0.0
        %1063 = vmatpush1.msra.mxu0 %v229
        %1064 = vmatprep.subr.mxu0 0.0
        %1065 = vmatpush1.msra.mxu0 %v230
        %1066 = vmatprep.subr.mxu0 0.0
        %1067 = vmatpush1.msra.mxu0 %v231
        %1068 = vmatprep.subr.mxu0 0.0
        %1069 = vmatpush1.msra.mxu0 %v232
        %1070 = vmatprep.subr.mxu0 0.0
        %1071 = vmatpush1.msra.mxu0 %v233
        %1072 = vmatprep.subr.mxu0 0.0
        %1073 = vmatpush1.msra.mxu0 %v234
        %1074 = vmatprep.subr.mxu0 0.0
        %1075 = vmatpush1.msra.mxu0 %v235
        %1076 = vmatprep.subr.mxu0 0.0
        %1077 = vmatpush1.msra.mxu0 0.0
        %1078 = vmatprep.subr.mxu0 0.0
        %1079 = vmatpush1.msra.mxu0 0.0
        %1080 = vmatprep.subr.mxu0 0.0
        %1081 = vmatpush1.msra.mxu0 0.0
        %1082 = vmatprep.subr.mxu0 0.0
        %1083 = vmatpush1.msra.mxu0 0.0
        %1084 = vmatprep.subr.mxu0 0.0
        %1085 = vmatpush1.msra.mxu0 0.0
        %1086 = vmatprep.subr.mxu0 0.0
        %1087 = vmatpush1.msra.mxu0 0.0
        %1088 = vmatprep.subr.mxu0 0.0
        %1089 = vmatpush1.msra.mxu0 0.0
        %1090 = vmatprep.subr.mxu0 0.0
        %1091 = vmatpush1.msra.mxu0 0.0
        %1092 = vmatprep.subr.mxu0 0.0
        %1093 = vmatpush1.msra.mxu0 0.0
        %1094 = vmatprep.subr.mxu0 0.0
        %1095 = vmatpush1.msra.mxu0 0.0
        %1096 = vmatprep.subr.mxu0 0.0
        %1097 = vmatpush1.msra.mxu0 0.0
        %1098 = vmatprep.subr.mxu0 0.0
        %1099 = vmatpush1.msra.mxu0 0.0
        %1100 = vmatprep.subr.mxu0 0.0
        %1101 = vmatpush1.msra.mxu0 0.0
        %1102 = vmatprep.subr.mxu0 0.0
        %1103 = vmatpush1.msra.mxu0 0.0
        %1104 = vmatprep.subr.mxu0 0.0
        %1105 = vmatpush1.msra.mxu0 0.0
        %1106 = vmatprep.subr.mxu0 0.0
        %1107 = vmatpush1.msra.mxu0 0.0
        %1108 = vmatprep.subr.mxu0 0.0
        %1109 = vmatpush1.msra.mxu0 0.0
        %1110 = vmatprep.subr.mxu0 0.0
        %1111 = vmatpush1.msra.mxu0 0.0
        %1112 = vmatprep.subr.mxu0 0.0
        %1113 = vmatpush1.msra.mxu0 0.0
        %1114 = vmatprep.subr.mxu0 0.0
        %1115 = vmatpush1.msra.mxu0 0.0
        %1116 = vmatprep.subr.mxu0 0.0
        %1117 = vmatpush1.msra.mxu0 0.0
        %1118 = vmatprep.subr.mxu0 0.0
        %1119 = vmatpush1.msra.mxu0 0.0
        %1120 = vmatprep.subr.mxu0 0.0
        %1121 = vmatpush1.msra.mxu0 0.0
        %1122 = vmatprep.subr.mxu0 0.0
        %1123 = vmatpush1.msra.mxu0 0.0
        %1124 = vmatprep.mubr.f32.mxu0 0.0
        %1125 = vmatmul.mubr.f32.gmra.mrb[0].mxu0 %v249
        %v1126 = vpop.f32.mrb[0].mxu0
        %v1127 = vadd.f32 %v1057, %v1126
        %v1128 = vpop.f32.mrb[0].mxu0
        %1129 = vdwg.mxu0
        %v1130 = vld [vmem:[%s236 + $0x1] sm:$0xf]
        %v1132 = vsel %vm247, %v1130, 0
        %1134 = vmatprep.subr.mxu0 0.0
        %1135 = vmatpush1.msra.mxu0 %v396
        %1136 = vmatprep.subr.mxu0 0.0
        %1137 = vmatpush1.msra.mxu0 %v397
        %1138 = vmatprep.subr.mxu0 0.0
        %1139 = vmatpush1.msra.mxu0 %v398
        %1140 = vmatprep.subr.mxu0 0.0
        %1141 = vmatpush1.msra.mxu0 %v399
        %1142 = vmatprep.subr.mxu0 0.0
        %1143 = vmatpush1.msra.mxu0 %v400
        %1144 = vmatprep.subr.mxu0 0.0
        %1145 = vmatpush1.msra.mxu0 %v401
        %1146 = vmatprep.subr.mxu0 0.0
        %1147 = vmatpush1.msra.mxu0 %v402
        %1148 = vmatprep.subr.mxu0 0.0
        %1149 = vmatpush1.msra.mxu0 %v403
        %1150 = vmatprep.subr.mxu0 0.0
        %1151 = vmatpush1.msra.mxu0 0.0
        %1152 = vmatprep.subr.mxu0 0.0
        %1153 = vmatpush1.msra.mxu0 0.0
        %1154 = vmatprep.subr.mxu0 0.0
        %1155 = vmatpush1.msra.mxu0 0.0
        %1156 = vmatprep.subr.mxu0 0.0
        %1157 = vmatpush1.msra.mxu0 0.0
        %1158 = vmatprep.subr.mxu0 0.0
        %1159 = vmatpush1.msra.mxu0 0.0
        %1160 = vmatprep.subr.mxu0 0.0
        %1161 = vmatpush1.msra.mxu0 0.0
        %1162 = vmatprep.subr.mxu0 0.0
        %1163 = vmatpush1.msra.mxu0 0.0
        %1164 = vmatprep.subr.mxu0 0.0
        %1165 = vmatpush1.msra.mxu0 0.0
        %1166 = vmatprep.subr.mxu0 0.0
        %1167 = vmatpush1.msra.mxu0 0.0
        %1168 = vmatprep.subr.mxu0 0.0
        %1169 = vmatpush1.msra.mxu0 0.0
        %1170 = vmatprep.subr.mxu0 0.0
        %1171 = vmatpush1.msra.mxu0 0.0
        %1172 = vmatprep.subr.mxu0 0.0
        %1173 = vmatpush1.msra.mxu0 0.0
        %1174 = vmatprep.subr.mxu0 0.0
        %1175 = vmatpush1.msra.mxu0 0.0
        %1176 = vmatprep.subr.mxu0 0.0
        %1177 = vmatpush1.msra.mxu0 0.0
        %1178 = vmatprep.subr.mxu0 0.0
        %1179 = vmatpush1.msra.mxu0 0.0
        %1180 = vmatprep.subr.mxu0 0.0
        %1181 = vmatpush1.msra.mxu0 0.0
        %1182 = vmatprep.subr.mxu0 0.0
        %1183 = vmatpush1.msra.mxu0 0.0
        %1184 = vmatprep.subr.mxu0 0.0
        %1185 = vmatpush1.msra.mxu0 0.0
        %1186 = vmatprep.subr.mxu0 0.0
        %1187 = vmatpush1.msra.mxu0 0.0
        %1188 = vmatprep.subr.mxu0 0.0
        %1189 = vmatpush1.msra.mxu0 0.0
        %1190 = vmatprep.subr.mxu0 0.0
        %1191 = vmatpush1.msra.mxu0 0.0
        %1192 = vmatprep.subr.mxu0 0.0
        %1193 = vmatpush1.msra.mxu0 0.0
        %1194 = vmatprep.subr.mxu0 0.0
        %1195 = vmatpush1.msra.mxu0 0.0
        %1196 = vmatprep.subr.mxu0 0.0
        %1197 = vmatpush1.msra.mxu0 0.0
        %1198 = vmatprep.mubr.f32.mxu0 0.0
        %1199 = vmatmul.mubr.f32.gmra.mrb[0].mxu0 %v1132
        %v1200 = vpop.f32.mrb[0].mxu0
        %v1201 = vadd.f32 0.0, %v1200
        %v1202 = vpop.f32.mrb[0].mxu0
        %1203 = vdwg.mxu0
        %v1204 = vadd.f32 %v1127, %v1201
        %1205 = vmatprep.subr.mxu0 0.0
        %1206 = vmatpush1.msra.mxu0 %v483
        %1207 = vmatprep.subr.mxu0 0.0
        %1208 = vmatpush1.msra.mxu0 %v484
        %1209 = vmatprep.subr.mxu0 0.0
        %1210 = vmatpush1.msra.mxu0 %v485
        %1211 = vmatprep.subr.mxu0 0.0
        %1212 = vmatpush1.msra.mxu0 %v486
        %1213 = vmatprep.subr.mxu0 0.0
        %1214 = vmatpush1.msra.mxu0 %v487
        %1215 = vmatprep.subr.mxu0 0.0
        %1216 = vmatpush1.msra.mxu0 %v488
        %1217 = vmatprep.subr.mxu0 0.0
        %1218 = vmatpush1.msra.mxu0 %v489
        %1219 = vmatprep.subr.mxu0 0.0
        %1220 = vmatpush1.msra.mxu0 %v490
        %1221 = vmatprep.subr.mxu0 0.0
        %1222 = vmatpush1.msra.mxu0 0.0
        %1223 = vmatprep.subr.mxu0 0.0
        %1224 = vmatpush1.msra.mxu0 0.0
        %1225 = vmatprep.subr.mxu0 0.0
        %1226 = vmatpush1.msra.mxu0 0.0
        %1227 = vmatprep.subr.mxu0 0.0
        %1228 = vmatpush1.msra.mxu0 0.0
        %1229 = vmatprep.subr.mxu0 0.0
        %1230 = vmatpush1.msra.mxu0 0.0
        %1231 = vmatprep.subr.mxu0 0.0
        %1232 = vmatpush1.msra.mxu0 0.0
        %1233 = vmatprep.subr.mxu0 0.0
        %1234 = vmatpush1.msra.mxu0 0.0
        %1235 = vmatprep.subr.mxu0 0.0
        %1236 = vmatpush1.msra.mxu0 0.0
        %1237 = vmatprep.subr.mxu0 0.0
        %1238 = vmatpush1.msra.mxu0 0.0
        %1239 = vmatprep.subr.mxu0 0.0
        %1240 = vmatpush1.msra.mxu0 0.0
        %1241 = vmatprep.subr.mxu0 0.0
        %1242 = vmatpush1.msra.mxu0 0.0
        %1243 = vmatprep.subr.mxu0 0.0
        %1244 = vmatpush1.msra.mxu0 0.0
        %1245 = vmatprep.subr.mxu0 0.0
        %1246 = vmatpush1.msra.mxu0 0.0
        %1247 = vmatprep.subr.mxu0 0.0
        %1248 = vmatpush1.msra.mxu0 0.0
        %1249 = vmatprep.subr.mxu0 0.0
        %1250 = vmatpush1.msra.mxu0 0.0
        %1251 = vmatprep.subr.mxu0 0.0
        %1252 = vmatpush1.msra.mxu0 0.0
        %1253 = vmatprep.subr.mxu0 0.0
        %1254 = vmatpush1.msra.mxu0 0.0
        %1255 = vmatprep.subr.mxu0 0.0
        %1256 = vmatpush1.msra.mxu0 0.0
        %1257 = vmatprep.subr.mxu0 0.0
        %1258 = vmatpush1.msra.mxu0 0.0
        %1259 = vmatprep.subr.mxu0 0.0
        %1260 = vmatpush1.msra.mxu0 0.0
        %1261 = vmatprep.subr.mxu0 0.0
        %1262 = vmatpush1.msra.mxu0 0.0
        %1263 = vmatprep.subr.mxu0 0.0
        %1264 = vmatpush1.msra.mxu0 0.0
        %1265 = vmatprep.subr.mxu0 0.0
        %1266 = vmatpush1.msra.mxu0 0.0
        %1267 = vmatprep.subr.mxu0 0.0
        %1268 = vmatpush1.msra.mxu0 0.0
        %1269 = vmatprep.mubr.f32.mxu0 0.0
        %1270 = vmatmul.mubr.f32.gmra.mrb[0].mxu0 %v577
        %v1271 = vpop.f32.mrb[0].mxu0
        %v1272 = vadd.f32 0.0, %v1271
        %v1273 = vpop.f32.mrb[0].mxu0
        %1274 = vdwg.mxu0
        %v1275 = vadd.f32 %v1204, %v1272
        %1276 = vmatprep.subr.mxu0 0.0
        %1277 = vmatpush1.msra.mxu0 %v568
        %1278 = vmatprep.subr.mxu0 0.0
        %1279 = vmatpush1.msra.mxu0 %v569
        %1280 = vmatprep.subr.mxu0 0.0
        %1281 = vmatpush1.msra.mxu0 %v570
        %1282 = vmatprep.subr.mxu0 0.0
        %1283 = vmatpush1.msra.mxu0 %v571
        %1284 = vmatprep.subr.mxu0 0.0
        %1285 = vmatpush1.msra.mxu0 %v572
        %1286 = vmatprep.subr.mxu0 0.0
        %1287 = vmatpush1.msra.mxu0 %v573
        %1288 = vmatprep.subr.mxu0 0.0
        %1289 = vmatpush1.msra.mxu0 %v574
        %1290 = vmatprep.subr.mxu0 0.0
        %1291 = vmatpush1.msra.mxu0 %v575
        %1292 = vmatprep.subr.mxu0 0.0
        %1293 = vmatpush1.msra.mxu0 0.0
        %1294 = vmatprep.subr.mxu0 0.0
        %1295 = vmatpush1.msra.mxu0 0.0
        %1296 = vmatprep.subr.mxu0 0.0
        %1297 = vmatpush1.msra.mxu0 0.0
        %1298 = vmatprep.subr.mxu0 0.0
        %1299 = vmatpush1.msra.mxu0 0.0
        %1300 = vmatprep.subr.mxu0 0.0
        %1301 = vmatpush1.msra.mxu0 0.0
        %1302 = vmatprep.subr.mxu0 0.0
        %1303 = vmatpush1.msra.mxu0 0.0
        %1304 = vmatprep.subr.mxu0 0.0
        %1305 = vmatpush1.msra.mxu0 0.0
        %1306 = vmatprep.subr.mxu0 0.0
        %1307 = vmatpush1.msra.mxu0 0.0
        %1308 = vmatprep.subr.mxu0 0.0
        %1309 = vmatpush1.msra.mxu0 0.0
        %1310 = vmatprep.subr.mxu0 0.0
        %1311 = vmatpush1.msra.mxu0 0.0
        %1312 = vmatprep.subr.mxu0 0.0
        %1313 = vmatpush1.msra.mxu0 0.0
        %1314 = vmatprep.subr.mxu0 0.0
        %1315 = vmatpush1.msra.mxu0 0.0
        %1316 = vmatprep.subr.mxu0 0.0
        %1317 = vmatpush1.msra.mxu0 0.0
        %1318 = vmatprep.subr.mxu0 0.0
        %1319 = vmatpush1.msra.mxu0 0.0
        %1320 = vmatprep.subr.mxu0 0.0
        %1321 = vmatpush1.msra.mxu0 0.0
        %1322 = vmatprep.subr.mxu0 0.0
        %1323 = vmatpush1.msra.mxu0 0.0
        %1324 = vmatprep.subr.mxu0 0.0
        %1325 = vmatpush1.msra.mxu0 0.0
        %1326 = vmatprep.subr.mxu0 0.0
        %1327 = vmatpush1.msra.mxu0 0.0
        %1328 = vmatprep.subr.mxu0 0.0
        %1329 = vmatpush1.msra.mxu0 0.0
        %1330 = vmatprep.subr.mxu0 0.0
        %1331 = vmatpush1.msra.mxu0 0.0
        %1332 = vmatprep.subr.mxu0 0.0
        %1333 = vmatpush1.msra.mxu0 0.0
        %1334 = vmatprep.subr.mxu0 0.0
        %1335 = vmatpush1.msra.mxu0 0.0
        %1336 = vmatprep.subr.mxu0 0.0
        %1337 = vmatpush1.msra.mxu0 0.0
        %1338 = vmatprep.subr.mxu0 0.0
        %1339 = vmatpush1.msra.mxu0 0.0
        %1340 = vmatprep.mubr.f32.mxu0 0.0
        %1341 = vmatmul.mubr.f32.gmra.mrb[0].mxu0 %v661
        %v1342 = vpop.f32.mrb[0].mxu0
        %v1343 = vadd.f32 0.0, %v1342
        %v1344 = vpop.f32.mrb[0].mxu0
        %1345 = vdwg.mxu0
        %v1346 = vadd.f32 %v1275, %v1343
        %v1347 = vld [vmem:[%s565 + $0x1] sm:$0xf]
        %v1349 = vsel %vm247, %v1347, 0
        %1351 = vmatprep.subr.mxu0 0.0
        %1352 = vmatpush1.msra.mxu0 %v652
        %1353 = vmatprep.subr.mxu0 0.0
        %1354 = vmatpush1.msra.mxu0 %v653
        %1355 = vmatprep.subr.mxu0 0.0
        %1356 = vmatpush1.msra.mxu0 %v654
        %1357 = vmatprep.subr.mxu0 0.0
        %1358 = vmatpush1.msra.mxu0 %v655
        %1359 = vmatprep.subr.mxu0 0.0
        %1360 = vmatpush1.msra.mxu0 %v656
        %1361 = vmatprep.subr.mxu0 0.0
        %1362 = vmatpush1.msra.mxu0 %v657
        %1363 = vmatprep.subr.mxu0 0.0
        %1364 = vmatpush1.msra.mxu0 %v658
        %1365 = vmatprep.subr.mxu0 0.0
        %1366 = vmatpush1.msra.mxu0 %v659
        %1367 = vmatprep.subr.mxu0 0.0
        %1368 = vmatpush1.msra.mxu0 0.0
        %1369 = vmatprep.subr.mxu0 0.0
        %1370 = vmatpush1.msra.mxu0 0.0
        %1371 = vmatprep.subr.mxu0 0.0
        %1372 = vmatpush1.msra.mxu0 0.0
        %1373 = vmatprep.subr.mxu0 0.0
        %1374 = vmatpush1.msra.mxu0 0.0
        %1375 = vmatprep.subr.mxu0 0.0
        %1376 = vmatpush1.msra.mxu0 0.0
        %1377 = vmatprep.subr.mxu0 0.0
        %1378 = vmatpush1.msra.mxu0 0.0
        %1379 = vmatprep.subr.mxu0 0.0
        %1380 = vmatpush1.msra.mxu0 0.0
        %1381 = vmatprep.subr.mxu0 0.0
        %1382 = vmatpush1.msra.mxu0 0.0
        %1383 = vmatprep.subr.mxu0 0.0
        %1384 = vmatpush1.msra.mxu0 0.0
        %1385 = vmatprep.subr.mxu0 0.0
        %1386 = vmatpush1.msra.mxu0 0.0
        %1387 = vmatprep.subr.mxu0 0.0
        %1388 = vmatpush1.msra.mxu0 0.0
        %1389 = vmatprep.subr.mxu0 0.0
        %1390 = vmatpush1.msra.mxu0 0.0
        %1391 = vmatprep.subr.mxu0 0.0
        %1392 = vmatpush1.msra.mxu0 0.0
        %1393 = vmatprep.subr.mxu0 0.0
        %1394 = vmatpush1.msra.mxu0 0.0
        %1395 = vmatprep.subr.mxu0 0.0
        %1396 = vmatpush1.msra.mxu0 0.0
        %1397 = vmatprep.subr.mxu0 0.0
        %1398 = vmatpush1.msra.mxu0 0.0
        %1399 = vmatprep.subr.mxu0 0.0
        %1400 = vmatpush1.msra.mxu0 0.0
        %1401 = vmatprep.subr.mxu0 0.0
        %1402 = vmatpush1.msra.mxu0 0.0
        %1403 = vmatprep.subr.mxu0 0.0
        %1404 = vmatpush1.msra.mxu0 0.0
        %1405 = vmatprep.subr.mxu0 0.0
        %1406 = vmatpush1.msra.mxu0 0.0
        %1407 = vmatprep.subr.mxu0 0.0
        %1408 = vmatpush1.msra.mxu0 0.0
        %1409 = vmatprep.subr.mxu0 0.0
        %1410 = vmatpush1.msra.mxu0 0.0
        %1411 = vmatprep.subr.mxu0 0.0
        %1412 = vmatpush1.msra.mxu0 0.0
        %1413 = vmatprep.subr.mxu0 0.0
        %1414 = vmatpush1.msra.mxu0 0.0
        %1415 = vmatprep.mubr.f32.mxu0 0.0
        %1416 = vmatmul.mubr.f32.gmra.mrb[0].mxu0 %v1349
        %v1417 = vpop.f32.mrb[0].mxu0
        %v1418 = vadd.f32 0.0, %v1417
        %v1419 = vpop.f32.mrb[0].mxu0
        %1420 = vdwg.mxu0
        %v1421 = vadd.f32 %v1346, %v1418
        %1422 = vmatprep.subr.mxu0 0.0
        %1423 = vmatpush1.msra.mxu0 %v739
        %1424 = vmatprep.subr.mxu0 0.0
        %1425 = vmatpush1.msra.mxu0 %v740
        %1426 = vmatprep.subr.mxu0 0.0
        %1427 = vmatpush1.msra.mxu0 %v741
        %1428 = vmatprep.subr.mxu0 0.0
        %1429 = vmatpush1.msra.mxu0 %v742
        %1430 = vmatprep.subr.mxu0 0.0
        %1431 = vmatpush1.msra.mxu0 %v743
        %1432 = vmatprep.subr.mxu0 0.0
        %1433 = vmatpush1.msra.mxu0 %v744
        %1434 = vmatprep.subr.mxu0 0.0
        %1435 = vmatpush1.msra.mxu0 %v745
        %1436 = vmatprep.subr.mxu0 0.0
        %1437 = vmatpush1.msra.mxu0 %v746
        %1438 = vmatprep.subr.mxu0 0.0
        %1439 = vmatpush1.msra.mxu0 0.0
        %1440 = vmatprep.subr.mxu0 0.0
        %1441 = vmatpush1.msra.mxu0 0.0
        %1442 = vmatprep.subr.mxu0 0.0
        %1443 = vmatpush1.msra.mxu0 0.0
        %1444 = vmatprep.subr.mxu0 0.0
        %1445 = vmatpush1.msra.mxu0 0.0
        %1446 = vmatprep.subr.mxu0 0.0
        %1447 = vmatpush1.msra.mxu0 0.0
        %1448 = vmatprep.subr.mxu0 0.0
        %1449 = vmatpush1.msra.mxu0 0.0
        %1450 = vmatprep.subr.mxu0 0.0
        %1451 = vmatpush1.msra.mxu0 0.0
        %1452 = vmatprep.subr.mxu0 0.0
        %1453 = vmatpush1.msra.mxu0 0.0
        %1454 = vmatprep.subr.mxu0 0.0
        %1455 = vmatpush1.msra.mxu0 0.0
        %1456 = vmatprep.subr.mxu0 0.0
        %1457 = vmatpush1.msra.mxu0 0.0
        %1458 = vmatprep.subr.mxu0 0.0
        %1459 = vmatpush1.msra.mxu0 0.0
        %1460 = vmatprep.subr.mxu0 0.0
        %1461 = vmatpush1.msra.mxu0 0.0
        %1462 = vmatprep.subr.mxu0 0.0
        %1463 = vmatpush1.msra.mxu0 0.0
        %1464 = vmatprep.subr.mxu0 0.0
        %1465 = vmatpush1.msra.mxu0 0.0
        %1466 = vmatprep.subr.mxu0 0.0
        %1467 = vmatpush1.msra.mxu0 0.0
        %1468 = vmatprep.subr.mxu0 0.0
        %1469 = vmatpush1.msra.mxu0 0.0
        %1470 = vmatprep.subr.mxu0 0.0
        %1471 = vmatpush1.msra.mxu0 0.0
        %1472 = vmatprep.subr.mxu0 0.0
        %1473 = vmatpush1.msra.mxu0 0.0
        %1474 = vmatprep.subr.mxu0 0.0
        %1475 = vmatpush1.msra.mxu0 0.0
        %1476 = vmatprep.subr.mxu0 0.0
        %1477 = vmatpush1.msra.mxu0 0.0
        %1478 = vmatprep.subr.mxu0 0.0
        %1479 = vmatpush1.msra.mxu0 0.0
        %1480 = vmatprep.subr.mxu0 0.0
        %1481 = vmatpush1.msra.mxu0 0.0
        %1482 = vmatprep.subr.mxu0 0.0
        %1483 = vmatpush1.msra.mxu0 0.0
        %1484 = vmatprep.subr.mxu0 0.0
        %1485 = vmatpush1.msra.mxu0 0.0
        %1486 = vmatprep.mubr.f32.mxu0 0.0
        %1487 = vmatmul.mubr.f32.gmra.mrb[0].mxu0 %v833
        %v1488 = vpop.f32.mrb[0].mxu0
        %v1489 = vadd.f32 0.0, %v1488
        %v1490 = vpop.f32.mrb[0].mxu0
        %1491 = vdwg.mxu0
        %v1492 = vadd.f32 %v1421, %v1489
        %1493 = vmatprep.subr.mxu0 0.0
        %1494 = vmatpush1.msra.mxu0 %v824
        %1495 = vmatprep.subr.mxu0 0.0
        %1496 = vmatpush1.msra.mxu0 %v825
        %1497 = vmatprep.subr.mxu0 0.0
        %1498 = vmatpush1.msra.mxu0 %v826
        %1499 = vmatprep.subr.mxu0 0.0
        %1500 = vmatpush1.msra.mxu0 %v827
        %1501 = vmatprep.subr.mxu0 0.0
        %1502 = vmatpush1.msra.mxu0 %v828
        %1503 = vmatprep.subr.mxu0 0.0
        %1504 = vmatpush1.msra.mxu0 %v829
        %1505 = vmatprep.subr.mxu0 0.0
        %1506 = vmatpush1.msra.mxu0 %v830
        %1507 = vmatprep.subr.mxu0 0.0
        %1508 = vmatpush1.msra.mxu0 %v831
        %1509 = vmatprep.subr.mxu0 0.0
        %1510 = vmatpush1.msra.mxu0 0.0
        %1511 = vmatprep.subr.mxu0 0.0
        %1512 = vmatpush1.msra.mxu0 0.0
        %1513 = vmatprep.subr.mxu0 0.0
        %1514 = vmatpush1.msra.mxu0 0.0
        %1515 = vmatprep.subr.mxu0 0.0
        %1516 = vmatpush1.msra.mxu0 0.0
        %1517 = vmatprep.subr.mxu0 0.0
        %1518 = vmatpush1.msra.mxu0 0.0
        %1519 = vmatprep.subr.mxu0 0.0
        %1520 = vmatpush1.msra.mxu0 0.0
        %1521 = vmatprep.subr.mxu0 0.0
        %1522 = vmatpush1.msra.mxu0 0.0
        %1523 = vmatprep.subr.mxu0 0.0
        %1524 = vmatpush1.msra.mxu0 0.0
        %1525 = vmatprep.subr.mxu0 0.0
        %1526 = vmatpush1.msra.mxu0 0.0
        %1527 = vmatprep.subr.mxu0 0.0
        %1528 = vmatpush1.msra.mxu0 0.0
        %1529 = vmatprep.subr.mxu0 0.0
        %1530 = vmatpush1.msra.mxu0 0.0
        %1531 = vmatprep.subr.mxu0 0.0
        %1532 = vmatpush1.msra.mxu0 0.0
        %1533 = vmatprep.subr.mxu0 0.0
        %1534 = vmatpush1.msra.mxu0 0.0
        %1535 = vmatprep.subr.mxu0 0.0
        %1536 = vmatpush1.msra.mxu0 0.0
        %1537 = vmatprep.subr.mxu0 0.0
        %1538 = vmatpush1.msra.mxu0 0.0
        %1539 = vmatprep.subr.mxu0 0.0
        %1540 = vmatpush1.msra.mxu0 0.0
        %1541 = vmatprep.subr.mxu0 0.0
        %1542 = vmatpush1.msra.mxu0 0.0
        %1543 = vmatprep.subr.mxu0 0.0
        %1544 = vmatpush1.msra.mxu0 0.0
        %1545 = vmatprep.subr.mxu0 0.0
        %1546 = vmatpush1.msra.mxu0 0.0
        %1547 = vmatprep.subr.mxu0 0.0
        %1548 = vmatpush1.msra.mxu0 0.0
        %1549 = vmatprep.subr.mxu0 0.0
        %1550 = vmatpush1.msra.mxu0 0.0
        %1551 = vmatprep.subr.mxu0 0.0
        %1552 = vmatpush1.msra.mxu0 0.0
        %1553 = vmatprep.subr.mxu0 0.0
        %1554 = vmatpush1.msra.mxu0 0.0
        %1555 = vmatprep.subr.mxu0 0.0
        %1556 = vmatpush1.msra.mxu0 0.0
        %1557 = vmatprep.mubr.f32.mxu0 0.0
        %1558 = vmatmul.mubr.f32.gmra.mrb[0].mxu0 %v917
        %v1559 = vpop.f32.mrb[0].mxu0
        %v1560 = vadd.f32 0.0, %v1559
        %v1561 = vpop.f32.mrb[0].mxu0
        %1562 = vdwg.mxu0
        %v1563 = vadd.f32 %v1492, %v1560
        %v1564 = vld [vmem:[%s821 + $0x1] sm:$0xf]
        %v1566 = vsel %vm247, %v1564, 0
        %1568 = vmatprep.subr.mxu0 0.0
        %1569 = vmatpush1.msra.mxu0 %v908
        %1570 = vmatprep.subr.mxu0 0.0
        %1571 = vmatpush1.msra.mxu0 %v909
        %1572 = vmatprep.subr.mxu0 0.0
        %1573 = vmatpush1.msra.mxu0 %v910
        %1574 = vmatprep.subr.mxu0 0.0
        %1575 = vmatpush1.msra.mxu0 %v911
        %1576 = vmatprep.subr.mxu0 0.0
        %1577 = vmatpush1.msra.mxu0 %v912
        %1578 = vmatprep.subr.mxu0 0.0
        %1579 = vmatpush1.msra.mxu0 %v913
        %1580 = vmatprep.subr.mxu0 0.0
        %1581 = vmatpush1.msra.mxu0 %v914
        %1582 = vmatprep.subr.mxu0 0.0
        %1583 = vmatpush1.msra.mxu0 %v915
        %1584 = vmatprep.subr.mxu0 0.0
        %1585 = vmatpush1.msra.mxu0 0.0
        %1586 = vmatprep.subr.mxu0 0.0
        %1587 = vmatpush1.msra.mxu0 0.0
        %1588 = vmatprep.subr.mxu0 0.0
        %1589 = vmatpush1.msra.mxu0 0.0
        %1590 = vmatprep.subr.mxu0 0.0
        %1591 = vmatpush1.msra.mxu0 0.0
        %1592 = vmatprep.subr.mxu0 0.0
        %1593 = vmatpush1.msra.mxu0 0.0
        %1594 = vmatprep.subr.mxu0 0.0
        %1595 = vmatpush1.msra.mxu0 0.0
        %1596 = vmatprep.subr.mxu0 0.0
        %1597 = vmatpush1.msra.mxu0 0.0
        %1598 = vmatprep.subr.mxu0 0.0
        %1599 = vmatpush1.msra.mxu0 0.0
        %1600 = vmatprep.subr.mxu0 0.0
        %1601 = vmatpush1.msra.mxu0 0.0
        %1602 = vmatprep.subr.mxu0 0.0
        %1603 = vmatpush1.msra.mxu0 0.0
        %1604 = vmatprep.subr.mxu0 0.0
        %1605 = vmatpush1.msra.mxu0 0.0
        %1606 = vmatprep.subr.mxu0 0.0
        %1607 = vmatpush1.msra.mxu0 0.0
        %1608 = vmatprep.subr.mxu0 0.0
        %1609 = vmatpush1.msra.mxu0 0.0
        %1610 = vmatprep.subr.mxu0 0.0
        %1611 = vmatpush1.msra.mxu0 0.0
        %1612 = vmatprep.subr.mxu0 0.0
        %1613 = vmatpush1.msra.mxu0 0.0
        %1614 = vmatprep.subr.mxu0 0.0
        %1615 = vmatpush1.msra.mxu0 0.0
        %1616 = vmatprep.subr.mxu0 0.0
        %1617 = vmatpush1.msra.mxu0 0.0
        %1618 = vmatprep.subr.mxu0 0.0
        %1619 = vmatpush1.msra.mxu0 0.0
        %1620 = vmatprep.subr.mxu0 0.0
        %1621 = vmatpush1.msra.mxu0 0.0
        %1622 = vmatprep.subr.mxu0 0.0
        %1623 = vmatpush1.msra.mxu0 0.0
        %1624 = vmatprep.subr.mxu0 0.0
        %1625 = vmatpush1.msra.mxu0 0.0
        %1626 = vmatprep.subr.mxu0 0.0
        %1627 = vmatpush1.msra.mxu0 0.0
        %1628 = vmatprep.subr.mxu0 0.0
        %1629 = vmatpush1.msra.mxu0 0.0
        %1630 = vmatprep.subr.mxu0 0.0
        %1631 = vmatpush1.msra.mxu0 0.0
        %1632 = vmatprep.mubr.f32.mxu0 0.0
        %1633 = vmatmul.mubr.f32.gmra.mrb[0].mxu0 %v1566
        %v1634 = vpop.f32.mrb[0].mxu0
        %v1635 = vadd.f32 0.0, %v1634
        %v1636 = vpop.f32.mrb[0].mxu0
        %1637 = vdwg.mxu0
        %v1638 = vadd.f32 %v1563, %v1635
        %v1639 = vmax.f32 %v989, %v1638
        %1640 = vmatprep.subr.mxu0 0.0
        %1641 = vmatpush1.msra.mxu0 %v239
        %1642 = vmatprep.subr.mxu0 0.0
        %1643 = vmatpush1.msra.mxu0 %v240
        %1644 = vmatprep.subr.mxu0 0.0
        %1645 = vmatpush1.msra.mxu0 %v241
        %1646 = vmatprep.subr.mxu0 0.0
        %1647 = vmatpush1.msra.mxu0 %v242
        %1648 = vmatprep.subr.mxu0 0.0
        %1649 = vmatpush1.msra.mxu0 %v243
        %1650 = vmatprep.subr.mxu0 0.0
        %1651 = vmatpush1.msra.mxu0 %v244
        %1652 = vmatprep.subr.mxu0 0.0
        %1653 = vmatpush1.msra.mxu0 %v245
        %1654 = vmatprep.subr.mxu0 0.0
        %1655 = vmatpush1.msra.mxu0 %v246
        %1656 = vmatprep.subr.mxu0 0.0
        %1657 = vmatpush1.msra.mxu0 0.0
        %1658 = vmatprep.subr.mxu0 0.0
        %1659 = vmatpush1.msra.mxu0 0.0
        %1660 = vmatprep.subr.mxu0 0.0
        %1661 = vmatpush1.msra.mxu0 0.0
        %1662 = vmatprep.subr.mxu0 0.0
        %1663 = vmatpush1.msra.mxu0 0.0
        %1664 = vmatprep.subr.mxu0 0.0
        %1665 = vmatpush1.msra.mxu0 0.0
        %1666 = vmatprep.subr.mxu0 0.0
        %1667 = vmatpush1.msra.mxu0 0.0
        %1668 = vmatprep.subr.mxu0 0.0
        %1669 = vmatpush1.msra.mxu0 0.0
        %1670 = vmatprep.subr.mxu0 0.0
        %1671 = vmatpush1.msra.mxu0 0.0
        %1672 = vmatprep.subr.mxu0 0.0
        %1673 = vmatpush1.msra.mxu0 0.0
        %1674 = vmatprep.subr.mxu0 0.0
        %1675 = vmatpush1.msra.mxu0 0.0
        %1676 = vmatprep.subr.mxu0 0.0
        %1677 = vmatpush1.msra.mxu0 0.0
        %1678 = vmatprep.subr.mxu0 0.0
        %1679 = vmatpush1.msra.mxu0 0.0
        %1680 = vmatprep.subr.mxu0 0.0
        %1681 = vmatpush1.msra.mxu0 0.0
        %1682 = vmatprep.subr.mxu0 0.0
        %1683 = vmatpush1.msra.mxu0 0.0
        %1684 = vmatprep.subr.mxu0 0.0
        %1685 = vmatpush1.msra.mxu0 0.0
        %1686 = vmatprep.subr.mxu0 0.0
        %1687 = vmatpush1.msra.mxu0 0.0
        %1688 = vmatprep.subr.mxu0 0.0
        %1689 = vmatpush1.msra.mxu0 0.0
        %1690 = vmatprep.subr.mxu0 0.0
        %1691 = vmatpush1.msra.mxu0 0.0
        %1692 = vmatprep.subr.mxu0 0.0
        %1693 = vmatpush1.msra.mxu0 0.0
        %1694 = vmatprep.subr.mxu0 0.0
        %1695 = vmatpush1.msra.mxu0 0.0
        %1696 = vmatprep.subr.mxu0 0.0
        %1697 = vmatpush1.msra.mxu0 0.0
        %1698 = vmatprep.subr.mxu0 0.0
        %1699 = vmatpush1.msra.mxu0 0.0
        %1700 = vmatprep.subr.mxu0 0.0
        %1701 = vmatpush1.msra.mxu0 0.0
        %1702 = vmatprep.subr.mxu0 0.0
        %1703 = vmatpush1.msra.mxu0 0.0
        %1704 = vmatprep.mubr.f32.mxu0 0.0
        %1705 = vmatmul.mubr.f32.gmra.mrb[0].mxu0 %v577
        %v1706 = vpop.f32.mrb[0].mxu0
        %v1707 = vadd.f32 0.0, %v1706
        %v1708 = vpop.f32.mrb[0].mxu0
        %1709 = vdwg.mxu0
        %1710 = vmatprep.subr.mxu0 0.0
        %1711 = vmatpush1.msra.mxu0 %v228
        %1712 = vmatprep.subr.mxu0 0.0
        %1713 = vmatpush1.msra.mxu0 %v229
        %1714 = vmatprep.subr.mxu0 0.0
        %1715 = vmatpush1.msra.mxu0 %v230
        %1716 = vmatprep.subr.mxu0 0.0
        %1717 = vmatpush1.msra.mxu0 %v231
        %1718 = vmatprep.subr.mxu0 0.0
        %1719 = vmatpush1.msra.mxu0 %v232
        %1720 = vmatprep.subr.mxu0 0.0
        %1721 = vmatpush1.msra.mxu0 %v233
        %1722 = vmatprep.subr.mxu0 0.0
        %1723 = vmatpush1.msra.mxu0 %v234
        %1724 = vmatprep.subr.mxu0 0.0
        %1725 = vmatpush1.msra.mxu0 %v235
        %1726 = vmatprep.subr.mxu0 0.0
        %1727 = vmatpush1.msra.mxu0 0.0
        %1728 = vmatprep.subr.mxu0 0.0
        %1729 = vmatpush1.msra.mxu0 0.0
        %1730 = vmatprep.subr.mxu0 0.0
        %1731 = vmatpush1.msra.mxu0 0.0
        %1732 = vmatprep.subr.mxu0 0.0
        %1733 = vmatpush1.msra.mxu0 0.0
        %1734 = vmatprep.subr.mxu0 0.0
        %1735 = vmatpush1.msra.mxu0 0.0
        %1736 = vmatprep.subr.mxu0 0.0
        %1737 = vmatpush1.msra.mxu0 0.0
        %1738 = vmatprep.subr.mxu0 0.0
        %1739 = vmatpush1.msra.mxu0 0.0
        %1740 = vmatprep.subr.mxu0 0.0
        %1741 = vmatpush1.msra.mxu0 0.0
        %1742 = vmatprep.subr.mxu0 0.0
        %1743 = vmatpush1.msra.mxu0 0.0
        %1744 = vmatprep.subr.mxu0 0.0
        %1745 = vmatpush1.msra.mxu0 0.0
        %1746 = vmatprep.subr.mxu0 0.0
        %1747 = vmatpush1.msra.mxu0 0.0
        %1748 = vmatprep.subr.mxu0 0.0
        %1749 = vmatpush1.msra.mxu0 0.0
        %1750 = vmatprep.subr.mxu0 0.0
        %1751 = vmatpush1.msra.mxu0 0.0
        %1752 = vmatprep.subr.mxu0 0.0
        %1753 = vmatpush1.msra.mxu0 0.0
        %1754 = vmatprep.subr.mxu0 0.0
        %1755 = vmatpush1.msra.mxu0 0.0
        %1756 = vmatprep.subr.mxu0 0.0
        %1757 = vmatpush1.msra.mxu0 0.0
        %1758 = vmatprep.subr.mxu0 0.0
        %1759 = vmatpush1.msra.mxu0 0.0
        %1760 = vmatprep.subr.mxu0 0.0
        %1761 = vmatpush1.msra.mxu0 0.0
        %1762 = vmatprep.subr.mxu0 0.0
        %1763 = vmatpush1.msra.mxu0 0.0
        %1764 = vmatprep.subr.mxu0 0.0
        %1765 = vmatpush1.msra.mxu0 0.0
        %1766 = vmatprep.subr.mxu0 0.0
        %1767 = vmatpush1.msra.mxu0 0.0
        %1768 = vmatprep.subr.mxu0 0.0
        %1769 = vmatpush1.msra.mxu0 0.0
        %1770 = vmatprep.subr.mxu0 0.0
        %1771 = vmatpush1.msra.mxu0 0.0
        %1772 = vmatprep.subr.mxu0 0.0
        %1773 = vmatpush1.msra.mxu0 0.0
        %1774 = vmatprep.mubr.f32.mxu0 0.0
        %1775 = vmatmul.mubr.f32.gmra.mrb[0].mxu0 %v492
        %v1776 = vpop.f32.mrb[0].mxu0
        %v1777 = vadd.f32 %v1707, %v1776
        %v1778 = vpop.f32.mrb[0].mxu0
        %1779 = vdwg.mxu0
        %1780 = vmatprep.subr.mxu0 0.0
        %1781 = vmatpush1.msra.mxu0 %v396
        %1782 = vmatprep.subr.mxu0 0.0
        %1783 = vmatpush1.msra.mxu0 %v397
        %1784 = vmatprep.subr.mxu0 0.0
        %1785 = vmatpush1.msra.mxu0 %v398
        %1786 = vmatprep.subr.mxu0 0.0
        %1787 = vmatpush1.msra.mxu0 %v399
        %1788 = vmatprep.subr.mxu0 0.0
        %1789 = vmatpush1.msra.mxu0 %v400
        %1790 = vmatprep.subr.mxu0 0.0
        %1791 = vmatpush1.msra.mxu0 %v401
        %1792 = vmatprep.subr.mxu0 0.0
        %1793 = vmatpush1.msra.mxu0 %v402
        %1794 = vmatprep.subr.mxu0 0.0
        %1795 = vmatpush1.msra.mxu0 %v403
        %1796 = vmatprep.subr.mxu0 0.0
        %1797 = vmatpush1.msra.mxu0 0.0
        %1798 = vmatprep.subr.mxu0 0.0
        %1799 = vmatpush1.msra.mxu0 0.0
        %1800 = vmatprep.subr.mxu0 0.0
        %1801 = vmatpush1.msra.mxu0 0.0
        %1802 = vmatprep.subr.mxu0 0.0
        %1803 = vmatpush1.msra.mxu0 0.0
        %1804 = vmatprep.subr.mxu0 0.0
        %1805 = vmatpush1.msra.mxu0 0.0
        %1806 = vmatprep.subr.mxu0 0.0
        %1807 = vmatpush1.msra.mxu0 0.0
        %1808 = vmatprep.subr.mxu0 0.0
        %1809 = vmatpush1.msra.mxu0 0.0
        %1810 = vmatprep.subr.mxu0 0.0
        %1811 = vmatpush1.msra.mxu0 0.0
        %1812 = vmatprep.subr.mxu0 0.0
        %1813 = vmatpush1.msra.mxu0 0.0
        %1814 = vmatprep.subr.mxu0 0.0
        %1815 = vmatpush1.msra.mxu0 0.0
        %1816 = vmatprep.subr.mxu0 0.0
        %1817 = vmatpush1.msra.mxu0 0.0
        %1818 = vmatprep.subr.mxu0 0.0
        %1819 = vmatpush1.msra.mxu0 0.0
        %1820 = vmatprep.subr.mxu0 0.0
        %1821 = vmatpush1.msra.mxu0 0.0
        %1822 = vmatprep.subr.mxu0 0.0
        %1823 = vmatpush1.msra.mxu0 0.0
        %1824 = vmatprep.subr.mxu0 0.0
        %1825 = vmatpush1.msra.mxu0 0.0
        %1826 = vmatprep.subr.mxu0 0.0
        %1827 = vmatpush1.msra.mxu0 0.0
        %1828 = vmatprep.subr.mxu0 0.0
        %1829 = vmatpush1.msra.mxu0 0.0
        %1830 = vmatprep.subr.mxu0 0.0
        %1831 = vmatpush1.msra.mxu0 0.0
        %1832 = vmatprep.subr.mxu0 0.0
        %1833 = vmatpush1.msra.mxu0 0.0
        %1834 = vmatprep.subr.mxu0 0.0
        %1835 = vmatpush1.msra.mxu0 0.0
        %1836 = vmatprep.subr.mxu0 0.0
        %1837 = vmatpush1.msra.mxu0 0.0
        %1838 = vmatprep.subr.mxu0 0.0
        %1839 = vmatpush1.msra.mxu0 0.0
        %1840 = vmatprep.subr.mxu0 0.0
        %1841 = vmatpush1.msra.mxu0 0.0
        %1842 = vmatprep.subr.mxu0 0.0
        %1843 = vmatpush1.msra.mxu0 0.0
        %1844 = vmatprep.mubr.f32.mxu0 0.0
        %1845 = vmatmul.mubr.f32.gmra.mrb[0].mxu0 %v661
        %v1846 = vpop.f32.mrb[0].mxu0
        %v1847 = vadd.f32 0.0, %v1846
        %v1848 = vpop.f32.mrb[0].mxu0
        %1849 = vdwg.mxu0
        %v1850 = vadd.f32 %v1777, %v1847
        %1851 = vmatprep.subr.mxu0 0.0
        %1852 = vmatpush1.msra.mxu0 %v483
        %1853 = vmatprep.subr.mxu0 0.0
        %1854 = vmatpush1.msra.mxu0 %v484
        %1855 = vmatprep.subr.mxu0 0.0
        %1856 = vmatpush1.msra.mxu0 %v485
        %1857 = vmatprep.subr.mxu0 0.0
        %1858 = vmatpush1.msra.mxu0 %v486
        %1859 = vmatprep.subr.mxu0 0.0
        %1860 = vmatpush1.msra.mxu0 %v487
        %1861 = vmatprep.subr.mxu0 0.0
        %1862 = vmatpush1.msra.mxu0 %v488
        %1863 = vmatprep.subr.mxu0 0.0
        %1864 = vmatpush1.msra.mxu0 %v489
        %1865 = vmatprep.subr.mxu0 0.0
        %1866 = vmatpush1.msra.mxu0 %v490
        %1867 = vmatprep.subr.mxu0 0.0
        %1868 = vmatpush1.msra.mxu0 0.0
        %1869 = vmatprep.subr.mxu0 0.0
        %1870 = vmatpush1.msra.mxu0 0.0
        %1871 = vmatprep.subr.mxu0 0.0
        %1872 = vmatpush1.msra.mxu0 0.0
        %1873 = vmatprep.subr.mxu0 0.0
        %1874 = vmatpush1.msra.mxu0 0.0
        %1875 = vmatprep.subr.mxu0 0.0
        %1876 = vmatpush1.msra.mxu0 0.0
        %1877 = vmatprep.subr.mxu0 0.0
        %1878 = vmatpush1.msra.mxu0 0.0
        %1879 = vmatprep.subr.mxu0 0.0
        %1880 = vmatpush1.msra.mxu0 0.0
        %1881 = vmatprep.subr.mxu0 0.0
        %1882 = vmatpush1.msra.mxu0 0.0
        %1883 = vmatprep.subr.mxu0 0.0
        %1884 = vmatpush1.msra.mxu0 0.0
        %1885 = vmatprep.subr.mxu0 0.0
        %1886 = vmatpush1.msra.mxu0 0.0
        %1887 = vmatprep.subr.mxu0 0.0
        %1888 = vmatpush1.msra.mxu0 0.0
        %1889 = vmatprep.subr.mxu0 0.0
        %1890 = vmatpush1.msra.mxu0 0.0
        %1891 = vmatprep.subr.mxu0 0.0
        %1892 = vmatpush1.msra.mxu0 0.0
        %1893 = vmatprep.subr.mxu0 0.0
        %1894 = vmatpush1.msra.mxu0 0.0
        %1895 = vmatprep.subr.mxu0 0.0
        %1896 = vmatpush1.msra.mxu0 0.0
        %1897 = vmatprep.subr.mxu0 0.0
        %1898 = vmatpush1.msra.mxu0 0.0
        %1899 = vmatprep.subr.mxu0 0.0
        %1900 = vmatpush1.msra.mxu0 0.0
        %1901 = vmatprep.subr.mxu0 0.0
        %1902 = vmatpush1.msra.mxu0 0.0
        %1903 = vmatprep.subr.mxu0 0.0
        %1904 = vmatpush1.msra.mxu0 0.0
        %1905 = vmatprep.subr.mxu0 0.0
        %1906 = vmatpush1.msra.mxu0 0.0
        %1907 = vmatprep.subr.mxu0 0.0
        %1908 = vmatpush1.msra.mxu0 0.0
        %1909 = vmatprep.subr.mxu0 0.0
        %1910 = vmatpush1.msra.mxu0 0.0
        %1911 = vmatprep.subr.mxu0 0.0
        %1912 = vmatpush1.msra.mxu0 0.0
        %1913 = vmatprep.subr.mxu0 0.0
        %1914 = vmatpush1.msra.mxu0 0.0
        %1915 = vmatprep.mubr.f32.mxu0 0.0
        %1916 = vmatmul.mubr.f32.gmra.mrb[0].mxu0 %v748
        %v1917 = vpop.f32.mrb[0].mxu0
        %v1918 = vadd.f32 0.0, %v1917
        %v1919 = vpop.f32.mrb[0].mxu0
        %1920 = vdwg.mxu0
        %v1921 = vadd.f32 %v1850, %v1918
        %1922 = vmatprep.subr.mxu0 0.0
        %1923 = vmatpush1.msra.mxu0 %v568
        %1924 = vmatprep.subr.mxu0 0.0
        %1925 = vmatpush1.msra.mxu0 %v569
        %1926 = vmatprep.subr.mxu0 0.0
        %1927 = vmatpush1.msra.mxu0 %v570
        %1928 = vmatprep.subr.mxu0 0.0
        %1929 = vmatpush1.msra.mxu0 %v571
        %1930 = vmatprep.subr.mxu0 0.0
        %1931 = vmatpush1.msra.mxu0 %v572
        %1932 = vmatprep.subr.mxu0 0.0
        %1933 = vmatpush1.msra.mxu0 %v573
        %1934 = vmatprep.subr.mxu0 0.0
        %1935 = vmatpush1.msra.mxu0 %v574
        %1936 = vmatprep.subr.mxu0 0.0
        %1937 = vmatpush1.msra.mxu0 %v575
        %1938 = vmatprep.subr.mxu0 0.0
        %1939 = vmatpush1.msra.mxu0 0.0
        %1940 = vmatprep.subr.mxu0 0.0
        %1941 = vmatpush1.msra.mxu0 0.0
        %1942 = vmatprep.subr.mxu0 0.0
        %1943 = vmatpush1.msra.mxu0 0.0
        %1944 = vmatprep.subr.mxu0 0.0
        %1945 = vmatpush1.msra.mxu0 0.0
        %1946 = vmatprep.subr.mxu0 0.0
        %1947 = vmatpush1.msra.mxu0 0.0
        %1948 = vmatprep.subr.mxu0 0.0
        %1949 = vmatpush1.msra.mxu0 0.0
        %1950 = vmatprep.subr.mxu0 0.0
        %1951 = vmatpush1.msra.mxu0 0.0
        %1952 = vmatprep.subr.mxu0 0.0
        %1953 = vmatpush1.msra.mxu0 0.0
        %1954 = vmatprep.subr.mxu0 0.0
        %1955 = vmatpush1.msra.mxu0 0.0
        %1956 = vmatprep.subr.mxu0 0.0
        %1957 = vmatpush1.msra.mxu0 0.0
        %1958 = vmatprep.subr.mxu0 0.0
        %1959 = vmatpush1.msra.mxu0 0.0
        %1960 = vmatprep.subr.mxu0 0.0
        %1961 = vmatpush1.msra.mxu0 0.0
        %1962 = vmatprep.subr.mxu0 0.0
        %1963 = vmatpush1.msra.mxu0 0.0
        %1964 = vmatprep.subr.mxu0 0.0
        %1965 = vmatpush1.msra.mxu0 0.0
        %1966 = vmatprep.subr.mxu0 0.0
        %1967 = vmatpush1.msra.mxu0 0.0
        %1968 = vmatprep.subr.mxu0 0.0
        %1969 = vmatpush1.msra.mxu0 0.0
        %1970 = vmatprep.subr.mxu0 0.0
        %1971 = vmatpush1.msra.mxu0 0.0
        %1972 = vmatprep.subr.mxu0 0.0
        %1973 = vmatpush1.msra.mxu0 0.0
        %1974 = vmatprep.subr.mxu0 0.0
        %1975 = vmatpush1.msra.mxu0 0.0
        %1976 = vmatprep.subr.mxu0 0.0
        %1977 = vmatpush1.msra.mxu0 0.0
        %1978 = vmatprep.subr.mxu0 0.0
        %1979 = vmatpush1.msra.mxu0 0.0
        %1980 = vmatprep.subr.mxu0 0.0
        %1981 = vmatpush1.msra.mxu0 0.0
        %1982 = vmatprep.subr.mxu0 0.0
        %1983 = vmatpush1.msra.mxu0 0.0
        %1984 = vmatprep.subr.mxu0 0.0
        %1985 = vmatpush1.msra.mxu0 0.0
        %1986 = vmatprep.mubr.f32.mxu0 0.0
        %1987 = vmatmul.mubr.f32.gmra.mrb[0].mxu0 %v833
        %v1988 = vpop.f32.mrb[0].mxu0
        %v1989 = vadd.f32 0.0, %v1988
        %v1990 = vpop.f32.mrb[0].mxu0
        %1991 = vdwg.mxu0
        %v1992 = vadd.f32 %v1921, %v1989
        %1993 = vmatprep.subr.mxu0 0.0
        %1994 = vmatpush1.msra.mxu0 %v652
        %1995 = vmatprep.subr.mxu0 0.0
        %1996 = vmatpush1.msra.mxu0 %v653
        %1997 = vmatprep.subr.mxu0 0.0
        %1998 = vmatpush1.msra.mxu0 %v654
        %1999 = vmatprep.subr.mxu0 0.0
        %2000 = vmatpush1.msra.mxu0 %v655
        %2001 = vmatprep.subr.mxu0 0.0
        %2002 = vmatpush1.msra.mxu0 %v656
        %2003 = vmatprep.subr.mxu0 0.0
        %2004 = vmatpush1.msra.mxu0 %v657
        %2005 = vmatprep.subr.mxu0 0.0
        %2006 = vmatpush1.msra.mxu0 %v658
        %2007 = vmatprep.subr.mxu0 0.0
        %2008 = vmatpush1.msra.mxu0 %v659
        %2009 = vmatprep.subr.mxu0 0.0
        %2010 = vmatpush1.msra.mxu0 0.0
        %2011 = vmatprep.subr.mxu0 0.0
        %2012 = vmatpush1.msra.mxu0 0.0
        %2013 = vmatprep.subr.mxu0 0.0
        %2014 = vmatpush1.msra.mxu0 0.0
        %2015 = vmatprep.subr.mxu0 0.0
        %2016 = vmatpush1.msra.mxu0 0.0
        %2017 = vmatprep.subr.mxu0 0.0
        %2018 = vmatpush1.msra.mxu0 0.0
        %2019 = vmatprep.subr.mxu0 0.0
        %2020 = vmatpush1.msra.mxu0 0.0
        %2021 = vmatprep.subr.mxu0 0.0
        %2022 = vmatpush1.msra.mxu0 0.0
        %2023 = vmatprep.subr.mxu0 0.0
        %2024 = vmatpush1.msra.mxu0 0.0
        %2025 = vmatprep.subr.mxu0 0.0
        %2026 = vmatpush1.msra.mxu0 0.0
        %2027 = vmatprep.subr.mxu0 0.0
        %2028 = vmatpush1.msra.mxu0 0.0
        %2029 = vmatprep.subr.mxu0 0.0
        %2030 = vmatpush1.msra.mxu0 0.0
        %2031 = vmatprep.subr.mxu0 0.0
        %2032 = vmatpush1.msra.mxu0 0.0
        %2033 = vmatprep.subr.mxu0 0.0
        %2034 = vmatpush1.msra.mxu0 0.0
        %2035 = vmatprep.subr.mxu0 0.0
        %2036 = vmatpush1.msra.mxu0 0.0
        %2037 = vmatprep.subr.mxu0 0.0
        %2038 = vmatpush1.msra.mxu0 0.0
        %2039 = vmatprep.subr.mxu0 0.0
        %2040 = vmatpush1.msra.mxu0 0.0
        %2041 = vmatprep.subr.mxu0 0.0
        %2042 = vmatpush1.msra.mxu0 0.0
        %2043 = vmatprep.subr.mxu0 0.0
        %2044 = vmatpush1.msra.mxu0 0.0
        %2045 = vmatprep.subr.mxu0 0.0
        %2046 = vmatpush1.msra.mxu0 0.0
        %2047 = vmatprep.subr.mxu0 0.0
        %2048 = vmatpush1.msra.mxu0 0.0
        %2049 = vmatprep.subr.mxu0 0.0
        %2050 = vmatpush1.msra.mxu0 0.0
        %2051 = vmatprep.subr.mxu0 0.0
        %2052 = vmatpush1.msra.mxu0 0.0
        %2053 = vmatprep.subr.mxu0 0.0
        %2054 = vmatpush1.msra.mxu0 0.0
        %2055 = vmatprep.subr.mxu0 0.0
        %2056 = vmatpush1.msra.mxu0 0.0
        %2057 = vmatprep.mubr.f32.mxu0 0.0
        %2058 = vmatmul.mubr.f32.gmra.mrb[0].mxu0 %v917
        %v2059 = vpop.f32.mrb[0].mxu0
        %v2060 = vadd.f32 0.0, %v2059
        %v2061 = vpop.f32.mrb[0].mxu0
        %2062 = vdwg.mxu0
        %v2063 = vadd.f32 %v1992, %v2060
        %s2064 = sadd.s32 %s224, 3
        %s2065 = smul.u32 %s2064, 8
        %s2066 = scalar_lea.vmem %s207, %s2065
        %v2067 = vld [vmem:[%s2066] sm:$0xf]
        %v2069 = vsel %vm247, %v2067, 0
        %2071 = vmatprep.subr.mxu0 0.0
        %2072 = vmatpush1.msra.mxu0 %v739
        %2073 = vmatprep.subr.mxu0 0.0
        %2074 = vmatpush1.msra.mxu0 %v740
        %2075 = vmatprep.subr.mxu0 0.0
        %2076 = vmatpush1.msra.mxu0 %v741
        %2077 = vmatprep.subr.mxu0 0.0
        %2078 = vmatpush1.msra.mxu0 %v742
        %2079 = vmatprep.subr.mxu0 0.0
        %2080 = vmatpush1.msra.mxu0 %v743
        %2081 = vmatprep.subr.mxu0 0.0
        %2082 = vmatpush1.msra.mxu0 %v744
        %2083 = vmatprep.subr.mxu0 0.0
        %2084 = vmatpush1.msra.mxu0 %v745
        %2085 = vmatprep.subr.mxu0 0.0
        %2086 = vmatpush1.msra.mxu0 %v746
        %2087 = vmatprep.subr.mxu0 0.0
        %2088 = vmatpush1.msra.mxu0 0.0
        %2089 = vmatprep.subr.mxu0 0.0
        %2090 = vmatpush1.msra.mxu0 0.0
        %2091 = vmatprep.subr.mxu0 0.0
        %2092 = vmatpush1.msra.mxu0 0.0
        %2093 = vmatprep.subr.mxu0 0.0
        %2094 = vmatpush1.msra.mxu0 0.0
        %2095 = vmatprep.subr.mxu0 0.0
        %2096 = vmatpush1.msra.mxu0 0.0
        %2097 = vmatprep.subr.mxu0 0.0
        %2098 = vmatpush1.msra.mxu0 0.0
        %2099 = vmatprep.subr.mxu0 0.0
        %2100 = vmatpush1.msra.mxu0 0.0
        %2101 = vmatprep.subr.mxu0 0.0
        %2102 = vmatpush1.msra.mxu0 0.0
        %2103 = vmatprep.subr.mxu0 0.0
        %2104 = vmatpush1.msra.mxu0 0.0
        %2105 = vmatprep.subr.mxu0 0.0
        %2106 = vmatpush1.msra.mxu0 0.0
        %2107 = vmatprep.subr.mxu0 0.0
        %2108 = vmatpush1.msra.mxu0 0.0
        %2109 = vmatprep.subr.mxu0 0.0
        %2110 = vmatpush1.msra.mxu0 0.0
        %2111 = vmatprep.subr.mxu0 0.0
        %2112 = vmatpush1.msra.mxu0 0.0
        %2113 = vmatprep.subr.mxu0 0.0
        %2114 = vmatpush1.msra.mxu0 0.0
        %2115 = vmatprep.subr.mxu0 0.0
        %2116 = vmatpush1.msra.mxu0 0.0
        %2117 = vmatprep.subr.mxu0 0.0
        %2118 = vmatpush1.msra.mxu0 0.0
        %2119 = vmatprep.subr.mxu0 0.0
        %2120 = vmatpush1.msra.mxu0 0.0
        %2121 = vmatprep.subr.mxu0 0.0
        %2122 = vmatpush1.msra.mxu0 0.0
        %2123 = vmatprep.subr.mxu0 0.0
        %2124 = vmatpush1.msra.mxu0 0.0
        %2125 = vmatprep.subr.mxu0 0.0
        %2126 = vmatpush1.msra.mxu0 0.0
        %2127 = vmatprep.subr.mxu0 0.0
        %2128 = vmatpush1.msra.mxu0 0.0
        %2129 = vmatprep.subr.mxu0 0.0
        %2130 = vmatpush1.msra.mxu0 0.0
        %2131 = vmatprep.subr.mxu0 0.0
        %2132 = vmatpush1.msra.mxu0 0.0
        %2133 = vmatprep.subr.mxu0 0.0
        %2134 = vmatpush1.msra.mxu0 0.0
        %2135 = vmatprep.mubr.f32.mxu0 0.0
        %2136 = vmatmul.mubr.f32.gmra.mrb[0].mxu0 %v2069
        %v2137 = vpop.f32.mrb[0].mxu0
        %v2138 = vadd.f32 0.0, %v2137
        %v2139 = vpop.f32.mrb[0].mxu0
        %2140 = vdwg.mxu0
        %v2141 = vadd.f32 %v2063, %v2138
        %s2142 = scalar_lea.vmem %s212, %s2065
        %v2143 = vld [vmem:[%s2142] sm:$0xf]
        %v2145 = vsel %vm247, %v2143, 0
        %2147 = vmatprep.subr.mxu0 0.0
        %2148 = vmatpush1.msra.mxu0 %v824
        %2149 = vmatprep.subr.mxu0 0.0
        %2150 = vmatpush1.msra.mxu0 %v825
        %2151 = vmatprep.subr.mxu0 0.0
        %2152 = vmatpush1.msra.mxu0 %v826
        %2153 = vmatprep.subr.mxu0 0.0
        %2154 = vmatpush1.msra.mxu0 %v827
        %2155 = vmatprep.subr.mxu0 0.0
        %2156 = vmatpush1.msra.mxu0 %v828
        %2157 = vmatprep.subr.mxu0 0.0
        %2158 = vmatpush1.msra.mxu0 %v829
        %2159 = vmatprep.subr.mxu0 0.0
        %2160 = vmatpush1.msra.mxu0 %v830
        %2161 = vmatprep.subr.mxu0 0.0
        %2162 = vmatpush1.msra.mxu0 %v831
        %2163 = vmatprep.subr.mxu0 0.0
        %2164 = vmatpush1.msra.mxu0 0.0
        %2165 = vmatprep.subr.mxu0 0.0
        %2166 = vmatpush1.msra.mxu0 0.0
        %2167 = vmatprep.subr.mxu0 0.0
        %2168 = vmatpush1.msra.mxu0 0.0
        %2169 = vmatprep.subr.mxu0 0.0
        %2170 = vmatpush1.msra.mxu0 0.0
        %2171 = vmatprep.subr.mxu0 0.0
        %2172 = vmatpush1.msra.mxu0 0.0
        %2173 = vmatprep.subr.mxu0 0.0
        %2174 = vmatpush1.msra.mxu0 0.0
        %2175 = vmatprep.subr.mxu0 0.0
        %2176 = vmatpush1.msra.mxu0 0.0
        %2177 = vmatprep.subr.mxu0 0.0
        %2178 = vmatpush1.msra.mxu0 0.0
        %2179 = vmatprep.subr.mxu0 0.0
        %2180 = vmatpush1.msra.mxu0 0.0
        %2181 = vmatprep.subr.mxu0 0.0
        %2182 = vmatpush1.msra.mxu0 0.0
        %2183 = vmatprep.subr.mxu0 0.0
        %2184 = vmatpush1.msra.mxu0 0.0
        %2185 = vmatprep.subr.mxu0 0.0
        %2186 = vmatpush1.msra.mxu0 0.0
        %2187 = vmatprep.subr.mxu0 0.0
        %2188 = vmatpush1.msra.mxu0 0.0
        %2189 = vmatprep.subr.mxu0 0.0
        %2190 = vmatpush1.msra.mxu0 0.0
        %2191 = vmatprep.subr.mxu0 0.0
        %2192 = vmatpush1.msra.mxu0 0.0
        %2193 = vmatprep.subr.mxu0 0.0
        %2194 = vmatpush1.msra.mxu0 0.0
        %2195 = vmatprep.subr.mxu0 0.0
        %2196 = vmatpush1.msra.mxu0 0.0
        %2197 = vmatprep.subr.mxu0 0.0
        %2198 = vmatpush1.msra.mxu0 0.0
        %2199 = vmatprep.subr.mxu0 0.0
        %2200 = vmatpush1.msra.mxu0 0.0
        %2201 = vmatprep.subr.mxu0 0.0
        %2202 = vmatpush1.msra.mxu0 0.0
        %2203 = vmatprep.subr.mxu0 0.0
        %2204 = vmatpush1.msra.mxu0 0.0
        %2205 = vmatprep.subr.mxu0 0.0
        %2206 = vmatpush1.msra.mxu0 0.0
        %2207 = vmatprep.subr.mxu0 0.0
        %2208 = vmatpush1.msra.mxu0 0.0
        %2209 = vmatprep.subr.mxu0 0.0
        %2210 = vmatpush1.msra.mxu0 0.0
        %2211 = vmatprep.mubr.f32.mxu0 0.0
        %2212 = vmatmul.mubr.f32.gmra.mrb[0].mxu0 %v2145
        %v2213 = vpop.f32.mrb[0].mxu0
        %v2214 = vadd.f32 0.0, %v2213
        %v2215 = vpop.f32.mrb[0].mxu0
        %2216 = vdwg.mxu0
        %v2217 = vadd.f32 %v2141, %v2214
        %v2218 = vld [vmem:[%s2066 + $0x1] sm:$0xf]
        %v2220 = vsel %vm247, %v2218, 0
        %2222 = vmatprep.subr.mxu0 0.0
        %2223 = vmatpush1.msra.mxu0 %v908
        %2224 = vmatprep.subr.mxu0 0.0
        %2225 = vmatpush1.msra.mxu0 %v909
        %2226 = vmatprep.subr.mxu0 0.0
        %2227 = vmatpush1.msra.mxu0 %v910
        %2228 = vmatprep.subr.mxu0 0.0
        %2229 = vmatpush1.msra.mxu0 %v911
        %2230 = vmatprep.subr.mxu0 0.0
        %2231 = vmatpush1.msra.mxu0 %v912
        %2232 = vmatprep.subr.mxu0 0.0
        %2233 = vmatpush1.msra.mxu0 %v913
        %2234 = vmatprep.subr.mxu0 0.0
        %2235 = vmatpush1.msra.mxu0 %v914
        %2236 = vmatprep.subr.mxu0 0.0
        %2237 = vmatpush1.msra.mxu0 %v915
        %2238 = vmatprep.subr.mxu0 0.0
        %2239 = vmatpush1.msra.mxu0 0.0
        %2240 = vmatprep.subr.mxu0 0.0
        %2241 = vmatpush1.msra.mxu0 0.0
        %2242 = vmatprep.subr.mxu0 0.0
        %2243 = vmatpush1.msra.mxu0 0.0
        %2244 = vmatprep.subr.mxu0 0.0
        %2245 = vmatpush1.msra.mxu0 0.0
        %2246 = vmatprep.subr.mxu0 0.0
        %2247 = vmatpush1.msra.mxu0 0.0
        %2248 = vmatprep.subr.mxu0 0.0
        %2249 = vmatpush1.msra.mxu0 0.0
        %2250 = vmatprep.subr.mxu0 0.0
        %2251 = vmatpush1.msra.mxu0 0.0
        %2252 = vmatprep.subr.mxu0 0.0
        %2253 = vmatpush1.msra.mxu0 0.0
        %2254 = vmatprep.subr.mxu0 0.0
        %2255 = vmatpush1.msra.mxu0 0.0
        %2256 = vmatprep.subr.mxu0 0.0
        %2257 = vmatpush1.msra.mxu0 0.0
        %2258 = vmatprep.subr.mxu0 0.0
        %2259 = vmatpush1.msra.mxu0 0.0
        %2260 = vmatprep.subr.mxu0 0.0
        %2261 = vmatpush1.msra.mxu0 0.0
        %2262 = vmatprep.subr.mxu0 0.0
        %2263 = vmatpush1.msra.mxu0 0.0
        %2264 = vmatprep.subr.mxu0 0.0
        %2265 = vmatpush1.msra.mxu0 0.0
        %2266 = vmatprep.subr.mxu0 0.0
        %2267 = vmatpush1.msra.mxu0 0.0
        %2268 = vmatprep.subr.mxu0 0.0
        %2269 = vmatpush1.msra.mxu0 0.0
        %2270 = vmatprep.subr.mxu0 0.0
        %2271 = vmatpush1.msra.mxu0 0.0
        %2272 = vmatprep.subr.mxu0 0.0
        %2273 = vmatpush1.msra.mxu0 0.0
        %2274 = vmatprep.subr.mxu0 0.0
        %2275 = vmatpush1.msra.mxu0 0.0
        %2276 = vmatprep.subr.mxu0 0.0
        %2277 = vmatpush1.msra.mxu0 0.0
        %2278 = vmatprep.subr.mxu0 0.0
        %2279 = vmatpush1.msra.mxu0 0.0
        %2280 = vmatprep.subr.mxu0 0.0
        %2281 = vmatpush1.msra.mxu0 0.0
        %2282 = vmatprep.subr.mxu0 0.0
        %2283 = vmatpush1.msra.mxu0 0.0
        %2284 = vmatprep.subr.mxu0 0.0
        %2285 = vmatpush1.msra.mxu0 0.0
        %2286 = vmatprep.mubr.f32.mxu0 0.0
        %2287 = vmatmul.mubr.f32.gmra.mrb[0].mxu0 %v2220
        %v2288 = vpop.f32.mrb[0].mxu0
        %v2289 = vadd.f32 0.0, %v2288
        %v2290 = vpop.f32.mrb[0].mxu0
        %2291 = vdwg.mxu0
        %v2292 = vadd.f32 %v2217, %v2289
        %v2293 = vmax.f32 %v1639, %v2292
        %2294 = vmatprep.subr.mxu0 0.0
        %2295 = vmatpush1.msra.mxu0 %v239
        %2296 = vmatprep.subr.mxu0 0.0
        %2297 = vmatpush1.msra.mxu0 %v240
        %2298 = vmatprep.subr.mxu0 0.0
        %2299 = vmatpush1.msra.mxu0 %v241
        %2300 = vmatprep.subr.mxu0 0.0
        %2301 = vmatpush1.msra.mxu0 %v242
        %2302 = vmatprep.subr.mxu0 0.0
        %2303 = vmatpush1.msra.mxu0 %v243
        %2304 = vmatprep.subr.mxu0 0.0
        %2305 = vmatpush1.msra.mxu0 %v244
        %2306 = vmatprep.subr.mxu0 0.0
        %2307 = vmatpush1.msra.mxu0 %v245
        %2308 = vmatprep.subr.mxu0 0.0
        %2309 = vmatpush1.msra.mxu0 %v246
        %2310 = vmatprep.subr.mxu0 0.0
        %2311 = vmatpush1.msra.mxu0 0.0
        %2312 = vmatprep.subr.mxu0 0.0
        %2313 = vmatpush1.msra.mxu0 0.0
        %2314 = vmatprep.subr.mxu0 0.0
        %2315 = vmatpush1.msra.mxu0 0.0
        %2316 = vmatprep.subr.mxu0 0.0
        %2317 = vmatpush1.msra.mxu0 0.0
        %2318 = vmatprep.subr.mxu0 0.0
        %2319 = vmatpush1.msra.mxu0 0.0
        %2320 = vmatprep.subr.mxu0 0.0
        %2321 = vmatpush1.msra.mxu0 0.0
        %2322 = vmatprep.subr.mxu0 0.0
        %2323 = vmatpush1.msra.mxu0 0.0
        %2324 = vmatprep.subr.mxu0 0.0
        %2325 = vmatpush1.msra.mxu0 0.0
        %2326 = vmatprep.subr.mxu0 0.0
        %2327 = vmatpush1.msra.mxu0 0.0
        %2328 = vmatprep.subr.mxu0 0.0
        %2329 = vmatpush1.msra.mxu0 0.0
        %2330 = vmatprep.subr.mxu0 0.0
        %2331 = vmatpush1.msra.mxu0 0.0
        %2332 = vmatprep.subr.mxu0 0.0
        %2333 = vmatpush1.msra.mxu0 0.0
        %2334 = vmatprep.subr.mxu0 0.0
        %2335 = vmatpush1.msra.mxu0 0.0
        %2336 = vmatprep.subr.mxu0 0.0
        %2337 = vmatpush1.msra.mxu0 0.0
        %2338 = vmatprep.subr.mxu0 0.0
        %2339 = vmatpush1.msra.mxu0 0.0
        %2340 = vmatprep.subr.mxu0 0.0
        %2341 = vmatpush1.msra.mxu0 0.0
        %2342 = vmatprep.subr.mxu0 0.0
        %2343 = vmatpush1.msra.mxu0 0.0
        %2344 = vmatprep.subr.mxu0 0.0
        %2345 = vmatpush1.msra.mxu0 0.0
        %2346 = vmatprep.subr.mxu0 0.0
        %2347 = vmatpush1.msra.mxu0 0.0
        %2348 = vmatprep.subr.mxu0 0.0
        %2349 = vmatpush1.msra.mxu0 0.0
        %2350 = vmatprep.subr.mxu0 0.0
        %2351 = vmatpush1.msra.mxu0 0.0
        %2352 = vmatprep.subr.mxu0 0.0
        %2353 = vmatpush1.msra.mxu0 0.0
        %2354 = vmatprep.subr.mxu0 0.0
        %2355 = vmatpush1.msra.mxu0 0.0
        %2356 = vmatprep.subr.mxu0 0.0
        %2357 = vmatpush1.msra.mxu0 0.0
        %2358 = vmatprep.mubr.f32.mxu0 0.0
        %2359 = vmatmul.mubr.f32.gmra.mrb[0].mxu0 %v661
        %v2360 = vpop.f32.mrb[0].mxu0
        %v2361 = vadd.f32 0.0, %v2360
        %v2362 = vpop.f32.mrb[0].mxu0
        %2363 = vdwg.mxu0
        %2364 = vmatprep.subr.mxu0 0.0
        %2365 = vmatpush1.msra.mxu0 %v228
        %2366 = vmatprep.subr.mxu0 0.0
        %2367 = vmatpush1.msra.mxu0 %v229
        %2368 = vmatprep.subr.mxu0 0.0
        %2369 = vmatpush1.msra.mxu0 %v230
        %2370 = vmatprep.subr.mxu0 0.0
        %2371 = vmatpush1.msra.mxu0 %v231
        %2372 = vmatprep.subr.mxu0 0.0
        %2373 = vmatpush1.msra.mxu0 %v232
        %2374 = vmatprep.subr.mxu0 0.0
        %2375 = vmatpush1.msra.mxu0 %v233
        %2376 = vmatprep.subr.mxu0 0.0
        %2377 = vmatpush1.msra.mxu0 %v234
        %2378 = vmatprep.subr.mxu0 0.0
        %2379 = vmatpush1.msra.mxu0 %v235
        %2380 = vmatprep.subr.mxu0 0.0
        %2381 = vmatpush1.msra.mxu0 0.0
        %2382 = vmatprep.subr.mxu0 0.0
        %2383 = vmatpush1.msra.mxu0 0.0
        %2384 = vmatprep.subr.mxu0 0.0
        %2385 = vmatpush1.msra.mxu0 0.0
        %2386 = vmatprep.subr.mxu0 0.0
        %2387 = vmatpush1.msra.mxu0 0.0
        %2388 = vmatprep.subr.mxu0 0.0
        %2389 = vmatpush1.msra.mxu0 0.0
        %2390 = vmatprep.subr.mxu0 0.0
        %2391 = vmatpush1.msra.mxu0 0.0
        %2392 = vmatprep.subr.mxu0 0.0
        %2393 = vmatpush1.msra.mxu0 0.0
        %2394 = vmatprep.subr.mxu0 0.0
        %2395 = vmatpush1.msra.mxu0 0.0
        %2396 = vmatprep.subr.mxu0 0.0
        %2397 = vmatpush1.msra.mxu0 0.0
        %2398 = vmatprep.subr.mxu0 0.0
        %2399 = vmatpush1.msra.mxu0 0.0
        %2400 = vmatprep.subr.mxu0 0.0
        %2401 = vmatpush1.msra.mxu0 0.0
        %2402 = vmatprep.subr.mxu0 0.0
        %2403 = vmatpush1.msra.mxu0 0.0
        %2404 = vmatprep.subr.mxu0 0.0
        %2405 = vmatpush1.msra.mxu0 0.0
        %2406 = vmatprep.subr.mxu0 0.0
        %2407 = vmatpush1.msra.mxu0 0.0
        %2408 = vmatprep.subr.mxu0 0.0
        %2409 = vmatpush1.msra.mxu0 0.0
        %2410 = vmatprep.subr.mxu0 0.0
        %2411 = vmatpush1.msra.mxu0 0.0
        %2412 = vmatprep.subr.mxu0 0.0
        %2413 = vmatpush1.msra.mxu0 0.0
        %2414 = vmatprep.subr.mxu0 0.0
        %2415 = vmatpush1.msra.mxu0 0.0
        %2416 = vmatprep.subr.mxu0 0.0
        %2417 = vmatpush1.msra.mxu0 0.0
        %2418 = vmatprep.subr.mxu0 0.0
        %2419 = vmatpush1.msra.mxu0 0.0
        %2420 = vmatprep.subr.mxu0 0.0
        %2421 = vmatpush1.msra.mxu0 0.0
        %2422 = vmatprep.subr.mxu0 0.0
        %2423 = vmatpush1.msra.mxu0 0.0
        %2424 = vmatprep.subr.mxu0 0.0
        %2425 = vmatpush1.msra.mxu0 0.0
        %2426 = vmatprep.subr.mxu0 0.0
        %2427 = vmatpush1.msra.mxu0 0.0
        %2428 = vmatprep.mubr.f32.mxu0 0.0
        %2429 = vmatmul.mubr.f32.gmra.mrb[0].mxu0 %v577
        %v2430 = vpop.f32.mrb[0].mxu0
        %v2431 = vadd.f32 %v2361, %v2430
        %v2432 = vpop.f32.mrb[0].mxu0
        %2433 = vdwg.mxu0
        %2434 = vmatprep.subr.mxu0 0.0
        %2435 = vmatpush1.msra.mxu0 %v396
        %2436 = vmatprep.subr.mxu0 0.0
        %2437 = vmatpush1.msra.mxu0 %v397
        %2438 = vmatprep.subr.mxu0 0.0
        %2439 = vmatpush1.msra.mxu0 %v398
        %2440 = vmatprep.subr.mxu0 0.0
        %2441 = vmatpush1.msra.mxu0 %v399
        %2442 = vmatprep.subr.mxu0 0.0
        %2443 = vmatpush1.msra.mxu0 %v400
        %2444 = vmatprep.subr.mxu0 0.0
        %2445 = vmatpush1.msra.mxu0 %v401
        %2446 = vmatprep.subr.mxu0 0.0
        %2447 = vmatpush1.msra.mxu0 %v402
        %2448 = vmatprep.subr.mxu0 0.0
        %2449 = vmatpush1.msra.mxu0 %v403
        %2450 = vmatprep.subr.mxu0 0.0
        %2451 = vmatpush1.msra.mxu0 0.0
        %2452 = vmatprep.subr.mxu0 0.0
        %2453 = vmatpush1.msra.mxu0 0.0
        %2454 = vmatprep.subr.mxu0 0.0
        %2455 = vmatpush1.msra.mxu0 0.0
        %2456 = vmatprep.subr.mxu0 0.0
        %2457 = vmatpush1.msra.mxu0 0.0
        %2458 = vmatprep.subr.mxu0 0.0
        %2459 = vmatpush1.msra.mxu0 0.0
        %2460 = vmatprep.subr.mxu0 0.0
        %2461 = vmatpush1.msra.mxu0 0.0
        %2462 = vmatprep.subr.mxu0 0.0
        %2463 = vmatpush1.msra.mxu0 0.0
        %2464 = vmatprep.subr.mxu0 0.0
        %2465 = vmatpush1.msra.mxu0 0.0
        %2466 = vmatprep.subr.mxu0 0.0
        %2467 = vmatpush1.msra.mxu0 0.0
        %2468 = vmatprep.subr.mxu0 0.0
        %2469 = vmatpush1.msra.mxu0 0.0
        %2470 = vmatprep.subr.mxu0 0.0
        %2471 = vmatpush1.msra.mxu0 0.0
        %2472 = vmatprep.subr.mxu0 0.0
        %2473 = vmatpush1.msra.mxu0 0.0
        %2474 = vmatprep.subr.mxu0 0.0
        %2475 = vmatpush1.msra.mxu0 0.0
        %2476 = vmatprep.subr.mxu0 0.0
        %2477 = vmatpush1.msra.mxu0 0.0
        %2478 = vmatprep.subr.mxu0 0.0
        %2479 = vmatpush1.msra.mxu0 0.0
        %2480 = vmatprep.subr.mxu0 0.0
        %2481 = vmatpush1.msra.mxu0 0.0
        %2482 = vmatprep.subr.mxu0 0.0
        %2483 = vmatpush1.msra.mxu0 0.0
        %2484 = vmatprep.subr.mxu0 0.0
        %2485 = vmatpush1.msra.mxu0 0.0
        %2486 = vmatprep.subr.mxu0 0.0
        %2487 = vmatpush1.msra.mxu0 0.0
        %2488 = vmatprep.subr.mxu0 0.0
        %2489 = vmatpush1.msra.mxu0 0.0
        %2490 = vmatprep.subr.mxu0 0.0
        %2491 = vmatpush1.msra.mxu0 0.0
        %2492 = vmatprep.subr.mxu0 0.0
        %2493 = vmatpush1.msra.mxu0 0.0
        %2494 = vmatprep.subr.mxu0 0.0
        %2495 = vmatpush1.msra.mxu0 0.0
        %2496 = vmatprep.subr.mxu0 0.0
        %2497 = vmatpush1.msra.mxu0 0.0
        %2498 = vmatprep.mubr.f32.mxu0 0.0
        %2499 = vmatmul.mubr.f32.gmra.mrb[0].mxu0 %v1349
        %v2500 = vpop.f32.mrb[0].mxu0
        %v2501 = vadd.f32 0.0, %v2500
        %v2502 = vpop.f32.mrb[0].mxu0
        %2503 = vdwg.mxu0
        %v2504 = vadd.f32 %v2431, %v2501
        %2505 = vmatprep.subr.mxu0 0.0
        %2506 = vmatpush1.msra.mxu0 %v483
        %2507 = vmatprep.subr.mxu0 0.0
        %2508 = vmatpush1.msra.mxu0 %v484
        %2509 = vmatprep.subr.mxu0 0.0
        %2510 = vmatpush1.msra.mxu0 %v485
        %2511 = vmatprep.subr.mxu0 0.0
        %2512 = vmatpush1.msra.mxu0 %v486
        %2513 = vmatprep.subr.mxu0 0.0
        %2514 = vmatpush1.msra.mxu0 %v487
        %2515 = vmatprep.subr.mxu0 0.0
        %2516 = vmatpush1.msra.mxu0 %v488
        %2517 = vmatprep.subr.mxu0 0.0
        %2518 = vmatpush1.msra.mxu0 %v489
        %2519 = vmatprep.subr.mxu0 0.0
        %2520 = vmatpush1.msra.mxu0 %v490
        %2521 = vmatprep.subr.mxu0 0.0
        %2522 = vmatpush1.msra.mxu0 0.0
        %2523 = vmatprep.subr.mxu0 0.0
        %2524 = vmatpush1.msra.mxu0 0.0
        %2525 = vmatprep.subr.mxu0 0.0
        %2526 = vmatpush1.msra.mxu0 0.0
        %2527 = vmatprep.subr.mxu0 0.0
        %2528 = vmatpush1.msra.mxu0 0.0
        %2529 = vmatprep.subr.mxu0 0.0
        %2530 = vmatpush1.msra.mxu0 0.0
        %2531 = vmatprep.subr.mxu0 0.0
        %2532 = vmatpush1.msra.mxu0 0.0
        %2533 = vmatprep.subr.mxu0 0.0
        %2534 = vmatpush1.msra.mxu0 0.0
        %2535 = vmatprep.subr.mxu0 0.0
        %2536 = vmatpush1.msra.mxu0 0.0
        %2537 = vmatprep.subr.mxu0 0.0
        %2538 = vmatpush1.msra.mxu0 0.0
        %2539 = vmatprep.subr.mxu0 0.0
        %2540 = vmatpush1.msra.mxu0 0.0
        %2541 = vmatprep.subr.mxu0 0.0
        %2542 = vmatpush1.msra.mxu0 0.0
        %2543 = vmatprep.subr.mxu0 0.0
        %2544 = vmatpush1.msra.mxu0 0.0
        %2545 = vmatprep.subr.mxu0 0.0
        %2546 = vmatpush1.msra.mxu0 0.0
        %2547 = vmatprep.subr.mxu0 0.0
        %2548 = vmatpush1.msra.mxu0 0.0
        %2549 = vmatprep.subr.mxu0 0.0
        %2550 = vmatpush1.msra.mxu0 0.0
        %2551 = vmatprep.subr.mxu0 0.0
        %2552 = vmatpush1.msra.mxu0 0.0
        %2553 = vmatprep.subr.mxu0 0.0
        %2554 = vmatpush1.msra.mxu0 0.0
        %2555 = vmatprep.subr.mxu0 0.0
        %2556 = vmatpush1.msra.mxu0 0.0
        %2557 = vmatprep.subr.mxu0 0.0
        %2558 = vmatpush1.msra.mxu0 0.0
        %2559 = vmatprep.subr.mxu0 0.0
        %2560 = vmatpush1.msra.mxu0 0.0
        %2561 = vmatprep.subr.mxu0 0.0
        %2562 = vmatpush1.msra.mxu0 0.0
        %2563 = vmatprep.subr.mxu0 0.0
        %2564 = vmatpush1.msra.mxu0 0.0
        %2565 = vmatprep.subr.mxu0 0.0
        %2566 = vmatpush1.msra.mxu0 0.0
        %2567 = vmatprep.subr.mxu0 0.0
        %2568 = vmatpush1.msra.mxu0 0.0
        %2569 = vmatprep.mubr.f32.mxu0 0.0
        %2570 = vmatmul.mubr.f32.gmra.mrb[0].mxu0 %v833
        %v2571 = vpop.f32.mrb[0].mxu0
        %v2572 = vadd.f32 0.0, %v2571
        %v2573 = vpop.f32.mrb[0].mxu0
        %2574 = vdwg.mxu0
        %v2575 = vadd.f32 %v2504, %v2572
        %2576 = vmatprep.subr.mxu0 0.0
        %2577 = vmatpush1.msra.mxu0 %v568
        %2578 = vmatprep.subr.mxu0 0.0
        %2579 = vmatpush1.msra.mxu0 %v569
        %2580 = vmatprep.subr.mxu0 0.0
        %2581 = vmatpush1.msra.mxu0 %v570
        %2582 = vmatprep.subr.mxu0 0.0
        %2583 = vmatpush1.msra.mxu0 %v571
        %2584 = vmatprep.subr.mxu0 0.0
        %2585 = vmatpush1.msra.mxu0 %v572
        %2586 = vmatprep.subr.mxu0 0.0
        %2587 = vmatpush1.msra.mxu0 %v573
        %2588 = vmatprep.subr.mxu0 0.0
        %2589 = vmatpush1.msra.mxu0 %v574
        %2590 = vmatprep.subr.mxu0 0.0
        %2591 = vmatpush1.msra.mxu0 %v575
        %2592 = vmatprep.subr.mxu0 0.0
        %2593 = vmatpush1.msra.mxu0 0.0
        %2594 = vmatprep.subr.mxu0 0.0
        %2595 = vmatpush1.msra.mxu0 0.0
        %2596 = vmatprep.subr.mxu0 0.0
        %2597 = vmatpush1.msra.mxu0 0.0
        %2598 = vmatprep.subr.mxu0 0.0
        %2599 = vmatpush1.msra.mxu0 0.0
        %2600 = vmatprep.subr.mxu0 0.0
        %2601 = vmatpush1.msra.mxu0 0.0
        %2602 = vmatprep.subr.mxu0 0.0
        %2603 = vmatpush1.msra.mxu0 0.0
        %2604 = vmatprep.subr.mxu0 0.0
        %2605 = vmatpush1.msra.mxu0 0.0
        %2606 = vmatprep.subr.mxu0 0.0
        %2607 = vmatpush1.msra.mxu0 0.0
        %2608 = vmatprep.subr.mxu0 0.0
        %2609 = vmatpush1.msra.mxu0 0.0
        %2610 = vmatprep.subr.mxu0 0.0
        %2611 = vmatpush1.msra.mxu0 0.0
        %2612 = vmatprep.subr.mxu0 0.0
        %2613 = vmatpush1.msra.mxu0 0.0
        %2614 = vmatprep.subr.mxu0 0.0
        %2615 = vmatpush1.msra.mxu0 0.0
        %2616 = vmatprep.subr.mxu0 0.0
        %2617 = vmatpush1.msra.mxu0 0.0
        %2618 = vmatprep.subr.mxu0 0.0
        %2619 = vmatpush1.msra.mxu0 0.0
        %2620 = vmatprep.subr.mxu0 0.0
        %2621 = vmatpush1.msra.mxu0 0.0
        %2622 = vmatprep.subr.mxu0 0.0
        %2623 = vmatpush1.msra.mxu0 0.0
        %2624 = vmatprep.subr.mxu0 0.0
        %2625 = vmatpush1.msra.mxu0 0.0
        %2626 = vmatprep.subr.mxu0 0.0
        %2627 = vmatpush1.msra.mxu0 0.0
        %2628 = vmatprep.subr.mxu0 0.0
        %2629 = vmatpush1.msra.mxu0 0.0
        %2630 = vmatprep.subr.mxu0 0.0
        %2631 = vmatpush1.msra.mxu0 0.0
        %2632 = vmatprep.subr.mxu0 0.0
        %2633 = vmatpush1.msra.mxu0 0.0
        %2634 = vmatprep.subr.mxu0 0.0
        %2635 = vmatpush1.msra.mxu0 0.0
        %2636 = vmatprep.subr.mxu0 0.0
        %2637 = vmatpush1.msra.mxu0 0.0
        %2638 = vmatprep.subr.mxu0 0.0
        %2639 = vmatpush1.msra.mxu0 0.0
        %2640 = vmatprep.mubr.f32.mxu0 0.0
        %2641 = vmatmul.mubr.f32.gmra.mrb[0].mxu0 %v917
        %v2642 = vpop.f32.mrb[0].mxu0
        %v2643 = vadd.f32 0.0, %v2642
        %v2644 = vpop.f32.mrb[0].mxu0
        %2645 = vdwg.mxu0
        %v2646 = vadd.f32 %v2575, %v2643
        %2647 = vmatprep.subr.mxu0 0.0
        %2648 = vmatpush1.msra.mxu0 %v652
        %2649 = vmatprep.subr.mxu0 0.0
        %2650 = vmatpush1.msra.mxu0 %v653
        %2651 = vmatprep.subr.mxu0 0.0
        %2652 = vmatpush1.msra.mxu0 %v654
        %2653 = vmatprep.subr.mxu0 0.0
        %2654 = vmatpush1.msra.mxu0 %v655
        %2655 = vmatprep.subr.mxu0 0.0
        %2656 = vmatpush1.msra.mxu0 %v656
        %2657 = vmatprep.subr.mxu0 0.0
        %2658 = vmatpush1.msra.mxu0 %v657
        %2659 = vmatprep.subr.mxu0 0.0
        %2660 = vmatpush1.msra.mxu0 %v658
        %2661 = vmatprep.subr.mxu0 0.0
        %2662 = vmatpush1.msra.mxu0 %v659
        %2663 = vmatprep.subr.mxu0 0.0
        %2664 = vmatpush1.msra.mxu0 0.0
        %2665 = vmatprep.subr.mxu0 0.0
        %2666 = vmatpush1.msra.mxu0 0.0
        %2667 = vmatprep.subr.mxu0 0.0
        %2668 = vmatpush1.msra.mxu0 0.0
        %2669 = vmatprep.subr.mxu0 0.0
        %2670 = vmatpush1.msra.mxu0 0.0
        %2671 = vmatprep.subr.mxu0 0.0
        %2672 = vmatpush1.msra.mxu0 0.0
        %2673 = vmatprep.subr.mxu0 0.0
        %2674 = vmatpush1.msra.mxu0 0.0
        %2675 = vmatprep.subr.mxu0 0.0
        %2676 = vmatpush1.msra.mxu0 0.0
        %2677 = vmatprep.subr.mxu0 0.0
        %2678 = vmatpush1.msra.mxu0 0.0
        %2679 = vmatprep.subr.mxu0 0.0
        %2680 = vmatpush1.msra.mxu0 0.0
        %2681 = vmatprep.subr.mxu0 0.0
        %2682 = vmatpush1.msra.mxu0 0.0
        %2683 = vmatprep.subr.mxu0 0.0
        %2684 = vmatpush1.msra.mxu0 0.0
        %2685 = vmatprep.subr.mxu0 0.0
        %2686 = vmatpush1.msra.mxu0 0.0
        %2687 = vmatprep.subr.mxu0 0.0
        %2688 = vmatpush1.msra.mxu0 0.0
        %2689 = vmatprep.subr.mxu0 0.0
        %2690 = vmatpush1.msra.mxu0 0.0
        %2691 = vmatprep.subr.mxu0 0.0
        %2692 = vmatpush1.msra.mxu0 0.0
        %2693 = vmatprep.subr.mxu0 0.0
        %2694 = vmatpush1.msra.mxu0 0.0
        %2695 = vmatprep.subr.mxu0 0.0
        %2696 = vmatpush1.msra.mxu0 0.0
        %2697 = vmatprep.subr.mxu0 0.0
        %2698 = vmatpush1.msra.mxu0 0.0
        %2699 = vmatprep.subr.mxu0 0.0
        %2700 = vmatpush1.msra.mxu0 0.0
        %2701 = vmatprep.subr.mxu0 0.0
        %2702 = vmatpush1.msra.mxu0 0.0
        %2703 = vmatprep.subr.mxu0 0.0
        %2704 = vmatpush1.msra.mxu0 0.0
        %2705 = vmatprep.subr.mxu0 0.0
        %2706 = vmatpush1.msra.mxu0 0.0
        %2707 = vmatprep.subr.mxu0 0.0
        %2708 = vmatpush1.msra.mxu0 0.0
        %2709 = vmatprep.subr.mxu0 0.0
        %2710 = vmatpush1.msra.mxu0 0.0
        %2711 = vmatprep.mubr.f32.mxu0 0.0
        %2712 = vmatmul.mubr.f32.gmra.mrb[0].mxu0 %v1566
        %v2713 = vpop.f32.mrb[0].mxu0
        %v2714 = vadd.f32 0.0, %v2713
        %v2715 = vpop.f32.mrb[0].mxu0
        %2716 = vdwg.mxu0
        %v2717 = vadd.f32 %v2646, %v2714
        %2718 = vmatprep.subr.mxu0 0.0
        %2719 = vmatpush1.msra.mxu0 %v739
        %2720 = vmatprep.subr.mxu0 0.0
        %2721 = vmatpush1.msra.mxu0 %v740
        %2722 = vmatprep.subr.mxu0 0.0
        %2723 = vmatpush1.msra.mxu0 %v741
        %2724 = vmatprep.subr.mxu0 0.0
        %2725 = vmatpush1.msra.mxu0 %v742
        %2726 = vmatprep.subr.mxu0 0.0
        %2727 = vmatpush1.msra.mxu0 %v743
        %2728 = vmatprep.subr.mxu0 0.0
        %2729 = vmatpush1.msra.mxu0 %v744
        %2730 = vmatprep.subr.mxu0 0.0
        %2731 = vmatpush1.msra.mxu0 %v745
        %2732 = vmatprep.subr.mxu0 0.0
        %2733 = vmatpush1.msra.mxu0 %v746
        %2734 = vmatprep.subr.mxu0 0.0
        %2735 = vmatpush1.msra.mxu0 0.0
        %2736 = vmatprep.subr.mxu0 0.0
        %2737 = vmatpush1.msra.mxu0 0.0
        %2738 = vmatprep.subr.mxu0 0.0
        %2739 = vmatpush1.msra.mxu0 0.0
        %2740 = vmatprep.subr.mxu0 0.0
        %2741 = vmatpush1.msra.mxu0 0.0
        %2742 = vmatprep.subr.mxu0 0.0
        %2743 = vmatpush1.msra.mxu0 0.0
        %2744 = vmatprep.subr.mxu0 0.0
        %2745 = vmatpush1.msra.mxu0 0.0
        %2746 = vmatprep.subr.mxu0 0.0
        %2747 = vmatpush1.msra.mxu0 0.0
        %2748 = vmatprep.subr.mxu0 0.0
        %2749 = vmatpush1.msra.mxu0 0.0
        %2750 = vmatprep.subr.mxu0 0.0
        %2751 = vmatpush1.msra.mxu0 0.0
        %2752 = vmatprep.subr.mxu0 0.0
        %2753 = vmatpush1.msra.mxu0 0.0
        %2754 = vmatprep.subr.mxu0 0.0
        %2755 = vmatpush1.msra.mxu0 0.0
        %2756 = vmatprep.subr.mxu0 0.0
        %2757 = vmatpush1.msra.mxu0 0.0
        %2758 = vmatprep.subr.mxu0 0.0
        %2759 = vmatpush1.msra.mxu0 0.0
        %2760 = vmatprep.subr.mxu0 0.0
        %2761 = vmatpush1.msra.mxu0 0.0
        %2762 = vmatprep.subr.mxu0 0.0
        %2763 = vmatpush1.msra.mxu0 0.0
        %2764 = vmatprep.subr.mxu0 0.0
        %2765 = vmatpush1.msra.mxu0 0.0
        %2766 = vmatprep.subr.mxu0 0.0
        %2767 = vmatpush1.msra.mxu0 0.0
        %2768 = vmatprep.subr.mxu0 0.0
        %2769 = vmatpush1.msra.mxu0 0.0
        %2770 = vmatprep.subr.mxu0 0.0
        %2771 = vmatpush1.msra.mxu0 0.0
        %2772 = vmatprep.subr.mxu0 0.0
        %2773 = vmatpush1.msra.mxu0 0.0
        %2774 = vmatprep.subr.mxu0 0.0
        %2775 = vmatpush1.msra.mxu0 0.0
        %2776 = vmatprep.subr.mxu0 0.0
        %2777 = vmatpush1.msra.mxu0 0.0
        %2778 = vmatprep.subr.mxu0 0.0
        %2779 = vmatpush1.msra.mxu0 0.0
        %2780 = vmatprep.subr.mxu0 0.0
        %2781 = vmatpush1.msra.mxu0 0.0
        %2782 = vmatprep.mubr.f32.mxu0 0.0
        %2783 = vmatmul.mubr.f32.gmra.mrb[0].mxu0 %v2145
        %v2784 = vpop.f32.mrb[0].mxu0
        %v2785 = vadd.f32 0.0, %v2784
        %v2786 = vpop.f32.mrb[0].mxu0
        %2787 = vdwg.mxu0
        %v2788 = vadd.f32 %v2717, %v2785
        %2789 = vmatprep.subr.mxu0 0.0
        %2790 = vmatpush1.msra.mxu0 %v824
        %2791 = vmatprep.subr.mxu0 0.0
        %2792 = vmatpush1.msra.mxu0 %v825
        %2793 = vmatprep.subr.mxu0 0.0
        %2794 = vmatpush1.msra.mxu0 %v826
        %2795 = vmatprep.subr.mxu0 0.0
        %2796 = vmatpush1.msra.mxu0 %v827
        %2797 = vmatprep.subr.mxu0 0.0
        %2798 = vmatpush1.msra.mxu0 %v828
        %2799 = vmatprep.subr.mxu0 0.0
        %2800 = vmatpush1.msra.mxu0 %v829
        %2801 = vmatprep.subr.mxu0 0.0
        %2802 = vmatpush1.msra.mxu0 %v830
        %2803 = vmatprep.subr.mxu0 0.0
        %2804 = vmatpush1.msra.mxu0 %v831
        %2805 = vmatprep.subr.mxu0 0.0
        %2806 = vmatpush1.msra.mxu0 0.0
        %2807 = vmatprep.subr.mxu0 0.0
        %2808 = vmatpush1.msra.mxu0 0.0
        %2809 = vmatprep.subr.mxu0 0.0
        %2810 = vmatpush1.msra.mxu0 0.0
        %2811 = vmatprep.subr.mxu0 0.0
        %2812 = vmatpush1.msra.mxu0 0.0
        %2813 = vmatprep.subr.mxu0 0.0
        %2814 = vmatpush1.msra.mxu0 0.0
        %2815 = vmatprep.subr.mxu0 0.0
        %2816 = vmatpush1.msra.mxu0 0.0
        %2817 = vmatprep.subr.mxu0 0.0
        %2818 = vmatpush1.msra.mxu0 0.0
        %2819 = vmatprep.subr.mxu0 0.0
        %2820 = vmatpush1.msra.mxu0 0.0
        %2821 = vmatprep.subr.mxu0 0.0
        %2822 = vmatpush1.msra.mxu0 0.0
        %2823 = vmatprep.subr.mxu0 0.0
        %2824 = vmatpush1.msra.mxu0 0.0
        %2825 = vmatprep.subr.mxu0 0.0
        %2826 = vmatpush1.msra.mxu0 0.0
        %2827 = vmatprep.subr.mxu0 0.0
        %2828 = vmatpush1.msra.mxu0 0.0
        %2829 = vmatprep.subr.mxu0 0.0
        %2830 = vmatpush1.msra.mxu0 0.0
        %2831 = vmatprep.subr.mxu0 0.0
        %2832 = vmatpush1.msra.mxu0 0.0
        %2833 = vmatprep.subr.mxu0 0.0
        %2834 = vmatpush1.msra.mxu0 0.0
        %2835 = vmatprep.subr.mxu0 0.0
        %2836 = vmatpush1.msra.mxu0 0.0
        %2837 = vmatprep.subr.mxu0 0.0
        %2838 = vmatpush1.msra.mxu0 0.0
        %2839 = vmatprep.subr.mxu0 0.0
        %2840 = vmatpush1.msra.mxu0 0.0
        %2841 = vmatprep.subr.mxu0 0.0
        %2842 = vmatpush1.msra.mxu0 0.0
        %2843 = vmatprep.subr.mxu0 0.0
        %2844 = vmatpush1.msra.mxu0 0.0
        %2845 = vmatprep.subr.mxu0 0.0
        %2846 = vmatpush1.msra.mxu0 0.0
        %2847 = vmatprep.subr.mxu0 0.0
        %2848 = vmatpush1.msra.mxu0 0.0
        %2849 = vmatprep.subr.mxu0 0.0
        %2850 = vmatpush1.msra.mxu0 0.0
        %2851 = vmatprep.subr.mxu0 0.0
        %2852 = vmatpush1.msra.mxu0 0.0
        %2853 = vmatprep.mubr.f32.mxu0 0.0
        %2854 = vmatmul.mubr.f32.gmra.mrb[0].mxu0 %v2220
        %v2855 = vpop.f32.mrb[0].mxu0
        %v2856 = vadd.f32 0.0, %v2855
        %v2857 = vpop.f32.mrb[0].mxu0
        %2858 = vdwg.mxu0
        %v2859 = vadd.f32 %v2788, %v2856
        %v2860 = vld [vmem:[%s2142 + $0x1] sm:$0xf]
        %v2862 = vsel %vm247, %v2860, 0
        %2864 = vmatprep.subr.mxu0 0.0
        %2865 = vmatpush1.msra.mxu0 %v908
        %2866 = vmatprep.subr.mxu0 0.0
        %2867 = vmatpush1.msra.mxu0 %v909
        %2868 = vmatprep.subr.mxu0 0.0
        %2869 = vmatpush1.msra.mxu0 %v910
        %2870 = vmatprep.subr.mxu0 0.0
        %2871 = vmatpush1.msra.mxu0 %v911
        %2872 = vmatprep.subr.mxu0 0.0
        %2873 = vmatpush1.msra.mxu0 %v912
        %2874 = vmatprep.subr.mxu0 0.0
        %2875 = vmatpush1.msra.mxu0 %v913
        %2876 = vmatprep.subr.mxu0 0.0
        %2877 = vmatpush1.msra.mxu0 %v914
        %2878 = vmatprep.subr.mxu0 0.0
        %2879 = vmatpush1.msra.mxu0 %v915
        %2880 = vmatprep.subr.mxu0 0.0
        %2881 = vmatpush1.msra.mxu0 0.0
        %2882 = vmatprep.subr.mxu0 0.0
        %2883 = vmatpush1.msra.mxu0 0.0
        %2884 = vmatprep.subr.mxu0 0.0
        %2885 = vmatpush1.msra.mxu0 0.0
        %2886 = vmatprep.subr.mxu0 0.0
        %2887 = vmatpush1.msra.mxu0 0.0
        %2888 = vmatprep.subr.mxu0 0.0
        %2889 = vmatpush1.msra.mxu0 0.0
        %2890 = vmatprep.subr.mxu0 0.0
        %2891 = vmatpush1.msra.mxu0 0.0
        %2892 = vmatprep.subr.mxu0 0.0
        %2893 = vmatpush1.msra.mxu0 0.0
        %2894 = vmatprep.subr.mxu0 0.0
        %2895 = vmatpush1.msra.mxu0 0.0
        %2896 = vmatprep.subr.mxu0 0.0
        %2897 = vmatpush1.msra.mxu0 0.0
        %2898 = vmatprep.subr.mxu0 0.0
        %2899 = vmatpush1.msra.mxu0 0.0
        %2900 = vmatprep.subr.mxu0 0.0
        %2901 = vmatpush1.msra.mxu0 0.0
        %2902 = vmatprep.subr.mxu0 0.0
        %2903 = vmatpush1.msra.mxu0 0.0
        %2904 = vmatprep.subr.mxu0 0.0
        %2905 = vmatpush1.msra.mxu0 0.0
        %2906 = vmatprep.subr.mxu0 0.0
        %2907 = vmatpush1.msra.mxu0 0.0
        %2908 = vmatprep.subr.mxu0 0.0
        %2909 = vmatpush1.msra.mxu0 0.0
        %2910 = vmatprep.subr.mxu0 0.0
        %2911 = vmatpush1.msra.mxu0 0.0
        %2912 = vmatprep.subr.mxu0 0.0
        %2913 = vmatpush1.msra.mxu0 0.0
        %2914 = vmatprep.subr.mxu0 0.0
        %2915 = vmatpush1.msra.mxu0 0.0
        %2916 = vmatprep.subr.mxu0 0.0
        %2917 = vmatpush1.msra.mxu0 0.0
        %2918 = vmatprep.subr.mxu0 0.0
        %2919 = vmatpush1.msra.mxu0 0.0
        %2920 = vmatprep.subr.mxu0 0.0
        %2921 = vmatpush1.msra.mxu0 0.0
        %2922 = vmatprep.subr.mxu0 0.0
        %2923 = vmatpush1.msra.mxu0 0.0
        %2924 = vmatprep.subr.mxu0 0.0
        %2925 = vmatpush1.msra.mxu0 0.0
        %2926 = vmatprep.subr.mxu0 0.0
        %2927 = vmatpush1.msra.mxu0 0.0
        %2928 = vmatprep.mubr.f32.mxu0 0.0
        %2929 = vmatmul.mubr.f32.gmra.mrb[0].mxu0 %v2862
        %v2930 = vpop.f32.mrb[0].mxu0
        %v2931 = vadd.f32 0.0, %v2930
        %v2932 = vpop.f32.mrb[0].mxu0
        %2933 = vdwg.mxu0
        %v2934 = vadd.f32 %v2859, %v2931
        %v2935 = vmax.f32 %v2293, %v2934
        %v2936 = vld [vmem:[%s3] sm:$0x1]
        %v2938 = vlaneseq
        %v2939 = vshrl.u32 %v2938, 7
        %v2940 = vsub.s32 0, %v2939
        %v2941 = vrot.slane %v2936, %v2940
        %v2943 = vadd.f32 %v2935, %v2941
        %v2944 = vmax.f32 %v2943, 0.0
        %s2945 = smul.u32 %s219, 4
        %s2946 = scalar_lea.vmem %s217, %s2945
        %2947 = vst [vmem:[%s2946] sm:$0xf] %v2944
      $region41: #{simple_cnn_encoder.4} parent=35 // loop_footer
        %s223 = sadd.s32 1, %s219
      $region42: #{simple_cnn_encoder.4} parent=35 // loop_footer_branch
        %218 = sbr.rel target = $region38
      $region43: #{simple_cnn_encoder.4} parent=35 // loop_exit
        _
      %p2948 = scmp.lt.s32.totalorder %s15, 1
      %s2949 = scalar_select %p2948, %s15, 1
      %s2950 = smul.addr %s2949, 4
      %s2951 = smul.addr %s2950, 4
      %s2952 = scalar_lea.vmem %s4, %s2951
      // Predicated region
      $region44: #{simple_cnn_encoder.4} parent=35 // pred_check
        %p2953 = pneg %p127
      $region45: #{simple_cnn_encoder.4} parent=35 // pred_check_branch
        %2955 = sbr.rel (%p2953) target = $region47
      $region46: #{simple_cnn_encoder.4} parent=35 // pred_region
        _
      $region47: #{simple_cnn_encoder.4} parent=35 // pred_fallthru
        _
    $region36: #{simple_cnn_encoder.4} parent=5 // pred_fallthru
      _
    %p2956 = scmp.le.s32.totalorder 2, %s10
    // Predicated region
    $region48: #{simple_cnn_encoder.4} parent=5 // pred_check
      %p2957 = pneg %p2956
    $region49: #{simple_cnn_encoder.4} parent=5 // pred_check_branch
      %2959 = sbr.rel (%p2957) target = $region51
    $region50: #{simple_cnn_encoder.4} parent=5 // pred_region
      %s2960 = ssub.s32 %s10, 2
      // Predicated region
      $region52: #{simple_cnn_encoder.4} parent=50 // pred_check
        %p2961 = pneg %p133
      $region53: #{simple_cnn_encoder.4} parent=50 // pred_check_branch
        %2963 = sbr.rel (%p2961) target = $region55
      $region54: #{simple_cnn_encoder.4} parent=50 // pred_region
        %p2964 = scmp.lt.s32.totalorder %s16, 1
        %s2965 = scalar_select %p2964, %s16, 1
        %s2966 = smul.addr %s2965, 4
        %s2967 = smul.addr %s2966, 4
        %s2968 = scalar_lea.vmem %s4, %s2967
      $region55: #{simple_cnn_encoder.4} parent=50 // pred_fallthru
        _
    $region51: #{simple_cnn_encoder.4} parent=5 // pred_fallthru
      _
  $region6: #{simple_cnn_encoder.4} parent=0 // loop_footer
    %s14 = sadd.s32 1, %s10
  $region7: #{simple_cnn_encoder.4} parent=0 // loop_footer_branch
    %9 = sbr.rel target = $region3
  $region8: #{simple_cnn_encoder.4} parent=0 // loop_exit
    _

// kernel: simple_cnn_encoder.5
$region0: #{simple_cnn_encoder.5}
  #allocation0 [shape = 'u32[]', space=smem, size = 0x4, offset = 0x4, fixed_abs, tag = 'smem constant byte address 0x4 - core index']
  #allocation1 [shape = 'u32[144,128]{1,0:T(1,128)}', space=vmem, size = 0x12000, scoped, tag = 'internal scratch']
  %s0 = inlined_call_operand.vmem [shape: f32[2,6,6,128], index: 0, kind: input, shape index: {}]
  %s1 = inlined_call_operand.vmem [shape: f32[9,128,320], index: 1, kind: input, shape index: {}]
  %s2 = inlined_call_operand.vmem [shape: f32[1,320], index: 2, kind: input, shape index: {}]
  %s3 = inlined_call_operand.hbm [shape: f32[2,4,4,320], index: 3, kind: output, shape index: {}]
  %s4 = sld [smem:[#allocation0]]
  $region52: #{simple_cnn_encoder.5} parent=0
    _
  %s6 = ssub.s32 1, %s4
  %s7 = scalar_select 0, %s6, %s4
  $region1: #{simple_cnn_encoder.5} parent=0
    #allocation2 [shape = 'u8[49152]{0}', space=vmem, size = 0xc000, scoped, tag = 'output window, operand 0']
    #allocation3 [shape = 's32[2]{0}', space=sflag, size = 0x8, scoped, tag = 'scoped memory for simple_cnn_encoder.5']
    %8 = vsyncpa [#allocation3], 0
    %s9 = scalar_lea.sflag [#allocation3], 1
    %10 = vsyncpa %s9, 0
    loop: start=0, step=1, limit=4
    $region2: #{simple_cnn_encoder.5} parent=1 // loop_pre_header
      _
    $region3: #{simple_cnn_encoder.5} parent=1 // loop_header
      %s12 = sphi 0, %s16
      %p13 = scmp.ge.s32.totalorder %s12, 4
      %s22 = sphi 0, %s24
      %s25 = sphi 0, %s22
      %s26 = sphi 0, %s25
      %s42 = sphi 0, %s26
      %s46 = sphi 0, %s46
      %s48 = sphi 0, %s46
      %s49 = sphi 0, %s48
      %s63 = sphi 0, %s49
      %s67 = sphi 0, %s67
      %s69 = sphi 0, %s67
      %s70 = sphi 0, %s69
      %s84 = sphi 0, %s70
      %s90 = sphi 0, %s92
      %s93 = sphi 0, %s90
      %s94 = sphi 0, %s93
      %s110 = sphi 0, %s94
    $region4: #{simple_cnn_encoder.5} parent=1 // loop_header_branch
      %15 = sbr.rel (%p13) target = $region8
    $region5: #{simple_cnn_encoder.5} parent=1 // loop_body
      %s17 = ssub.s32 %s12, 1
      %s18 = ssub.s32 %s12, 2
      %s19 = sadd.s32 %s12, 1
      %s20 = ssub.s32 %s12, %s19
      %p21 = scmp.eq.s32.totalorder %s20, 0
      %s23 = sadd.s32 %s22, 1
      %s24 = scalar_select %p21, %s22, %s23
      %p27 = pneg %p21
      %p28 = scmp.eq.s32.totalorder %s12, 1
      %p29 = por %p27, %p28
      %p30 = scmp.ne.s32.totalorder %s22, %s25
      %p31 = scmp.eq.s32.totalorder %s12, 0
      %p32 = por %p30, %p31
      %p33 = scmp.ne.s32.totalorder %s22, %s25
      %p34 = scmp.eq.s32.totalorder %s17, 1
      %p35 = por %p33, %p34
      %p36 = scmp.ne.s32.totalorder %s25, %s26
      %p37 = scmp.eq.s32.totalorder %s17, 0
      %p38 = por %p36, %p37
      %p39 = scmp.ne.s32.totalorder %s25, %s26
      %p40 = scmp.eq.s32.totalorder %s18, 1
      %p41 = por %p39, %p40
      %p43 = scmp.ne.s32.totalorder %s26, %s42
      %p44 = scmp.eq.s32.totalorder %s18, 0
      %p45 = por %p43, %p44
      %s47 = sadd.s32 %s46, 1
      %p50 = scmp.eq.s32.totalorder %s12, 1
      %p51 = scmp.ne.s32.totalorder %s46, %s48
      %p52 = scmp.eq.s32.totalorder %s12, 0
      %p53 = por %p51, %p52
      %p54 = scmp.ne.s32.totalorder %s46, %s48
      %p55 = scmp.eq.s32.totalorder %s17, 1
      %p56 = por %p54, %p55
      %p57 = scmp.ne.s32.totalorder %s48, %s49
      %p58 = scmp.eq.s32.totalorder %s17, 0
      %p59 = por %p57, %p58
      %p60 = scmp.ne.s32.totalorder %s48, %s49
      %p61 = scmp.eq.s32.totalorder %s18, 1
      %p62 = por %p60, %p61
      %p64 = scmp.ne.s32.totalorder %s49, %s63
      %p65 = scmp.eq.s32.totalorder %s18, 0
      %p66 = por %p64, %p65
      %s68 = sadd.s32 %s67, 1
      %p71 = scmp.eq.s32.totalorder %s12, 1
      %p72 = scmp.ne.s32.totalorder %s67, %s69
      %p73 = scmp.eq.s32.totalorder %s12, 0
      %p74 = por %p72, %p73
      %p75 = scmp.ne.s32.totalorder %s67, %s69
      %p76 = scmp.eq.s32.totalorder %s17, 1
      %p77 = por %p75, %p76
      %p78 = scmp.ne.s32.totalorder %s69, %s70
      %p79 = scmp.eq.s32.totalorder %s17, 0
      %p80 = por %p78, %p79
      %p81 = scmp.ne.s32.totalorder %s69, %s70
      %p82 = scmp.eq.s32.totalorder %s18, 1
      %p83 = por %p81, %p82
      %p85 = scmp.ne.s32.totalorder %s70, %s84
      %p86 = scmp.eq.s32.totalorder %s18, 0
      %p87 = por %p85, %p86
      %s88 = ssub.s32 %s12, %s19
      %p89 = scmp.eq.s32.totalorder %s88, 0
      %s91 = sadd.s32 %s90, 1
      %s92 = scalar_select %p89, %s90, %s91
      %p95 = pneg %p89
      %p96 = scmp.eq.s32.totalorder %s12, 1
      %p97 = por %p95, %p96
      %p98 = scmp.ne.s32.totalorder %s90, %s93
      %p99 = scmp.eq.s32.totalorder %s12, 0
      %p100 = por %p98, %p99
      %p101 = scmp.ne.s32.totalorder %s90, %s93
      %p102 = scmp.eq.s32.totalorder %s17, 1
      %p103 = por %p101, %p102
      %p104 = scmp.ne.s32.totalorder %s93, %s94
      %p105 = scmp.eq.s32.totalorder %s17, 0
      %p106 = por %p104, %p105
      %p107 = scmp.ne.s32.totalorder %s93, %s94
      %p108 = scmp.eq.s32.totalorder %s18, 1
      %p109 = por %p107, %p108
      %p111 = scmp.ne.s32.totalorder %s94, %s110
      %p112 = scmp.eq.s32.totalorder %s18, 0
      %p113 = por %p111, %p112
      %p114 = scmp.le.s32.totalorder 1, %s12
      %p115 = scmp.lt.s32.totalorder %s12, 3
      %p116 = pnand %p114, %p115
      %p117 = pneg %p116
      // Predicated region
      $region9: #{simple_cnn_encoder.5} parent=5 // pred_check
        _
      $region10: #{simple_cnn_encoder.5} parent=5 // pred_check_branch
        %119 = sbr.rel (%p116) target = $region12
      $region11: #{simple_cnn_encoder.5} parent=5 // pred_region
        %s120 = ssub.s32 %s12, 1
        // Predicated region
        $region13: #{simple_cnn_encoder.5} parent=11 // pred_check
          %p121 = pneg %p59
        $region14: #{simple_cnn_encoder.5} parent=11 // pred_check_branch
          %123 = sbr.rel (%p121) target = $region16
        $region15: #{simple_cnn_encoder.5} parent=11 // pred_region
          _
        $region16: #{simple_cnn_encoder.5} parent=11 // pred_fallthru
          _
        // Predicated region
        $region17: #{simple_cnn_encoder.5} parent=11 // pred_check
          %p124 = pneg %p80
        $region18: #{simple_cnn_encoder.5} parent=11 // pred_check_branch
          %126 = sbr.rel (%p124) target = $region20
        $region19: #{simple_cnn_encoder.5} parent=11 // pred_region
          _
        $region20: #{simple_cnn_encoder.5} parent=11 // pred_fallthru
          _
      $region12: #{simple_cnn_encoder.5} parent=5 // pred_fallthru
        _
      %p127 = scmp.lt.s32.totalorder %s12, 2
      // Predicated region
      $region21: #{simple_cnn_encoder.5} parent=5 // pred_check
        %p128 = pneg %p127
      $region22: #{simple_cnn_encoder.5} parent=5 // pred_check_branch
        %130 = sbr.rel (%p128) target = $region24
      $region23: #{simple_cnn_encoder.5} parent=5 // pred_region
        // Predicated region
        $region25: #{simple_cnn_encoder.5} parent=23 // pred_check
          %p131 = pneg %p32
        $region26: #{simple_cnn_encoder.5} parent=23 // pred_check_branch
          %133 = sbr.rel (%p131) target = $region28
        $region27: #{simple_cnn_encoder.5} parent=23 // pred_region
          %p134 = scmp.lt.s32.totalorder %s12, 1
          %s135 = scalar_select %p134, %s12, 1
          %s136 = smul.addr %s135, 6
          %s137 = smul.addr %s136, 8
          %s138 = scalar_lea.vmem %s0, %s137
        $region28: #{simple_cnn_encoder.5} parent=23 // pred_fallthru
          _
      $region24: #{simple_cnn_encoder.5} parent=5 // pred_fallthru
        _
      %p139 = scmp.le.s32.totalorder 1, %s12
      %p140 = scmp.lt.s32.totalorder %s12, 3
      %p141 = pnand %p139, %p140
      %p142 = pneg %p141
      // Predicated region
      $region29: #{simple_cnn_encoder.5} parent=5 // pred_check
        _
      $region30: #{simple_cnn_encoder.5} parent=5 // pred_check_branch
        %144 = sbr.rel (%p141) target = $region32
      $region31: #{simple_cnn_encoder.5} parent=5 // pred_region
        %s145 = ssub.s32 %s12, 1
        %p146 = scmp.lt.s32.totalorder %s17, 1
        %s147 = scalar_select %p146, %s17, 1
        %s148 = smul.addr %s147, 6
        %s149 = smul.addr %s148, 8
        %s150 = scalar_lea.vmem %s0, %s149
        %p151 = pneg %p38
        %p152 = pneg %p35
        %p153 = pneg %p59
        %p154 = pneg %p56
        %p155 = pneg %p80
        %p156 = pneg %p77
        %p157 = pneg %p106
        %p158 = pneg %p103
        %s159 = sand.u32 %s93, 1
        %s160 = scalar_lea.sflag [#allocation3], %s159
        %s161 = sand.u32 %s93, 1
        %s162 = smul.addr %s161, 48
        %s163 = scalar_lea.vmem [#allocation2], %s162
        %p164 = scmp.lt.s32.totalorder %s17, 1
        %s165 = scalar_select %p164, %s17, 1
        %s166 = smul.addr %s165, 6
        %s167 = smul.addr %s166, 8
        %s168 = scalar_lea.vmem %s0, %s167
        loop: start=0, step=1, limit=4
        $region33: #{simple_cnn_encoder.5} parent=31 // loop_pre_header
          _
        $region34: #{simple_cnn_encoder.5} parent=31 // loop_header
          %s170 = sphi 0, %s174
          %p171 = scmp.ge.s32.totalorder %s170, 4
        $region35: #{simple_cnn_encoder.5} parent=31 // loop_header_branch
          %173 = sbr.rel (%p171) target = $region39
        $region36: #{simple_cnn_encoder.5} parent=31 // loop_body
          %s175 = smul.u32 %s170, 8
          %s176 = scalar_lea.vmem %s168, %s175
          %v177 = vld [vmem:[%s176] sm:$0xf]
          %v178 = vld [vmem:[%s1] sm:$0xff]
          %v179 = vld [vmem:[%s1 + $0x8] sm:$0xff]
          %v180 = vld [vmem:[%s1 + $0x10] sm:$0xff]
          %v181 = vld [vmem:[%s1 + $0x18] sm:$0xff]
          %v182 = vld [vmem:[%s1 + $0x20] sm:$0xff]
          %v183 = vld [vmem:[%s1 + $0x28] sm:$0xff]
          %v184 = vld [vmem:[%s1 + $0x30] sm:$0xff]
          %v185 = vld [vmem:[%s1 + $0x38] sm:$0xff]
          %v186 = vld [vmem:[%s1 + $0x40] sm:$0xff]
          %v187 = vld [vmem:[%s1 + $0x48] sm:$0xff]
          %v188 = vld [vmem:[%s1 + $0x50] sm:$0xff]
          %v189 = vld [vmem:[%s1 + $0x58] sm:$0xff]
          %v190 = vld [vmem:[%s1 + $0x60] sm:$0xff]
          %v191 = vld [vmem:[%s1 + $0x68] sm:$0xff]
          %v192 = vld [vmem:[%s1 + $0x70] sm:$0xff]
          %v193 = vld [vmem:[%s1 + $0x78] sm:$0xff]
          %v194 = vld [vmem:[%s1 + $0x80] sm:$0xff]
          %v195 = vld [vmem:[%s1 + $0x88] sm:$0xff]
          %v196 = vld [vmem:[%s1 + $0x90] sm:$0xff]
          %v197 = vld [vmem:[%s1 + $0x98] sm:$0xff]
          %v198 = vld [vmem:[%s1 + $0xa0] sm:$0xff]
          %v199 = vld [vmem:[%s1 + $0xa8] sm:$0xff]
          %v200 = vld [vmem:[%s1 + $0xb0] sm:$0xff]
          %v201 = vld [vmem:[%s1 + $0xb8] sm:$0xff]
          %v202 = vld [vmem:[%s1 + $0xc0] sm:$0xff]
          %v203 = vld [vmem:[%s1 + $0xc8] sm:$0xff]
          %v204 = vld [vmem:[%s1 + $0xd0] sm:$0xff]
          %v205 = vld [vmem:[%s1 + $0xd8] sm:$0xff]
          %v206 = vld [vmem:[%s1 + $0xe0] sm:$0xff]
          %v207 = vld [vmem:[%s1 + $0xe8] sm:$0xff]
          %v208 = vld [vmem:[%s1 + $0xf0] sm:$0xff]
          %v209 = vld [vmem:[%s1 + $0xf8] sm:$0xff]
          %v210 = vld [vmem:[%s1 + $0x100] sm:$0xff]
          %v211 = vld [vmem:[%s1 + $0x108] sm:$0xff]
          %v212 = vld [vmem:[%s1 + $0x110] sm:$0xff]
          %v213 = vld [vmem:[%s1 + $0x118] sm:$0xff]
          %v214 = vld [vmem:[%s1 + $0x120] sm:$0xff]
          %v215 = vld [vmem:[%s1 + $0x128] sm:$0xff]
          %v216 = vld [vmem:[%s1 + $0x130] sm:$0xff]
          %v217 = vld [vmem:[%s1 + $0x138] sm:$0xff]
          %v218 = vld [vmem:[%s1 + $0x140] sm:$0xff]
          %v219 = vld [vmem:[%s1 + $0x148] sm:$0xff]
          %v220 = vld [vmem:[%s1 + $0x150] sm:$0xff]
          %v221 = vld [vmem:[%s1 + $0x158] sm:$0xff]
          %v222 = vld [vmem:[%s1 + $0x160] sm:$0xff]
          %v223 = vld [vmem:[%s1 + $0x168] sm:$0xff]
          %v224 = vld [vmem:[%s1 + $0x170] sm:$0xff]
          %v225 = vld [vmem:[%s1 + $0x178] sm:$0xff]
          %v226 = vld [vmem:[%s176 + $0x1] sm:$0xf]
          %s227 = scalar_lea.vmem %s1, 384
          %v228 = vld [vmem:[%s227] sm:$0xff]
          %v229 = vld [vmem:[%s227 + $0x8] sm:$0xff]
          %v230 = vld [vmem:[%s227 + $0x10] sm:$0xff]
          %v231 = vld [vmem:[%s227 + $0x18] sm:$0xff]
          %v232 = vld [vmem:[%s227 + $0x20] sm:$0xff]
          %v233 = vld [vmem:[%s227 + $0x28] sm:$0xff]
          %v234 = vld [vmem:[%s227 + $0x30] sm:$0xff]
          %v235 = vld [vmem:[%s227 + $0x38] sm:$0xff]
          %v236 = vld [vmem:[%s227 + $0x40] sm:$0xff]
          %v237 = vld [vmem:[%s227 + $0x48] sm:$0xff]
          %v238 = vld [vmem:[%s227 + $0x50] sm:$0xff]
          %v239 = vld [vmem:[%s227 + $0x58] sm:$0xff]
          %v240 = vld [vmem:[%s227 + $0x60] sm:$0xff]
          %v241 = vld [vmem:[%s227 + $0x68] sm:$0xff]
          %v242 = vld [vmem:[%s227 + $0x70] sm:$0xff]
          %v243 = vld [vmem:[%s227 + $0x78] sm:$0xff]
          %v244 = vld [vmem:[%s227 + $0x80] sm:$0xff]
          %v245 = vld [vmem:[%s227 + $0x88] sm:$0xff]
          %v246 = vld [vmem:[%s227 + $0x90] sm:$0xff]
          %v247 = vld [vmem:[%s227 + $0x98] sm:$0xff]
          %v248 = vld [vmem:[%s227 + $0xa0] sm:$0xff]
          %v249 = vld [vmem:[%s227 + $0xa8] sm:$0xff]
          %v250 = vld [vmem:[%s227 + $0xb0] sm:$0xff]
          %v251 = vld [vmem:[%s227 + $0xb8] sm:$0xff]
          %v252 = vld [vmem:[%s227 + $0xc0] sm:$0xff]
          %v253 = vld [vmem:[%s227 + $0xc8] sm:$0xff]
          %v254 = vld [vmem:[%s227 + $0xd0] sm:$0xff]
          %v255 = vld [vmem:[%s227 + $0xd8] sm:$0xff]
          %v256 = vld [vmem:[%s227 + $0xe0] sm:$0xff]
          %v257 = vld [vmem:[%s227 + $0xe8] sm:$0xff]
          %v258 = vld [vmem:[%s227 + $0xf0] sm:$0xff]
          %v259 = vld [vmem:[%s227 + $0xf8] sm:$0xff]
          %v260 = vld [vmem:[%s227 + $0x100] sm:$0xff]
          %v261 = vld [vmem:[%s227 + $0x108] sm:$0xff]
          %v262 = vld [vmem:[%s227 + $0x110] sm:$0xff]
          %v263 = vld [vmem:[%s227 + $0x118] sm:$0xff]
          %v264 = vld [vmem:[%s227 + $0x120] sm:$0xff]
          %v265 = vld [vmem:[%s227 + $0x128] sm:$0xff]
          %v266 = vld [vmem:[%s227 + $0x130] sm:$0xff]
          %v267 = vld [vmem:[%s227 + $0x138] sm:$0xff]
          %v268 = vld [vmem:[%s227 + $0x140] sm:$0xff]
          %v269 = vld [vmem:[%s227 + $0x148] sm:$0xff]
          %v270 = vld [vmem:[%s227 + $0x150] sm:$0xff]
          %v271 = vld [vmem:[%s227 + $0x158] sm:$0xff]
          %v272 = vld [vmem:[%s227 + $0x160] sm:$0xff]
          %v273 = vld [vmem:[%s227 + $0x168] sm:$0xff]
          %v274 = vld [vmem:[%s227 + $0x170] sm:$0xff]
          %v275 = vld [vmem:[%s227 + $0x178] sm:$0xff]
          %276 = vmatprep.subr.mxu0 %v229
          %277 = vmatpush1.msra.mxu0 %v228
          %278 = vmatprep.subr.mxu0 %v232
          %279 = vmatpush1.msra.mxu0 %v231
          %280 = vmatprep.subr.mxu0 %v235
          %281 = vmatpush1.msra.mxu0 %v234
          %282 = vmatprep.subr.mxu0 %v238
          %283 = vmatpush1.msra.mxu0 %v237
          %284 = vmatprep.subr.mxu0 %v241
          %285 = vmatpush1.msra.mxu0 %v240
          %286 = vmatprep.subr.mxu0 %v244
          %287 = vmatpush1.msra.mxu0 %v243
          %288 = vmatprep.subr.mxu0 %v247
          %289 = vmatpush1.msra.mxu0 %v246
          %290 = vmatprep.subr.mxu0 %v250
          %291 = vmatpush1.msra.mxu0 %v249
          %292 = vmatprep.subr.mxu0 %v253
          %293 = vmatpush1.msra.mxu0 %v252
          %294 = vmatprep.subr.mxu0 %v256
          %295 = vmatpush1.msra.mxu0 %v255
          %296 = vmatprep.subr.mxu0 %v259
          %297 = vmatpush1.msra.mxu0 %v258
          %298 = vmatprep.subr.mxu0 %v262
          %299 = vmatpush1.msra.mxu0 %v261
          %300 = vmatprep.subr.mxu0 %v265
          %301 = vmatpush1.msra.mxu0 %v264
          %302 = vmatprep.subr.mxu0 %v268
          %303 = vmatpush1.msra.mxu0 %v267
          %304 = vmatprep.subr.mxu0 %v271
          %305 = vmatpush1.msra.mxu0 %v270
          %306 = vmatprep.subr.mxu0 %v274
          %307 = vmatpush1.msra.mxu0 %v273
          %308 = vmatprep.subr.mxu0 0.0
          %309 = vmatpush1.msra.mxu0 0.0
          %310 = vmatprep.subr.mxu0 0.0
          %311 = vmatpush1.msra.mxu0 0.0
          %312 = vmatprep.subr.mxu0 0.0
          %313 = vmatpush1.msra.mxu0 0.0
          %314 = vmatprep.subr.mxu0 0.0
          %315 = vmatpush1.msra.mxu0 0.0
          %316 = vmatprep.subr.mxu0 0.0
          %317 = vmatpush1.msra.mxu0 0.0
          %318 = vmatprep.subr.mxu0 0.0
          %319 = vmatpush1.msra.mxu0 0.0
          %320 = vmatprep.subr.mxu0 0.0
          %321 = vmatpush1.msra.mxu0 0.0
          %322 = vmatprep.subr.mxu0 0.0
          %323 = vmatpush1.msra.mxu0 0.0
          %324 = vmatprep.subr.mxu0 0.0
          %325 = vmatpush1.msra.mxu0 0.0
          %326 = vmatprep.subr.mxu0 0.0
          %327 = vmatpush1.msra.mxu0 0.0
          %328 = vmatprep.subr.mxu0 0.0
          %329 = vmatpush1.msra.mxu0 0.0
          %330 = vmatprep.subr.mxu0 0.0
          %331 = vmatpush1.msra.mxu0 0.0
          %332 = vmatprep.subr.mxu0 0.0
          %333 = vmatpush1.msra.mxu0 0.0
          %334 = vmatprep.subr.mxu0 0.0
          %335 = vmatpush1.msra.mxu0 0.0
          %336 = vmatprep.subr.mxu0 0.0
          %337 = vmatpush1.msra.mxu0 0.0
          %338 = vmatprep.subr.mxu0 0.0
          %339 = vmatpush1.msra.mxu0 0.0
          %340 = vmatprep.mubr.f32.mxu0 0.0
          %341 = vmatmul.mubr.f32.gmra.mrb[0].mxu0 %v226
          %v342 = vpop.f32.mrb[0].mxu0
          %v343 = vadd.f32 0.0, %v342
          %v344 = vpop.f32.mrb[0].mxu0
          %v345 = vadd.f32 0.0, %v344
          %346 = vdwg.mxu0
          %347 = vmatprep.subr.mxu0 0.0
          %348 = vmatpush1.msra.mxu0 %v230
          %349 = vmatprep.subr.mxu0 0.0
          %350 = vmatpush1.msra.mxu0 %v233
          %351 = vmatprep.subr.mxu0 0.0
          %352 = vmatpush1.msra.mxu0 %v236
          %353 = vmatprep.subr.mxu0 0.0
          %354 = vmatpush1.msra.mxu0 %v239
          %355 = vmatprep.subr.mxu0 0.0
          %356 = vmatpush1.msra.mxu0 %v242
          %357 = vmatprep.subr.mxu0 0.0
          %358 = vmatpush1.msra.mxu0 %v245
          %359 = vmatprep.subr.mxu0 0.0
          %360 = vmatpush1.msra.mxu0 %v248
          %361 = vmatprep.subr.mxu0 0.0
          %362 = vmatpush1.msra.mxu0 %v251
          %363 = vmatprep.subr.mxu0 0.0
          %364 = vmatpush1.msra.mxu0 %v254
          %365 = vmatprep.subr.mxu0 0.0
          %366 = vmatpush1.msra.mxu0 %v257
          %367 = vmatprep.subr.mxu0 0.0
          %368 = vmatpush1.msra.mxu0 %v260
          %369 = vmatprep.subr.mxu0 0.0
          %370 = vmatpush1.msra.mxu0 %v263
          %371 = vmatprep.subr.mxu0 0.0
          %372 = vmatpush1.msra.mxu0 %v266
          %373 = vmatprep.subr.mxu0 0.0
          %374 = vmatpush1.msra.mxu0 %v269
          %375 = vmatprep.subr.mxu0 0.0
          %376 = vmatpush1.msra.mxu0 %v272
          %377 = vmatprep.subr.mxu0 0.0
          %378 = vmatpush1.msra.mxu0 %v275
          %379 = vmatprep.subr.mxu0 0.0
          %380 = vmatpush1.msra.mxu0 0.0
          %381 = vmatprep.subr.mxu0 0.0
          %382 = vmatpush1.msra.mxu0 0.0
          %383 = vmatprep.subr.mxu0 0.0
          %384 = vmatpush1.msra.mxu0 0.0
          %385 = vmatprep.subr.mxu0 0.0
          %386 = vmatpush1.msra.mxu0 0.0
          %387 = vmatprep.subr.mxu0 0.0
          %388 = vmatpush1.msra.mxu0 0.0
          %389 = vmatprep.subr.mxu0 0.0
          %390 = vmatpush1.msra.mxu0 0.0
          %391 = vmatprep.subr.mxu0 0.0
          %392 = vmatpush1.msra.mxu0 0.0
          %393 = vmatprep.subr.mxu0 0.0
          %394 = vmatpush1.msra.mxu0 0.0
          %395 = vmatprep.subr.mxu0 0.0
          %396 = vmatpush1.msra.mxu0 0.0
          %397 = vmatprep.subr.mxu0 0.0
          %398 = vmatpush1.msra.mxu0 0.0
          %399 = vmatprep.subr.mxu0 0.0
          %400 = vmatpush1.msra.mxu0 0.0
          %401 = vmatprep.subr.mxu0 0.0
          %402 = vmatpush1.msra.mxu0 0.0
          %403 = vmatprep.subr.mxu0 0.0
          %404 = vmatpush1.msra.mxu0 0.0
          %405 = vmatprep.subr.mxu0 0.0
          %406 = vmatpush1.msra.mxu0 0.0
          %407 = vmatprep.subr.mxu0 0.0
          %408 = vmatpush1.msra.mxu0 0.0
          %409 = vmatprep.subr.mxu0 0.0
          %410 = vmatpush1.msra.mxu0 0.0
          %411 = vmatprep.mubr.f32.mxu0 0.0
          %412 = vmatmul.mubr.f32.gmra.mrb[0].mxu0 %v226
          %v413 = vpop.f32.mrb[0].mxu0
          %v414 = vadd.f32 0.0, %v413
          %v415 = vpop.f32.mrb[0].mxu0
          %416 = vdwg.mxu0
          %417 = vmatprep.subr.mxu0 %v179
          %418 = vmatpush1.msra.mxu0 %v178
          %419 = vmatprep.subr.mxu0 %v182
          %420 = vmatpush1.msra.mxu0 %v181
          %421 = vmatprep.subr.mxu0 %v185
          %422 = vmatpush1.msra.mxu0 %v184
          %423 = vmatprep.subr.mxu0 %v188
          %424 = vmatpush1.msra.mxu0 %v187
          %425 = vmatprep.subr.mxu0 %v191
          %426 = vmatpush1.msra.mxu0 %v190
          %427 = vmatprep.subr.mxu0 %v194
          %428 = vmatpush1.msra.mxu0 %v193
          %429 = vmatprep.subr.mxu0 %v197
          %430 = vmatpush1.msra.mxu0 %v196
          %431 = vmatprep.subr.mxu0 %v200
          %432 = vmatpush1.msra.mxu0 %v199
          %433 = vmatprep.subr.mxu0 %v203
          %434 = vmatpush1.msra.mxu0 %v202
          %435 = vmatprep.subr.mxu0 %v206
          %436 = vmatpush1.msra.mxu0 %v205
          %437 = vmatprep.subr.mxu0 %v209
          %438 = vmatpush1.msra.mxu0 %v208
          %439 = vmatprep.subr.mxu0 %v212
          %440 = vmatpush1.msra.mxu0 %v211
          %441 = vmatprep.subr.mxu0 %v215
          %442 = vmatpush1.msra.mxu0 %v214
          %443 = vmatprep.subr.mxu0 %v218
          %444 = vmatpush1.msra.mxu0 %v217
          %445 = vmatprep.subr.mxu0 %v221
          %446 = vmatpush1.msra.mxu0 %v220
          %447 = vmatprep.subr.mxu0 %v224
          %448 = vmatpush1.msra.mxu0 %v223
          %449 = vmatprep.subr.mxu0 0.0
          %450 = vmatpush1.msra.mxu0 0.0
          %451 = vmatprep.subr.mxu0 0.0
          %452 = vmatpush1.msra.mxu0 0.0
          %453 = vmatprep.subr.mxu0 0.0
          %454 = vmatpush1.msra.mxu0 0.0
          %455 = vmatprep.subr.mxu0 0.0
          %456 = vmatpush1.msra.mxu0 0.0
          %457 = vmatprep.subr.mxu0 0.0
          %458 = vmatpush1.msra.mxu0 0.0
          %459 = vmatprep.subr.mxu0 0.0
          %460 = vmatpush1.msra.mxu0 0.0
          %461 = vmatprep.subr.mxu0 0.0
          %462 = vmatpush1.msra.mxu0 0.0
          %463 = vmatprep.subr.mxu0 0.0
          %464 = vmatpush1.msra.mxu0 0.0
          %465 = vmatprep.subr.mxu0 0.0
          %466 = vmatpush1.msra.mxu0 0.0
          %467 = vmatprep.subr.mxu0 0.0
          %468 = vmatpush1.msra.mxu0 0.0
          %469 = vmatprep.subr.mxu0 0.0
          %470 = vmatpush1.msra.mxu0 0.0
          %471 = vmatprep.subr.mxu0 0.0
          %472 = vmatpush1.msra.mxu0 0.0
          %473 = vmatprep.subr.mxu0 0.0
          %474 = vmatpush1.msra.mxu0 0.0
          %475 = vmatprep.subr.mxu0 0.0
          %476 = vmatpush1.msra.mxu0 0.0
          %477 = vmatprep.subr.mxu0 0.0
          %478 = vmatpush1.msra.mxu0 0.0
          %479 = vmatprep.subr.mxu0 0.0
          %480 = vmatpush1.msra.mxu0 0.0
          %481 = vmatprep.mubr.f32.mxu0 0.0
          %482 = vmatmul.mubr.f32.gmra.mrb[0].mxu0 %v177
          %v483 = vpop.f32.mrb[0].mxu0
          %v484 = vadd.f32 %v343, %v483
          %v485 = vpop.f32.mrb[0].mxu0
          %v486 = vadd.f32 %v345, %v485
          %487 = vdwg.mxu0
          %488 = vmatprep.subr.mxu0 0.0
          %489 = vmatpush1.msra.mxu0 %v180
          %490 = vmatprep.subr.mxu0 0.0
          %491 = vmatpush1.msra.mxu0 %v183
          %492 = vmatprep.subr.mxu0 0.0
          %493 = vmatpush1.msra.mxu0 %v186
          %494 = vmatprep.subr.mxu0 0.0
          %495 = vmatpush1.msra.mxu0 %v189
          %496 = vmatprep.subr.mxu0 0.0
          %497 = vmatpush1.msra.mxu0 %v192
          %498 = vmatprep.subr.mxu0 0.0
          %499 = vmatpush1.msra.mxu0 %v195
          %500 = vmatprep.subr.mxu0 0.0
          %501 = vmatpush1.msra.mxu0 %v198
          %502 = vmatprep.subr.mxu0 0.0
          %503 = vmatpush1.msra.mxu0 %v201
          %504 = vmatprep.subr.mxu0 0.0
          %505 = vmatpush1.msra.mxu0 %v204
          %506 = vmatprep.subr.mxu0 0.0
          %507 = vmatpush1.msra.mxu0 %v207
          %508 = vmatprep.subr.mxu0 0.0
          %509 = vmatpush1.msra.mxu0 %v210
          %510 = vmatprep.subr.mxu0 0.0
          %511 = vmatpush1.msra.mxu0 %v213
          %512 = vmatprep.subr.mxu0 0.0
          %513 = vmatpush1.msra.mxu0 %v216
          %514 = vmatprep.subr.mxu0 0.0
          %515 = vmatpush1.msra.mxu0 %v219
          %516 = vmatprep.subr.mxu0 0.0
          %517 = vmatpush1.msra.mxu0 %v222
          %518 = vmatprep.subr.mxu0 0.0
          %519 = vmatpush1.msra.mxu0 %v225
          %520 = vmatprep.subr.mxu0 0.0
          %521 = vmatpush1.msra.mxu0 0.0
          %522 = vmatprep.subr.mxu0 0.0
          %523 = vmatpush1.msra.mxu0 0.0
          %524 = vmatprep.subr.mxu0 0.0
          %525 = vmatpush1.msra.mxu0 0.0
          %526 = vmatprep.subr.mxu0 0.0
          %527 = vmatpush1.msra.mxu0 0.0
          %528 = vmatprep.subr.mxu0 0.0
          %529 = vmatpush1.msra.mxu0 0.0
          %530 = vmatprep.subr.mxu0 0.0
          %531 = vmatpush1.msra.mxu0 0.0
          %532 = vmatprep.subr.mxu0 0.0
          %533 = vmatpush1.msra.mxu0 0.0
          %534 = vmatprep.subr.mxu0 0.0
          %535 = vmatpush1.msra.mxu0 0.0
          %536 = vmatprep.subr.mxu0 0.0
          %537 = vmatpush1.msra.mxu0 0.0
          %538 = vmatprep.subr.mxu0 0.0
          %539 = vmatpush1.msra.mxu0 0.0
          %540 = vmatprep.subr.mxu0 0.0
          %541 = vmatpush1.msra.mxu0 0.0
          %542 = vmatprep.subr.mxu0 0.0
          %543 = vmatpush1.msra.mxu0 0.0
          %544 = vmatprep.subr.mxu0 0.0
          %545 = vmatpush1.msra.mxu0 0.0
          %546 = vmatprep.subr.mxu0 0.0
          %547 = vmatpush1.msra.mxu0 0.0
          %548 = vmatprep.subr.mxu0 0.0
          %549 = vmatpush1.msra.mxu0 0.0
          %550 = vmatprep.subr.mxu0 0.0
          %551 = vmatpush1.msra.mxu0 0.0
          %552 = vmatprep.mubr.f32.mxu0 0.0
          %553 = vmatmul.mubr.f32.gmra.mrb[0].mxu0 %v177
          %v554 = vpop.f32.mrb[0].mxu0
          %v555 = vadd.f32 %v414, %v554
          %v556 = vpop.f32.mrb[0].mxu0
          %557 = vdwg.mxu0
          %v558 = vld [vmem:[%s176 + $0x2] sm:$0xf]
          %s559 = scalar_lea.vmem %s1, 768
          %v560 = vld [vmem:[%s559] sm:$0xff]
          %v561 = vld [vmem:[%s559 + $0x8] sm:$0xff]
          %v562 = vld [vmem:[%s559 + $0x10] sm:$0xff]
          %v563 = vld [vmem:[%s559 + $0x18] sm:$0xff]
          %v564 = vld [vmem:[%s559 + $0x20] sm:$0xff]
          %v565 = vld [vmem:[%s559 + $0x28] sm:$0xff]
          %v566 = vld [vmem:[%s559 + $0x30] sm:$0xff]
          %v567 = vld [vmem:[%s559 + $0x38] sm:$0xff]
          %v568 = vld [vmem:[%s559 + $0x40] sm:$0xff]
          %v569 = vld [vmem:[%s559 + $0x48] sm:$0xff]
          %v570 = vld [vmem:[%s559 + $0x50] sm:$0xff]
          %v571 = vld [vmem:[%s559 + $0x58] sm:$0xff]
          %v572 = vld [vmem:[%s559 + $0x60] sm:$0xff]
          %v573 = vld [vmem:[%s559 + $0x68] sm:$0xff]
          %v574 = vld [vmem:[%s559 + $0x70] sm:$0xff]
          %v575 = vld [vmem:[%s559 + $0x78] sm:$0xff]
          %v576 = vld [vmem:[%s559 + $0x80] sm:$0xff]
          %v577 = vld [vmem:[%s559 + $0x88] sm:$0xff]
          %v578 = vld [vmem:[%s559 + $0x90] sm:$0xff]
          %v579 = vld [vmem:[%s559 + $0x98] sm:$0xff]
          %v580 = vld [vmem:[%s559 + $0xa0] sm:$0xff]
          %v581 = vld [vmem:[%s559 + $0xa8] sm:$0xff]
          %v582 = vld [vmem:[%s559 + $0xb0] sm:$0xff]
          %v583 = vld [vmem:[%s559 + $0xb8] sm:$0xff]
          %v584 = vld [vmem:[%s559 + $0xc0] sm:$0xff]
          %v585 = vld [vmem:[%s559 + $0xc8] sm:$0xff]
          %v586 = vld [vmem:[%s559 + $0xd0] sm:$0xff]
          %v587 = vld [vmem:[%s559 + $0xd8] sm:$0xff]
          %v588 = vld [vmem:[%s559 + $0xe0] sm:$0xff]
          %v589 = vld [vmem:[%s559 + $0xe8] sm:$0xff]
          %v590 = vld [vmem:[%s559 + $0xf0] sm:$0xff]
          %v591 = vld [vmem:[%s559 + $0xf8] sm:$0xff]
          %v592 = vld [vmem:[%s559 + $0x100] sm:$0xff]
          %v593 = vld [vmem:[%s559 + $0x108] sm:$0xff]
          %v594 = vld [vmem:[%s559 + $0x110] sm:$0xff]
          %v595 = vld [vmem:[%s559 + $0x118] sm:$0xff]
          %v596 = vld [vmem:[%s559 + $0x120] sm:$0xff]
          %v597 = vld [vmem:[%s559 + $0x128] sm:$0xff]
          %v598 = vld [vmem:[%s559 + $0x130] sm:$0xff]
          %v599 = vld [vmem:[%s559 + $0x138] sm:$0xff]
          %v600 = vld [vmem:[%s559 + $0x140] sm:$0xff]
          %v601 = vld [vmem:[%s559 + $0x148] sm:$0xff]
          %v602 = vld [vmem:[%s559 + $0x150] sm:$0xff]
          %v603 = vld [vmem:[%s559 + $0x158] sm:$0xff]
          %v604 = vld [vmem:[%s559 + $0x160] sm:$0xff]
          %v605 = vld [vmem:[%s559 + $0x168] sm:$0xff]
          %v606 = vld [vmem:[%s559 + $0x170] sm:$0xff]
          %v607 = vld [vmem:[%s559 + $0x178] sm:$0xff]
          %608 = vmatprep.subr.mxu0 %v561
          %609 = vmatpush1.msra.mxu0 %v560
          %610 = vmatprep.subr.mxu0 %v564
          %611 = vmatpush1.msra.mxu0 %v563
          %612 = vmatprep.subr.mxu0 %v567
          %613 = vmatpush1.msra.mxu0 %v566
          %614 = vmatprep.subr.mxu0 %v570
          %615 = vmatpush1.msra.mxu0 %v569
          %616 = vmatprep.subr.mxu0 %v573
          %617 = vmatpush1.msra.mxu0 %v572
          %618 = vmatprep.subr.mxu0 %v576
          %619 = vmatpush1.msra.mxu0 %v575
          %620 = vmatprep.subr.mxu0 %v579
          %621 = vmatpush1.msra.mxu0 %v578
          %622 = vmatprep.subr.mxu0 %v582
          %623 = vmatpush1.msra.mxu0 %v581
          %624 = vmatprep.subr.mxu0 %v585
          %625 = vmatpush1.msra.mxu0 %v584
          %626 = vmatprep.subr.mxu0 %v588
          %627 = vmatpush1.msra.mxu0 %v587
          %628 = vmatprep.subr.mxu0 %v591
          %629 = vmatpush1.msra.mxu0 %v590
          %630 = vmatprep.subr.mxu0 %v594
          %631 = vmatpush1.msra.mxu0 %v593
          %632 = vmatprep.subr.mxu0 %v597
          %633 = vmatpush1.msra.mxu0 %v596
          %634 = vmatprep.subr.mxu0 %v600
          %635 = vmatpush1.msra.mxu0 %v599
          %636 = vmatprep.subr.mxu0 %v603
          %637 = vmatpush1.msra.mxu0 %v602
          %638 = vmatprep.subr.mxu0 %v606
          %639 = vmatpush1.msra.mxu0 %v605
          %640 = vmatprep.subr.mxu0 0.0
          %641 = vmatpush1.msra.mxu0 0.0
          %642 = vmatprep.subr.mxu0 0.0
          %643 = vmatpush1.msra.mxu0 0.0
          %644 = vmatprep.subr.mxu0 0.0
          %645 = vmatpush1.msra.mxu0 0.0
          %646 = vmatprep.subr.mxu0 0.0
          %647 = vmatpush1.msra.mxu0 0.0
          %648 = vmatprep.subr.mxu0 0.0
          %649 = vmatpush1.msra.mxu0 0.0
          %650 = vmatprep.subr.mxu0 0.0
          %651 = vmatpush1.msra.mxu0 0.0
          %652 = vmatprep.subr.mxu0 0.0
          %653 = vmatpush1.msra.mxu0 0.0
          %654 = vmatprep.subr.mxu0 0.0
          %655 = vmatpush1.msra.mxu0 0.0
          %656 = vmatprep.subr.mxu0 0.0
          %657 = vmatpush1.msra.mxu0 0.0
          %658 = vmatprep.subr.mxu0 0.0
          %659 = vmatpush1.msra.mxu0 0.0
          %660 = vmatprep.subr.mxu0 0.0
          %661 = vmatpush1.msra.mxu0 0.0
          %662 = vmatprep.subr.mxu0 0.0
          %663 = vmatpush1.msra.mxu0 0.0
          %664 = vmatprep.subr.mxu0 0.0
          %665 = vmatpush1.msra.mxu0 0.0
          %666 = vmatprep.subr.mxu0 0.0
          %667 = vmatpush1.msra.mxu0 0.0
          %668 = vmatprep.subr.mxu0 0.0
          %669 = vmatpush1.msra.mxu0 0.0
          %670 = vmatprep.subr.mxu0 0.0
          %671 = vmatpush1.msra.mxu0 0.0
          %672 = vmatprep.mubr.f32.mxu0 0.0
          %673 = vmatmul.mubr.f32.gmra.mrb[0].mxu0 %v558
          %v674 = vpop.f32.mrb[0].mxu0
          %v675 = vadd.f32 0.0, %v674
          %v676 = vpop.f32.mrb[0].mxu0
          %v677 = vadd.f32 0.0, %v676
          %678 = vdwg.mxu0
          %679 = vmatprep.subr.mxu0 0.0
          %680 = vmatpush1.msra.mxu0 %v562
          %681 = vmatprep.subr.mxu0 0.0
          %682 = vmatpush1.msra.mxu0 %v565
          %683 = vmatprep.subr.mxu0 0.0
          %684 = vmatpush1.msra.mxu0 %v568
          %685 = vmatprep.subr.mxu0 0.0
          %686 = vmatpush1.msra.mxu0 %v571
          %687 = vmatprep.subr.mxu0 0.0
          %688 = vmatpush1.msra.mxu0 %v574
          %689 = vmatprep.subr.mxu0 0.0
          %690 = vmatpush1.msra.mxu0 %v577
          %691 = vmatprep.subr.mxu0 0.0
          %692 = vmatpush1.msra.mxu0 %v580
          %693 = vmatprep.subr.mxu0 0.0
          %694 = vmatpush1.msra.mxu0 %v583
          %695 = vmatprep.subr.mxu0 0.0
          %696 = vmatpush1.msra.mxu0 %v586
          %697 = vmatprep.subr.mxu0 0.0
          %698 = vmatpush1.msra.mxu0 %v589
          %699 = vmatprep.subr.mxu0 0.0
          %700 = vmatpush1.msra.mxu0 %v592
          %701 = vmatprep.subr.mxu0 0.0
          %702 = vmatpush1.msra.mxu0 %v595
          %703 = vmatprep.subr.mxu0 0.0
          %704 = vmatpush1.msra.mxu0 %v598
          %705 = vmatprep.subr.mxu0 0.0
          %706 = vmatpush1.msra.mxu0 %v601
          %707 = vmatprep.subr.mxu0 0.0
          %708 = vmatpush1.msra.mxu0 %v604
          %709 = vmatprep.subr.mxu0 0.0
          %710 = vmatpush1.msra.mxu0 %v607
          %711 = vmatprep.subr.mxu0 0.0
          %712 = vmatpush1.msra.mxu0 0.0
          %713 = vmatprep.subr.mxu0 0.0
          %714 = vmatpush1.msra.mxu0 0.0
          %715 = vmatprep.subr.mxu0 0.0
          %716 = vmatpush1.msra.mxu0 0.0
          %717 = vmatprep.subr.mxu0 0.0
          %718 = vmatpush1.msra.mxu0 0.0
          %719 = vmatprep.subr.mxu0 0.0
          %720 = vmatpush1.msra.mxu0 0.0
          %721 = vmatprep.subr.mxu0 0.0
          %722 = vmatpush1.msra.mxu0 0.0
          %723 = vmatprep.subr.mxu0 0.0
          %724 = vmatpush1.msra.mxu0 0.0
          %725 = vmatprep.subr.mxu0 0.0
          %726 = vmatpush1.msra.mxu0 0.0
          %727 = vmatprep.subr.mxu0 0.0
          %728 = vmatpush1.msra.mxu0 0.0
          %729 = vmatprep.subr.mxu0 0.0
          %730 = vmatpush1.msra.mxu0 0.0
          %731 = vmatprep.subr.mxu0 0.0
          %732 = vmatpush1.msra.mxu0 0.0
          %733 = vmatprep.subr.mxu0 0.0
          %734 = vmatpush1.msra.mxu0 0.0
          %735 = vmatprep.subr.mxu0 0.0
          %736 = vmatpush1.msra.mxu0 0.0
          %737 = vmatprep.subr.mxu0 0.0
          %738 = vmatpush1.msra.mxu0 0.0
          %739 = vmatprep.subr.mxu0 0.0
          %740 = vmatpush1.msra.mxu0 0.0
          %741 = vmatprep.subr.mxu0 0.0
          %742 = vmatpush1.msra.mxu0 0.0
          %743 = vmatprep.mubr.f32.mxu0 0.0
          %744 = vmatmul.mubr.f32.gmra.mrb[0].mxu0 %v558
          %v745 = vpop.f32.mrb[0].mxu0
          %v746 = vadd.f32 0.0, %v745
          %v747 = vpop.f32.mrb[0].mxu0
          %748 = vdwg.mxu0
          %v749 = vadd.f32 %v484, %v675
          %v750 = vadd.f32 %v486, %v677
          %v751 = vadd.f32 %v555, %v746
          %s752 = sadd.s32 %s170, 1
          %s753 = smul.u32 %s752, 8
          %s754 = scalar_lea.vmem %s168, %s753
          %v755 = vld [vmem:[%s754] sm:$0xf]
          %s756 = scalar_lea.vmem %s1, 1152
          %v757 = vld [vmem:[%s756] sm:$0xff]
          %v758 = vld [vmem:[%s756 + $0x8] sm:$0xff]
          %v759 = vld [vmem:[%s756 + $0x10] sm:$0xff]
          %v760 = vld [vmem:[%s756 + $0x18] sm:$0xff]
          %v761 = vld [vmem:[%s756 + $0x20] sm:$0xff]
          %v762 = vld [vmem:[%s756 + $0x28] sm:$0xff]
          %v763 = vld [vmem:[%s756 + $0x30] sm:$0xff]
          %v764 = vld [vmem:[%s756 + $0x38] sm:$0xff]
          %v765 = vld [vmem:[%s756 + $0x40] sm:$0xff]
          %v766 = vld [vmem:[%s756 + $0x48] sm:$0xff]
          %v767 = vld [vmem:[%s756 + $0x50] sm:$0xff]
          %v768 = vld [vmem:[%s756 + $0x58] sm:$0xff]
          %v769 = vld [vmem:[%s756 + $0x60] sm:$0xff]
          %v770 = vld [vmem:[%s756 + $0x68] sm:$0xff]
          %v771 = vld [vmem:[%s756 + $0x70] sm:$0xff]
          %v772 = vld [vmem:[%s756 + $0x78] sm:$0xff]
          %v773 = vld [vmem:[%s756 + $0x80] sm:$0xff]
          %v774 = vld [vmem:[%s756 + $0x88] sm:$0xff]
          %v775 = vld [vmem:[%s756 + $0x90] sm:$0xff]
          %v776 = vld [vmem:[%s756 + $0x98] sm:$0xff]
          %v777 = vld [vmem:[%s756 + $0xa0] sm:$0xff]
          %v778 = vld [vmem:[%s756 + $0xa8] sm:$0xff]
          %v779 = vld [vmem:[%s756 + $0xb0] sm:$0xff]
          %v780 = vld [vmem:[%s756 + $0xb8] sm:$0xff]
          %v781 = vld [vmem:[%s756 + $0xc0] sm:$0xff]
          %v782 = vld [vmem:[%s756 + $0xc8] sm:$0xff]
          %v783 = vld [vmem:[%s756 + $0xd0] sm:$0xff]
          %v784 = vld [vmem:[%s756 + $0xd8] sm:$0xff]
          %v785 = vld [vmem:[%s756 + $0xe0] sm:$0xff]
          %v786 = vld [vmem:[%s756 + $0xe8] sm:$0xff]
          %v787 = vld [vmem:[%s756 + $0xf0] sm:$0xff]
          %v788 = vld [vmem:[%s756 + $0xf8] sm:$0xff]
          %v789 = vld [vmem:[%s756 + $0x100] sm:$0xff]
          %v790 = vld [vmem:[%s756 + $0x108] sm:$0xff]
          %v791 = vld [vmem:[%s756 + $0x110] sm:$0xff]
          %v792 = vld [vmem:[%s756 + $0x118] sm:$0xff]
          %v793 = vld [vmem:[%s756 + $0x120] sm:$0xff]
          %v794 = vld [vmem:[%s756 + $0x128] sm:$0xff]
          %v795 = vld [vmem:[%s756 + $0x130] sm:$0xff]
          %v796 = vld [vmem:[%s756 + $0x138] sm:$0xff]
          %v797 = vld [vmem:[%s756 + $0x140] sm:$0xff]
          %v798 = vld [vmem:[%s756 + $0x148] sm:$0xff]
          %v799 = vld [vmem:[%s756 + $0x150] sm:$0xff]
          %v800 = vld [vmem:[%s756 + $0x158] sm:$0xff]
          %v801 = vld [vmem:[%s756 + $0x160] sm:$0xff]
          %v802 = vld [vmem:[%s756 + $0x168] sm:$0xff]
          %v803 = vld [vmem:[%s756 + $0x170] sm:$0xff]
          %v804 = vld [vmem:[%s756 + $0x178] sm:$0xff]
          %805 = vmatprep.subr.mxu0 %v758
          %806 = vmatpush1.msra.mxu0 %v757
          %807 = vmatprep.subr.mxu0 %v761
          %808 = vmatpush1.msra.mxu0 %v760
          %809 = vmatprep.subr.mxu0 %v764
          %810 = vmatpush1.msra.mxu0 %v763
          %811 = vmatprep.subr.mxu0 %v767
          %812 = vmatpush1.msra.mxu0 %v766
          %813 = vmatprep.subr.mxu0 %v770
          %814 = vmatpush1.msra.mxu0 %v769
          %815 = vmatprep.subr.mxu0 %v773
          %816 = vmatpush1.msra.mxu0 %v772
          %817 = vmatprep.subr.mxu0 %v776
          %818 = vmatpush1.msra.mxu0 %v775
          %819 = vmatprep.subr.mxu0 %v779
          %820 = vmatpush1.msra.mxu0 %v778
          %821 = vmatprep.subr.mxu0 %v782
          %822 = vmatpush1.msra.mxu0 %v781
          %823 = vmatprep.subr.mxu0 %v785
          %824 = vmatpush1.msra.mxu0 %v784
          %825 = vmatprep.subr.mxu0 %v788
          %826 = vmatpush1.msra.mxu0 %v787
          %827 = vmatprep.subr.mxu0 %v791
          %828 = vmatpush1.msra.mxu0 %v790
          %829 = vmatprep.subr.mxu0 %v794
          %830 = vmatpush1.msra.mxu0 %v793
          %831 = vmatprep.subr.mxu0 %v797
          %832 = vmatpush1.msra.mxu0 %v796
          %833 = vmatprep.subr.mxu0 %v800
          %834 = vmatpush1.msra.mxu0 %v799
          %835 = vmatprep.subr.mxu0 %v803
          %836 = vmatpush1.msra.mxu0 %v802
          %837 = vmatprep.subr.mxu0 0.0
          %838 = vmatpush1.msra.mxu0 0.0
          %839 = vmatprep.subr.mxu0 0.0
          %840 = vmatpush1.msra.mxu0 0.0
          %841 = vmatprep.subr.mxu0 0.0
          %842 = vmatpush1.msra.mxu0 0.0
          %843 = vmatprep.subr.mxu0 0.0
          %844 = vmatpush1.msra.mxu0 0.0
          %845 = vmatprep.subr.mxu0 0.0
          %846 = vmatpush1.msra.mxu0 0.0
          %847 = vmatprep.subr.mxu0 0.0
          %848 = vmatpush1.msra.mxu0 0.0
          %849 = vmatprep.subr.mxu0 0.0
          %850 = vmatpush1.msra.mxu0 0.0
          %851 = vmatprep.subr.mxu0 0.0
          %852 = vmatpush1.msra.mxu0 0.0
          %853 = vmatprep.subr.mxu0 0.0
          %854 = vmatpush1.msra.mxu0 0.0
          %855 = vmatprep.subr.mxu0 0.0
          %856 = vmatpush1.msra.mxu0 0.0
          %857 = vmatprep.subr.mxu0 0.0
          %858 = vmatpush1.msra.mxu0 0.0
          %859 = vmatprep.subr.mxu0 0.0
          %860 = vmatpush1.msra.mxu0 0.0
          %861 = vmatprep.subr.mxu0 0.0
          %862 = vmatpush1.msra.mxu0 0.0
          %863 = vmatprep.subr.mxu0 0.0
          %864 = vmatpush1.msra.mxu0 0.0
          %865 = vmatprep.subr.mxu0 0.0
          %866 = vmatpush1.msra.mxu0 0.0
          %867 = vmatprep.subr.mxu0 0.0
          %868 = vmatpush1.msra.mxu0 0.0
          %869 = vmatprep.mubr.f32.mxu0 0.0
          %870 = vmatmul.mubr.f32.gmra.mrb[0].mxu0 %v755
          %v871 = vpop.f32.mrb[0].mxu0
          %v872 = vadd.f32 0.0, %v871
          %v873 = vpop.f32.mrb[0].mxu0
          %v874 = vadd.f32 0.0, %v873
          %875 = vdwg.mxu0
          %876 = vmatprep.subr.mxu0 0.0
          %877 = vmatpush1.msra.mxu0 %v759
          %878 = vmatprep.subr.mxu0 0.0
          %879 = vmatpush1.msra.mxu0 %v762
          %880 = vmatprep.subr.mxu0 0.0
          %881 = vmatpush1.msra.mxu0 %v765
          %882 = vmatprep.subr.mxu0 0.0
          %883 = vmatpush1.msra.mxu0 %v768
          %884 = vmatprep.subr.mxu0 0.0
          %885 = vmatpush1.msra.mxu0 %v771
          %886 = vmatprep.subr.mxu0 0.0
          %887 = vmatpush1.msra.mxu0 %v774
          %888 = vmatprep.subr.mxu0 0.0
          %889 = vmatpush1.msra.mxu0 %v777
          %890 = vmatprep.subr.mxu0 0.0
          %891 = vmatpush1.msra.mxu0 %v780
          %892 = vmatprep.subr.mxu0 0.0
          %893 = vmatpush1.msra.mxu0 %v783
          %894 = vmatprep.subr.mxu0 0.0
          %895 = vmatpush1.msra.mxu0 %v786
          %896 = vmatprep.subr.mxu0 0.0
          %897 = vmatpush1.msra.mxu0 %v789
          %898 = vmatprep.subr.mxu0 0.0
          %899 = vmatpush1.msra.mxu0 %v792
          %900 = vmatprep.subr.mxu0 0.0
          %901 = vmatpush1.msra.mxu0 %v795
          %902 = vmatprep.subr.mxu0 0.0
          %903 = vmatpush1.msra.mxu0 %v798
          %904 = vmatprep.subr.mxu0 0.0
          %905 = vmatpush1.msra.mxu0 %v801
          %906 = vmatprep.subr.mxu0 0.0
          %907 = vmatpush1.msra.mxu0 %v804
          %908 = vmatprep.subr.mxu0 0.0
          %909 = vmatpush1.msra.mxu0 0.0
          %910 = vmatprep.subr.mxu0 0.0
          %911 = vmatpush1.msra.mxu0 0.0
          %912 = vmatprep.subr.mxu0 0.0
          %913 = vmatpush1.msra.mxu0 0.0
          %914 = vmatprep.subr.mxu0 0.0
          %915 = vmatpush1.msra.mxu0 0.0
          %916 = vmatprep.subr.mxu0 0.0
          %917 = vmatpush1.msra.mxu0 0.0
          %918 = vmatprep.subr.mxu0 0.0
          %919 = vmatpush1.msra.mxu0 0.0
          %920 = vmatprep.subr.mxu0 0.0
          %921 = vmatpush1.msra.mxu0 0.0
          %922 = vmatprep.subr.mxu0 0.0
          %923 = vmatpush1.msra.mxu0 0.0
          %924 = vmatprep.subr.mxu0 0.0
          %925 = vmatpush1.msra.mxu0 0.0
          %926 = vmatprep.subr.mxu0 0.0
          %927 = vmatpush1.msra.mxu0 0.0
          %928 = vmatprep.subr.mxu0 0.0
          %929 = vmatpush1.msra.mxu0 0.0
          %930 = vmatprep.subr.mxu0 0.0
          %931 = vmatpush1.msra.mxu0 0.0
          %932 = vmatprep.subr.mxu0 0.0
          %933 = vmatpush1.msra.mxu0 0.0
          %934 = vmatprep.subr.mxu0 0.0
          %935 = vmatpush1.msra.mxu0 0.0
          %936 = vmatprep.subr.mxu0 0.0
          %937 = vmatpush1.msra.mxu0 0.0
          %938 = vmatprep.subr.mxu0 0.0
          %939 = vmatpush1.msra.mxu0 0.0
          %940 = vmatprep.mubr.f32.mxu0 0.0
          %941 = vmatmul.mubr.f32.gmra.mrb[0].mxu0 %v755
          %v942 = vpop.f32.mrb[0].mxu0
          %v943 = vadd.f32 0.0, %v942
          %v944 = vpop.f32.mrb[0].mxu0
          %945 = vdwg.mxu0
          %v946 = vadd.f32 %v749, %v872
          %v947 = vadd.f32 %v750, %v874
          %v948 = vadd.f32 %v751, %v943
          %v949 = vld [vmem:[%s754 + $0x1] sm:$0xf]
          %s950 = scalar_lea.vmem %s1, 1536
          %v951 = vld [vmem:[%s950] sm:$0xff]
          %v952 = vld [vmem:[%s950 + $0x8] sm:$0xff]
          %v953 = vld [vmem:[%s950 + $0x10] sm:$0xff]
          %v954 = vld [vmem:[%s950 + $0x18] sm:$0xff]
          %v955 = vld [vmem:[%s950 + $0x20] sm:$0xff]
          %v956 = vld [vmem:[%s950 + $0x28] sm:$0xff]
          %v957 = vld [vmem:[%s950 + $0x30] sm:$0xff]
          %v958 = vld [vmem:[%s950 + $0x38] sm:$0xff]
          %v959 = vld [vmem:[%s950 + $0x40] sm:$0xff]
          %v960 = vld [vmem:[%s950 + $0x48] sm:$0xff]
          %v961 = vld [vmem:[%s950 + $0x50] sm:$0xff]
          %v962 = vld [vmem:[%s950 + $0x58] sm:$0xff]
          %v963 = vld [vmem:[%s950 + $0x60] sm:$0xff]
          %v964 = vld [vmem:[%s950 + $0x68] sm:$0xff]
          %v965 = vld [vmem:[%s950 + $0x70] sm:$0xff]
          %v966 = vld [vmem:[%s950 + $0x78] sm:$0xff]
          %v967 = vld [vmem:[%s950 + $0x80] sm:$0xff]
          %v968 = vld [vmem:[%s950 + $0x88] sm:$0xff]
          %v969 = vld [vmem:[%s950 + $0x90] sm:$0xff]
          %v970 = vld [vmem:[%s950 + $0x98] sm:$0xff]
          %v971 = vld [vmem:[%s950 + $0xa0] sm:$0xff]
          %v972 = vld [vmem:[%s950 + $0xa8] sm:$0xff]
          %v973 = vld [vmem:[%s950 + $0xb0] sm:$0xff]
          %v974 = vld [vmem:[%s950 + $0xb8] sm:$0xff]
          %v975 = vld [vmem:[%s950 + $0xc0] sm:$0xff]
          %v976 = vld [vmem:[%s950 + $0xc8] sm:$0xff]
          %v977 = vld [vmem:[%s950 + $0xd0] sm:$0xff]
          %v978 = vld [vmem:[%s950 + $0xd8] sm:$0xff]
          %v979 = vld [vmem:[%s950 + $0xe0] sm:$0xff]
          %v980 = vld [vmem:[%s950 + $0xe8] sm:$0xff]
          %v981 = vld [vmem:[%s950 + $0xf0] sm:$0xff]
          %v982 = vld [vmem:[%s950 + $0xf8] sm:$0xff]
          %v983 = vld [vmem:[%s950 + $0x100] sm:$0xff]
          %v984 = vld [vmem:[%s950 + $0x108] sm:$0xff]
          %v985 = vld [vmem:[%s950 + $0x110] sm:$0xff]
          %v986 = vld [vmem:[%s950 + $0x118] sm:$0xff]
          %v987 = vld [vmem:[%s950 + $0x120] sm:$0xff]
          %v988 = vld [vmem:[%s950 + $0x128] sm:$0xff]
          %v989 = vld [vmem:[%s950 + $0x130] sm:$0xff]
          %v990 = vld [vmem:[%s950 + $0x138] sm:$0xff]
          %v991 = vld [vmem:[%s950 + $0x140] sm:$0xff]
          %v992 = vld [vmem:[%s950 + $0x148] sm:$0xff]
          %v993 = vld [vmem:[%s950 + $0x150] sm:$0xff]
          %v994 = vld [vmem:[%s950 + $0x158] sm:$0xff]
          %v995 = vld [vmem:[%s950 + $0x160] sm:$0xff]
          %v996 = vld [vmem:[%s950 + $0x168] sm:$0xff]
          %v997 = vld [vmem:[%s950 + $0x170] sm:$0xff]
          %v998 = vld [vmem:[%s950 + $0x178] sm:$0xff]
          %999 = vmatprep.subr.mxu0 %v952
          %1000 = vmatpush1.msra.mxu0 %v951
          %1001 = vmatprep.subr.mxu0 %v955
          %1002 = vmatpush1.msra.mxu0 %v954
          %1003 = vmatprep.subr.mxu0 %v958
          %1004 = vmatpush1.msra.mxu0 %v957
          %1005 = vmatprep.subr.mxu0 %v961
          %1006 = vmatpush1.msra.mxu0 %v960
          %1007 = vmatprep.subr.mxu0 %v964
          %1008 = vmatpush1.msra.mxu0 %v963
          %1009 = vmatprep.subr.mxu0 %v967
          %1010 = vmatpush1.msra.mxu0 %v966
          %1011 = vmatprep.subr.mxu0 %v970
          %1012 = vmatpush1.msra.mxu0 %v969
          %1013 = vmatprep.subr.mxu0 %v973
          %1014 = vmatpush1.msra.mxu0 %v972
          %1015 = vmatprep.subr.mxu0 %v976
          %1016 = vmatpush1.msra.mxu0 %v975
          %1017 = vmatprep.subr.mxu0 %v979
          %1018 = vmatpush1.msra.mxu0 %v978
          %1019 = vmatprep.subr.mxu0 %v982
          %1020 = vmatpush1.msra.mxu0 %v981
          %1021 = vmatprep.subr.mxu0 %v985
          %1022 = vmatpush1.msra.mxu0 %v984
          %1023 = vmatprep.subr.mxu0 %v988
          %1024 = vmatpush1.msra.mxu0 %v987
          %1025 = vmatprep.subr.mxu0 %v991
          %1026 = vmatpush1.msra.mxu0 %v990
          %1027 = vmatprep.subr.mxu0 %v994
          %1028 = vmatpush1.msra.mxu0 %v993
          %1029 = vmatprep.subr.mxu0 %v997
          %1030 = vmatpush1.msra.mxu0 %v996
          %1031 = vmatprep.subr.mxu0 0.0
          %1032 = vmatpush1.msra.mxu0 0.0
          %1033 = vmatprep.subr.mxu0 0.0
          %1034 = vmatpush1.msra.mxu0 0.0
          %1035 = vmatprep.subr.mxu0 0.0
          %1036 = vmatpush1.msra.mxu0 0.0
          %1037 = vmatprep.subr.mxu0 0.0
          %1038 = vmatpush1.msra.mxu0 0.0
          %1039 = vmatprep.subr.mxu0 0.0
          %1040 = vmatpush1.msra.mxu0 0.0
          %1041 = vmatprep.subr.mxu0 0.0
          %1042 = vmatpush1.msra.mxu0 0.0
          %1043 = vmatprep.subr.mxu0 0.0
          %1044 = vmatpush1.msra.mxu0 0.0
          %1045 = vmatprep.subr.mxu0 0.0
          %1046 = vmatpush1.msra.mxu0 0.0
          %1047 = vmatprep.subr.mxu0 0.0
          %1048 = vmatpush1.msra.mxu0 0.0
          %1049 = vmatprep.subr.mxu0 0.0
          %1050 = vmatpush1.msra.mxu0 0.0
          %1051 = vmatprep.subr.mxu0 0.0
          %1052 = vmatpush1.msra.mxu0 0.0
          %1053 = vmatprep.subr.mxu0 0.0
          %1054 = vmatpush1.msra.mxu0 0.0
          %1055 = vmatprep.subr.mxu0 0.0
          %1056 = vmatpush1.msra.mxu0 0.0
          %1057 = vmatprep.subr.mxu0 0.0
          %1058 = vmatpush1.msra.mxu0 0.0
          %1059 = vmatprep.subr.mxu0 0.0
          %1060 = vmatpush1.msra.mxu0 0.0
          %1061 = vmatprep.subr.mxu0 0.0
          %1062 = vmatpush1.msra.mxu0 0.0
          %1063 = vmatprep.mubr.f32.mxu0 0.0
          %1064 = vmatmul.mubr.f32.gmra.mrb[0].mxu0 %v949
          %v1065 = vpop.f32.mrb[0].mxu0
          %v1066 = vadd.f32 0.0, %v1065
          %v1067 = vpop.f32.mrb[0].mxu0
          %v1068 = vadd.f32 0.0, %v1067
          %1069 = vdwg.mxu0
          %1070 = vmatprep.subr.mxu0 0.0
          %1071 = vmatpush1.msra.mxu0 %v953
          %1072 = vmatprep.subr.mxu0 0.0
          %1073 = vmatpush1.msra.mxu0 %v956
          %1074 = vmatprep.subr.mxu0 0.0
          %1075 = vmatpush1.msra.mxu0 %v959
          %1076 = vmatprep.subr.mxu0 0.0
          %1077 = vmatpush1.msra.mxu0 %v962
          %1078 = vmatprep.subr.mxu0 0.0
          %1079 = vmatpush1.msra.mxu0 %v965
          %1080 = vmatprep.subr.mxu0 0.0
          %1081 = vmatpush1.msra.mxu0 %v968
          %1082 = vmatprep.subr.mxu0 0.0
          %1083 = vmatpush1.msra.mxu0 %v971
          %1084 = vmatprep.subr.mxu0 0.0
          %1085 = vmatpush1.msra.mxu0 %v974
          %1086 = vmatprep.subr.mxu0 0.0
          %1087 = vmatpush1.msra.mxu0 %v977
          %1088 = vmatprep.subr.mxu0 0.0
          %1089 = vmatpush1.msra.mxu0 %v980
          %1090 = vmatprep.subr.mxu0 0.0
          %1091 = vmatpush1.msra.mxu0 %v983
          %1092 = vmatprep.subr.mxu0 0.0
          %1093 = vmatpush1.msra.mxu0 %v986
          %1094 = vmatprep.subr.mxu0 0.0
          %1095 = vmatpush1.msra.mxu0 %v989
          %1096 = vmatprep.subr.mxu0 0.0
          %1097 = vmatpush1.msra.mxu0 %v992
          %1098 = vmatprep.subr.mxu0 0.0
          %1099 = vmatpush1.msra.mxu0 %v995
          %1100 = vmatprep.subr.mxu0 0.0
          %1101 = vmatpush1.msra.mxu0 %v998
          %1102 = vmatprep.subr.mxu0 0.0
          %1103 = vmatpush1.msra.mxu0 0.0
          %1104 = vmatprep.subr.mxu0 0.0
          %1105 = vmatpush1.msra.mxu0 0.0
          %1106 = vmatprep.subr.mxu0 0.0
          %1107 = vmatpush1.msra.mxu0 0.0
          %1108 = vmatprep.subr.mxu0 0.0
          %1109 = vmatpush1.msra.mxu0 0.0
          %1110 = vmatprep.subr.mxu0 0.0
          %1111 = vmatpush1.msra.mxu0 0.0
          %1112 = vmatprep.subr.mxu0 0.0
          %1113 = vmatpush1.msra.mxu0 0.0
          %1114 = vmatprep.subr.mxu0 0.0
          %1115 = vmatpush1.msra.mxu0 0.0
          %1116 = vmatprep.subr.mxu0 0.0
          %1117 = vmatpush1.msra.mxu0 0.0
          %1118 = vmatprep.subr.mxu0 0.0
          %1119 = vmatpush1.msra.mxu0 0.0
          %1120 = vmatprep.subr.mxu0 0.0
          %1121 = vmatpush1.msra.mxu0 0.0
          %1122 = vmatprep.subr.mxu0 0.0
          %1123 = vmatpush1.msra.mxu0 0.0
          %1124 = vmatprep.subr.mxu0 0.0
          %1125 = vmatpush1.msra.mxu0 0.0
          %1126 = vmatprep.subr.mxu0 0.0
          %1127 = vmatpush1.msra.mxu0 0.0
          %1128 = vmatprep.subr.mxu0 0.0
          %1129 = vmatpush1.msra.mxu0 0.0
          %1130 = vmatprep.subr.mxu0 0.0
          %1131 = vmatpush1.msra.mxu0 0.0
          %1132 = vmatprep.subr.mxu0 0.0
          %1133 = vmatpush1.msra.mxu0 0.0
          %1134 = vmatprep.mubr.f32.mxu0 0.0
          %1135 = vmatmul.mubr.f32.gmra.mrb[0].mxu0 %v949
          %v1136 = vpop.f32.mrb[0].mxu0
          %v1137 = vadd.f32 0.0, %v1136
          %v1138 = vpop.f32.mrb[0].mxu0
          %1139 = vdwg.mxu0
          %v1140 = vadd.f32 %v946, %v1066
          %v1141 = vadd.f32 %v947, %v1068
          %v1142 = vadd.f32 %v948, %v1137
          %v1143 = vld [vmem:[%s754 + $0x2] sm:$0xf]
          %s1144 = scalar_lea.vmem %s1, 1920
          %v1145 = vld [vmem:[%s1144] sm:$0xff]
          %v1146 = vld [vmem:[%s1144 + $0x8] sm:$0xff]
          %v1147 = vld [vmem:[%s1144 + $0x10] sm:$0xff]
          %v1148 = vld [vmem:[%s1144 + $0x18] sm:$0xff]
          %v1149 = vld [vmem:[%s1144 + $0x20] sm:$0xff]
          %v1150 = vld [vmem:[%s1144 + $0x28] sm:$0xff]
          %v1151 = vld [vmem:[%s1144 + $0x30] sm:$0xff]
          %v1152 = vld [vmem:[%s1144 + $0x38] sm:$0xff]
          %v1153 = vld [vmem:[%s1144 + $0x40] sm:$0xff]
          %v1154 = vld [vmem:[%s1144 + $0x48] sm:$0xff]
          %v1155 = vld [vmem:[%s1144 + $0x50] sm:$0xff]
          %v1156 = vld [vmem:[%s1144 + $0x58] sm:$0xff]
          %v1157 = vld [vmem:[%s1144 + $0x60] sm:$0xff]
          %v1158 = vld [vmem:[%s1144 + $0x68] sm:$0xff]
          %v1159 = vld [vmem:[%s1144 + $0x70] sm:$0xff]
          %v1160 = vld [vmem:[%s1144 + $0x78] sm:$0xff]
          %v1161 = vld [vmem:[%s1144 + $0x80] sm:$0xff]
          %v1162 = vld [vmem:[%s1144 + $0x88] sm:$0xff]
          %v1163 = vld [vmem:[%s1144 + $0x90] sm:$0xff]
          %v1164 = vld [vmem:[%s1144 + $0x98] sm:$0xff]
          %v1165 = vld [vmem:[%s1144 + $0xa0] sm:$0xff]
          %v1166 = vld [vmem:[%s1144 + $0xa8] sm:$0xff]
          %v1167 = vld [vmem:[%s1144 + $0xb0] sm:$0xff]
          %v1168 = vld [vmem:[%s1144 + $0xb8] sm:$0xff]
          %v1169 = vld [vmem:[%s1144 + $0xc0] sm:$0xff]
          %v1170 = vld [vmem:[%s1144 + $0xc8] sm:$0xff]
          %v1171 = vld [vmem:[%s1144 + $0xd0] sm:$0xff]
          %v1172 = vld [vmem:[%s1144 + $0xd8] sm:$0xff]
          %v1173 = vld [vmem:[%s1144 + $0xe0] sm:$0xff]
          %v1174 = vld [vmem:[%s1144 + $0xe8] sm:$0xff]
          %v1175 = vld [vmem:[%s1144 + $0xf0] sm:$0xff]
          %v1176 = vld [vmem:[%s1144 + $0xf8] sm:$0xff]
          %v1177 = vld [vmem:[%s1144 + $0x100] sm:$0xff]
          %v1178 = vld [vmem:[%s1144 + $0x108] sm:$0xff]
          %v1179 = vld [vmem:[%s1144 + $0x110] sm:$0xff]
          %v1180 = vld [vmem:[%s1144 + $0x118] sm:$0xff]
          %v1181 = vld [vmem:[%s1144 + $0x120] sm:$0xff]
          %v1182 = vld [vmem:[%s1144 + $0x128] sm:$0xff]
          %v1183 = vld [vmem:[%s1144 + $0x130] sm:$0xff]
          %v1184 = vld [vmem:[%s1144 + $0x138] sm:$0xff]
          %v1185 = vld [vmem:[%s1144 + $0x140] sm:$0xff]
          %v1186 = vld [vmem:[%s1144 + $0x148] sm:$0xff]
          %v1187 = vld [vmem:[%s1144 + $0x150] sm:$0xff]
          %v1188 = vld [vmem:[%s1144 + $0x158] sm:$0xff]
          %v1189 = vld [vmem:[%s1144 + $0x160] sm:$0xff]
          %v1190 = vld [vmem:[%s1144 + $0x168] sm:$0xff]
          %v1191 = vld [vmem:[%s1144 + $0x170] sm:$0xff]
          %v1192 = vld [vmem:[%s1144 + $0x178] sm:$0xff]
          %1193 = vmatprep.subr.mxu0 %v1146
          %1194 = vmatpush1.msra.mxu0 %v1145
          %1195 = vmatprep.subr.mxu0 %v1149
          %1196 = vmatpush1.msra.mxu0 %v1148
          %1197 = vmatprep.subr.mxu0 %v1152
          %1198 = vmatpush1.msra.mxu0 %v1151
          %1199 = vmatprep.subr.mxu0 %v1155
          %1200 = vmatpush1.msra.mxu0 %v1154
          %1201 = vmatprep.subr.mxu0 %v1158
          %1202 = vmatpush1.msra.mxu0 %v1157
          %1203 = vmatprep.subr.mxu0 %v1161
          %1204 = vmatpush1.msra.mxu0 %v1160
          %1205 = vmatprep.subr.mxu0 %v1164
          %1206 = vmatpush1.msra.mxu0 %v1163
          %1207 = vmatprep.subr.mxu0 %v1167
          %1208 = vmatpush1.msra.mxu0 %v1166
          %1209 = vmatprep.subr.mxu0 %v1170
          %1210 = vmatpush1.msra.mxu0 %v1169
          %1211 = vmatprep.subr.mxu0 %v1173
          %1212 = vmatpush1.msra.mxu0 %v1172
          %1213 = vmatprep.subr.mxu0 %v1176
          %1214 = vmatpush1.msra.mxu0 %v1175
          %1215 = vmatprep.subr.mxu0 %v1179
          %1216 = vmatpush1.msra.mxu0 %v1178
          %1217 = vmatprep.subr.mxu0 %v1182
          %1218 = vmatpush1.msra.mxu0 %v1181
          %1219 = vmatprep.subr.mxu0 %v1185
          %1220 = vmatpush1.msra.mxu0 %v1184
          %1221 = vmatprep.subr.mxu0 %v1188
          %1222 = vmatpush1.msra.mxu0 %v1187
          %1223 = vmatprep.subr.mxu0 %v1191
          %1224 = vmatpush1.msra.mxu0 %v1190
          %1225 = vmatprep.subr.mxu0 0.0
          %1226 = vmatpush1.msra.mxu0 0.0
          %1227 = vmatprep.subr.mxu0 0.0
          %1228 = vmatpush1.msra.mxu0 0.0
          %1229 = vmatprep.subr.mxu0 0.0
          %1230 = vmatpush1.msra.mxu0 0.0
          %1231 = vmatprep.subr.mxu0 0.0
          %1232 = vmatpush1.msra.mxu0 0.0
          %1233 = vmatprep.subr.mxu0 0.0
          %1234 = vmatpush1.msra.mxu0 0.0
          %1235 = vmatprep.subr.mxu0 0.0
          %1236 = vmatpush1.msra.mxu0 0.0
          %1237 = vmatprep.subr.mxu0 0.0
          %1238 = vmatpush1.msra.mxu0 0.0
          %1239 = vmatprep.subr.mxu0 0.0
          %1240 = vmatpush1.msra.mxu0 0.0
          %1241 = vmatprep.subr.mxu0 0.0
          %1242 = vmatpush1.msra.mxu0 0.0
          %1243 = vmatprep.subr.mxu0 0.0
          %1244 = vmatpush1.msra.mxu0 0.0
          %1245 = vmatprep.subr.mxu0 0.0
          %1246 = vmatpush1.msra.mxu0 0.0
          %1247 = vmatprep.subr.mxu0 0.0
          %1248 = vmatpush1.msra.mxu0 0.0
          %1249 = vmatprep.subr.mxu0 0.0
          %1250 = vmatpush1.msra.mxu0 0.0
          %1251 = vmatprep.subr.mxu0 0.0
          %1252 = vmatpush1.msra.mxu0 0.0
          %1253 = vmatprep.subr.mxu0 0.0
          %1254 = vmatpush1.msra.mxu0 0.0
          %1255 = vmatprep.subr.mxu0 0.0
          %1256 = vmatpush1.msra.mxu0 0.0
          %1257 = vmatprep.mubr.f32.mxu0 0.0
          %1258 = vmatmul.mubr.f32.gmra.mrb[0].mxu0 %v1143
          %v1259 = vpop.f32.mrb[0].mxu0
          %v1260 = vadd.f32 0.0, %v1259
          %v1261 = vpop.f32.mrb[0].mxu0
          %v1262 = vadd.f32 0.0, %v1261
          %1263 = vdwg.mxu0
          %1264 = vmatprep.subr.mxu0 0.0
          %1265 = vmatpush1.msra.mxu0 %v1147
          %1266 = vmatprep.subr.mxu0 0.0
          %1267 = vmatpush1.msra.mxu0 %v1150
          %1268 = vmatprep.subr.mxu0 0.0
          %1269 = vmatpush1.msra.mxu0 %v1153
          %1270 = vmatprep.subr.mxu0 0.0
          %1271 = vmatpush1.msra.mxu0 %v1156
          %1272 = vmatprep.subr.mxu0 0.0
          %1273 = vmatpush1.msra.mxu0 %v1159
          %1274 = vmatprep.subr.mxu0 0.0
          %1275 = vmatpush1.msra.mxu0 %v1162
          %1276 = vmatprep.subr.mxu0 0.0
          %1277 = vmatpush1.msra.mxu0 %v1165
          %1278 = vmatprep.subr.mxu0 0.0
          %1279 = vmatpush1.msra.mxu0 %v1168
          %1280 = vmatprep.subr.mxu0 0.0
          %1281 = vmatpush1.msra.mxu0 %v1171
          %1282 = vmatprep.subr.mxu0 0.0
          %1283 = vmatpush1.msra.mxu0 %v1174
          %1284 = vmatprep.subr.mxu0 0.0
          %1285 = vmatpush1.msra.mxu0 %v1177
          %1286 = vmatprep.subr.mxu0 0.0
          %1287 = vmatpush1.msra.mxu0 %v1180
          %1288 = vmatprep.subr.mxu0 0.0
          %1289 = vmatpush1.msra.mxu0 %v1183
          %1290 = vmatprep.subr.mxu0 0.0
          %1291 = vmatpush1.msra.mxu0 %v1186
          %1292 = vmatprep.subr.mxu0 0.0
          %1293 = vmatpush1.msra.mxu0 %v1189
          %1294 = vmatprep.subr.mxu0 0.0
          %1295 = vmatpush1.msra.mxu0 %v1192
          %1296 = vmatprep.subr.mxu0 0.0
          %1297 = vmatpush1.msra.mxu0 0.0
          %1298 = vmatprep.subr.mxu0 0.0
          %1299 = vmatpush1.msra.mxu0 0.0
          %1300 = vmatprep.subr.mxu0 0.0
          %1301 = vmatpush1.msra.mxu0 0.0
          %1302 = vmatprep.subr.mxu0 0.0
          %1303 = vmatpush1.msra.mxu0 0.0
          %1304 = vmatprep.subr.mxu0 0.0
          %1305 = vmatpush1.msra.mxu0 0.0
          %1306 = vmatprep.subr.mxu0 0.0
          %1307 = vmatpush1.msra.mxu0 0.0
          %1308 = vmatprep.subr.mxu0 0.0
          %1309 = vmatpush1.msra.mxu0 0.0
          %1310 = vmatprep.subr.mxu0 0.0
          %1311 = vmatpush1.msra.mxu0 0.0
          %1312 = vmatprep.subr.mxu0 0.0
          %1313 = vmatpush1.msra.mxu0 0.0
          %1314 = vmatprep.subr.mxu0 0.0
          %1315 = vmatpush1.msra.mxu0 0.0
          %1316 = vmatprep.subr.mxu0 0.0
          %1317 = vmatpush1.msra.mxu0 0.0
          %1318 = vmatprep.subr.mxu0 0.0
          %1319 = vmatpush1.msra.mxu0 0.0
          %1320 = vmatprep.subr.mxu0 0.0
          %1321 = vmatpush1.msra.mxu0 0.0
          %1322 = vmatprep.subr.mxu0 0.0
          %1323 = vmatpush1.msra.mxu0 0.0
          %1324 = vmatprep.subr.mxu0 0.0
          %1325 = vmatpush1.msra.mxu0 0.0
          %1326 = vmatprep.subr.mxu0 0.0
          %1327 = vmatpush1.msra.mxu0 0.0
          %1328 = vmatprep.mubr.f32.mxu0 0.0
          %1329 = vmatmul.mubr.f32.gmra.mrb[0].mxu0 %v1143
          %v1330 = vpop.f32.mrb[0].mxu0
          %v1331 = vadd.f32 0.0, %v1330
          %v1332 = vpop.f32.mrb[0].mxu0
          %1333 = vdwg.mxu0
          %v1334 = vadd.f32 %v1140, %v1260
          %v1335 = vadd.f32 %v1141, %v1262
          %v1336 = vadd.f32 %v1142, %v1331
          %s1337 = sadd.s32 %s170, 2
          %s1338 = smul.u32 %s1337, 8
          %s1339 = scalar_lea.vmem %s168, %s1338
          %v1340 = vld [vmem:[%s1339] sm:$0xf]
          %s1341 = scalar_lea.vmem %s1, 2304
          %v1342 = vld [vmem:[%s1341] sm:$0xff]
          %v1343 = vld [vmem:[%s1341 + $0x8] sm:$0xff]
          %v1344 = vld [vmem:[%s1341 + $0x10] sm:$0xff]
          %v1345 = vld [vmem:[%s1341 + $0x18] sm:$0xff]
          %v1346 = vld [vmem:[%s1341 + $0x20] sm:$0xff]
          %v1347 = vld [vmem:[%s1341 + $0x28] sm:$0xff]
          %v1348 = vld [vmem:[%s1341 + $0x30] sm:$0xff]
          %v1349 = vld [vmem:[%s1341 + $0x38] sm:$0xff]
          %v1350 = vld [vmem:[%s1341 + $0x40] sm:$0xff]
          %v1351 = vld [vmem:[%s1341 + $0x48] sm:$0xff]
          %v1352 = vld [vmem:[%s1341 + $0x50] sm:$0xff]
          %v1353 = vld [vmem:[%s1341 + $0x58] sm:$0xff]
          %v1354 = vld [vmem:[%s1341 + $0x60] sm:$0xff]
          %v1355 = vld [vmem:[%s1341 + $0x68] sm:$0xff]
          %v1356 = vld [vmem:[%s1341 + $0x70] sm:$0xff]
          %v1357 = vld [vmem:[%s1341 + $0x78] sm:$0xff]
          %v1358 = vld [vmem:[%s1341 + $0x80] sm:$0xff]
          %v1359 = vld [vmem:[%s1341 + $0x88] sm:$0xff]
          %v1360 = vld [vmem:[%s1341 + $0x90] sm:$0xff]
          %v1361 = vld [vmem:[%s1341 + $0x98] sm:$0xff]
          %v1362 = vld [vmem:[%s1341 + $0xa0] sm:$0xff]
          %v1363 = vld [vmem:[%s1341 + $0xa8] sm:$0xff]
          %v1364 = vld [vmem:[%s1341 + $0xb0] sm:$0xff]
          %v1365 = vld [vmem:[%s1341 + $0xb8] sm:$0xff]
          %v1366 = vld [vmem:[%s1341 + $0xc0] sm:$0xff]
          %v1367 = vld [vmem:[%s1341 + $0xc8] sm:$0xff]
          %v1368 = vld [vmem:[%s1341 + $0xd0] sm:$0xff]
          %v1369 = vld [vmem:[%s1341 + $0xd8] sm:$0xff]
          %v1370 = vld [vmem:[%s1341 + $0xe0] sm:$0xff]
          %v1371 = vld [vmem:[%s1341 + $0xe8] sm:$0xff]
          %v1372 = vld [vmem:[%s1341 + $0xf0] sm:$0xff]
          %v1373 = vld [vmem:[%s1341 + $0xf8] sm:$0xff]
          %v1374 = vld [vmem:[%s1341 + $0x100] sm:$0xff]
          %v1375 = vld [vmem:[%s1341 + $0x108] sm:$0xff]
          %v1376 = vld [vmem:[%s1341 + $0x110] sm:$0xff]
          %v1377 = vld [vmem:[%s1341 + $0x118] sm:$0xff]
          %v1378 = vld [vmem:[%s1341 + $0x120] sm:$0xff]
          %v1379 = vld [vmem:[%s1341 + $0x128] sm:$0xff]
          %v1380 = vld [vmem:[%s1341 + $0x130] sm:$0xff]
          %v1381 = vld [vmem:[%s1341 + $0x138] sm:$0xff]
          %v1382 = vld [vmem:[%s1341 + $0x140] sm:$0xff]
          %v1383 = vld [vmem:[%s1341 + $0x148] sm:$0xff]
          %v1384 = vld [vmem:[%s1341 + $0x150] sm:$0xff]
          %v1385 = vld [vmem:[%s1341 + $0x158] sm:$0xff]
          %v1386 = vld [vmem:[%s1341 + $0x160] sm:$0xff]
          %v1387 = vld [vmem:[%s1341 + $0x168] sm:$0xff]
          %v1388 = vld [vmem:[%s1341 + $0x170] sm:$0xff]
          %v1389 = vld [vmem:[%s1341 + $0x178] sm:$0xff]
          %1390 = vmatprep.subr.mxu0 %v1343
          %1391 = vmatpush1.msra.mxu0 %v1342
          %1392 = vmatprep.subr.mxu0 %v1346
          %1393 = vmatpush1.msra.mxu0 %v1345
          %1394 = vmatprep.subr.mxu0 %v1349
          %1395 = vmatpush1.msra.mxu0 %v1348
          %1396 = vmatprep.subr.mxu0 %v1352
          %1397 = vmatpush1.msra.mxu0 %v1351
          %1398 = vmatprep.subr.mxu0 %v1355
          %1399 = vmatpush1.msra.mxu0 %v1354
          %1400 = vmatprep.subr.mxu0 %v1358
          %1401 = vmatpush1.msra.mxu0 %v1357
          %1402 = vmatprep.subr.mxu0 %v1361
          %1403 = vmatpush1.msra.mxu0 %v1360
          %1404 = vmatprep.subr.mxu0 %v1364
          %1405 = vmatpush1.msra.mxu0 %v1363
          %1406 = vmatprep.subr.mxu0 %v1367
          %1407 = vmatpush1.msra.mxu0 %v1366
          %1408 = vmatprep.subr.mxu0 %v1370
          %1409 = vmatpush1.msra.mxu0 %v1369
          %1410 = vmatprep.subr.mxu0 %v1373
          %1411 = vmatpush1.msra.mxu0 %v1372
          %1412 = vmatprep.subr.mxu0 %v1376
          %1413 = vmatpush1.msra.mxu0 %v1375
          %1414 = vmatprep.subr.mxu0 %v1379
          %1415 = vmatpush1.msra.mxu0 %v1378
          %1416 = vmatprep.subr.mxu0 %v1382
          %1417 = vmatpush1.msra.mxu0 %v1381
          %1418 = vmatprep.subr.mxu0 %v1385
          %1419 = vmatpush1.msra.mxu0 %v1384
          %1420 = vmatprep.subr.mxu0 %v1388
          %1421 = vmatpush1.msra.mxu0 %v1387
          %1422 = vmatprep.subr.mxu0 0.0
          %1423 = vmatpush1.msra.mxu0 0.0
          %1424 = vmatprep.subr.mxu0 0.0
          %1425 = vmatpush1.msra.mxu0 0.0
          %1426 = vmatprep.subr.mxu0 0.0
          %1427 = vmatpush1.msra.mxu0 0.0
          %1428 = vmatprep.subr.mxu0 0.0
          %1429 = vmatpush1.msra.mxu0 0.0
          %1430 = vmatprep.subr.mxu0 0.0
          %1431 = vmatpush1.msra.mxu0 0.0
          %1432 = vmatprep.subr.mxu0 0.0
          %1433 = vmatpush1.msra.mxu0 0.0
          %1434 = vmatprep.subr.mxu0 0.0
          %1435 = vmatpush1.msra.mxu0 0.0
          %1436 = vmatprep.subr.mxu0 0.0
          %1437 = vmatpush1.msra.mxu0 0.0
          %1438 = vmatprep.subr.mxu0 0.0
          %1439 = vmatpush1.msra.mxu0 0.0
          %1440 = vmatprep.subr.mxu0 0.0
          %1441 = vmatpush1.msra.mxu0 0.0
          %1442 = vmatprep.subr.mxu0 0.0
          %1443 = vmatpush1.msra.mxu0 0.0
          %1444 = vmatprep.subr.mxu0 0.0
          %1445 = vmatpush1.msra.mxu0 0.0
          %1446 = vmatprep.subr.mxu0 0.0
          %1447 = vmatpush1.msra.mxu0 0.0
          %1448 = vmatprep.subr.mxu0 0.0
          %1449 = vmatpush1.msra.mxu0 0.0
          %1450 = vmatprep.subr.mxu0 0.0
          %1451 = vmatpush1.msra.mxu0 0.0
          %1452 = vmatprep.subr.mxu0 0.0
          %1453 = vmatpush1.msra.mxu0 0.0
          %1454 = vmatprep.mubr.f32.mxu0 0.0
          %1455 = vmatmul.mubr.f32.gmra.mrb[0].mxu0 %v1340
          %v1456 = vpop.f32.mrb[0].mxu0
          %v1457 = vadd.f32 0.0, %v1456
          %v1458 = vpop.f32.mrb[0].mxu0
          %v1459 = vadd.f32 0.0, %v1458
          %1460 = vdwg.mxu0
          %1461 = vmatprep.subr.mxu0 0.0
          %1462 = vmatpush1.msra.mxu0 %v1344
          %1463 = vmatprep.subr.mxu0 0.0
          %1464 = vmatpush1.msra.mxu0 %v1347
          %1465 = vmatprep.subr.mxu0 0.0
          %1466 = vmatpush1.msra.mxu0 %v1350
          %1467 = vmatprep.subr.mxu0 0.0
          %1468 = vmatpush1.msra.mxu0 %v1353
          %1469 = vmatprep.subr.mxu0 0.0
          %1470 = vmatpush1.msra.mxu0 %v1356
          %1471 = vmatprep.subr.mxu0 0.0
          %1472 = vmatpush1.msra.mxu0 %v1359
          %1473 = vmatprep.subr.mxu0 0.0
          %1474 = vmatpush1.msra.mxu0 %v1362
          %1475 = vmatprep.subr.mxu0 0.0
          %1476 = vmatpush1.msra.mxu0 %v1365
          %1477 = vmatprep.subr.mxu0 0.0
          %1478 = vmatpush1.msra.mxu0 %v1368
          %1479 = vmatprep.subr.mxu0 0.0
          %1480 = vmatpush1.msra.mxu0 %v1371
          %1481 = vmatprep.subr.mxu0 0.0
          %1482 = vmatpush1.msra.mxu0 %v1374
          %1483 = vmatprep.subr.mxu0 0.0
          %1484 = vmatpush1.msra.mxu0 %v1377
          %1485 = vmatprep.subr.mxu0 0.0
          %1486 = vmatpush1.msra.mxu0 %v1380
          %1487 = vmatprep.subr.mxu0 0.0
          %1488 = vmatpush1.msra.mxu0 %v1383
          %1489 = vmatprep.subr.mxu0 0.0
          %1490 = vmatpush1.msra.mxu0 %v1386
          %1491 = vmatprep.subr.mxu0 0.0
          %1492 = vmatpush1.msra.mxu0 %v1389
          %1493 = vmatprep.subr.mxu0 0.0
          %1494 = vmatpush1.msra.mxu0 0.0
          %1495 = vmatprep.subr.mxu0 0.0
          %1496 = vmatpush1.msra.mxu0 0.0
          %1497 = vmatprep.subr.mxu0 0.0
          %1498 = vmatpush1.msra.mxu0 0.0
          %1499 = vmatprep.subr.mxu0 0.0
          %1500 = vmatpush1.msra.mxu0 0.0
          %1501 = vmatprep.subr.mxu0 0.0
          %1502 = vmatpush1.msra.mxu0 0.0
          %1503 = vmatprep.subr.mxu0 0.0
          %1504 = vmatpush1.msra.mxu0 0.0
          %1505 = vmatprep.subr.mxu0 0.0
          %1506 = vmatpush1.msra.mxu0 0.0
          %1507 = vmatprep.subr.mxu0 0.0
          %1508 = vmatpush1.msra.mxu0 0.0
          %1509 = vmatprep.subr.mxu0 0.0
          %1510 = vmatpush1.msra.mxu0 0.0
          %1511 = vmatprep.subr.mxu0 0.0
          %1512 = vmatpush1.msra.mxu0 0.0
          %1513 = vmatprep.subr.mxu0 0.0
          %1514 = vmatpush1.msra.mxu0 0.0
          %1515 = vmatprep.subr.mxu0 0.0
          %1516 = vmatpush1.msra.mxu0 0.0
          %1517 = vmatprep.subr.mxu0 0.0
          %1518 = vmatpush1.msra.mxu0 0.0
          %1519 = vmatprep.subr.mxu0 0.0
          %1520 = vmatpush1.msra.mxu0 0.0
          %1521 = vmatprep.subr.mxu0 0.0
          %1522 = vmatpush1.msra.mxu0 0.0
          %1523 = vmatprep.subr.mxu0 0.0
          %1524 = vmatpush1.msra.mxu0 0.0
          %1525 = vmatprep.mubr.f32.mxu0 0.0
          %1526 = vmatmul.mubr.f32.gmra.mrb[0].mxu0 %v1340
          %v1527 = vpop.f32.mrb[0].mxu0
          %v1528 = vadd.f32 0.0, %v1527
          %v1529 = vpop.f32.mrb[0].mxu0
          %1530 = vdwg.mxu0
          %v1531 = vadd.f32 %v1334, %v1457
          %v1532 = vadd.f32 %v1335, %v1459
          %v1533 = vadd.f32 %v1336, %v1528
          %v1534 = vld [vmem:[%s1339 + $0x1] sm:$0xf]
          %s1535 = scalar_lea.vmem %s1, 2688
          %v1536 = vld [vmem:[%s1535] sm:$0xff]
          %v1537 = vld [vmem:[%s1535 + $0x8] sm:$0xff]
          %v1538 = vld [vmem:[%s1535 + $0x10] sm:$0xff]
          %v1539 = vld [vmem:[%s1535 + $0x18] sm:$0xff]
          %v1540 = vld [vmem:[%s1535 + $0x20] sm:$0xff]
          %v1541 = vld [vmem:[%s1535 + $0x28] sm:$0xff]
          %v1542 = vld [vmem:[%s1535 + $0x30] sm:$0xff]
          %v1543 = vld [vmem:[%s1535 + $0x38] sm:$0xff]
          %v1544 = vld [vmem:[%s1535 + $0x40] sm:$0xff]
          %v1545 = vld [vmem:[%s1535 + $0x48] sm:$0xff]
          %v1546 = vld [vmem:[%s1535 + $0x50] sm:$0xff]
          %v1547 = vld [vmem:[%s1535 + $0x58] sm:$0xff]
          %v1548 = vld [vmem:[%s1535 + $0x60] sm:$0xff]
          %v1549 = vld [vmem:[%s1535 + $0x68] sm:$0xff]
          %v1550 = vld [vmem:[%s1535 + $0x70] sm:$0xff]
          %v1551 = vld [vmem:[%s1535 + $0x78] sm:$0xff]
          %v1552 = vld [vmem:[%s1535 + $0x80] sm:$0xff]
          %v1553 = vld [vmem:[%s1535 + $0x88] sm:$0xff]
          %v1554 = vld [vmem:[%s1535 + $0x90] sm:$0xff]
          %v1555 = vld [vmem:[%s1535 + $0x98] sm:$0xff]
          %v1556 = vld [vmem:[%s1535 + $0xa0] sm:$0xff]
          %v1557 = vld [vmem:[%s1535 + $0xa8] sm:$0xff]
          %v1558 = vld [vmem:[%s1535 + $0xb0] sm:$0xff]
          %v1559 = vld [vmem:[%s1535 + $0xb8] sm:$0xff]
          %v1560 = vld [vmem:[%s1535 + $0xc0] sm:$0xff]
          %v1561 = vld [vmem:[%s1535 + $0xc8] sm:$0xff]
          %v1562 = vld [vmem:[%s1535 + $0xd0] sm:$0xff]
          %v1563 = vld [vmem:[%s1535 + $0xd8] sm:$0xff]
          %v1564 = vld [vmem:[%s1535 + $0xe0] sm:$0xff]
          %v1565 = vld [vmem:[%s1535 + $0xe8] sm:$0xff]
          %v1566 = vld [vmem:[%s1535 + $0xf0] sm:$0xff]
          %v1567 = vld [vmem:[%s1535 + $0xf8] sm:$0xff]
          %v1568 = vld [vmem:[%s1535 + $0x100] sm:$0xff]
          %v1569 = vld [vmem:[%s1535 + $0x108] sm:$0xff]
          %v1570 = vld [vmem:[%s1535 + $0x110] sm:$0xff]
          %v1571 = vld [vmem:[%s1535 + $0x118] sm:$0xff]
          %v1572 = vld [vmem:[%s1535 + $0x120] sm:$0xff]
          %v1573 = vld [vmem:[%s1535 + $0x128] sm:$0xff]
          %v1574 = vld [vmem:[%s1535 + $0x130] sm:$0xff]
          %v1575 = vld [vmem:[%s1535 + $0x138] sm:$0xff]
          %v1576 = vld [vmem:[%s1535 + $0x140] sm:$0xff]
          %v1577 = vld [vmem:[%s1535 + $0x148] sm:$0xff]
          %v1578 = vld [vmem:[%s1535 + $0x150] sm:$0xff]
          %v1579 = vld [vmem:[%s1535 + $0x158] sm:$0xff]
          %v1580 = vld [vmem:[%s1535 + $0x160] sm:$0xff]
          %v1581 = vld [vmem:[%s1535 + $0x168] sm:$0xff]
          %v1582 = vld [vmem:[%s1535 + $0x170] sm:$0xff]
          %v1583 = vld [vmem:[%s1535 + $0x178] sm:$0xff]
          %1584 = vmatprep.subr.mxu0 %v1537
          %1585 = vmatpush1.msra.mxu0 %v1536
          %1586 = vmatprep.subr.mxu0 %v1540
          %1587 = vmatpush1.msra.mxu0 %v1539
          %1588 = vmatprep.subr.mxu0 %v1543
          %1589 = vmatpush1.msra.mxu0 %v1542
          %1590 = vmatprep.subr.mxu0 %v1546
          %1591 = vmatpush1.msra.mxu0 %v1545
          %1592 = vmatprep.subr.mxu0 %v1549
          %1593 = vmatpush1.msra.mxu0 %v1548
          %1594 = vmatprep.subr.mxu0 %v1552
          %1595 = vmatpush1.msra.mxu0 %v1551
          %1596 = vmatprep.subr.mxu0 %v1555
          %1597 = vmatpush1.msra.mxu0 %v1554
          %1598 = vmatprep.subr.mxu0 %v1558
          %1599 = vmatpush1.msra.mxu0 %v1557
          %1600 = vmatprep.subr.mxu0 %v1561
          %1601 = vmatpush1.msra.mxu0 %v1560
          %1602 = vmatprep.subr.mxu0 %v1564
          %1603 = vmatpush1.msra.mxu0 %v1563
          %1604 = vmatprep.subr.mxu0 %v1567
          %1605 = vmatpush1.msra.mxu0 %v1566
          %1606 = vmatprep.subr.mxu0 %v1570
          %1607 = vmatpush1.msra.mxu0 %v1569
          %1608 = vmatprep.subr.mxu0 %v1573
          %1609 = vmatpush1.msra.mxu0 %v1572
          %1610 = vmatprep.subr.mxu0 %v1576
          %1611 = vmatpush1.msra.mxu0 %v1575
          %1612 = vmatprep.subr.mxu0 %v1579
          %1613 = vmatpush1.msra.mxu0 %v1578
          %1614 = vmatprep.subr.mxu0 %v1582
          %1615 = vmatpush1.msra.mxu0 %v1581
          %1616 = vmatprep.subr.mxu0 0.0
          %1617 = vmatpush1.msra.mxu0 0.0
          %1618 = vmatprep.subr.mxu0 0.0
          %1619 = vmatpush1.msra.mxu0 0.0
          %1620 = vmatprep.subr.mxu0 0.0
          %1621 = vmatpush1.msra.mxu0 0.0
          %1622 = vmatprep.subr.mxu0 0.0
          %1623 = vmatpush1.msra.mxu0 0.0
          %1624 = vmatprep.subr.mxu0 0.0
          %1625 = vmatpush1.msra.mxu0 0.0
          %1626 = vmatprep.subr.mxu0 0.0
          %1627 = vmatpush1.msra.mxu0 0.0
          %1628 = vmatprep.subr.mxu0 0.0
          %1629 = vmatpush1.msra.mxu0 0.0
          %1630 = vmatprep.subr.mxu0 0.0
          %1631 = vmatpush1.msra.mxu0 0.0
          %1632 = vmatprep.subr.mxu0 0.0
          %1633 = vmatpush1.msra.mxu0 0.0
          %1634 = vmatprep.subr.mxu0 0.0
          %1635 = vmatpush1.msra.mxu0 0.0
          %1636 = vmatprep.subr.mxu0 0.0
          %1637 = vmatpush1.msra.mxu0 0.0
          %1638 = vmatprep.subr.mxu0 0.0
          %1639 = vmatpush1.msra.mxu0 0.0
          %1640 = vmatprep.subr.mxu0 0.0
          %1641 = vmatpush1.msra.mxu0 0.0
          %1642 = vmatprep.subr.mxu0 0.0
          %1643 = vmatpush1.msra.mxu0 0.0
          %1644 = vmatprep.subr.mxu0 0.0
          %1645 = vmatpush1.msra.mxu0 0.0
          %1646 = vmatprep.subr.mxu0 0.0
          %1647 = vmatpush1.msra.mxu0 0.0
          %1648 = vmatprep.mubr.f32.mxu0 0.0
          %1649 = vmatmul.mubr.f32.gmra.mrb[0].mxu0 %v1534
          %v1650 = vpop.f32.mrb[0].mxu0
          %v1651 = vadd.f32 0.0, %v1650
          %v1652 = vpop.f32.mrb[0].mxu0
          %v1653 = vadd.f32 0.0, %v1652
          %1654 = vdwg.mxu0
          %1655 = vmatprep.subr.mxu0 0.0
          %1656 = vmatpush1.msra.mxu0 %v1538
          %1657 = vmatprep.subr.mxu0 0.0
          %1658 = vmatpush1.msra.mxu0 %v1541
          %1659 = vmatprep.subr.mxu0 0.0
          %1660 = vmatpush1.msra.mxu0 %v1544
          %1661 = vmatprep.subr.mxu0 0.0
          %1662 = vmatpush1.msra.mxu0 %v1547
          %1663 = vmatprep.subr.mxu0 0.0
          %1664 = vmatpush1.msra.mxu0 %v1550
          %1665 = vmatprep.subr.mxu0 0.0
          %1666 = vmatpush1.msra.mxu0 %v1553
          %1667 = vmatprep.subr.mxu0 0.0
          %1668 = vmatpush1.msra.mxu0 %v1556
          %1669 = vmatprep.subr.mxu0 0.0
          %1670 = vmatpush1.msra.mxu0 %v1559
          %1671 = vmatprep.subr.mxu0 0.0
          %1672 = vmatpush1.msra.mxu0 %v1562
          %1673 = vmatprep.subr.mxu0 0.0
          %1674 = vmatpush1.msra.mxu0 %v1565
          %1675 = vmatprep.subr.mxu0 0.0
          %1676 = vmatpush1.msra.mxu0 %v1568
          %1677 = vmatprep.subr.mxu0 0.0
          %1678 = vmatpush1.msra.mxu0 %v1571
          %1679 = vmatprep.subr.mxu0 0.0
          %1680 = vmatpush1.msra.mxu0 %v1574
          %1681 = vmatprep.subr.mxu0 0.0
          %1682 = vmatpush1.msra.mxu0 %v1577
          %1683 = vmatprep.subr.mxu0 0.0
          %1684 = vmatpush1.msra.mxu0 %v1580
          %1685 = vmatprep.subr.mxu0 0.0
          %1686 = vmatpush1.msra.mxu0 %v1583
          %1687 = vmatprep.subr.mxu0 0.0
          %1688 = vmatpush1.msra.mxu0 0.0
          %1689 = vmatprep.subr.mxu0 0.0
          %1690 = vmatpush1.msra.mxu0 0.0
          %1691 = vmatprep.subr.mxu0 0.0
          %1692 = vmatpush1.msra.mxu0 0.0
          %1693 = vmatprep.subr.mxu0 0.0
          %1694 = vmatpush1.msra.mxu0 0.0
          %1695 = vmatprep.subr.mxu0 0.0
          %1696 = vmatpush1.msra.mxu0 0.0
          %1697 = vmatprep.subr.mxu0 0.0
          %1698 = vmatpush1.msra.mxu0 0.0
          %1699 = vmatprep.subr.mxu0 0.0
          %1700 = vmatpush1.msra.mxu0 0.0
          %1701 = vmatprep.subr.mxu0 0.0
          %1702 = vmatpush1.msra.mxu0 0.0
          %1703 = vmatprep.subr.mxu0 0.0
          %1704 = vmatpush1.msra.mxu0 0.0
          %1705 = vmatprep.subr.mxu0 0.0
          %1706 = vmatpush1.msra.mxu0 0.0
          %1707 = vmatprep.subr.mxu0 0.0
          %1708 = vmatpush1.msra.mxu0 0.0
          %1709 = vmatprep.subr.mxu0 0.0
          %1710 = vmatpush1.msra.mxu0 0.0
          %1711 = vmatprep.subr.mxu0 0.0
          %1712 = vmatpush1.msra.mxu0 0.0
          %1713 = vmatprep.subr.mxu0 0.0
          %1714 = vmatpush1.msra.mxu0 0.0
          %1715 = vmatprep.subr.mxu0 0.0
          %1716 = vmatpush1.msra.mxu0 0.0
          %1717 = vmatprep.subr.mxu0 0.0
          %1718 = vmatpush1.msra.mxu0 0.0
          %1719 = vmatprep.mubr.f32.mxu0 0.0
          %1720 = vmatmul.mubr.f32.gmra.mrb[0].mxu0 %v1534
          %v1721 = vpop.f32.mrb[0].mxu0
          %v1722 = vadd.f32 0.0, %v1721
          %v1723 = vpop.f32.mrb[0].mxu0
          %1724 = vdwg.mxu0
          %v1725 = vadd.f32 %v1531, %v1651
          %v1726 = vadd.f32 %v1532, %v1653
          %v1727 = vadd.f32 %v1533, %v1722
          %v1728 = vld [vmem:[%s1339 + $0x2] sm:$0xf]
          %s1729 = scalar_lea.vmem %s1, 3072
          %v1730 = vld [vmem:[%s1729] sm:$0xff]
          %v1731 = vld [vmem:[%s1729 + $0x8] sm:$0xff]
          %v1732 = vld [vmem:[%s1729 + $0x10] sm:$0xff]
          %v1733 = vld [vmem:[%s1729 + $0x18] sm:$0xff]
          %v1734 = vld [vmem:[%s1729 + $0x20] sm:$0xff]
          %v1735 = vld [vmem:[%s1729 + $0x28] sm:$0xff]
          %v1736 = vld [vmem:[%s1729 + $0x30] sm:$0xff]
          %v1737 = vld [vmem:[%s1729 + $0x38] sm:$0xff]
          %v1738 = vld [vmem:[%s1729 + $0x40] sm:$0xff]
          %v1739 = vld [vmem:[%s1729 + $0x48] sm:$0xff]
          %v1740 = vld [vmem:[%s1729 + $0x50] sm:$0xff]
          %v1741 = vld [vmem:[%s1729 + $0x58] sm:$0xff]
          %v1742 = vld [vmem:[%s1729 + $0x60] sm:$0xff]
          %v1743 = vld [vmem:[%s1729 + $0x68] sm:$0xff]
          %v1744 = vld [vmem:[%s1729 + $0x70] sm:$0xff]
          %v1745 = vld [vmem:[%s1729 + $0x78] sm:$0xff]
          %v1746 = vld [vmem:[%s1729 + $0x80] sm:$0xff]
          %v1747 = vld [vmem:[%s1729 + $0x88] sm:$0xff]
          %v1748 = vld [vmem:[%s1729 + $0x90] sm:$0xff]
          %v1749 = vld [vmem:[%s1729 + $0x98] sm:$0xff]
          %v1750 = vld [vmem:[%s1729 + $0xa0] sm:$0xff]
          %v1751 = vld [vmem:[%s1729 + $0xa8] sm:$0xff]
          %v1752 = vld [vmem:[%s1729 + $0xb0] sm:$0xff]
          %v1753 = vld [vmem:[%s1729 + $0xb8] sm:$0xff]
          %v1754 = vld [vmem:[%s1729 + $0xc0] sm:$0xff]
          %v1755 = vld [vmem:[%s1729 + $0xc8] sm:$0xff]
          %v1756 = vld [vmem:[%s1729 + $0xd0] sm:$0xff]
          %v1757 = vld [vmem:[%s1729 + $0xd8] sm:$0xff]
          %v1758 = vld [vmem:[%s1729 + $0xe0] sm:$0xff]
          %v1759 = vld [vmem:[%s1729 + $0xe8] sm:$0xff]
          %v1760 = vld [vmem:[%s1729 + $0xf0] sm:$0xff]
          %v1761 = vld [vmem:[%s1729 + $0xf8] sm:$0xff]
          %v1762 = vld [vmem:[%s1729 + $0x100] sm:$0xff]
          %v1763 = vld [vmem:[%s1729 + $0x108] sm:$0xff]
          %v1764 = vld [vmem:[%s1729 + $0x110] sm:$0xff]
          %v1765 = vld [vmem:[%s1729 + $0x118] sm:$0xff]
          %v1766 = vld [vmem:[%s1729 + $0x120] sm:$0xff]
          %v1767 = vld [vmem:[%s1729 + $0x128] sm:$0xff]
          %v1768 = vld [vmem:[%s1729 + $0x130] sm:$0xff]
          %v1769 = vld [vmem:[%s1729 + $0x138] sm:$0xff]
          %v1770 = vld [vmem:[%s1729 + $0x140] sm:$0xff]
          %v1771 = vld [vmem:[%s1729 + $0x148] sm:$0xff]
          %v1772 = vld [vmem:[%s1729 + $0x150] sm:$0xff]
          %v1773 = vld [vmem:[%s1729 + $0x158] sm:$0xff]
          %v1774 = vld [vmem:[%s1729 + $0x160] sm:$0xff]
          %v1775 = vld [vmem:[%s1729 + $0x168] sm:$0xff]
          %v1776 = vld [vmem:[%s1729 + $0x170] sm:$0xff]
          %v1777 = vld [vmem:[%s1729 + $0x178] sm:$0xff]
          %1778 = vmatprep.subr.mxu0 %v1731
          %1779 = vmatpush1.msra.mxu0 %v1730
          %1780 = vmatprep.subr.mxu0 %v1734
          %1781 = vmatpush1.msra.mxu0 %v1733
          %1782 = vmatprep.subr.mxu0 %v1737
          %1783 = vmatpush1.msra.mxu0 %v1736
          %1784 = vmatprep.subr.mxu0 %v1740
          %1785 = vmatpush1.msra.mxu0 %v1739
          %1786 = vmatprep.subr.mxu0 %v1743
          %1787 = vmatpush1.msra.mxu0 %v1742
          %1788 = vmatprep.subr.mxu0 %v1746
          %1789 = vmatpush1.msra.mxu0 %v1745
          %1790 = vmatprep.subr.mxu0 %v1749
          %1791 = vmatpush1.msra.mxu0 %v1748
          %1792 = vmatprep.subr.mxu0 %v1752
          %1793 = vmatpush1.msra.mxu0 %v1751
          %1794 = vmatprep.subr.mxu0 %v1755
          %1795 = vmatpush1.msra.mxu0 %v1754
          %1796 = vmatprep.subr.mxu0 %v1758
          %1797 = vmatpush1.msra.mxu0 %v1757
          %1798 = vmatprep.subr.mxu0 %v1761
          %1799 = vmatpush1.msra.mxu0 %v1760
          %1800 = vmatprep.subr.mxu0 %v1764
          %1801 = vmatpush1.msra.mxu0 %v1763
          %1802 = vmatprep.subr.mxu0 %v1767
          %1803 = vmatpush1.msra.mxu0 %v1766
          %1804 = vmatprep.subr.mxu0 %v1770
          %1805 = vmatpush1.msra.mxu0 %v1769
          %1806 = vmatprep.subr.mxu0 %v1773
          %1807 = vmatpush1.msra.mxu0 %v1772
          %1808 = vmatprep.subr.mxu0 %v1776
          %1809 = vmatpush1.msra.mxu0 %v1775
          %1810 = vmatprep.subr.mxu0 0.0
          %1811 = vmatpush1.msra.mxu0 0.0
          %1812 = vmatprep.subr.mxu0 0.0
          %1813 = vmatpush1.msra.mxu0 0.0
          %1814 = vmatprep.subr.mxu0 0.0
          %1815 = vmatpush1.msra.mxu0 0.0
          %1816 = vmatprep.subr.mxu0 0.0
          %1817 = vmatpush1.msra.mxu0 0.0
          %1818 = vmatprep.subr.mxu0 0.0
          %1819 = vmatpush1.msra.mxu0 0.0
          %1820 = vmatprep.subr.mxu0 0.0
          %1821 = vmatpush1.msra.mxu0 0.0
          %1822 = vmatprep.subr.mxu0 0.0
          %1823 = vmatpush1.msra.mxu0 0.0
          %1824 = vmatprep.subr.mxu0 0.0
          %1825 = vmatpush1.msra.mxu0 0.0
          %1826 = vmatprep.subr.mxu0 0.0
          %1827 = vmatpush1.msra.mxu0 0.0
          %1828 = vmatprep.subr.mxu0 0.0
          %1829 = vmatpush1.msra.mxu0 0.0
          %1830 = vmatprep.subr.mxu0 0.0
          %1831 = vmatpush1.msra.mxu0 0.0
          %1832 = vmatprep.subr.mxu0 0.0
          %1833 = vmatpush1.msra.mxu0 0.0
          %1834 = vmatprep.subr.mxu0 0.0
          %1835 = vmatpush1.msra.mxu0 0.0
          %1836 = vmatprep.subr.mxu0 0.0
          %1837 = vmatpush1.msra.mxu0 0.0
          %1838 = vmatprep.subr.mxu0 0.0
          %1839 = vmatpush1.msra.mxu0 0.0
          %1840 = vmatprep.subr.mxu0 0.0
          %1841 = vmatpush1.msra.mxu0 0.0
          %1842 = vmatprep.mubr.f32.mxu0 0.0
          %1843 = vmatmul.mubr.f32.gmra.mrb[0].mxu0 %v1728
          %v1844 = vpop.f32.mrb[0].mxu0
          %v1845 = vadd.f32 0.0, %v1844
          %v1846 = vpop.f32.mrb[0].mxu0
          %v1847 = vadd.f32 0.0, %v1846
          %1848 = vdwg.mxu0
          %1849 = vmatprep.subr.mxu0 0.0
          %1850 = vmatpush1.msra.mxu0 %v1732
          %1851 = vmatprep.subr.mxu0 0.0
          %1852 = vmatpush1.msra.mxu0 %v1735
          %1853 = vmatprep.subr.mxu0 0.0
          %1854 = vmatpush1.msra.mxu0 %v1738
          %1855 = vmatprep.subr.mxu0 0.0
          %1856 = vmatpush1.msra.mxu0 %v1741
          %1857 = vmatprep.subr.mxu0 0.0
          %1858 = vmatpush1.msra.mxu0 %v1744
          %1859 = vmatprep.subr.mxu0 0.0
          %1860 = vmatpush1.msra.mxu0 %v1747
          %1861 = vmatprep.subr.mxu0 0.0
          %1862 = vmatpush1.msra.mxu0 %v1750
          %1863 = vmatprep.subr.mxu0 0.0
          %1864 = vmatpush1.msra.mxu0 %v1753
          %1865 = vmatprep.subr.mxu0 0.0
          %1866 = vmatpush1.msra.mxu0 %v1756
          %1867 = vmatprep.subr.mxu0 0.0
          %1868 = vmatpush1.msra.mxu0 %v1759
          %1869 = vmatprep.subr.mxu0 0.0
          %1870 = vmatpush1.msra.mxu0 %v1762
          %1871 = vmatprep.subr.mxu0 0.0
          %1872 = vmatpush1.msra.mxu0 %v1765
          %1873 = vmatprep.subr.mxu0 0.0
          %1874 = vmatpush1.msra.mxu0 %v1768
          %1875 = vmatprep.subr.mxu0 0.0
          %1876 = vmatpush1.msra.mxu0 %v1771
          %1877 = vmatprep.subr.mxu0 0.0
          %1878 = vmatpush1.msra.mxu0 %v1774
          %1879 = vmatprep.subr.mxu0 0.0
          %1880 = vmatpush1.msra.mxu0 %v1777
          %1881 = vmatprep.subr.mxu0 0.0
          %1882 = vmatpush1.msra.mxu0 0.0
          %1883 = vmatprep.subr.mxu0 0.0
          %1884 = vmatpush1.msra.mxu0 0.0
          %1885 = vmatprep.subr.mxu0 0.0
          %1886 = vmatpush1.msra.mxu0 0.0
          %1887 = vmatprep.subr.mxu0 0.0
          %1888 = vmatpush1.msra.mxu0 0.0
          %1889 = vmatprep.subr.mxu0 0.0
          %1890 = vmatpush1.msra.mxu0 0.0
          %1891 = vmatprep.subr.mxu0 0.0
          %1892 = vmatpush1.msra.mxu0 0.0
          %1893 = vmatprep.subr.mxu0 0.0
          %1894 = vmatpush1.msra.mxu0 0.0
          %1895 = vmatprep.subr.mxu0 0.0
          %1896 = vmatpush1.msra.mxu0 0.0
          %1897 = vmatprep.subr.mxu0 0.0
          %1898 = vmatpush1.msra.mxu0 0.0
          %1899 = vmatprep.subr.mxu0 0.0
          %1900 = vmatpush1.msra.mxu0 0.0
          %1901 = vmatprep.subr.mxu0 0.0
          %1902 = vmatpush1.msra.mxu0 0.0
          %1903 = vmatprep.subr.mxu0 0.0
          %1904 = vmatpush1.msra.mxu0 0.0
          %1905 = vmatprep.subr.mxu0 0.0
          %1906 = vmatpush1.msra.mxu0 0.0
          %1907 = vmatprep.subr.mxu0 0.0
          %1908 = vmatpush1.msra.mxu0 0.0
          %1909 = vmatprep.subr.mxu0 0.0
          %1910 = vmatpush1.msra.mxu0 0.0
          %1911 = vmatprep.subr.mxu0 0.0
          %1912 = vmatpush1.msra.mxu0 0.0
          %1913 = vmatprep.mubr.f32.mxu0 0.0
          %1914 = vmatmul.mubr.f32.gmra.mrb[0].mxu0 %v1728
          %v1915 = vpop.f32.mrb[0].mxu0
          %v1916 = vadd.f32 0.0, %v1915
          %v1917 = vpop.f32.mrb[0].mxu0
          %1918 = vdwg.mxu0
          %v1919 = vadd.f32 %v1725, %v1845
          %v1920 = vadd.f32 %v1726, %v1847
          %v1921 = vadd.f32 %v1727, %v1916
          %v1922 = vld [vmem:[%s2] sm:$0x7]
          %v1924 = vlaneseq
          %v1925 = vshrl.u32 %v1924, 7
          %v1926 = vsub.s32 0, %v1925
          %v1927 = vrot.slane %v1922, %v1926
          %v1928 = vlaneseq
          %v1929 = vshrl.u32 %v1928, 7
          %v1930 = vsub.s32 1, %v1929
          %v1931 = vrot.slane %v1922, %v1930
          %v1932 = vlaneseq
          %v1933 = vshrl.u32 %v1932, 7
          %v1934 = vsub.s32 2, %v1933
          %v1935 = vrot.slane %v1922, %v1934
          %v1939 = vadd.f32 %v1919, %v1927
          %v1940 = vadd.f32 %v1920, %v1931
          %v1941 = vadd.f32 %v1921, %v1935
          %v1942 = vmax.f32 %v1939, 0.0
          %v1943 = vmax.f32 %v1940, 0.0
          %v1944 = vmax.f32 %v1941, 0.0
          %v1947 = vcombine.low %v1942, %v1943
          %s1949 = smul.u32 %s170, 3
          %s1950 = smul.addr %s1949, 4
          %s1951 = scalar_lea.vmem %s163, %s1950 [#allocation2]
          %1952 = vst [vmem:[%s1951] sm:$0xff] %v1947
          %vm1953 = vcmask 519168
          %1954 = vst.msk [vmem:[%s1951 + $0x8] sm:$0xf] %vm1953, %v1944
        $region37: #{simple_cnn_encoder.5} parent=31 // loop_footer
          %s174 = sadd.s32 1, %s170
        $region38: #{simple_cnn_encoder.5} parent=31 // loop_footer_branch
          %169 = sbr.rel target = $region34
        $region39: #{simple_cnn_encoder.5} parent=31 // loop_exit
          _
        %s1955 = sand.u32 %s93, 1
        %s1956 = scalar_lea.sflag [#allocation3], %s1955
        %s1957 = sand.u32 %s93, 1
        %s1958 = smul.addr %s1957, 48
        %s1959 = scalar_lea.vmem [#allocation2], %s1958
        // Predicated region
        $region40: #{simple_cnn_encoder.5} parent=31 // pred_check
          %p1960 = pneg %p103
        $region41: #{simple_cnn_encoder.5} parent=31 // pred_check_branch
          %1962 = sbr.rel (%p1960) target = $region43
        $region42: #{simple_cnn_encoder.5} parent=31 // pred_region
          %s1964 = ssub.s32 768, 768
          %1965 = vsyncadd %s1956, %s1964
          %s1966 = smul.addr %s17, 12
          %s1967 = smul.addr %s1966, 64
          %s1968 = scalar_lea.hbm %s3, %s1967
          %s1969 = sshll.u32 %s1959, 4
          %s1970 = int_to_ptr.vmem [resolvable:$true] %s1969
          %1975 = dma.vmem_to_hbm [thread:$0]  %s1970, 768, %s1968, %s1956, 192, 192, 12
        $region43: #{simple_cnn_encoder.5} parent=31 // pred_fallthru
          _
      $region32: #{simple_cnn_encoder.5} parent=5 // pred_fallthru
        _
      %p1976 = scmp.le.s32.totalorder 2, %s12
      // Predicated region
      $region44: #{simple_cnn_encoder.5} parent=5 // pred_check
        %p1977 = pneg %p1976
      $region45: #{simple_cnn_encoder.5} parent=5 // pred_check_branch
        %1979 = sbr.rel (%p1977) target = $region47
      $region46: #{simple_cnn_encoder.5} parent=5 // pred_region
        %s1980 = ssub.s32 %s12, 2
        // Predicated region
        $region48: #{simple_cnn_encoder.5} parent=46 // pred_check
          %p1981 = pneg %p109
        $region49: #{simple_cnn_encoder.5} parent=46 // pred_check_branch
          %1983 = sbr.rel (%p1981) target = $region51
        $region50: #{simple_cnn_encoder.5} parent=46 // pred_region
          %s1984 = sand.u32 %s94, 1
          %s1985 = scalar_lea.sflag [#allocation3], %s1984
          %s1986 = sand.u32 %s94, 1
          %s1987 = smul.addr %s1986, 48
          %s1988 = scalar_lea.vmem [#allocation2], %s1987
          %1989 = dma.done %s1985, 768
        $region51: #{simple_cnn_encoder.5} parent=46 // pred_fallthru
          _
      $region47: #{simple_cnn_encoder.5} parent=5 // pred_fallthru
        _
    $region6: #{simple_cnn_encoder.5} parent=1 // loop_footer
      %s16 = sadd.s32 1, %s12
    $region7: #{simple_cnn_encoder.5} parent=1 // loop_footer_branch
      %11 = sbr.rel target = $region3
    $region8: #{simple_cnn_encoder.5} parent=1 // loop_exit
      _
    %1990 = vsyncpa [#allocation3], 1
    %s1991 = scalar_lea.sflag [#allocation3], 1
    %1992 = vsyncpa %s1991, 1

</llo_original>
